<compile_context>
chip_gen: v6e
topology: v6e:2x2x1
jax: 0.10.0
libtpu: 0.0.40
codegen_flags: <defaults>
</compile_context>

<pallas_src>
import functools

import jax
import jax.numpy as jnp
from jax.experimental import pallas as pl
from jax.experimental.pallas import tpu as pltpu


# --------------------------------------------------------------------------------------
# Fused kernel: the whole ResidualGroup for one image
# --------------------------------------------------------------------------------------
def _residual_group_kernel(x_ref, wrc_ref, brc_ref, caw1_ref, cab1_ref,
                           caw2_ref, cab2_ref, wl_ref, bl_ref, o_ref,
                           *, H, W, alpha):
    """Refs:
      x_ref   : (1, C, HW)            input activation (lane-dense: HW on the lane axis)
      wrc_ref : (nb, 2, 9*C, C)       RCAB conv weights (tap-major rows)
      brc_ref : (nb, 2, 1, C)         RCAB conv biases
      caw1_ref: (nb, C, 4)  cab1_ref: (nb, 1, 4)     CALayer squeeze 1x1 conv
      caw2_ref: (nb, 4, C)  cab2_ref: (nb, 1, C)     CALayer excite 1x1 conv
      wl_ref  : (9*C, C)    bl_ref  : (1, C)         final group conv
      o_ref   : (1, C, HW)            output activation (lane-dense store)
    """
    HW = H * W
    C = x_ref.shape[1]
    nb = wrc_ref.shape[0]
    f32 = jnp.float32
    wdt = wrc_ref.dtype                       # MXU input dtype (f32 or bf16)

    def lrelu(v):
        return jnp.where(v >= 0.0, v, alpha * v)

    def im2col(v):
        # v: (HW, C) f32 -> (HW, 9*C) tap matrix; zero halo built with concatenates,
        # taps are static shifted slices of the VMEM-resident padded tile.
        x3 = v.reshape(H, W, C).astype(wdt)
        zr = jnp.zeros((1, W, C), wdt)
        zc = jnp.zeros((H + 2, 1, C), wdt)
        xp = jnp.concatenate(
            [zc, jnp.concatenate([zr, x3, zr], axis=0), zc], axis=1)   # (H+2, W+2, C)
        taps = [xp[dy:dy + H, dx:dx + W, :] for dy in range(3) for dx in range(3)]
        return jnp.concatenate(taps, axis=2).reshape(HW, 9 * C)

    def conv3x3(v, w, b):
        # single MXU matmul, K = 9*C, f32 accumulation
        acc = jnp.dot(im2col(v), w, preferred_element_type=f32)
        return acc + b.astype(f32)

    # Input block arrives lane-dense as (C, HW); flip once (XLU) to the (HW, C)
    # working layout used for the im2col matmuls, and keep it in VMEM all group long.
    x = jnp.transpose(x_ref[0], (1, 0)).astype(f32)          # (HW, C)
    group_skip = x

    for bi in range(nb):                      # unrolled RCAB blocks
        h = lrelu(conv3x3(x, wrc_ref[bi, 0], brc_ref[bi, 0]))      # conv + LeakyReLU(0.1)
        h = conv3x3(h, wrc_ref[bi, 1], brc_ref[bi, 1])             # conv
        # CALayer: global avg pool -> 1x1 conv -> LeakyReLU -> 1x1 conv -> sigmoid -> scale
        y = jnp.mean(h, axis=0, keepdims=True)                     # (1, C)
        z = lrelu(jnp.dot(y, caw1_ref[bi].astype(f32),
                          preferred_element_type=f32) + cab1_ref[bi].astype(f32))
        s = jax.nn.sigmoid(jnp.dot(z, caw2_ref[bi].astype(f32),
                                   preferred_element_type=f32) + cab2_ref[bi].astype(f32))
        x = h * s + x                                              # fused RCAB residual

    out = conv3x3(x, wl_ref[...], bl_ref[...]) + group_skip        # final conv + long skip
    # Flip back once and store lane-dense (last dim HW, multiple of 128 -> unmasked vst).
    o_ref[0] = jnp.transpose(out, (1, 0)).astype(o_ref.dtype)


# --------------------------------------------------------------------------------------
# Host wrapper
# --------------------------------------------------------------------------------------
def _pack_params(params):
    blks = params["blocks"]
    c = params["w_last"].shape[1]
    w_rc = jnp.stack([jnp.stack([b["w1"].reshape(9 * c, c),
                                 b["w2"].reshape(9 * c, c)]) for b in blks])   # (nb,2,9C,C)
    b_rc = jnp.stack([jnp.stack([b["b1"].reshape(1, c),
                                 b["b2"].reshape(1, c)]) for b in blks])       # (nb,2,1,C)
    ca_w1 = jnp.stack([b["ca_w1"] for b in blks])                              # (nb,C,4)
    ca_b1 = jnp.stack([b["ca_b1"].reshape(1, 4) for b in blks])                # (nb,1,4)
    ca_w2 = jnp.stack([b["ca_w2"] for b in blks])                              # (nb,4,C)
    ca_b2 = jnp.stack([b["ca_b2"].reshape(1, c) for b in blks])                # (nb,1,C)
    w_last = params["w_last"].reshape(9 * c, c)
    b_last = params["b_last"].reshape(1, c)
    return (w_rc, b_rc, ca_w1, ca_b1, ca_w2, ca_b2, w_last, b_last)


def residual_group_forward(x_nchw, params):
    """Pallas implementation of ResidualGroup.forward (input/output in NCHW)."""
    n, c, h, w = x_nchw.shape
    hw = h * w
    nb = len(params["blocks"])
    packed = _pack_params(params)

    # NCHW -> (N, C, HW): a free reshape, no transpose.  HW lands on the lane axis,
    # so both the input load and the output store of each grid step are lane-dense.
    x2 = x_nchw.reshape(n, c, hw)

    def full_spec(a):
        nd = a.ndim
        return pl.BlockSpec(a.shape, lambda i, _nd=nd: (0,) * _nd)

    in_specs = [pl.BlockSpec((1, c, hw), lambda i: (i, 0, 0))]
    in_specs += [full_spec(a) for a in packed]

    # Advisory cost estimate (flops dominated by the 2*nb+1 3x3 convs).
    conv_flops = 2 * hw * (9 * c) * c
    flops = n * ((2 * nb + 1) * conv_flops + nb * 2 * (2 * c * 4))
    bytes_accessed = 2 * x2.size * x2.dtype.itemsize \
        + sum(int(a.size) * a.dtype.itemsize for a in packed)
    cost = pl.CostEstimate(flops=int(flops), transcendentals=int(n * nb * c),
                           bytes_accessed=int(bytes_accessed))

    kern = functools.partial(_residual_group_kernel, H=h, W=w, alpha=0.1)
    out = pl.pallas_call(
        kern,
        out_shape=jax.ShapeDtypeStruct((n, c, hw), x_nchw.dtype),
        grid=(n,),
        in_specs=in_specs,
        out_specs=pl.BlockSpec((1, c, hw), lambda i: (i, 0, 0)),
        compiler_params=pltpu.CompilerParams(
            dimension_semantics=("parallel",),
            vmem_limit_bytes=32 * 1024 * 1024),
        cost_estimate=cost,
    )(x2, *packed)

    return out.reshape(n, c, h, w)


# --------------------------------------------------------------------------------------
# Deterministic parameter init (synthetic weights, shapes as in the PyTorch module)
# --------------------------------------------------------------------------------------
def init_params(key, n_feat, n_resblocks):
    n_keys = 6 * n_resblocks + 2
    ks = jax.random.split(key, n_keys)
    blocks, i = [], 0
    for _ in range(n_resblocks):
        blocks.append({
            # conv weights stored as (9, Cin, Cout); w[dy*3+dx, ci, co] == torch_w[co, ci, dy, dx]
            "w1": 0.05 * jax.random.normal(ks[i + 0], (9, n_feat, n_feat), jnp.float32),
            "b1": 0.01 * jax.random.normal(ks[i + 1], (n_feat,), jnp.float32),
            "w2": 0.05 * jax.random.normal(ks[i + 2], (9, n_feat, n_feat), jnp.float32),
            "b2": 0.01 * jax.random.normal(ks[i + 3], (n_feat,), jnp.float32),
            # CALayer 1x1 convs: (C -> 4) and (4 -> C)
            "ca_w1": 0.2 * jax.random.normal(ks[i + 4], (n_feat, 4), jnp.float32),
            "ca_b1": jnp.zeros((4,), jnp.float32),
            "ca_w2": 0.2 * jax.random.normal(ks[i + 5], (4, n_feat), jnp.float32),
            "ca_b2": jnp.zeros((n_feat,), jnp.float32),
        })
        i += 6
    return {
        "blocks": blocks,
        "w_last": 0.05 * jax.random.normal(ks[i + 0], (9, n_feat, n_feat), jnp.float32),
        "b_last": 0.01 * jax.random.normal(ks[i + 1], (n_feat,), jnp.float32),
    }


# --------------------------------------------------------------------------------------
# Pure-JAX reference (for correctness check)
# --------------------------------------------------------------------------------------
def _ref_conv3x3(x, w9, b, lrelu):
    w = w9.reshape(3, 3, w9.shape[1], w9.shape[2])           # HWIO
    out = jax.lax.conv_general_dilated(
        x, w, (1, 1), 'SAME', dimension_numbers=('NHWC', 'HWIO', 'NHWC')) + b
    return jnp.where(out >= 0, out, 0.1 * out) if lrelu else out


def _ref_ca(x, w1, b1, w2, b2):
    y = jnp.mean(x, axis=(1, 2), keepdims=True)
    z = jnp.einsum('nijc,cd->nijd', y, w1) + b1.reshape(1, 1, 1, -1)
    z = jnp.where(z >= 0, z, 0.1 * z)
    s = jax.nn.sigmoid(jnp.einsum('nijd,dc->nijc', z, w2) + b2.reshape(1, 1, 1, -1))
    return x * s


def residual_group_ref(x_nchw, params):
    x = jnp.transpose(x_nchw, (0, 2, 3, 1))
    skip = x
    for blk in params["blocks"]:
        h = _ref_conv3x3(x, blk["w1"], blk["b1"], True)
        h = _ref_conv3x3(h, blk["w2"], blk["b2"], False)
        x = _ref_ca(h, blk["ca_w1"], blk["ca_b1"], blk["ca_w2"], blk["ca_b2"]) + x
    x = _ref_conv3x3(x, params["w_last"], params["b_last"], False) + skip
    return jnp.transpose(x, (0, 3, 1, 2))


# --------------------------------------------------------------------------------------
if __name__ == "__main__":
    key = jax.random.PRNGKey(0)
    kx, kp = jax.random.split(key)

    N, C, H, W = 2, 8, 16, 16       # NCHW, matching the PyTorch module's input convention
    n_resblocks = 2

    x = jax.random.normal(kx, (N, C, H, W), jnp.float32)
    params = init_params(kp, C, n_resblocks)

    fwd = jax.jit(residual_group_forward)
    out = jax.block_until_ready(fwd(x, params))

    ref = residual_group_ref(x, params)
    assert out.shape == (N, C, H, W)
    assert jnp.allclose(out, ref, atol=2e-4, rtol=2e-4), float(jnp.max(jnp.abs(out - ref)))

    print("KERNEL_OK")
</pallas_src>

<mosaic_0001>
module attributes {stable_mosaic.version = 11 : i64} {
  func.func @_residual_group_kernel(%arg0: i32, %arg1: memref<1x8x256xf32, #tpu.memory_space<vmem>>, %arg2: memref<2x2x72x8xf32, #tpu.memory_space<vmem>>, %arg3: memref<2x2x1x8xf32, #tpu.memory_space<vmem>>, %arg4: memref<2x8x4xf32, #tpu.memory_space<vmem>>, %arg5: memref<2x1x4xf32, #tpu.memory_space<vmem>>, %arg6: memref<2x4x8xf32, #tpu.memory_space<vmem>>, %arg7: memref<2x1x8xf32, #tpu.memory_space<vmem>>, %arg8: memref<72x8xf32, #tpu.memory_space<vmem>>, %arg9: memref<1x8xf32, #tpu.memory_space<vmem>>, %arg10: memref<1x8x256xf32, #tpu.memory_space<vmem>>) attributes {dimension_semantics = [#tpu.dimension_semantics<parallel>], iteration_bounds = array<i64: 2>, scalar_prefetch = 0 : i64, scratch_operands = 0 : i64, tpu.core_type = #tpu.core_type<tc>, window_params = [{transform_indices = @transform_0, window_bounds = array<i64: 1, 8, 256>}, {pipeline_mode = #tpu.pipeline_mode<synchronous>, transform_indices = @transform_1, window_bounds = array<i64: 2, 2, 72, 8>}, {pipeline_mode = #tpu.pipeline_mode<synchronous>, transform_indices = @transform_2, window_bounds = array<i64: 2, 2, 1, 8>}, {pipeline_mode = #tpu.pipeline_mode<synchronous>, transform_indices = @transform_3, window_bounds = array<i64: 2, 8, 4>}, {pipeline_mode = #tpu.pipeline_mode<synchronous>, transform_indices = @transform_4, window_bounds = array<i64: 2, 1, 4>}, {pipeline_mode = #tpu.pipeline_mode<synchronous>, transform_indices = @transform_5, window_bounds = array<i64: 2, 4, 8>}, {pipeline_mode = #tpu.pipeline_mode<synchronous>, transform_indices = @transform_6, window_bounds = array<i64: 2, 1, 8>}, {pipeline_mode = #tpu.pipeline_mode<synchronous>, transform_indices = @transform_7, window_bounds = array<i64: 72, 8>}, {pipeline_mode = #tpu.pipeline_mode<synchronous>, transform_indices = @transform_8, window_bounds = array<i64: 1, 8>}, {transform_indices = @transform_9, window_bounds = array<i64: 1, 8, 256>}]} {
    %c0 = arith.constant 0 : index
    %c0_0 = arith.constant 0 : index
    %c0_1 = arith.constant 0 : index
    %0 = vector.load %arg1[%c0, %c0_0, %c0_1] : memref<1x8x256xf32, #tpu.memory_space<vmem>>, vector<1x8x256xf32>
    %1 = vector.shape_cast %0 : vector<1x8x256xf32> to vector<8x256xf32>
    %2 = tpu.transpose %1, [1, 0] : vector<8x256xf32> -> vector<256x8xf32>
    %c0_2 = arith.constant 0 : index
    %c0_3 = arith.constant 0 : index
    %c0_4 = arith.constant 0 : index
    %c0_5 = arith.constant 0 : index
    %3 = vector.load %arg2[%c0_2, %c0_3, %c0_4, %c0_5] : memref<2x2x72x8xf32, #tpu.memory_space<vmem>>, vector<1x1x72x8xf32>
    %4 = vector.shape_cast %3 : vector<1x1x72x8xf32> to vector<72x8xf32>
    %c0_6 = arith.constant 0 : index
    %c0_7 = arith.constant 0 : index
    %c0_8 = arith.constant 0 : index
    %c0_9 = arith.constant 0 : index
    %5 = vector.load %arg3[%c0_6, %c0_7, %c0_8, %c0_9] : memref<2x2x1x8xf32, #tpu.memory_space<vmem>>, vector<1x1x1x8xf32>
    %6 = vector.shape_cast %5 : vector<1x1x1x8xf32> to vector<1x8xf32>
    %7 = vector.shape_cast %2 : vector<256x8xf32> to vector<16x16x8xf32>
    %cst = arith.constant 0.000000e+00 : f32
    %8 = vector.broadcast %cst : f32 to vector<1x16x8xf32>
    %cst_10 = arith.constant 0.000000e+00 : f32
    %9 = vector.broadcast %cst_10 : f32 to vector<18x1x8xf32>
    %10 = tpu.concatenate %8, %7, %8 in 0 : vector<1x16x8xf32>, vector<16x16x8xf32>, vector<1x16x8xf32> -> vector<18x16x8xf32>
    %11 = tpu.concatenate %9, %10, %9 in 1 : vector<18x1x8xf32>, vector<18x16x8xf32>, vector<18x1x8xf32> -> vector<18x18x8xf32>
    %12 = vector.extract_strided_slice %11 {offsets = [0, 0, 0], sizes = [16, 16, 8], strides = [1, 1, 1]} : vector<18x18x8xf32> to vector<16x16x8xf32>
    %13 = vector.extract_strided_slice %11 {offsets = [0, 1, 0], sizes = [16, 16, 8], strides = [1, 1, 1]} : vector<18x18x8xf32> to vector<16x16x8xf32>
    %14 = vector.extract_strided_slice %11 {offsets = [0, 2, 0], sizes = [16, 16, 8], strides = [1, 1, 1]} : vector<18x18x8xf32> to vector<16x16x8xf32>
    %15 = vector.extract_strided_slice %11 {offsets = [1, 0, 0], sizes = [16, 16, 8], strides = [1, 1, 1]} : vector<18x18x8xf32> to vector<16x16x8xf32>
    %16 = vector.extract_strided_slice %11 {offsets = [1, 1, 0], sizes = [16, 16, 8], strides = [1, 1, 1]} : vector<18x18x8xf32> to vector<16x16x8xf32>
    %17 = vector.extract_strided_slice %11 {offsets = [1, 2, 0], sizes = [16, 16, 8], strides = [1, 1, 1]} : vector<18x18x8xf32> to vector<16x16x8xf32>
    %18 = vector.extract_strided_slice %11 {offsets = [2, 0, 0], sizes = [16, 16, 8], strides = [1, 1, 1]} : vector<18x18x8xf32> to vector<16x16x8xf32>
    %19 = vector.extract_strided_slice %11 {offsets = [2, 1, 0], sizes = [16, 16, 8], strides = [1, 1, 1]} : vector<18x18x8xf32> to vector<16x16x8xf32>
    %20 = vector.extract_strided_slice %11 {offsets = [2, 2, 0], sizes = [16, 16, 8], strides = [1, 1, 1]} : vector<18x18x8xf32> to vector<16x16x8xf32>
    %21 = tpu.concatenate %12, %13, %14, %15, %16, %17, %18, %19, %20 in 2 : vector<16x16x8xf32>, vector<16x16x8xf32>, vector<16x16x8xf32>, vector<16x16x8xf32>, vector<16x16x8xf32>, vector<16x16x8xf32>, vector<16x16x8xf32>, vector<16x16x8xf32>, vector<16x16x8xf32> -> vector<16x16x72xf32>
    %22 = vector.shape_cast %21 : vector<16x16x72xf32> to vector<256x72xf32>
    %cst_11 = arith.constant dense<0.000000e+00> : vector<256x8xf32>
    %23 = tpu.matmul %22, %4, %cst_11 {dimension_numbers = #tpu.dot_dimension_numbers<[1], [0], [0], [1], [0, 0, 1, 1], [], []>} : vector<256x72xf32>, vector<72x8xf32>, vector<256x8xf32> -> vector<256x8xf32>
    %24 = vector.broadcast %6 : vector<1x8xf32> to vector<256x8xf32>
    %25 = arith.addf %23, %24 : vector<256x8xf32>
    %cst_12 = arith.constant 0.000000e+00 : f32
    %26 = vector.broadcast %cst_12 : f32 to vector<256x8xf32>
    %27 = arith.cmpf oge, %25, %26 : vector<256x8xf32>
    %cst_13 = arith.constant 1.000000e-01 : f32
    %28 = vector.broadcast %cst_13 : f32 to vector<256x8xf32>
    %29 = arith.mulf %28, %25 : vector<256x8xf32>
    %30 = arith.select %27, %25, %29 : vector<256x8xi1>, vector<256x8xf32>
    %c0_14 = arith.constant 0 : index
    %c1 = arith.constant 1 : index
    %c0_15 = arith.constant 0 : index
    %c0_16 = arith.constant 0 : index
    %31 = vector.load %arg2[%c0_14, %c1, %c0_15, %c0_16] : memref<2x2x72x8xf32, #tpu.memory_space<vmem>>, vector<1x1x72x8xf32>
    %32 = vector.shape_cast %31 : vector<1x1x72x8xf32> to vector<72x8xf32>
    %c0_17 = arith.constant 0 : index
    %c1_18 = arith.constant 1 : index
    %c0_19 = arith.constant 0 : index
    %c0_20 = arith.constant 0 : index
    %33 = vector.load %arg3[%c0_17, %c1_18, %c0_19, %c0_20] : memref<2x2x1x8xf32, #tpu.memory_space<vmem>>, vector<1x1x1x8xf32>
    %34 = vector.shape_cast %33 : vector<1x1x1x8xf32> to vector<1x8xf32>
    %35 = vector.shape_cast %30 : vector<256x8xf32> to vector<16x16x8xf32>
    %cst_21 = arith.constant 0.000000e+00 : f32
    %36 = vector.broadcast %cst_21 : f32 to vector<1x16x8xf32>
    %cst_22 = arith.constant 0.000000e+00 : f32
    %37 = vector.broadcast %cst_22 : f32 to vector<18x1x8xf32>
    %38 = tpu.concatenate %36, %35, %36 in 0 : vector<1x16x8xf32>, vector<16x16x8xf32>, vector<1x16x8xf32> -> vector<18x16x8xf32>
    %39 = tpu.concatenate %37, %38, %37 in 1 : vector<18x1x8xf32>, vector<18x16x8xf32>, vector<18x1x8xf32> -> vector<18x18x8xf32>
    %40 = vector.extract_strided_slice %39 {offsets = [0, 0, 0], sizes = [16, 16, 8], strides = [1, 1, 1]} : vector<18x18x8xf32> to vector<16x16x8xf32>
    %41 = vector.extract_strided_slice %39 {offsets = [0, 1, 0], sizes = [16, 16, 8], strides = [1, 1, 1]} : vector<18x18x8xf32> to vector<16x16x8xf32>
    %42 = vector.extract_strided_slice %39 {offsets = [0, 2, 0], sizes = [16, 16, 8], strides = [1, 1, 1]} : vector<18x18x8xf32> to vector<16x16x8xf32>
    %43 = vector.extract_strided_slice %39 {offsets = [1, 0, 0], sizes = [16, 16, 8], strides = [1, 1, 1]} : vector<18x18x8xf32> to vector<16x16x8xf32>
    %44 = vector.extract_strided_slice %39 {offsets = [1, 1, 0], sizes = [16, 16, 8], strides = [1, 1, 1]} : vector<18x18x8xf32> to vector<16x16x8xf32>
    %45 = vector.extract_strided_slice %39 {offsets = [1, 2, 0], sizes = [16, 16, 8], strides = [1, 1, 1]} : vector<18x18x8xf32> to vector<16x16x8xf32>
    %46 = vector.extract_strided_slice %39 {offsets = [2, 0, 0], sizes = [16, 16, 8], strides = [1, 1, 1]} : vector<18x18x8xf32> to vector<16x16x8xf32>
    %47 = vector.extract_strided_slice %39 {offsets = [2, 1, 0], sizes = [16, 16, 8], strides = [1, 1, 1]} : vector<18x18x8xf32> to vector<16x16x8xf32>
    %48 = vector.extract_strided_slice %39 {offsets = [2, 2, 0], sizes = [16, 16, 8], strides = [1, 1, 1]} : vector<18x18x8xf32> to vector<16x16x8xf32>
    %49 = tpu.concatenate %40, %41, %42, %43, %44, %45, %46, %47, %48 in 2 : vector<16x16x8xf32>, vector<16x16x8xf32>, vector<16x16x8xf32>, vector<16x16x8xf32>, vector<16x16x8xf32>, vector<16x16x8xf32>, vector<16x16x8xf32>, vector<16x16x8xf32>, vector<16x16x8xf32> -> vector<16x16x72xf32>
    %50 = vector.shape_cast %49 : vector<16x16x72xf32> to vector<256x72xf32>
    %cst_23 = arith.constant dense<0.000000e+00> : vector<256x8xf32>
    %51 = tpu.matmul %50, %32, %cst_23 {dimension_numbers = #tpu.dot_dimension_numbers<[1], [0], [0], [1], [0, 0, 1, 1], [], []>} : vector<256x72xf32>, vector<72x8xf32>, vector<256x8xf32> -> vector<256x8xf32>
    %52 = vector.broadcast %34 : vector<1x8xf32> to vector<256x8xf32>
    %53 = arith.addf %51, %52 : vector<256x8xf32>
    %cst_24 = arith.constant dense<0.000000e+00> : vector<8xf32>
    %54 = vector.multi_reduction <add>, %53, %cst_24 [0] : vector<256x8xf32> to vector<8xf32>
    %55 = vector.shape_cast %54 : vector<8xf32> to vector<1x8xf32>
    %cst_25 = arith.constant 2.560000e+02 : f32
    %56 = vector.broadcast %cst_25 : f32 to vector<1x8xf32>
    %57 = arith.divf %55, %56 : vector<1x8xf32>
    %c0_26 = arith.constant 0 : index
    %c0_27 = arith.constant 0 : index
    %c0_28 = arith.constant 0 : index
    %58 = vector.load %arg4[%c0_26, %c0_27, %c0_28] : memref<2x8x4xf32, #tpu.memory_space<vmem>>, vector<1x8x4xf32>
    %59 = vector.shape_cast %58 : vector<1x8x4xf32> to vector<8x4xf32>
    %cst_29 = arith.constant dense<0.000000e+00> : vector<1x4xf32>
    %60 = tpu.matmul %57, %59, %cst_29 {dimension_numbers = #tpu.dot_dimension_numbers<[1], [0], [0], [1], [0, 0, 1, 1], [], []>} : vector<1x8xf32>, vector<8x4xf32>, vector<1x4xf32> -> vector<1x4xf32>
    %c0_30 = arith.constant 0 : index
    %c0_31 = arith.constant 0 : index
    %c0_32 = arith.constant 0 : index
    %61 = vector.load %arg5[%c0_30, %c0_31, %c0_32] : memref<2x1x4xf32, #tpu.memory_space<vmem>>, vector<1x1x4xf32>
    %62 = vector.shape_cast %61 : vector<1x1x4xf32> to vector<1x4xf32>
    %63 = arith.addf %60, %62 : vector<1x4xf32>
    %cst_33 = arith.constant 0.000000e+00 : f32
    %64 = vector.broadcast %cst_33 : f32 to vector<1x4xf32>
    %65 = arith.cmpf oge, %63, %64 : vector<1x4xf32>
    %cst_34 = arith.constant 1.000000e-01 : f32
    %66 = vector.broadcast %cst_34 : f32 to vector<1x4xf32>
    %67 = arith.mulf %66, %63 : vector<1x4xf32>
    %68 = arith.select %65, %63, %67 : vector<1x4xi1>, vector<1x4xf32>
    %c0_35 = arith.constant 0 : index
    %c0_36 = arith.constant 0 : index
    %c0_37 = arith.constant 0 : index
    %69 = vector.load %arg6[%c0_35, %c0_36, %c0_37] : memref<2x4x8xf32, #tpu.memory_space<vmem>>, vector<1x4x8xf32>
    %70 = vector.shape_cast %69 : vector<1x4x8xf32> to vector<4x8xf32>
    %cst_38 = arith.constant dense<0.000000e+00> : vector<1x8xf32>
    %71 = tpu.matmul %68, %70, %cst_38 {dimension_numbers = #tpu.dot_dimension_numbers<[1], [0], [0], [1], [0, 0, 1, 1], [], []>} : vector<1x4xf32>, vector<4x8xf32>, vector<1x8xf32> -> vector<1x8xf32>
    %c0_39 = arith.constant 0 : index
    %c0_40 = arith.constant 0 : index
    %c0_41 = arith.constant 0 : index
    %72 = vector.load %arg7[%c0_39, %c0_40, %c0_41] : memref<2x1x8xf32, #tpu.memory_space<vmem>>, vector<1x1x8xf32>
    %73 = vector.shape_cast %72 : vector<1x1x8xf32> to vector<1x8xf32>
    %74 = arith.addf %71, %73 : vector<1x8xf32>
    %75 = arith.negf %74 : vector<1x8xf32>
    %76 = math.exp %75 : vector<1x8xf32>
    %cst_42 = arith.constant 1.000000e+00 : f32
    %77 = vector.broadcast %cst_42 : f32 to vector<1x8xf32>
    %78 = arith.addf %77, %76 : vector<1x8xf32>
    %79 = arith.divf %77, %78 : vector<1x8xf32>
    %80 = vector.broadcast %79 : vector<1x8xf32> to vector<256x8xf32>
    %81 = arith.mulf %53, %80 : vector<256x8xf32>
    %82 = arith.addf %81, %2 : vector<256x8xf32>
    %c1_43 = arith.constant 1 : index
    %c0_44 = arith.constant 0 : index
    %c0_45 = arith.constant 0 : index
    %c0_46 = arith.constant 0 : index
    %83 = vector.load %arg2[%c1_43, %c0_44, %c0_45, %c0_46] : memref<2x2x72x8xf32, #tpu.memory_space<vmem>>, vector<1x1x72x8xf32>
    %84 = vector.shape_cast %83 : vector<1x1x72x8xf32> to vector<72x8xf32>
    %c1_47 = arith.constant 1 : index
    %c0_48 = arith.constant 0 : index
    %c0_49 = arith.constant 0 : index
    %c0_50 = arith.constant 0 : index
    %85 = vector.load %arg3[%c1_47, %c0_48, %c0_49, %c0_50] : memref<2x2x1x8xf32, #tpu.memory_space<vmem>>, vector<1x1x1x8xf32>
    %86 = vector.shape_cast %85 : vector<1x1x1x8xf32> to vector<1x8xf32>
    %87 = vector.shape_cast %82 : vector<256x8xf32> to vector<16x16x8xf32>
    %cst_51 = arith.constant 0.000000e+00 : f32
    %88 = vector.broadcast %cst_51 : f32 to vector<1x16x8xf32>
    %cst_52 = arith.constant 0.000000e+00 : f32
    %89 = vector.broadcast %cst_52 : f32 to vector<18x1x8xf32>
    %90 = tpu.concatenate %88, %87, %88 in 0 : vector<1x16x8xf32>, vector<16x16x8xf32>, vector<1x16x8xf32> -> vector<18x16x8xf32>
    %91 = tpu.concatenate %89, %90, %89 in 1 : vector<18x1x8xf32>, vector<18x16x8xf32>, vector<18x1x8xf32> -> vector<18x18x8xf32>
    %92 = vector.extract_strided_slice %91 {offsets = [0, 0, 0], sizes = [16, 16, 8], strides = [1, 1, 1]} : vector<18x18x8xf32> to vector<16x16x8xf32>
    %93 = vector.extract_strided_slice %91 {offsets = [0, 1, 0], sizes = [16, 16, 8], strides = [1, 1, 1]} : vector<18x18x8xf32> to vector<16x16x8xf32>
    %94 = vector.extract_strided_slice %91 {offsets = [0, 2, 0], sizes = [16, 16, 8], strides = [1, 1, 1]} : vector<18x18x8xf32> to vector<16x16x8xf32>
    %95 = vector.extract_strided_slice %91 {offsets = [1, 0, 0], sizes = [16, 16, 8], strides = [1, 1, 1]} : vector<18x18x8xf32> to vector<16x16x8xf32>
    %96 = vector.extract_strided_slice %91 {offsets = [1, 1, 0], sizes = [16, 16, 8], strides = [1, 1, 1]} : vector<18x18x8xf32> to vector<16x16x8xf32>
    %97 = vector.extract_strided_slice %91 {offsets = [1, 2, 0], sizes = [16, 16, 8], strides = [1, 1, 1]} : vector<18x18x8xf32> to vector<16x16x8xf32>
    %98 = vector.extract_strided_slice %91 {offsets = [2, 0, 0], sizes = [16, 16, 8], strides = [1, 1, 1]} : vector<18x18x8xf32> to vector<16x16x8xf32>
    %99 = vector.extract_strided_slice %91 {offsets = [2, 1, 0], sizes = [16, 16, 8], strides = [1, 1, 1]} : vector<18x18x8xf32> to vector<16x16x8xf32>
    %100 = vector.extract_strided_slice %91 {offsets = [2, 2, 0], sizes = [16, 16, 8], strides = [1, 1, 1]} : vector<18x18x8xf32> to vector<16x16x8xf32>
    %101 = tpu.concatenate %92, %93, %94, %95, %96, %97, %98, %99, %100 in 2 : vector<16x16x8xf32>, vector<16x16x8xf32>, vector<16x16x8xf32>, vector<16x16x8xf32>, vector<16x16x8xf32>, vector<16x16x8xf32>, vector<16x16x8xf32>, vector<16x16x8xf32>, vector<16x16x8xf32> -> vector<16x16x72xf32>
    %102 = vector.shape_cast %101 : vector<16x16x72xf32> to vector<256x72xf32>
    %cst_53 = arith.constant dense<0.000000e+00> : vector<256x8xf32>
    %103 = tpu.matmul %102, %84, %cst_53 {dimension_numbers = #tpu.dot_dimension_numbers<[1], [0], [0], [1], [0, 0, 1, 1], [], []>} : vector<256x72xf32>, vector<72x8xf32>, vector<256x8xf32> -> vector<256x8xf32>
    %104 = vector.broadcast %86 : vector<1x8xf32> to vector<256x8xf32>
    %105 = arith.addf %103, %104 : vector<256x8xf32>
    %cst_54 = arith.constant 0.000000e+00 : f32
    %106 = vector.broadcast %cst_54 : f32 to vector<256x8xf32>
    %107 = arith.cmpf oge, %105, %106 : vector<256x8xf32>
    %cst_55 = arith.constant 1.000000e-01 : f32
    %108 = vector.broadcast %cst_55 : f32 to vector<256x8xf32>
    %109 = arith.mulf %108, %105 : vector<256x8xf32>
    %110 = arith.select %107, %105, %109 : vector<256x8xi1>, vector<256x8xf32>
    %c1_56 = arith.constant 1 : index
    %c1_57 = arith.constant 1 : index
    %c0_58 = arith.constant 0 : index
    %c0_59 = arith.constant 0 : index
    %111 = vector.load %arg2[%c1_56, %c1_57, %c0_58, %c0_59] : memref<2x2x72x8xf32, #tpu.memory_space<vmem>>, vector<1x1x72x8xf32>
    %112 = vector.shape_cast %111 : vector<1x1x72x8xf32> to vector<72x8xf32>
    %c1_60 = arith.constant 1 : index
    %c1_61 = arith.constant 1 : index
    %c0_62 = arith.constant 0 : index
    %c0_63 = arith.constant 0 : index
    %113 = vector.load %arg3[%c1_60, %c1_61, %c0_62, %c0_63] : memref<2x2x1x8xf32, #tpu.memory_space<vmem>>, vector<1x1x1x8xf32>
    %114 = vector.shape_cast %113 : vector<1x1x1x8xf32> to vector<1x8xf32>
    %115 = vector.shape_cast %110 : vector<256x8xf32> to vector<16x16x8xf32>
    %cst_64 = arith.constant 0.000000e+00 : f32
    %116 = vector.broadcast %cst_64 : f32 to vector<1x16x8xf32>
    %cst_65 = arith.constant 0.000000e+00 : f32
    %117 = vector.broadcast %cst_65 : f32 to vector<18x1x8xf32>
    %118 = tpu.concatenate %116, %115, %116 in 0 : vector<1x16x8xf32>, vector<16x16x8xf32>, vector<1x16x8xf32> -> vector<18x16x8xf32>
    %119 = tpu.concatenate %117, %118, %117 in 1 : vector<18x1x8xf32>, vector<18x16x8xf32>, vector<18x1x8xf32> -> vector<18x18x8xf32>
    %120 = vector.extract_strided_slice %119 {offsets = [0, 0, 0], sizes = [16, 16, 8], strides = [1, 1, 1]} : vector<18x18x8xf32> to vector<16x16x8xf32>
    %121 = vector.extract_strided_slice %119 {offsets = [0, 1, 0], sizes = [16, 16, 8], strides = [1, 1, 1]} : vector<18x18x8xf32> to vector<16x16x8xf32>
    %122 = vector.extract_strided_slice %119 {offsets = [0, 2, 0], sizes = [16, 16, 8], strides = [1, 1, 1]} : vector<18x18x8xf32> to vector<16x16x8xf32>
    %123 = vector.extract_strided_slice %119 {offsets = [1, 0, 0], sizes = [16, 16, 8], strides = [1, 1, 1]} : vector<18x18x8xf32> to vector<16x16x8xf32>
    %124 = vector.extract_strided_slice %119 {offsets = [1, 1, 0], sizes = [16, 16, 8], strides = [1, 1, 1]} : vector<18x18x8xf32> to vector<16x16x8xf32>
    %125 = vector.extract_strided_slice %119 {offsets = [1, 2, 0], sizes = [16, 16, 8], strides = [1, 1, 1]} : vector<18x18x8xf32> to vector<16x16x8xf32>
    %126 = vector.extract_strided_slice %119 {offsets = [2, 0, 0], sizes = [16, 16, 8], strides = [1, 1, 1]} : vector<18x18x8xf32> to vector<16x16x8xf32>
    %127 = vector.extract_strided_slice %119 {offsets = [2, 1, 0], sizes = [16, 16, 8], strides = [1, 1, 1]} : vector<18x18x8xf32> to vector<16x16x8xf32>
    %128 = vector.extract_strided_slice %119 {offsets = [2, 2, 0], sizes = [16, 16, 8], strides = [1, 1, 1]} : vector<18x18x8xf32> to vector<16x16x8xf32>
    %129 = tpu.concatenate %120, %121, %122, %123, %124, %125, %126, %127, %128 in 2 : vector<16x16x8xf32>, vector<16x16x8xf32>, vector<16x16x8xf32>, vector<16x16x8xf32>, vector<16x16x8xf32>, vector<16x16x8xf32>, vector<16x16x8xf32>, vector<16x16x8xf32>, vector<16x16x8xf32> -> vector<16x16x72xf32>
    %130 = vector.shape_cast %129 : vector<16x16x72xf32> to vector<256x72xf32>
    %cst_66 = arith.constant dense<0.000000e+00> : vector<256x8xf32>
    %131 = tpu.matmul %130, %112, %cst_66 {dimension_numbers = #tpu.dot_dimension_numbers<[1], [0], [0], [1], [0, 0, 1, 1], [], []>} : vector<256x72xf32>, vector<72x8xf32>, vector<256x8xf32> -> vector<256x8xf32>
    %132 = vector.broadcast %114 : vector<1x8xf32> to vector<256x8xf32>
    %133 = arith.addf %131, %132 : vector<256x8xf32>
    %cst_67 = arith.constant dense<0.000000e+00> : vector<8xf32>
    %134 = vector.multi_reduction <add>, %133, %cst_67 [0] : vector<256x8xf32> to vector<8xf32>
    %135 = vector.shape_cast %134 : vector<8xf32> to vector<1x8xf32>
    %cst_68 = arith.constant 2.560000e+02 : f32
    %136 = vector.broadcast %cst_68 : f32 to vector<1x8xf32>
    %137 = arith.divf %135, %136 : vector<1x8xf32>
    %c1_69 = arith.constant 1 : index
    %c0_70 = arith.constant 0 : index
    %c0_71 = arith.constant 0 : index
    %138 = vector.load %arg4[%c1_69, %c0_70, %c0_71] : memref<2x8x4xf32, #tpu.memory_space<vmem>>, vector<1x8x4xf32>
    %139 = vector.shape_cast %138 : vector<1x8x4xf32> to vector<8x4xf32>
    %cst_72 = arith.constant dense<0.000000e+00> : vector<1x4xf32>
    %140 = tpu.matmul %137, %139, %cst_72 {dimension_numbers = #tpu.dot_dimension_numbers<[1], [0], [0], [1], [0, 0, 1, 1], [], []>} : vector<1x8xf32>, vector<8x4xf32>, vector<1x4xf32> -> vector<1x4xf32>
    %c1_73 = arith.constant 1 : index
    %c0_74 = arith.constant 0 : index
    %c0_75 = arith.constant 0 : index
    %141 = vector.load %arg5[%c1_73, %c0_74, %c0_75] : memref<2x1x4xf32, #tpu.memory_space<vmem>>, vector<1x1x4xf32>
    %142 = vector.shape_cast %141 : vector<1x1x4xf32> to vector<1x4xf32>
    %143 = arith.addf %140, %142 : vector<1x4xf32>
    %cst_76 = arith.constant 0.000000e+00 : f32
    %144 = vector.broadcast %cst_76 : f32 to vector<1x4xf32>
    %145 = arith.cmpf oge, %143, %144 : vector<1x4xf32>
    %cst_77 = arith.constant 1.000000e-01 : f32
    %146 = vector.broadcast %cst_77 : f32 to vector<1x4xf32>
    %147 = arith.mulf %146, %143 : vector<1x4xf32>
    %148 = arith.select %145, %143, %147 : vector<1x4xi1>, vector<1x4xf32>
    %c1_78 = arith.constant 1 : index
    %c0_79 = arith.constant 0 : index
    %c0_80 = arith.constant 0 : index
    %149 = vector.load %arg6[%c1_78, %c0_79, %c0_80] : memref<2x4x8xf32, #tpu.memory_space<vmem>>, vector<1x4x8xf32>
    %150 = vector.shape_cast %149 : vector<1x4x8xf32> to vector<4x8xf32>
    %cst_81 = arith.constant dense<0.000000e+00> : vector<1x8xf32>
    %151 = tpu.matmul %148, %150, %cst_81 {dimension_numbers = #tpu.dot_dimension_numbers<[1], [0], [0], [1], [0, 0, 1, 1], [], []>} : vector<1x4xf32>, vector<4x8xf32>, vector<1x8xf32> -> vector<1x8xf32>
    %c1_82 = arith.constant 1 : index
    %c0_83 = arith.constant 0 : index
    %c0_84 = arith.constant 0 : index
    %152 = vector.load %arg7[%c1_82, %c0_83, %c0_84] : memref<2x1x8xf32, #tpu.memory_space<vmem>>, vector<1x1x8xf32>
    %153 = vector.shape_cast %152 : vector<1x1x8xf32> to vector<1x8xf32>
    %154 = arith.addf %151, %153 : vector<1x8xf32>
    %155 = arith.negf %154 : vector<1x8xf32>
    %156 = math.exp %155 : vector<1x8xf32>
    %cst_85 = arith.constant 1.000000e+00 : f32
    %157 = vector.broadcast %cst_85 : f32 to vector<1x8xf32>
    %158 = arith.addf %157, %156 : vector<1x8xf32>
    %159 = arith.divf %157, %158 : vector<1x8xf32>
    %160 = vector.broadcast %159 : vector<1x8xf32> to vector<256x8xf32>
    %161 = arith.mulf %133, %160 : vector<256x8xf32>
    %162 = arith.addf %161, %82 : vector<256x8xf32>
    %c0_86 = arith.constant 0 : index
    %c0_87 = arith.constant 0 : index
    %163 = vector.load %arg8[%c0_86, %c0_87] : memref<72x8xf32, #tpu.memory_space<vmem>>, vector<72x8xf32>
    %c0_88 = arith.constant 0 : index
    %c0_89 = arith.constant 0 : index
    %164 = vector.load %arg9[%c0_88, %c0_89] : memref<1x8xf32, #tpu.memory_space<vmem>>, vector<1x8xf32>
    %165 = vector.shape_cast %162 : vector<256x8xf32> to vector<16x16x8xf32>
    %cst_90 = arith.constant 0.000000e+00 : f32
    %166 = vector.broadcast %cst_90 : f32 to vector<1x16x8xf32>
    %cst_91 = arith.constant 0.000000e+00 : f32
    %167 = vector.broadcast %cst_91 : f32 to vector<18x1x8xf32>
    %168 = tpu.concatenate %166, %165, %166 in 0 : vector<1x16x8xf32>, vector<16x16x8xf32>, vector<1x16x8xf32> -> vector<18x16x8xf32>
    %169 = tpu.concatenate %167, %168, %167 in 1 : vector<18x1x8xf32>, vector<18x16x8xf32>, vector<18x1x8xf32> -> vector<18x18x8xf32>
    %170 = vector.extract_strided_slice %169 {offsets = [0, 0, 0], sizes = [16, 16, 8], strides = [1, 1, 1]} : vector<18x18x8xf32> to vector<16x16x8xf32>
    %171 = vector.extract_strided_slice %169 {offsets = [0, 1, 0], sizes = [16, 16, 8], strides = [1, 1, 1]} : vector<18x18x8xf32> to vector<16x16x8xf32>
    %172 = vector.extract_strided_slice %169 {offsets = [0, 2, 0], sizes = [16, 16, 8], strides = [1, 1, 1]} : vector<18x18x8xf32> to vector<16x16x8xf32>
    %173 = vector.extract_strided_slice %169 {offsets = [1, 0, 0], sizes = [16, 16, 8], strides = [1, 1, 1]} : vector<18x18x8xf32> to vector<16x16x8xf32>
    %174 = vector.extract_strided_slice %169 {offsets = [1, 1, 0], sizes = [16, 16, 8], strides = [1, 1, 1]} : vector<18x18x8xf32> to vector<16x16x8xf32>
    %175 = vector.extract_strided_slice %169 {offsets = [1, 2, 0], sizes = [16, 16, 8], strides = [1, 1, 1]} : vector<18x18x8xf32> to vector<16x16x8xf32>
    %176 = vector.extract_strided_slice %169 {offsets = [2, 0, 0], sizes = [16, 16, 8], strides = [1, 1, 1]} : vector<18x18x8xf32> to vector<16x16x8xf32>
    %177 = vector.extract_strided_slice %169 {offsets = [2, 1, 0], sizes = [16, 16, 8], strides = [1, 1, 1]} : vector<18x18x8xf32> to vector<16x16x8xf32>
    %178 = vector.extract_strided_slice %169 {offsets = [2, 2, 0], sizes = [16, 16, 8], strides = [1, 1, 1]} : vector<18x18x8xf32> to vector<16x16x8xf32>
    %179 = tpu.concatenate %170, %171, %172, %173, %174, %175, %176, %177, %178 in 2 : vector<16x16x8xf32>, vector<16x16x8xf32>, vector<16x16x8xf32>, vector<16x16x8xf32>, vector<16x16x8xf32>, vector<16x16x8xf32>, vector<16x16x8xf32>, vector<16x16x8xf32>, vector<16x16x8xf32> -> vector<16x16x72xf32>
    %180 = vector.shape_cast %179 : vector<16x16x72xf32> to vector<256x72xf32>
    %cst_92 = arith.constant dense<0.000000e+00> : vector<256x8xf32>
    %181 = tpu.matmul %180, %163, %cst_92 {dimension_numbers = #tpu.dot_dimension_numbers<[1], [0], [0], [1], [0, 0, 1, 1], [], []>} : vector<256x72xf32>, vector<72x8xf32>, vector<256x8xf32> -> vector<256x8xf32>
    %182 = vector.broadcast %164 : vector<1x8xf32> to vector<256x8xf32>
    %183 = arith.addf %181, %182 : vector<256x8xf32>
    %184 = arith.addf %183, %2 : vector<256x8xf32>
    %185 = tpu.transpose %184, [1, 0] : vector<256x8xf32> -> vector<8x256xf32>
    %c0_93 = arith.constant 0 : index
    %c0_94 = arith.constant 0 : index
    %c0_95 = arith.constant 0 : index
    %186 = vector.load %arg10[%c0_93, %c0_94, %c0_95] : memref<1x8x256xf32, #tpu.memory_space<vmem>>, vector<1x8x256xf32>
    %187 = vector.shape_cast %186 : vector<1x8x256xf32> to vector<8x256xf32>
    %188 = vector.shape_cast %185 : vector<8x256xf32> to vector<1x8x256xf32>
    tpu.vector_store %arg10[%c0_93, %c0_94, %c0_95], %188 {strides = array<i32>} : memref<1x8x256xf32, #tpu.memory_space<vmem>>, vector<1x8x256xf32>,
    return
  }
  func.func @transform_0(%arg0: i32) -> (i32, i32, i32) {
    %c0_i32 = arith.constant 0 : i32
    %c0_i32_0 = arith.constant 0 : i32
    %c0_i32_1 = arith.constant 0 : i32
    return %arg0, %c0_i32, %c0_i32_0 : i32, i32, i32
  }
  func.func @transform_1(%arg0: i32) -> (i32, i32, i32, i32) {
    %c0_i32 = arith.constant 0 : i32
    %c0_i32_0 = arith.constant 0 : i32
    %c0_i32_1 = arith.constant 0 : i32
    %c0_i32_2 = arith.constant 0 : i32
    %c0_i32_3 = arith.constant 0 : i32
    return %c0_i32, %c0_i32_0, %c0_i32_1, %c0_i32_2 : i32, i32, i32, i32
  }
  func.func @transform_2(%arg0: i32) -> (i32, i32, i32, i32) {
    %c0_i32 = arith.constant 0 : i32
    %c0_i32_0 = arith.constant 0 : i32
    %c0_i32_1 = arith.constant 0 : i32
    %c0_i32_2 = arith.constant 0 : i32
    %c0_i32_3 = arith.constant 0 : i32
    return %c0_i32, %c0_i32_0, %c0_i32_1, %c0_i32_2 : i32, i32, i32, i32
  }
  func.func @transform_3(%arg0: i32) -> (i32, i32, i32) {
    %c0_i32 = arith.constant 0 : i32
    %c0_i32_0 = arith.constant 0 : i32
    %c0_i32_1 = arith.constant 0 : i32
    %c0_i32_2 = arith.constant 0 : i32
    return %c0_i32, %c0_i32_0, %c0_i32_1 : i32, i32, i32
  }
  func.func @transform_4(%arg0: i32) -> (i32, i32, i32) {
    %c0_i32 = arith.constant 0 : i32
    %c0_i32_0 = arith.constant 0 : i32
    %c0_i32_1 = arith.constant 0 : i32
    %c0_i32_2 = arith.constant 0 : i32
    return %c0_i32, %c0_i32_0, %c0_i32_1 : i32, i32, i32
  }
  func.func @transform_5(%arg0: i32) -> (i32, i32, i32) {
    %c0_i32 = arith.constant 0 : i32
    %c0_i32_0 = arith.constant 0 : i32
    %c0_i32_1 = arith.constant 0 : i32
    %c0_i32_2 = arith.constant 0 : i32
    return %c0_i32, %c0_i32_0, %c0_i32_1 : i32, i32, i32
  }
  func.func @transform_6(%arg0: i32) -> (i32, i32, i32) {
    %c0_i32 = arith.constant 0 : i32
    %c0_i32_0 = arith.constant 0 : i32
    %c0_i32_1 = arith.constant 0 : i32
    %c0_i32_2 = arith.constant 0 : i32
    return %c0_i32, %c0_i32_0, %c0_i32_1 : i32, i32, i32
  }
  func.func @transform_7(%arg0: i32) -> (i32, i32) {
    %c0_i32 = arith.constant 0 : i32
    %c0_i32_0 = arith.constant 0 : i32
    %c0_i32_1 = arith.constant 0 : i32
    return %c0_i32, %c0_i32_0 : i32, i32
  }
  func.func @transform_8(%arg0: i32) -> (i32, i32) {
    %c0_i32 = arith.constant 0 : i32
    %c0_i32_0 = arith.constant 0 : i32
    %c0_i32_1 = arith.constant 0 : i32
    return %c0_i32, %c0_i32_0 : i32, i32
  }
  func.func @transform_9(%arg0: i32) -> (i32, i32, i32) {
    %c0_i32 = arith.constant 0 : i32
    %c0_i32_0 = arith.constant 0 : i32
    %c0_i32_1 = arith.constant 0 : i32
    return %arg0, %c0_i32, %c0_i32_0 : i32, i32, i32
  }
}

</mosaic_0001>

<llo_original>
// kernel: residual_group_forward.1
$region0: #{residual_group_forward.1}
  #allocation0 [shape = 'u32[]', space=smem, size = 0x4, offset = 0x4, fixed_abs, tag = 'smem constant byte address 0x4 - core index']
  #allocation1 [shape = 'u32[144,128]{1,0:T(1,128)}', space=vmem, size = 0x12000, scoped, tag = 'internal scratch']
  %s0 = inlined_call_operand.vmem [shape: f32[2,8,256], index: 0, kind: input, shape index: {}]
  %s1 = inlined_call_operand.vmem [shape: f32[2,2,72,8], index: 1, kind: input, shape index: {}]
  %s2 = inlined_call_operand.vmem [shape: f32[2,2,1,8], index: 2, kind: input, shape index: {}]
  %s3 = inlined_call_operand.vmem [shape: f32[2,8,4], index: 3, kind: input, shape index: {}]
  %s4 = inlined_call_operand.vmem [shape: f32[2,1,4], index: 4, kind: input, shape index: {}]
  %s5 = inlined_call_operand.vmem [shape: f32[2,4,8], index: 5, kind: input, shape index: {}]
  %s6 = inlined_call_operand.vmem [shape: f32[2,1,8], index: 6, kind: input, shape index: {}]
  %s7 = inlined_call_operand.vmem [shape: f32[72,8], index: 7, kind: input, shape index: {}]
  %s8 = inlined_call_operand.vmem [shape: f32[1,8], index: 8, kind: input, shape index: {}]
  %s9 = inlined_call_operand.vmem [shape: f32[2,8,256], index: 9, kind: output, shape index: {}]
  %s10 = sld [smem:[#allocation0]]
  $region69: #{residual_group_forward.1} parent=0
    _
  %s12 = ssub.s32 1, %s10
  %s13 = scalar_select 0, %s12, %s10
  loop: start=0, step=1, limit=4
  $region2: #{residual_group_forward.1} parent=0 // loop_pre_header
    _
  $region3: #{residual_group_forward.1} parent=0 // loop_header
    %s15 = sphi 0, %s19
    %p16 = scmp.ge.s32.totalorder %s15, 4
    %s25 = sphi 0, %s27
    %s28 = sphi 0, %s25
    %s29 = sphi 0, %s28
    %s45 = sphi 0, %s29
    %s49 = sphi 0, %s49
    %s51 = sphi 0, %s49
    %s52 = sphi 0, %s51
    %s66 = sphi 0, %s52
    %s70 = sphi 0, %s70
    %s72 = sphi 0, %s70
    %s73 = sphi 0, %s72
    %s87 = sphi 0, %s73
    %s91 = sphi 0, %s91
    %s93 = sphi 0, %s91
    %s94 = sphi 0, %s93
    %s108 = sphi 0, %s94
    %s112 = sphi 0, %s112
    %s114 = sphi 0, %s112
    %s115 = sphi 0, %s114
    %s129 = sphi 0, %s115
    %s133 = sphi 0, %s133
    %s135 = sphi 0, %s133
    %s136 = sphi 0, %s135
    %s150 = sphi 0, %s136
    %s154 = sphi 0, %s154
    %s156 = sphi 0, %s154
    %s157 = sphi 0, %s156
    %s171 = sphi 0, %s157
    %s175 = sphi 0, %s175
    %s177 = sphi 0, %s175
    %s178 = sphi 0, %s177
    %s192 = sphi 0, %s178
    %s196 = sphi 0, %s196
    %s198 = sphi 0, %s196
    %s199 = sphi 0, %s198
    %s213 = sphi 0, %s199
    %s219 = sphi 0, %s221
    %s222 = sphi 0, %s219
    %s223 = sphi 0, %s222
    %s239 = sphi 0, %s223
  $region4: #{residual_group_forward.1} parent=0 // loop_header_branch
    %18 = sbr.rel (%p16) target = $region8
  $region5: #{residual_group_forward.1} parent=0 // loop_body
    %s20 = ssub.s32 %s15, 1
    %s21 = ssub.s32 %s15, 2
    %s22 = sadd.s32 %s15, 1
    %s23 = ssub.s32 %s15, %s22
    %p24 = scmp.eq.s32.totalorder %s23, 0
    %s26 = sadd.s32 %s25, 1
    %s27 = scalar_select %p24, %s25, %s26
    %p30 = pneg %p24
    %p31 = scmp.eq.s32.totalorder %s15, 1
    %p32 = por %p30, %p31
    %p33 = scmp.ne.s32.totalorder %s25, %s28
    %p34 = scmp.eq.s32.totalorder %s15, 0
    %p35 = por %p33, %p34
    %p36 = scmp.ne.s32.totalorder %s25, %s28
    %p37 = scmp.eq.s32.totalorder %s20, 1
    %p38 = por %p36, %p37
    %p39 = scmp.ne.s32.totalorder %s28, %s29
    %p40 = scmp.eq.s32.totalorder %s20, 0
    %p41 = por %p39, %p40
    %p42 = scmp.ne.s32.totalorder %s28, %s29
    %p43 = scmp.eq.s32.totalorder %s21, 1
    %p44 = por %p42, %p43
    %p46 = scmp.ne.s32.totalorder %s29, %s45
    %p47 = scmp.eq.s32.totalorder %s21, 0
    %p48 = por %p46, %p47
    %s50 = sadd.s32 %s49, 1
    %p53 = scmp.eq.s32.totalorder %s15, 1
    %p54 = scmp.ne.s32.totalorder %s49, %s51
    %p55 = scmp.eq.s32.totalorder %s15, 0
    %p56 = por %p54, %p55
    %p57 = scmp.ne.s32.totalorder %s49, %s51
    %p58 = scmp.eq.s32.totalorder %s20, 1
    %p59 = por %p57, %p58
    %p60 = scmp.ne.s32.totalorder %s51, %s52
    %p61 = scmp.eq.s32.totalorder %s20, 0
    %p62 = por %p60, %p61
    %p63 = scmp.ne.s32.totalorder %s51, %s52
    %p64 = scmp.eq.s32.totalorder %s21, 1
    %p65 = por %p63, %p64
    %p67 = scmp.ne.s32.totalorder %s52, %s66
    %p68 = scmp.eq.s32.totalorder %s21, 0
    %p69 = por %p67, %p68
    %s71 = sadd.s32 %s70, 1
    %p74 = scmp.eq.s32.totalorder %s15, 1
    %p75 = scmp.ne.s32.totalorder %s70, %s72
    %p76 = scmp.eq.s32.totalorder %s15, 0
    %p77 = por %p75, %p76
    %p78 = scmp.ne.s32.totalorder %s70, %s72
    %p79 = scmp.eq.s32.totalorder %s20, 1
    %p80 = por %p78, %p79
    %p81 = scmp.ne.s32.totalorder %s72, %s73
    %p82 = scmp.eq.s32.totalorder %s20, 0
    %p83 = por %p81, %p82
    %p84 = scmp.ne.s32.totalorder %s72, %s73
    %p85 = scmp.eq.s32.totalorder %s21, 1
    %p86 = por %p84, %p85
    %p88 = scmp.ne.s32.totalorder %s73, %s87
    %p89 = scmp.eq.s32.totalorder %s21, 0
    %p90 = por %p88, %p89
    %s92 = sadd.s32 %s91, 1
    %p95 = scmp.eq.s32.totalorder %s15, 1
    %p96 = scmp.ne.s32.totalorder %s91, %s93
    %p97 = scmp.eq.s32.totalorder %s15, 0
    %p98 = por %p96, %p97
    %p99 = scmp.ne.s32.totalorder %s91, %s93
    %p100 = scmp.eq.s32.totalorder %s20, 1
    %p101 = por %p99, %p100
    %p102 = scmp.ne.s32.totalorder %s93, %s94
    %p103 = scmp.eq.s32.totalorder %s20, 0
    %p104 = por %p102, %p103
    %p105 = scmp.ne.s32.totalorder %s93, %s94
    %p106 = scmp.eq.s32.totalorder %s21, 1
    %p107 = por %p105, %p106
    %p109 = scmp.ne.s32.totalorder %s94, %s108
    %p110 = scmp.eq.s32.totalorder %s21, 0
    %p111 = por %p109, %p110
    %s113 = sadd.s32 %s112, 1
    %p116 = scmp.eq.s32.totalorder %s15, 1
    %p117 = scmp.ne.s32.totalorder %s112, %s114
    %p118 = scmp.eq.s32.totalorder %s15, 0
    %p119 = por %p117, %p118
    %p120 = scmp.ne.s32.totalorder %s112, %s114
    %p121 = scmp.eq.s32.totalorder %s20, 1
    %p122 = por %p120, %p121
    %p123 = scmp.ne.s32.totalorder %s114, %s115
    %p124 = scmp.eq.s32.totalorder %s20, 0
    %p125 = por %p123, %p124
    %p126 = scmp.ne.s32.totalorder %s114, %s115
    %p127 = scmp.eq.s32.totalorder %s21, 1
    %p128 = por %p126, %p127
    %p130 = scmp.ne.s32.totalorder %s115, %s129
    %p131 = scmp.eq.s32.totalorder %s21, 0
    %p132 = por %p130, %p131
    %s134 = sadd.s32 %s133, 1
    %p137 = scmp.eq.s32.totalorder %s15, 1
    %p138 = scmp.ne.s32.totalorder %s133, %s135
    %p139 = scmp.eq.s32.totalorder %s15, 0
    %p140 = por %p138, %p139
    %p141 = scmp.ne.s32.totalorder %s133, %s135
    %p142 = scmp.eq.s32.totalorder %s20, 1
    %p143 = por %p141, %p142
    %p144 = scmp.ne.s32.totalorder %s135, %s136
    %p145 = scmp.eq.s32.totalorder %s20, 0
    %p146 = por %p144, %p145
    %p147 = scmp.ne.s32.totalorder %s135, %s136
    %p148 = scmp.eq.s32.totalorder %s21, 1
    %p149 = por %p147, %p148
    %p151 = scmp.ne.s32.totalorder %s136, %s150
    %p152 = scmp.eq.s32.totalorder %s21, 0
    %p153 = por %p151, %p152
    %s155 = sadd.s32 %s154, 1
    %p158 = scmp.eq.s32.totalorder %s15, 1
    %p159 = scmp.ne.s32.totalorder %s154, %s156
    %p160 = scmp.eq.s32.totalorder %s15, 0
    %p161 = por %p159, %p160
    %p162 = scmp.ne.s32.totalorder %s154, %s156
    %p163 = scmp.eq.s32.totalorder %s20, 1
    %p164 = por %p162, %p163
    %p165 = scmp.ne.s32.totalorder %s156, %s157
    %p166 = scmp.eq.s32.totalorder %s20, 0
    %p167 = por %p165, %p166
    %p168 = scmp.ne.s32.totalorder %s156, %s157
    %p169 = scmp.eq.s32.totalorder %s21, 1
    %p170 = por %p168, %p169
    %p172 = scmp.ne.s32.totalorder %s157, %s171
    %p173 = scmp.eq.s32.totalorder %s21, 0
    %p174 = por %p172, %p173
    %s176 = sadd.s32 %s175, 1
    %p179 = scmp.eq.s32.totalorder %s15, 1
    %p180 = scmp.ne.s32.totalorder %s175, %s177
    %p181 = scmp.eq.s32.totalorder %s15, 0
    %p182 = por %p180, %p181
    %p183 = scmp.ne.s32.totalorder %s175, %s177
    %p184 = scmp.eq.s32.totalorder %s20, 1
    %p185 = por %p183, %p184
    %p186 = scmp.ne.s32.totalorder %s177, %s178
    %p187 = scmp.eq.s32.totalorder %s20, 0
    %p188 = por %p186, %p187
    %p189 = scmp.ne.s32.totalorder %s177, %s178
    %p190 = scmp.eq.s32.totalorder %s21, 1
    %p191 = por %p189, %p190
    %p193 = scmp.ne.s32.totalorder %s178, %s192
    %p194 = scmp.eq.s32.totalorder %s21, 0
    %p195 = por %p193, %p194
    %s197 = sadd.s32 %s196, 1
    %p200 = scmp.eq.s32.totalorder %s15, 1
    %p201 = scmp.ne.s32.totalorder %s196, %s198
    %p202 = scmp.eq.s32.totalorder %s15, 0
    %p203 = por %p201, %p202
    %p204 = scmp.ne.s32.totalorder %s196, %s198
    %p205 = scmp.eq.s32.totalorder %s20, 1
    %p206 = por %p204, %p205
    %p207 = scmp.ne.s32.totalorder %s198, %s199
    %p208 = scmp.eq.s32.totalorder %s20, 0
    %p209 = por %p207, %p208
    %p210 = scmp.ne.s32.totalorder %s198, %s199
    %p211 = scmp.eq.s32.totalorder %s21, 1
    %p212 = por %p210, %p211
    %p214 = scmp.ne.s32.totalorder %s199, %s213
    %p215 = scmp.eq.s32.totalorder %s21, 0
    %p216 = por %p214, %p215
    %s217 = ssub.s32 %s15, %s22
    %p218 = scmp.eq.s32.totalorder %s217, 0
    %s220 = sadd.s32 %s219, 1
    %s221 = scalar_select %p218, %s219, %s220
    %p224 = pneg %p218
    %p225 = scmp.eq.s32.totalorder %s15, 1
    %p226 = por %p224, %p225
    %p227 = scmp.ne.s32.totalorder %s219, %s222
    %p228 = scmp.eq.s32.totalorder %s15, 0
    %p229 = por %p227, %p228
    %p230 = scmp.ne.s32.totalorder %s219, %s222
    %p231 = scmp.eq.s32.totalorder %s20, 1
    %p232 = por %p230, %p231
    %p233 = scmp.ne.s32.totalorder %s222, %s223
    %p234 = scmp.eq.s32.totalorder %s20, 0
    %p235 = por %p233, %p234
    %p236 = scmp.ne.s32.totalorder %s222, %s223
    %p237 = scmp.eq.s32.totalorder %s21, 1
    %p238 = por %p236, %p237
    %p240 = scmp.ne.s32.totalorder %s223, %s239
    %p241 = scmp.eq.s32.totalorder %s21, 0
    %p242 = por %p240, %p241
    %p243 = scmp.le.s32.totalorder 1, %s15
    %p244 = scmp.lt.s32.totalorder %s15, 3
    %p245 = pnand %p243, %p244
    %p246 = pneg %p245
    // Predicated region
    $region9: #{residual_group_forward.1} parent=5 // pred_check
      _
    $region10: #{residual_group_forward.1} parent=5 // pred_check_branch
      %248 = sbr.rel (%p245) target = $region12
    $region11: #{residual_group_forward.1} parent=5 // pred_region
      %s249 = ssub.s32 %s15, 1
      // Predicated region
      $region13: #{residual_group_forward.1} parent=11 // pred_check
        %p250 = pneg %p62
      $region14: #{residual_group_forward.1} parent=11 // pred_check_branch
        %252 = sbr.rel (%p250) target = $region16
      $region15: #{residual_group_forward.1} parent=11 // pred_region
        _
      $region16: #{residual_group_forward.1} parent=11 // pred_fallthru
        _
      // Predicated region
      $region17: #{residual_group_forward.1} parent=11 // pred_check
        %p253 = pneg %p83
      $region18: #{residual_group_forward.1} parent=11 // pred_check_branch
        %255 = sbr.rel (%p253) target = $region20
      $region19: #{residual_group_forward.1} parent=11 // pred_region
        _
      $region20: #{residual_group_forward.1} parent=11 // pred_fallthru
        _
      // Predicated region
      $region21: #{residual_group_forward.1} parent=11 // pred_check
        %p256 = pneg %p104
      $region22: #{residual_group_forward.1} parent=11 // pred_check_branch
        %258 = sbr.rel (%p256) target = $region24
      $region23: #{residual_group_forward.1} parent=11 // pred_region
        _
      $region24: #{residual_group_forward.1} parent=11 // pred_fallthru
        _
      // Predicated region
      $region25: #{residual_group_forward.1} parent=11 // pred_check
        %p259 = pneg %p125
      $region26: #{residual_group_forward.1} parent=11 // pred_check_branch
        %261 = sbr.rel (%p259) target = $region28
      $region27: #{residual_group_forward.1} parent=11 // pred_region
        _
      $region28: #{residual_group_forward.1} parent=11 // pred_fallthru
        _
      // Predicated region
      $region29: #{residual_group_forward.1} parent=11 // pred_check
        %p262 = pneg %p146
      $region30: #{residual_group_forward.1} parent=11 // pred_check_branch
        %264 = sbr.rel (%p262) target = $region32
      $region31: #{residual_group_forward.1} parent=11 // pred_region
        _
      $region32: #{residual_group_forward.1} parent=11 // pred_fallthru
        _
      // Predicated region
      $region33: #{residual_group_forward.1} parent=11 // pred_check
        %p265 = pneg %p167
      $region34: #{residual_group_forward.1} parent=11 // pred_check_branch
        %267 = sbr.rel (%p265) target = $region36
      $region35: #{residual_group_forward.1} parent=11 // pred_region
        _
      $region36: #{residual_group_forward.1} parent=11 // pred_fallthru
        _
      // Predicated region
      $region37: #{residual_group_forward.1} parent=11 // pred_check
        %p268 = pneg %p188
      $region38: #{residual_group_forward.1} parent=11 // pred_check_branch
        %270 = sbr.rel (%p268) target = $region40
      $region39: #{residual_group_forward.1} parent=11 // pred_region
        _
      $region40: #{residual_group_forward.1} parent=11 // pred_fallthru
        _
      // Predicated region
      $region41: #{residual_group_forward.1} parent=11 // pred_check
        %p271 = pneg %p209
      $region42: #{residual_group_forward.1} parent=11 // pred_check_branch
        %273 = sbr.rel (%p271) target = $region44
      $region43: #{residual_group_forward.1} parent=11 // pred_region
        _
      $region44: #{residual_group_forward.1} parent=11 // pred_fallthru
        _
    $region12: #{residual_group_forward.1} parent=5 // pred_fallthru
      _
    %p274 = scmp.lt.s32.totalorder %s15, 2
    // Predicated region
    $region45: #{residual_group_forward.1} parent=5 // pred_check
      %p275 = pneg %p274
    $region46: #{residual_group_forward.1} parent=5 // pred_check_branch
      %277 = sbr.rel (%p275) target = $region48
    $region47: #{residual_group_forward.1} parent=5 // pred_region
      // Predicated region
      $region49: #{residual_group_forward.1} parent=47 // pred_check
        %p278 = pneg %p35
      $region50: #{residual_group_forward.1} parent=47 // pred_check_branch
        %280 = sbr.rel (%p278) target = $region52
      $region51: #{residual_group_forward.1} parent=47 // pred_region
        %p281 = scmp.lt.s32.totalorder %s15, 1
        %s282 = scalar_select %p281, %s15, 1
        %s283 = smul.addr %s282, 2
        %s284 = smul.addr %s283, 8
        %s285 = scalar_lea.vmem %s0, %s284
      $region52: #{residual_group_forward.1} parent=47 // pred_fallthru
        _
    $region48: #{residual_group_forward.1} parent=5 // pred_fallthru
      _
    %p286 = scmp.le.s32.totalorder 1, %s15
    %p287 = scmp.lt.s32.totalorder %s15, 3
    %p288 = pnand %p286, %p287
    %p289 = pneg %p288
    // Predicated region
    $region53: #{residual_group_forward.1} parent=5 // pred_check
      _
    $region54: #{residual_group_forward.1} parent=5 // pred_check_branch
      %291 = sbr.rel (%p288) target = $region56
    $region55: #{residual_group_forward.1} parent=5 // pred_region
      %s292 = ssub.s32 %s15, 1
      %p293 = scmp.lt.s32.totalorder %s20, 1
      %s294 = scalar_select %p293, %s20, 1
      %s295 = smul.addr %s294, 2
      %s296 = smul.addr %s295, 8
      %s297 = scalar_lea.vmem %s0, %s296
      %p298 = pneg %p41
      %p299 = pneg %p38
      %p300 = pneg %p62
      %p301 = pneg %p59
      %p302 = pneg %p83
      %p303 = pneg %p80
      %p304 = pneg %p104
      %p305 = pneg %p101
      %p306 = pneg %p125
      %p307 = pneg %p122
      %p308 = pneg %p146
      %p309 = pneg %p143
      %p310 = pneg %p167
      %p311 = pneg %p164
      %p312 = pneg %p188
      %p313 = pneg %p185
      %p314 = pneg %p209
      %p315 = pneg %p206
      %p316 = pneg %p235
      %p317 = pneg %p232
      %p318 = scmp.lt.s32.totalorder %s20, 1
      %s319 = scalar_select %p318, %s20, 1
      %s320 = smul.addr %s319, 2
      %s321 = smul.addr %s320, 8
      %s322 = scalar_lea.vmem %s9, %s321
      %p323 = scmp.lt.s32.totalorder %s20, 1
      %s324 = scalar_select %p323, %s20, 1
      %s325 = smul.addr %s324, 2
      %s326 = smul.addr %s325, 8
      %s327 = scalar_lea.vmem %s0, %s326
      %p328 = scmp.lt.s32.totalorder %s20, 1
      %s329 = scalar_select %p328, %s20, 1
      %s330 = smul.addr %s329, 2
      %s331 = smul.addr %s330, 8
      %s332 = scalar_lea.vmem %s9, %s331
      %v333 = vld [vmem:[%s327] sm:$0xff]
      %v334 = vld [vmem:[%s327 + $0x8] sm:$0xff]
      %335 = vxpose.xlu0.b32.start [1/16] %v333, 128
      %336 = vxpose.xlu0.b32.cont [2/16] 0.0, 128
      %337 = vxpose.xlu0.b32.cont [3/16] 0.0, 128
      %338 = vxpose.xlu0.b32.cont [4/16] 0.0, 128
      %339 = vxpose.xlu0.b32.cont [5/16] 0.0, 128
      %340 = vxpose.xlu0.b32.cont [6/16] 0.0, 128
      %341 = vxpose.xlu0.b32.cont [7/16] 0.0, 128
      %342 = vxpose.xlu0.b32.cont [8/16] 0.0, 128
      %343 = vxpose.xlu0.b32.cont [9/16] 0.0, 128
      %344 = vxpose.xlu0.b32.cont [10/16] 0.0, 128
      %345 = vxpose.xlu0.b32.cont [11/16] 0.0, 128
      %346 = vxpose.xlu0.b32.cont [12/16] 0.0, 128
      %347 = vxpose.xlu0.b32.cont [13/16] 0.0, 128
      %348 = vxpose.xlu0.b32.cont [14/16] 0.0, 128
      %349 = vxpose.xlu0.b32.cont [15/16] 0.0, 128
      %350 = vxpose.xlu0.b32.end [16/16] 0.0, 128
      %v351 = vpop.trf.xlu0
      %v352 = vpop.trf.xlu0
      %v353 = vpop.trf.xlu0
      %v354 = vpop.trf.xlu0
      %v355 = vpop.trf.xlu0
      %v356 = vpop.trf.xlu0
      %v357 = vpop.trf.xlu0
      %v358 = vpop.trf.xlu0
      %v359 = vpop.trf.xlu0
      %v360 = vpop.trf.xlu0
      %v361 = vpop.trf.xlu0
      %v362 = vpop.trf.xlu0
      %v363 = vpop.trf.xlu0
      %v364 = vpop.trf.xlu0
      %v365 = vpop.trf.xlu0
      %v366 = vpop.trf.xlu0
      %367 = vxpose.xlu0.b32.start [1/16] %v334, 128
      %368 = vxpose.xlu0.b32.cont [2/16] 0.0, 128
      %369 = vxpose.xlu0.b32.cont [3/16] 0.0, 128
      %370 = vxpose.xlu0.b32.cont [4/16] 0.0, 128
      %371 = vxpose.xlu0.b32.cont [5/16] 0.0, 128
      %372 = vxpose.xlu0.b32.cont [6/16] 0.0, 128
      %373 = vxpose.xlu0.b32.cont [7/16] 0.0, 128
      %374 = vxpose.xlu0.b32.cont [8/16] 0.0, 128
      %375 = vxpose.xlu0.b32.cont [9/16] 0.0, 128
      %376 = vxpose.xlu0.b32.cont [10/16] 0.0, 128
      %377 = vxpose.xlu0.b32.cont [11/16] 0.0, 128
      %378 = vxpose.xlu0.b32.cont [12/16] 0.0, 128
      %379 = vxpose.xlu0.b32.cont [13/16] 0.0, 128
      %380 = vxpose.xlu0.b32.cont [14/16] 0.0, 128
      %381 = vxpose.xlu0.b32.cont [15/16] 0.0, 128
      %382 = vxpose.xlu0.b32.end [16/16] 0.0, 128
      %v383 = vpop.trf.xlu0
      %v384 = vpop.trf.xlu0
      %v385 = vpop.trf.xlu0
      %v386 = vpop.trf.xlu0
      %v387 = vpop.trf.xlu0
      %v388 = vpop.trf.xlu0
      %v389 = vpop.trf.xlu0
      %v390 = vpop.trf.xlu0
      %v391 = vpop.trf.xlu0
      %v392 = vpop.trf.xlu0
      %v393 = vpop.trf.xlu0
      %v394 = vpop.trf.xlu0
      %v395 = vpop.trf.xlu0
      %v396 = vpop.trf.xlu0
      %v397 = vpop.trf.xlu0
      %v398 = vpop.trf.xlu0
      %v399 = vld [vmem:[%s1] sm:$0xff]
      %v400 = vld [vmem:[%s1 + $0x8] sm:$0xff]
      %v401 = vld [vmem:[%s1 + $0x10] sm:$0xff]
      %v402 = vld [vmem:[%s1 + $0x18] sm:$0xff]
      %v403 = vld [vmem:[%s1 + $0x20] sm:$0xff]
      %v404 = vld [vmem:[%s1 + $0x28] sm:$0xff]
      %v405 = vld [vmem:[%s1 + $0x30] sm:$0xff]
      %v406 = vld [vmem:[%s1 + $0x38] sm:$0xff]
      %v407 = vld [vmem:[%s1 + $0x40] sm:$0xff]
      %v408 = vld [vmem:[%s2] sm:$0x1]
      %vm442 = vcmask 1040384
      %v443 = vrot.slane 0.0, 7
      %v444 = vsel %vm442, %v443, %v443
      %v445 = vrot.slane %v351, 7
      %v446 = vrot.slane %v352, 7
      %v447 = vsel %vm442, %v445, %v446
      %v448 = vrot.slane %v353, 7
      %v449 = vrot.slane %v354, 7
      %v450 = vsel %vm442, %v448, %v449
      %v451 = vrot.slane %v355, 7
      %v452 = vrot.slane %v356, 7
      %v453 = vsel %vm442, %v451, %v452
      %v454 = vrot.slane %v357, 7
      %v455 = vrot.slane %v358, 7
      %v456 = vsel %vm442, %v454, %v455
      %v457 = vrot.slane %v359, 7
      %v458 = vrot.slane %v360, 7
      %v459 = vsel %vm442, %v457, %v458
      %v460 = vrot.slane %v361, 7
      %v461 = vrot.slane %v362, 7
      %v462 = vsel %vm442, %v460, %v461
      %v463 = vrot.slane %v363, 7
      %v464 = vrot.slane %v364, 7
      %v465 = vsel %vm442, %v463, %v464
      %v466 = vrot.slane %v365, 7
      %v467 = vrot.slane %v366, 7
      %v468 = vsel %vm442, %v466, %v467
      %v469 = vrot.slane %v383, 7
      %v470 = vrot.slane %v384, 7
      %v471 = vsel %vm442, %v469, %v470
      %v472 = vrot.slane %v385, 7
      %v473 = vrot.slane %v386, 7
      %v474 = vsel %vm442, %v472, %v473
      %v475 = vrot.slane %v387, 7
      %v476 = vrot.slane %v388, 7
      %v477 = vsel %vm442, %v475, %v476
      %v478 = vrot.slane %v389, 7
      %v479 = vrot.slane %v390, 7
      %v480 = vsel %vm442, %v478, %v479
      %v481 = vrot.slane %v391, 7
      %v482 = vrot.slane %v392, 7
      %v483 = vsel %vm442, %v481, %v482
      %v484 = vrot.slane %v393, 7
      %v485 = vrot.slane %v394, 7
      %v486 = vsel %vm442, %v484, %v485
      %v487 = vrot.slane %v395, 7
      %v488 = vrot.slane %v396, 7
      %v489 = vsel %vm442, %v487, %v488
      %v490 = vrot.slane %v397, 7
      %v491 = vrot.slane %v398, 7
      %v492 = vsel %vm442, %v490, %v491
      %v542 = vsel %vm442, 0.0, %v443
      %v543 = vsel %vm442, 0.0, %v445
      %v544 = vsel %vm442, 0.0, %v448
      %v545 = vsel %vm442, 0.0, %v451
      %v546 = vsel %vm442, 0.0, %v454
      %v547 = vsel %vm442, 0.0, %v457
      %v548 = vsel %vm442, 0.0, %v460
      %v549 = vsel %vm442, 0.0, %v463
      %v550 = vsel %vm442, 0.0, %v466
      %v551 = vsel %vm442, 0.0, %v469
      %v552 = vsel %vm442, 0.0, %v472
      %v553 = vsel %vm442, 0.0, %v475
      %v554 = vsel %vm442, 0.0, %v478
      %v555 = vsel %vm442, 0.0, %v481
      %v556 = vsel %vm442, 0.0, %v484
      %v557 = vsel %vm442, 0.0, %v487
      %v558 = vsel %vm442, 0.0, %v490
      %v559 = vsel %vm442, %v443, 0.0
      %v560 = vsel %vm442, %v446, 0.0
      %v561 = vsel %vm442, %v449, 0.0
      %v562 = vsel %vm442, %v452, 0.0
      %v563 = vsel %vm442, %v455, 0.0
      %v564 = vsel %vm442, %v458, 0.0
      %v565 = vsel %vm442, %v461, 0.0
      %v566 = vsel %vm442, %v464, 0.0
      %v567 = vsel %vm442, %v467, 0.0
      %v568 = vsel %vm442, %v470, 0.0
      %v569 = vsel %vm442, %v473, 0.0
      %v570 = vsel %vm442, %v476, 0.0
      %v571 = vsel %vm442, %v479, 0.0
      %v572 = vsel %vm442, %v482, 0.0
      %v573 = vsel %vm442, %v485, 0.0
      %v574 = vsel %vm442, %v488, 0.0
      %v575 = vsel %vm442, %v491, 0.0
      %vm608 = vcmask 1046528
      %v609 = vrot.slane %v542, 1
      %v610 = vrot.slane %v444, 1
      %v611 = vsel %vm608, %v609, %v610
      %v612 = vrot.slane %v559, 1
      %v613 = vsel %vm608, %v610, %v612
      %v614 = vrot.slane %v543, 1
      %v615 = vrot.slane %v447, 1
      %v616 = vsel %vm608, %v614, %v615
      %v617 = vrot.slane %v560, 1
      %v618 = vsel %vm608, %v615, %v617
      %v619 = vrot.slane %v544, 1
      %v620 = vrot.slane %v450, 1
      %v621 = vsel %vm608, %v619, %v620
      %v622 = vrot.slane %v561, 1
      %v623 = vsel %vm608, %v620, %v622
      %v624 = vrot.slane %v545, 1
      %v625 = vrot.slane %v453, 1
      %v626 = vsel %vm608, %v624, %v625
      %v627 = vrot.slane %v562, 1
      %v628 = vsel %vm608, %v625, %v627
      %v629 = vrot.slane %v546, 1
      %v630 = vrot.slane %v456, 1
      %v631 = vsel %vm608, %v629, %v630
      %v632 = vrot.slane %v563, 1
      %v633 = vsel %vm608, %v630, %v632
      %v634 = vrot.slane %v547, 1
      %v635 = vrot.slane %v459, 1
      %v636 = vsel %vm608, %v634, %v635
      %v637 = vrot.slane %v564, 1
      %v638 = vsel %vm608, %v635, %v637
      %v639 = vrot.slane %v548, 1
      %v640 = vrot.slane %v462, 1
      %v641 = vsel %vm608, %v639, %v640
      %v642 = vrot.slane %v565, 1
      %v643 = vsel %vm608, %v640, %v642
      %v644 = vrot.slane %v549, 1
      %v645 = vrot.slane %v465, 1
      %v646 = vsel %vm608, %v644, %v645
      %v647 = vrot.slane %v566, 1
      %v648 = vsel %vm608, %v645, %v647
      %v649 = vrot.slane %v550, 1
      %v650 = vrot.slane %v468, 1
      %v651 = vsel %vm608, %v649, %v650
      %v652 = vrot.slane %v567, 1
      %v653 = vsel %vm608, %v650, %v652
      %v654 = vrot.slane %v551, 1
      %v655 = vrot.slane %v471, 1
      %v656 = vsel %vm608, %v654, %v655
      %v657 = vrot.slane %v568, 1
      %v658 = vsel %vm608, %v655, %v657
      %v659 = vrot.slane %v552, 1
      %v660 = vrot.slane %v474, 1
      %v661 = vsel %vm608, %v659, %v660
      %v662 = vrot.slane %v569, 1
      %v663 = vsel %vm608, %v660, %v662
      %v664 = vrot.slane %v553, 1
      %v665 = vrot.slane %v477, 1
      %v666 = vsel %vm608, %v664, %v665
      %v667 = vrot.slane %v570, 1
      %v668 = vsel %vm608, %v665, %v667
      %v669 = vrot.slane %v554, 1
      %v670 = vrot.slane %v480, 1
      %v671 = vsel %vm608, %v669, %v670
      %v672 = vrot.slane %v571, 1
      %v673 = vsel %vm608, %v670, %v672
      %v674 = vrot.slane %v555, 1
      %v675 = vrot.slane %v483, 1
      %v676 = vsel %vm608, %v674, %v675
      %v677 = vrot.slane %v572, 1
      %v678 = vsel %vm608, %v675, %v677
      %v679 = vrot.slane %v556, 1
      %v680 = vrot.slane %v486, 1
      %v681 = vsel %vm608, %v679, %v680
      %v682 = vrot.slane %v573, 1
      %v683 = vsel %vm608, %v680, %v682
      %v684 = vrot.slane %v557, 1
      %v685 = vrot.slane %v489, 1
      %v686 = vsel %vm608, %v684, %v685
      %v687 = vrot.slane %v574, 1
      %v688 = vsel %vm608, %v685, %v687
      %689 = vrot.lane.b32.xlu0 %v611, 8
      %v690 = vpop.permute.xlu0 %689
      %691 = vrot.lane.b32.xlu0 %v613, 8
      %v692 = vpop.permute.xlu0 %691
      %693 = vrot.lane.b32.xlu0 %v616, 8
      %v694 = vpop.permute.xlu0 %693
      %695 = vrot.lane.b32.xlu0 %v618, 8
      %v696 = vpop.permute.xlu0 %695
      %697 = vrot.lane.b32.xlu0 %v621, 8
      %v698 = vpop.permute.xlu0 %697
      %699 = vrot.lane.b32.xlu0 %v623, 8
      %v700 = vpop.permute.xlu0 %699
      %701 = vrot.lane.b32.xlu0 %v626, 8
      %v702 = vpop.permute.xlu0 %701
      %703 = vrot.lane.b32.xlu0 %v628, 8
      %v704 = vpop.permute.xlu0 %703
      %705 = vrot.lane.b32.xlu0 %v631, 8
      %v706 = vpop.permute.xlu0 %705
      %707 = vrot.lane.b32.xlu0 %v633, 8
      %v708 = vpop.permute.xlu0 %707
      %709 = vrot.lane.b32.xlu0 %v636, 8
      %v710 = vpop.permute.xlu0 %709
      %711 = vrot.lane.b32.xlu0 %v638, 8
      %v712 = vpop.permute.xlu0 %711
      %713 = vrot.lane.b32.xlu0 %v641, 8
      %v714 = vpop.permute.xlu0 %713
      %715 = vrot.lane.b32.xlu0 %v643, 8
      %v716 = vpop.permute.xlu0 %715
      %717 = vrot.lane.b32.xlu0 %v646, 8
      %v718 = vpop.permute.xlu0 %717
      %719 = vrot.lane.b32.xlu0 %v648, 8
      %v720 = vpop.permute.xlu0 %719
      %721 = vrot.lane.b32.xlu0 %v651, 8
      %v722 = vpop.permute.xlu0 %721
      %723 = vrot.lane.b32.xlu0 %v653, 8
      %v724 = vpop.permute.xlu0 %723
      %725 = vrot.lane.b32.xlu0 %v656, 8
      %v726 = vpop.permute.xlu0 %725
      %727 = vrot.lane.b32.xlu0 %v658, 8
      %v728 = vpop.permute.xlu0 %727
      %729 = vrot.lane.b32.xlu0 %v661, 8
      %v730 = vpop.permute.xlu0 %729
      %731 = vrot.lane.b32.xlu0 %v663, 8
      %v732 = vpop.permute.xlu0 %731
      %733 = vrot.lane.b32.xlu0 %v666, 8
      %v734 = vpop.permute.xlu0 %733
      %735 = vrot.lane.b32.xlu0 %v668, 8
      %v736 = vpop.permute.xlu0 %735
      %737 = vrot.lane.b32.xlu0 %v671, 8
      %v738 = vpop.permute.xlu0 %737
      %739 = vrot.lane.b32.xlu0 %v673, 8
      %v740 = vpop.permute.xlu0 %739
      %741 = vrot.lane.b32.xlu0 %v676, 8
      %v742 = vpop.permute.xlu0 %741
      %743 = vrot.lane.b32.xlu0 %v678, 8
      %v744 = vpop.permute.xlu0 %743
      %745 = vrot.lane.b32.xlu0 %v681, 8
      %v746 = vpop.permute.xlu0 %745
      %747 = vrot.lane.b32.xlu0 %v683, 8
      %v748 = vpop.permute.xlu0 %747
      %749 = vrot.lane.b32.xlu0 %v686, 8
      %v750 = vpop.permute.xlu0 %749
      %751 = vrot.lane.b32.xlu0 %v688, 8
      %v752 = vpop.permute.xlu0 %751
      %vm785 = vcmask 1045504
      %v786 = vrot.slane %v542, 2
      %v787 = vrot.slane %v444, 2
      %v788 = vsel %vm785, %v786, %v787
      %v789 = vrot.slane %v559, 2
      %v790 = vsel %vm785, %v787, %v789
      %v791 = vrot.slane %v543, 2
      %v792 = vrot.slane %v447, 2
      %v793 = vsel %vm785, %v791, %v792
      %v794 = vrot.slane %v560, 2
      %v795 = vsel %vm785, %v792, %v794
      %v796 = vrot.slane %v544, 2
      %v797 = vrot.slane %v450, 2
      %v798 = vsel %vm785, %v796, %v797
      %v799 = vrot.slane %v561, 2
      %v800 = vsel %vm785, %v797, %v799
      %v801 = vrot.slane %v545, 2
      %v802 = vrot.slane %v453, 2
      %v803 = vsel %vm785, %v801, %v802
      %v804 = vrot.slane %v562, 2
      %v805 = vsel %vm785, %v802, %v804
      %v806 = vrot.slane %v546, 2
      %v807 = vrot.slane %v456, 2
      %v808 = vsel %vm785, %v806, %v807
      %v809 = vrot.slane %v563, 2
      %v810 = vsel %vm785, %v807, %v809
      %v811 = vrot.slane %v547, 2
      %v812 = vrot.slane %v459, 2
      %v813 = vsel %vm785, %v811, %v812
      %v814 = vrot.slane %v564, 2
      %v815 = vsel %vm785, %v812, %v814
      %v816 = vrot.slane %v548, 2
      %v817 = vrot.slane %v462, 2
      %v818 = vsel %vm785, %v816, %v817
      %v819 = vrot.slane %v565, 2
      %v820 = vsel %vm785, %v817, %v819
      %v821 = vrot.slane %v549, 2
      %v822 = vrot.slane %v465, 2
      %v823 = vsel %vm785, %v821, %v822
      %v824 = vrot.slane %v566, 2
      %v825 = vsel %vm785, %v822, %v824
      %v826 = vrot.slane %v550, 2
      %v827 = vrot.slane %v468, 2
      %v828 = vsel %vm785, %v826, %v827
      %v829 = vrot.slane %v567, 2
      %v830 = vsel %vm785, %v827, %v829
      %v831 = vrot.slane %v551, 2
      %v832 = vrot.slane %v471, 2
      %v833 = vsel %vm785, %v831, %v832
      %v834 = vrot.slane %v568, 2
      %v835 = vsel %vm785, %v832, %v834
      %v836 = vrot.slane %v552, 2
      %v837 = vrot.slane %v474, 2
      %v838 = vsel %vm785, %v836, %v837
      %v839 = vrot.slane %v569, 2
      %v840 = vsel %vm785, %v837, %v839
      %v841 = vrot.slane %v553, 2
      %v842 = vrot.slane %v477, 2
      %v843 = vsel %vm785, %v841, %v842
      %v844 = vrot.slane %v570, 2
      %v845 = vsel %vm785, %v842, %v844
      %v846 = vrot.slane %v554, 2
      %v847 = vrot.slane %v480, 2
      %v848 = vsel %vm785, %v846, %v847
      %v849 = vrot.slane %v571, 2
      %v850 = vsel %vm785, %v847, %v849
      %v851 = vrot.slane %v555, 2
      %v852 = vrot.slane %v483, 2
      %v853 = vsel %vm785, %v851, %v852
      %v854 = vrot.slane %v572, 2
      %v855 = vsel %vm785, %v852, %v854
      %v856 = vrot.slane %v556, 2
      %v857 = vrot.slane %v486, 2
      %v858 = vsel %vm785, %v856, %v857
      %v859 = vrot.slane %v573, 2
      %v860 = vsel %vm785, %v857, %v859
      %v861 = vrot.slane %v557, 2
      %v862 = vrot.slane %v489, 2
      %v863 = vsel %vm785, %v861, %v862
      %v864 = vrot.slane %v574, 2
      %v865 = vsel %vm785, %v862, %v864
      %866 = vrot.lane.b32.xlu0 %v788, 16
      %v867 = vpop.permute.xlu0 %866
      %868 = vrot.lane.b32.xlu0 %v790, 16
      %v869 = vpop.permute.xlu0 %868
      %870 = vrot.lane.b32.xlu0 %v793, 16
      %v871 = vpop.permute.xlu0 %870
      %872 = vrot.lane.b32.xlu0 %v795, 16
      %v873 = vpop.permute.xlu0 %872
      %874 = vrot.lane.b32.xlu0 %v798, 16
      %v875 = vpop.permute.xlu0 %874
      %876 = vrot.lane.b32.xlu0 %v800, 16
      %v877 = vpop.permute.xlu0 %876
      %878 = vrot.lane.b32.xlu0 %v803, 16
      %v879 = vpop.permute.xlu0 %878
      %880 = vrot.lane.b32.xlu0 %v805, 16
      %v881 = vpop.permute.xlu0 %880
      %882 = vrot.lane.b32.xlu0 %v808, 16
      %v883 = vpop.permute.xlu0 %882
      %884 = vrot.lane.b32.xlu0 %v810, 16
      %v885 = vpop.permute.xlu0 %884
      %886 = vrot.lane.b32.xlu0 %v813, 16
      %v887 = vpop.permute.xlu0 %886
      %888 = vrot.lane.b32.xlu0 %v815, 16
      %v889 = vpop.permute.xlu0 %888
      %890 = vrot.lane.b32.xlu0 %v818, 16
      %v891 = vpop.permute.xlu0 %890
      %892 = vrot.lane.b32.xlu0 %v820, 16
      %v893 = vpop.permute.xlu0 %892
      %894 = vrot.lane.b32.xlu0 %v823, 16
      %v895 = vpop.permute.xlu0 %894
      %896 = vrot.lane.b32.xlu0 %v825, 16
      %v897 = vpop.permute.xlu0 %896
      %898 = vrot.lane.b32.xlu0 %v828, 16
      %v899 = vpop.permute.xlu0 %898
      %900 = vrot.lane.b32.xlu0 %v830, 16
      %v901 = vpop.permute.xlu0 %900
      %902 = vrot.lane.b32.xlu0 %v833, 16
      %v903 = vpop.permute.xlu0 %902
      %904 = vrot.lane.b32.xlu0 %v835, 16
      %v905 = vpop.permute.xlu0 %904
      %906 = vrot.lane.b32.xlu0 %v838, 16
      %v907 = vpop.permute.xlu0 %906
      %908 = vrot.lane.b32.xlu0 %v840, 16
      %v909 = vpop.permute.xlu0 %908
      %910 = vrot.lane.b32.xlu0 %v843, 16
      %v911 = vpop.permute.xlu0 %910
      %912 = vrot.lane.b32.xlu0 %v845, 16
      %v913 = vpop.permute.xlu0 %912
      %914 = vrot.lane.b32.xlu0 %v848, 16
      %v915 = vpop.permute.xlu0 %914
      %916 = vrot.lane.b32.xlu0 %v850, 16
      %v917 = vpop.permute.xlu0 %916
      %918 = vrot.lane.b32.xlu0 %v853, 16
      %v919 = vpop.permute.xlu0 %918
      %920 = vrot.lane.b32.xlu0 %v855, 16
      %v921 = vpop.permute.xlu0 %920
      %922 = vrot.lane.b32.xlu0 %v858, 16
      %v923 = vpop.permute.xlu0 %922
      %924 = vrot.lane.b32.xlu0 %v860, 16
      %v925 = vpop.permute.xlu0 %924
      %926 = vrot.lane.b32.xlu0 %v863, 16
      %v927 = vpop.permute.xlu0 %926
      %928 = vrot.lane.b32.xlu0 %v865, 16
      %v929 = vpop.permute.xlu0 %928
      %963 = vrot.lane.b32.xlu0 %v543, 24
      %v964 = vpop.permute.xlu0 %963
      %965 = vrot.lane.b32.xlu0 %v447, 24
      %v966 = vpop.permute.xlu0 %965
      %967 = vrot.lane.b32.xlu0 %v544, 24
      %v968 = vpop.permute.xlu0 %967
      %969 = vrot.lane.b32.xlu0 %v450, 24
      %v970 = vpop.permute.xlu0 %969
      %971 = vrot.lane.b32.xlu0 %v545, 24
      %v972 = vpop.permute.xlu0 %971
      %973 = vrot.lane.b32.xlu0 %v453, 24
      %v974 = vpop.permute.xlu0 %973
      %975 = vrot.lane.b32.xlu0 %v546, 24
      %v976 = vpop.permute.xlu0 %975
      %977 = vrot.lane.b32.xlu0 %v456, 24
      %v978 = vpop.permute.xlu0 %977
      %979 = vrot.lane.b32.xlu0 %v547, 24
      %v980 = vpop.permute.xlu0 %979
      %981 = vrot.lane.b32.xlu0 %v459, 24
      %v982 = vpop.permute.xlu0 %981
      %983 = vrot.lane.b32.xlu0 %v548, 24
      %v984 = vpop.permute.xlu0 %983
      %985 = vrot.lane.b32.xlu0 %v462, 24
      %v986 = vpop.permute.xlu0 %985
      %987 = vrot.lane.b32.xlu0 %v549, 24
      %v988 = vpop.permute.xlu0 %987
      %989 = vrot.lane.b32.xlu0 %v465, 24
      %v990 = vpop.permute.xlu0 %989
      %991 = vrot.lane.b32.xlu0 %v550, 24
      %v992 = vpop.permute.xlu0 %991
      %993 = vrot.lane.b32.xlu0 %v468, 24
      %v994 = vpop.permute.xlu0 %993
      %995 = vrot.lane.b32.xlu0 %v551, 24
      %v996 = vpop.permute.xlu0 %995
      %997 = vrot.lane.b32.xlu0 %v471, 24
      %v998 = vpop.permute.xlu0 %997
      %999 = vrot.lane.b32.xlu0 %v552, 24
      %v1000 = vpop.permute.xlu0 %999
      %1001 = vrot.lane.b32.xlu0 %v474, 24
      %v1002 = vpop.permute.xlu0 %1001
      %1003 = vrot.lane.b32.xlu0 %v553, 24
      %v1004 = vpop.permute.xlu0 %1003
      %1005 = vrot.lane.b32.xlu0 %v477, 24
      %v1006 = vpop.permute.xlu0 %1005
      %1007 = vrot.lane.b32.xlu0 %v554, 24
      %v1008 = vpop.permute.xlu0 %1007
      %1009 = vrot.lane.b32.xlu0 %v480, 24
      %v1010 = vpop.permute.xlu0 %1009
      %1011 = vrot.lane.b32.xlu0 %v555, 24
      %v1012 = vpop.permute.xlu0 %1011
      %1013 = vrot.lane.b32.xlu0 %v483, 24
      %v1014 = vpop.permute.xlu0 %1013
      %1015 = vrot.lane.b32.xlu0 %v556, 24
      %v1016 = vpop.permute.xlu0 %1015
      %1017 = vrot.lane.b32.xlu0 %v486, 24
      %v1018 = vpop.permute.xlu0 %1017
      %1019 = vrot.lane.b32.xlu0 %v557, 24
      %v1020 = vpop.permute.xlu0 %1019
      %1021 = vrot.lane.b32.xlu0 %v489, 24
      %v1022 = vpop.permute.xlu0 %1021
      %1023 = vrot.lane.b32.xlu0 %v558, 24
      %v1024 = vpop.permute.xlu0 %1023
      %1025 = vrot.lane.b32.xlu0 %v492, 24
      %v1026 = vpop.permute.xlu0 %1025
      %v1060 = vrot.slane %v558, 1
      %v1061 = vrot.slane %v492, 1
      %v1062 = vsel %vm608, %v1060, %v1061
      %v1063 = vrot.slane %v575, 1
      %v1064 = vsel %vm608, %v1061, %v1063
      %1065 = vrot.lane.b32.xlu0 %v616, 32
      %v1066 = vpop.permute.xlu0 %1065
      %1067 = vrot.lane.b32.xlu0 %v618, 32
      %v1068 = vpop.permute.xlu0 %1067
      %1069 = vrot.lane.b32.xlu0 %v621, 32
      %v1070 = vpop.permute.xlu0 %1069
      %1071 = vrot.lane.b32.xlu0 %v623, 32
      %v1072 = vpop.permute.xlu0 %1071
      %1073 = vrot.lane.b32.xlu0 %v626, 32
      %v1074 = vpop.permute.xlu0 %1073
      %1075 = vrot.lane.b32.xlu0 %v628, 32
      %v1076 = vpop.permute.xlu0 %1075
      %1077 = vrot.lane.b32.xlu0 %v631, 32
      %v1078 = vpop.permute.xlu0 %1077
      %1079 = vrot.lane.b32.xlu0 %v633, 32
      %v1080 = vpop.permute.xlu0 %1079
      %1081 = vrot.lane.b32.xlu0 %v636, 32
      %v1082 = vpop.permute.xlu0 %1081
      %1083 = vrot.lane.b32.xlu0 %v638, 32
      %v1084 = vpop.permute.xlu0 %1083
      %1085 = vrot.lane.b32.xlu0 %v641, 32
      %v1086 = vpop.permute.xlu0 %1085
      %1087 = vrot.lane.b32.xlu0 %v643, 32
      %v1088 = vpop.permute.xlu0 %1087
      %1089 = vrot.lane.b32.xlu0 %v646, 32
      %v1090 = vpop.permute.xlu0 %1089
      %1091 = vrot.lane.b32.xlu0 %v648, 32
      %v1092 = vpop.permute.xlu0 %1091
      %1093 = vrot.lane.b32.xlu0 %v651, 32
      %v1094 = vpop.permute.xlu0 %1093
      %1095 = vrot.lane.b32.xlu0 %v653, 32
      %v1096 = vpop.permute.xlu0 %1095
      %1097 = vrot.lane.b32.xlu0 %v656, 32
      %v1098 = vpop.permute.xlu0 %1097
      %1099 = vrot.lane.b32.xlu0 %v658, 32
      %v1100 = vpop.permute.xlu0 %1099
      %1101 = vrot.lane.b32.xlu0 %v661, 32
      %v1102 = vpop.permute.xlu0 %1101
      %1103 = vrot.lane.b32.xlu0 %v663, 32
      %v1104 = vpop.permute.xlu0 %1103
      %1105 = vrot.lane.b32.xlu0 %v666, 32
      %v1106 = vpop.permute.xlu0 %1105
      %1107 = vrot.lane.b32.xlu0 %v668, 32
      %v1108 = vpop.permute.xlu0 %1107
      %1109 = vrot.lane.b32.xlu0 %v671, 32
      %v1110 = vpop.permute.xlu0 %1109
      %1111 = vrot.lane.b32.xlu0 %v673, 32
      %v1112 = vpop.permute.xlu0 %1111
      %1113 = vrot.lane.b32.xlu0 %v676, 32
      %v1114 = vpop.permute.xlu0 %1113
      %1115 = vrot.lane.b32.xlu0 %v678, 32
      %v1116 = vpop.permute.xlu0 %1115
      %1117 = vrot.lane.b32.xlu0 %v681, 32
      %v1118 = vpop.permute.xlu0 %1117
      %1119 = vrot.lane.b32.xlu0 %v683, 32
      %v1120 = vpop.permute.xlu0 %1119
      %1121 = vrot.lane.b32.xlu0 %v686, 32
      %v1122 = vpop.permute.xlu0 %1121
      %1123 = vrot.lane.b32.xlu0 %v688, 32
      %v1124 = vpop.permute.xlu0 %1123
      %1125 = vrot.lane.b32.xlu0 %v1062, 32
      %v1126 = vpop.permute.xlu0 %1125
      %1127 = vrot.lane.b32.xlu0 %v1064, 32
      %v1128 = vpop.permute.xlu0 %1127
      %v1161 = vrot.slane %v558, 2
      %v1162 = vrot.slane %v492, 2
      %v1163 = vsel %vm785, %v1161, %v1162
      %v1164 = vrot.slane %v575, 2
      %v1165 = vsel %vm785, %v1162, %v1164
      %1166 = vrot.lane.b32.xlu0 %v793, 40
      %v1167 = vpop.permute.xlu0 %1166
      %1168 = vrot.lane.b32.xlu0 %v795, 40
      %v1169 = vpop.permute.xlu0 %1168
      %1170 = vrot.lane.b32.xlu0 %v798, 40
      %v1171 = vpop.permute.xlu0 %1170
      %1172 = vrot.lane.b32.xlu0 %v800, 40
      %v1173 = vpop.permute.xlu0 %1172
      %1174 = vrot.lane.b32.xlu0 %v803, 40
      %v1175 = vpop.permute.xlu0 %1174
      %1176 = vrot.lane.b32.xlu0 %v805, 40
      %v1177 = vpop.permute.xlu0 %1176
      %1178 = vrot.lane.b32.xlu0 %v808, 40
      %v1179 = vpop.permute.xlu0 %1178
      %1180 = vrot.lane.b32.xlu0 %v810, 40
      %v1181 = vpop.permute.xlu0 %1180
      %1182 = vrot.lane.b32.xlu0 %v813, 40
      %v1183 = vpop.permute.xlu0 %1182
      %1184 = vrot.lane.b32.xlu0 %v815, 40
      %v1185 = vpop.permute.xlu0 %1184
      %1186 = vrot.lane.b32.xlu0 %v818, 40
      %v1187 = vpop.permute.xlu0 %1186
      %1188 = vrot.lane.b32.xlu0 %v820, 40
      %v1189 = vpop.permute.xlu0 %1188
      %1190 = vrot.lane.b32.xlu0 %v823, 40
      %v1191 = vpop.permute.xlu0 %1190
      %1192 = vrot.lane.b32.xlu0 %v825, 40
      %v1193 = vpop.permute.xlu0 %1192
      %1194 = vrot.lane.b32.xlu0 %v828, 40
      %v1195 = vpop.permute.xlu0 %1194
      %1196 = vrot.lane.b32.xlu0 %v830, 40
      %v1197 = vpop.permute.xlu0 %1196
      %1198 = vrot.lane.b32.xlu0 %v833, 40
      %v1199 = vpop.permute.xlu0 %1198
      %1200 = vrot.lane.b32.xlu0 %v835, 40
      %v1201 = vpop.permute.xlu0 %1200
      %1202 = vrot.lane.b32.xlu0 %v838, 40
      %v1203 = vpop.permute.xlu0 %1202
      %1204 = vrot.lane.b32.xlu0 %v840, 40
      %v1205 = vpop.permute.xlu0 %1204
      %1206 = vrot.lane.b32.xlu0 %v843, 40
      %v1207 = vpop.permute.xlu0 %1206
      %1208 = vrot.lane.b32.xlu0 %v845, 40
      %v1209 = vpop.permute.xlu0 %1208
      %1210 = vrot.lane.b32.xlu0 %v848, 40
      %v1211 = vpop.permute.xlu0 %1210
      %1212 = vrot.lane.b32.xlu0 %v850, 40
      %v1213 = vpop.permute.xlu0 %1212
      %1214 = vrot.lane.b32.xlu0 %v853, 40
      %v1215 = vpop.permute.xlu0 %1214
      %1216 = vrot.lane.b32.xlu0 %v855, 40
      %v1217 = vpop.permute.xlu0 %1216
      %1218 = vrot.lane.b32.xlu0 %v858, 40
      %v1219 = vpop.permute.xlu0 %1218
      %1220 = vrot.lane.b32.xlu0 %v860, 40
      %v1221 = vpop.permute.xlu0 %1220
      %1222 = vrot.lane.b32.xlu0 %v863, 40
      %v1223 = vpop.permute.xlu0 %1222
      %1224 = vrot.lane.b32.xlu0 %v865, 40
      %v1225 = vpop.permute.xlu0 %1224
      %1226 = vrot.lane.b32.xlu0 %v1163, 40
      %v1227 = vpop.permute.xlu0 %1226
      %1228 = vrot.lane.b32.xlu0 %v1165, 40
      %v1229 = vpop.permute.xlu0 %1228
      %1262 = vrot.lane.b32.xlu0 %v544, 48
      %v1263 = vpop.permute.xlu0 %1262
      %1264 = vrot.lane.b32.xlu0 %v450, 48
      %v1265 = vpop.permute.xlu0 %1264
      %1266 = vrot.lane.b32.xlu0 %v545, 48
      %v1267 = vpop.permute.xlu0 %1266
      %1268 = vrot.lane.b32.xlu0 %v453, 48
      %v1269 = vpop.permute.xlu0 %1268
      %1270 = vrot.lane.b32.xlu0 %v546, 48
      %v1271 = vpop.permute.xlu0 %1270
      %1272 = vrot.lane.b32.xlu0 %v456, 48
      %v1273 = vpop.permute.xlu0 %1272
      %1274 = vrot.lane.b32.xlu0 %v547, 48
      %v1275 = vpop.permute.xlu0 %1274
      %1276 = vrot.lane.b32.xlu0 %v459, 48
      %v1277 = vpop.permute.xlu0 %1276
      %1278 = vrot.lane.b32.xlu0 %v548, 48
      %v1279 = vpop.permute.xlu0 %1278
      %1280 = vrot.lane.b32.xlu0 %v462, 48
      %v1281 = vpop.permute.xlu0 %1280
      %1282 = vrot.lane.b32.xlu0 %v549, 48
      %v1283 = vpop.permute.xlu0 %1282
      %1284 = vrot.lane.b32.xlu0 %v465, 48
      %v1285 = vpop.permute.xlu0 %1284
      %1286 = vrot.lane.b32.xlu0 %v550, 48
      %v1287 = vpop.permute.xlu0 %1286
      %1288 = vrot.lane.b32.xlu0 %v468, 48
      %v1289 = vpop.permute.xlu0 %1288
      %1290 = vrot.lane.b32.xlu0 %v551, 48
      %v1291 = vpop.permute.xlu0 %1290
      %1292 = vrot.lane.b32.xlu0 %v471, 48
      %v1293 = vpop.permute.xlu0 %1292
      %1294 = vrot.lane.b32.xlu0 %v552, 48
      %v1295 = vpop.permute.xlu0 %1294
      %1296 = vrot.lane.b32.xlu0 %v474, 48
      %v1297 = vpop.permute.xlu0 %1296
      %1298 = vrot.lane.b32.xlu0 %v553, 48
      %v1299 = vpop.permute.xlu0 %1298
      %1300 = vrot.lane.b32.xlu0 %v477, 48
      %v1301 = vpop.permute.xlu0 %1300
      %1302 = vrot.lane.b32.xlu0 %v554, 48
      %v1303 = vpop.permute.xlu0 %1302
      %1304 = vrot.lane.b32.xlu0 %v480, 48
      %v1305 = vpop.permute.xlu0 %1304
      %1306 = vrot.lane.b32.xlu0 %v555, 48
      %v1307 = vpop.permute.xlu0 %1306
      %1308 = vrot.lane.b32.xlu0 %v483, 48
      %v1309 = vpop.permute.xlu0 %1308
      %1310 = vrot.lane.b32.xlu0 %v556, 48
      %v1311 = vpop.permute.xlu0 %1310
      %1312 = vrot.lane.b32.xlu0 %v486, 48
      %v1313 = vpop.permute.xlu0 %1312
      %1314 = vrot.lane.b32.xlu0 %v557, 48
      %v1315 = vpop.permute.xlu0 %1314
      %1316 = vrot.lane.b32.xlu0 %v489, 48
      %v1317 = vpop.permute.xlu0 %1316
      %1318 = vrot.lane.b32.xlu0 %v558, 48
      %v1319 = vpop.permute.xlu0 %1318
      %1320 = vrot.lane.b32.xlu0 %v492, 48
      %v1321 = vpop.permute.xlu0 %1320
      %1322 = vrot.lane.b32.xlu0 %v542, 48
      %v1323 = vpop.permute.xlu0 %1322
      %1324 = vrot.lane.b32.xlu0 %v444, 48
      %v1325 = vpop.permute.xlu0 %1324
      %1358 = vrot.lane.b32.xlu0 %v621, 56
      %v1359 = vpop.permute.xlu0 %1358
      %1360 = vrot.lane.b32.xlu0 %v623, 56
      %v1361 = vpop.permute.xlu0 %1360
      %1362 = vrot.lane.b32.xlu0 %v626, 56
      %v1363 = vpop.permute.xlu0 %1362
      %1364 = vrot.lane.b32.xlu0 %v628, 56
      %v1365 = vpop.permute.xlu0 %1364
      %1366 = vrot.lane.b32.xlu0 %v631, 56
      %v1367 = vpop.permute.xlu0 %1366
      %1368 = vrot.lane.b32.xlu0 %v633, 56
      %v1369 = vpop.permute.xlu0 %1368
      %1370 = vrot.lane.b32.xlu0 %v636, 56
      %v1371 = vpop.permute.xlu0 %1370
      %1372 = vrot.lane.b32.xlu0 %v638, 56
      %v1373 = vpop.permute.xlu0 %1372
      %1374 = vrot.lane.b32.xlu0 %v641, 56
      %v1375 = vpop.permute.xlu0 %1374
      %1376 = vrot.lane.b32.xlu0 %v643, 56
      %v1377 = vpop.permute.xlu0 %1376
      %1378 = vrot.lane.b32.xlu0 %v646, 56
      %v1379 = vpop.permute.xlu0 %1378
      %1380 = vrot.lane.b32.xlu0 %v648, 56
      %v1381 = vpop.permute.xlu0 %1380
      %1382 = vrot.lane.b32.xlu0 %v651, 56
      %v1383 = vpop.permute.xlu0 %1382
      %1384 = vrot.lane.b32.xlu0 %v653, 56
      %v1385 = vpop.permute.xlu0 %1384
      %1386 = vrot.lane.b32.xlu0 %v656, 56
      %v1387 = vpop.permute.xlu0 %1386
      %1388 = vrot.lane.b32.xlu0 %v658, 56
      %v1389 = vpop.permute.xlu0 %1388
      %1390 = vrot.lane.b32.xlu0 %v661, 56
      %v1391 = vpop.permute.xlu0 %1390
      %1392 = vrot.lane.b32.xlu0 %v663, 56
      %v1393 = vpop.permute.xlu0 %1392
      %1394 = vrot.lane.b32.xlu0 %v666, 56
      %v1395 = vpop.permute.xlu0 %1394
      %1396 = vrot.lane.b32.xlu0 %v668, 56
      %v1397 = vpop.permute.xlu0 %1396
      %1398 = vrot.lane.b32.xlu0 %v671, 56
      %v1399 = vpop.permute.xlu0 %1398
      %1400 = vrot.lane.b32.xlu0 %v673, 56
      %v1401 = vpop.permute.xlu0 %1400
      %1402 = vrot.lane.b32.xlu0 %v676, 56
      %v1403 = vpop.permute.xlu0 %1402
      %1404 = vrot.lane.b32.xlu0 %v678, 56
      %v1405 = vpop.permute.xlu0 %1404
      %1406 = vrot.lane.b32.xlu0 %v681, 56
      %v1407 = vpop.permute.xlu0 %1406
      %1408 = vrot.lane.b32.xlu0 %v683, 56
      %v1409 = vpop.permute.xlu0 %1408
      %1410 = vrot.lane.b32.xlu0 %v686, 56
      %v1411 = vpop.permute.xlu0 %1410
      %1412 = vrot.lane.b32.xlu0 %v688, 56
      %v1413 = vpop.permute.xlu0 %1412
      %1414 = vrot.lane.b32.xlu0 %v1062, 56
      %v1415 = vpop.permute.xlu0 %1414
      %1416 = vrot.lane.b32.xlu0 %v1064, 56
      %v1417 = vpop.permute.xlu0 %1416
      %1418 = vrot.lane.b32.xlu0 %v611, 56
      %v1419 = vpop.permute.xlu0 %1418
      %1420 = vrot.lane.b32.xlu0 %v613, 56
      %v1421 = vpop.permute.xlu0 %1420
      %1454 = vrot.lane.b32.xlu0 %v798, 64
      %v1455 = vpop.permute.xlu0 %1454
      %1456 = vrot.lane.b32.xlu0 %v800, 64
      %v1457 = vpop.permute.xlu0 %1456
      %1458 = vrot.lane.b32.xlu0 %v803, 64
      %v1459 = vpop.permute.xlu0 %1458
      %1460 = vrot.lane.b32.xlu0 %v805, 64
      %v1461 = vpop.permute.xlu0 %1460
      %1462 = vrot.lane.b32.xlu0 %v808, 64
      %v1463 = vpop.permute.xlu0 %1462
      %1464 = vrot.lane.b32.xlu0 %v810, 64
      %v1465 = vpop.permute.xlu0 %1464
      %1466 = vrot.lane.b32.xlu0 %v813, 64
      %v1467 = vpop.permute.xlu0 %1466
      %1468 = vrot.lane.b32.xlu0 %v815, 64
      %v1469 = vpop.permute.xlu0 %1468
      %1470 = vrot.lane.b32.xlu0 %v818, 64
      %v1471 = vpop.permute.xlu0 %1470
      %1472 = vrot.lane.b32.xlu0 %v820, 64
      %v1473 = vpop.permute.xlu0 %1472
      %1474 = vrot.lane.b32.xlu0 %v823, 64
      %v1475 = vpop.permute.xlu0 %1474
      %1476 = vrot.lane.b32.xlu0 %v825, 64
      %v1477 = vpop.permute.xlu0 %1476
      %1478 = vrot.lane.b32.xlu0 %v828, 64
      %v1479 = vpop.permute.xlu0 %1478
      %1480 = vrot.lane.b32.xlu0 %v830, 64
      %v1481 = vpop.permute.xlu0 %1480
      %1482 = vrot.lane.b32.xlu0 %v833, 64
      %v1483 = vpop.permute.xlu0 %1482
      %1484 = vrot.lane.b32.xlu0 %v835, 64
      %v1485 = vpop.permute.xlu0 %1484
      %1486 = vrot.lane.b32.xlu0 %v838, 64
      %v1487 = vpop.permute.xlu0 %1486
      %1488 = vrot.lane.b32.xlu0 %v840, 64
      %v1489 = vpop.permute.xlu0 %1488
      %1490 = vrot.lane.b32.xlu0 %v843, 64
      %v1491 = vpop.permute.xlu0 %1490
      %1492 = vrot.lane.b32.xlu0 %v845, 64
      %v1493 = vpop.permute.xlu0 %1492
      %1494 = vrot.lane.b32.xlu0 %v848, 64
      %v1495 = vpop.permute.xlu0 %1494
      %1496 = vrot.lane.b32.xlu0 %v850, 64
      %v1497 = vpop.permute.xlu0 %1496
      %1498 = vrot.lane.b32.xlu0 %v853, 64
      %v1499 = vpop.permute.xlu0 %1498
      %1500 = vrot.lane.b32.xlu0 %v855, 64
      %v1501 = vpop.permute.xlu0 %1500
      %1502 = vrot.lane.b32.xlu0 %v858, 64
      %v1503 = vpop.permute.xlu0 %1502
      %1504 = vrot.lane.b32.xlu0 %v860, 64
      %v1505 = vpop.permute.xlu0 %1504
      %1506 = vrot.lane.b32.xlu0 %v863, 64
      %v1507 = vpop.permute.xlu0 %1506
      %1508 = vrot.lane.b32.xlu0 %v865, 64
      %v1509 = vpop.permute.xlu0 %1508
      %1510 = vrot.lane.b32.xlu0 %v1163, 64
      %v1511 = vpop.permute.xlu0 %1510
      %1512 = vrot.lane.b32.xlu0 %v1165, 64
      %v1513 = vpop.permute.xlu0 %1512
      %1514 = vrot.lane.b32.xlu0 %v788, 64
      %v1515 = vpop.permute.xlu0 %1514
      %1516 = vrot.lane.b32.xlu0 %v790, 64
      %v1517 = vpop.permute.xlu0 %1516
      %vm1550 = vcmask 64512
      %v1551 = vsel %vm1550, %v542, %v690
      %v1552 = vsel %vm1550, %v444, %v692
      %v1553 = vsel %vm1550, %v543, %v694
      %v1554 = vsel %vm1550, %v447, %v696
      %v1555 = vsel %vm1550, %v544, %v698
      %v1556 = vsel %vm1550, %v450, %v700
      %v1557 = vsel %vm1550, %v545, %v702
      %v1558 = vsel %vm1550, %v453, %v704
      %v1559 = vsel %vm1550, %v546, %v706
      %v1560 = vsel %vm1550, %v456, %v708
      %v1561 = vsel %vm1550, %v547, %v710
      %v1562 = vsel %vm1550, %v459, %v712
      %v1563 = vsel %vm1550, %v548, %v714
      %v1564 = vsel %vm1550, %v462, %v716
      %v1565 = vsel %vm1550, %v549, %v718
      %v1566 = vsel %vm1550, %v465, %v720
      %v1567 = vsel %vm1550, %v550, %v722
      %v1568 = vsel %vm1550, %v468, %v724
      %v1569 = vsel %vm1550, %v551, %v726
      %v1570 = vsel %vm1550, %v471, %v728
      %v1571 = vsel %vm1550, %v552, %v730
      %v1572 = vsel %vm1550, %v474, %v732
      %v1573 = vsel %vm1550, %v553, %v734
      %v1574 = vsel %vm1550, %v477, %v736
      %v1575 = vsel %vm1550, %v554, %v738
      %v1576 = vsel %vm1550, %v480, %v740
      %v1577 = vsel %vm1550, %v555, %v742
      %v1578 = vsel %vm1550, %v483, %v744
      %v1579 = vsel %vm1550, %v556, %v746
      %v1580 = vsel %vm1550, %v486, %v748
      %v1581 = vsel %vm1550, %v557, %v750
      %v1582 = vsel %vm1550, %v489, %v752
      %vm1583 = vcmask 130048
      %v1584 = vsel %vm1583, %v1551, %v867
      %v1585 = vsel %vm1583, %v1552, %v869
      %v1586 = vsel %vm1583, %v1553, %v871
      %v1587 = vsel %vm1583, %v1554, %v873
      %v1588 = vsel %vm1583, %v1555, %v875
      %v1589 = vsel %vm1583, %v1556, %v877
      %v1590 = vsel %vm1583, %v1557, %v879
      %v1591 = vsel %vm1583, %v1558, %v881
      %v1592 = vsel %vm1583, %v1559, %v883
      %v1593 = vsel %vm1583, %v1560, %v885
      %v1594 = vsel %vm1583, %v1561, %v887
      %v1595 = vsel %vm1583, %v1562, %v889
      %v1596 = vsel %vm1583, %v1563, %v891
      %v1597 = vsel %vm1583, %v1564, %v893
      %v1598 = vsel %vm1583, %v1565, %v895
      %v1599 = vsel %vm1583, %v1566, %v897
      %v1600 = vsel %vm1583, %v1567, %v899
      %v1601 = vsel %vm1583, %v1568, %v901
      %v1602 = vsel %vm1583, %v1569, %v903
      %v1603 = vsel %vm1583, %v1570, %v905
      %v1604 = vsel %vm1583, %v1571, %v907
      %v1605 = vsel %vm1583, %v1572, %v909
      %v1606 = vsel %vm1583, %v1573, %v911
      %v1607 = vsel %vm1583, %v1574, %v913
      %v1608 = vsel %vm1583, %v1575, %v915
      %v1609 = vsel %vm1583, %v1576, %v917
      %v1610 = vsel %vm1583, %v1577, %v919
      %v1611 = vsel %vm1583, %v1578, %v921
      %v1612 = vsel %vm1583, %v1579, %v923
      %v1613 = vsel %vm1583, %v1580, %v925
      %v1614 = vsel %vm1583, %v1581, %v927
      %v1615 = vsel %vm1583, %v1582, %v929
      %vm1616 = vcmask 195584
      %v1617 = vsel %vm1616, %v1584, %v964
      %v1618 = vsel %vm1616, %v1585, %v966
      %v1619 = vsel %vm1616, %v1586, %v968
      %v1620 = vsel %vm1616, %v1587, %v970
      %v1621 = vsel %vm1616, %v1588, %v972
      %v1622 = vsel %vm1616, %v1589, %v974
      %v1623 = vsel %vm1616, %v1590, %v976
      %v1624 = vsel %vm1616, %v1591, %v978
      %v1625 = vsel %vm1616, %v1592, %v980
      %v1626 = vsel %vm1616, %v1593, %v982
      %v1627 = vsel %vm1616, %v1594, %v984
      %v1628 = vsel %vm1616, %v1595, %v986
      %v1629 = vsel %vm1616, %v1596, %v988
      %v1630 = vsel %vm1616, %v1597, %v990
      %v1631 = vsel %vm1616, %v1598, %v992
      %v1632 = vsel %vm1616, %v1599, %v994
      %v1633 = vsel %vm1616, %v1600, %v996
      %v1634 = vsel %vm1616, %v1601, %v998
      %v1635 = vsel %vm1616, %v1602, %v1000
      %v1636 = vsel %vm1616, %v1603, %v1002
      %v1637 = vsel %vm1616, %v1604, %v1004
      %v1638 = vsel %vm1616, %v1605, %v1006
      %v1639 = vsel %vm1616, %v1606, %v1008
      %v1640 = vsel %vm1616, %v1607, %v1010
      %v1641 = vsel %vm1616, %v1608, %v1012
      %v1642 = vsel %vm1616, %v1609, %v1014
      %v1643 = vsel %vm1616, %v1610, %v1016
      %v1644 = vsel %vm1616, %v1611, %v1018
      %v1645 = vsel %vm1616, %v1612, %v1020
      %v1646 = vsel %vm1616, %v1613, %v1022
      %v1647 = vsel %vm1616, %v1614, %v1024
      %v1648 = vsel %vm1616, %v1615, %v1026
      %vm1649 = vcmask 261120
      %v1650 = vsel %vm1649, %v1617, %v1066
      %v1651 = vsel %vm1649, %v1618, %v1068
      %v1652 = vsel %vm1649, %v1619, %v1070
      %v1653 = vsel %vm1649, %v1620, %v1072
      %v1654 = vsel %vm1649, %v1621, %v1074
      %v1655 = vsel %vm1649, %v1622, %v1076
      %v1656 = vsel %vm1649, %v1623, %v1078
      %v1657 = vsel %vm1649, %v1624, %v1080
      %v1658 = vsel %vm1649, %v1625, %v1082
      %v1659 = vsel %vm1649, %v1626, %v1084
      %v1660 = vsel %vm1649, %v1627, %v1086
      %v1661 = vsel %vm1649, %v1628, %v1088
      %v1662 = vsel %vm1649, %v1629, %v1090
      %v1663 = vsel %vm1649, %v1630, %v1092
      %v1664 = vsel %vm1649, %v1631, %v1094
      %v1665 = vsel %vm1649, %v1632, %v1096
      %v1666 = vsel %vm1649, %v1633, %v1098
      %v1667 = vsel %vm1649, %v1634, %v1100
      %v1668 = vsel %vm1649, %v1635, %v1102
      %v1669 = vsel %vm1649, %v1636, %v1104
      %v1670 = vsel %vm1649, %v1637, %v1106
      %v1671 = vsel %vm1649, %v1638, %v1108
      %v1672 = vsel %vm1649, %v1639, %v1110
      %v1673 = vsel %vm1649, %v1640, %v1112
      %v1674 = vsel %vm1649, %v1641, %v1114
      %v1675 = vsel %vm1649, %v1642, %v1116
      %v1676 = vsel %vm1649, %v1643, %v1118
      %v1677 = vsel %vm1649, %v1644, %v1120
      %v1678 = vsel %vm1649, %v1645, %v1122
      %v1679 = vsel %vm1649, %v1646, %v1124
      %v1680 = vsel %vm1649, %v1647, %v1126
      %v1681 = vsel %vm1649, %v1648, %v1128
      %vm1682 = vcmask 326656
      %v1683 = vsel %vm1682, %v1650, %v1167
      %v1684 = vsel %vm1682, %v1651, %v1169
      %v1685 = vsel %vm1682, %v1652, %v1171
      %v1686 = vsel %vm1682, %v1653, %v1173
      %v1687 = vsel %vm1682, %v1654, %v1175
      %v1688 = vsel %vm1682, %v1655, %v1177
      %v1689 = vsel %vm1682, %v1656, %v1179
      %v1690 = vsel %vm1682, %v1657, %v1181
      %v1691 = vsel %vm1682, %v1658, %v1183
      %v1692 = vsel %vm1682, %v1659, %v1185
      %v1693 = vsel %vm1682, %v1660, %v1187
      %v1694 = vsel %vm1682, %v1661, %v1189
      %v1695 = vsel %vm1682, %v1662, %v1191
      %v1696 = vsel %vm1682, %v1663, %v1193
      %v1697 = vsel %vm1682, %v1664, %v1195
      %v1698 = vsel %vm1682, %v1665, %v1197
      %v1699 = vsel %vm1682, %v1666, %v1199
      %v1700 = vsel %vm1682, %v1667, %v1201
      %v1701 = vsel %vm1682, %v1668, %v1203
      %v1702 = vsel %vm1682, %v1669, %v1205
      %v1703 = vsel %vm1682, %v1670, %v1207
      %v1704 = vsel %vm1682, %v1671, %v1209
      %v1705 = vsel %vm1682, %v1672, %v1211
      %v1706 = vsel %vm1682, %v1673, %v1213
      %v1707 = vsel %vm1682, %v1674, %v1215
      %v1708 = vsel %vm1682, %v1675, %v1217
      %v1709 = vsel %vm1682, %v1676, %v1219
      %v1710 = vsel %vm1682, %v1677, %v1221
      %v1711 = vsel %vm1682, %v1678, %v1223
      %v1712 = vsel %vm1682, %v1679, %v1225
      %v1713 = vsel %vm1682, %v1680, %v1227
      %v1714 = vsel %vm1682, %v1681, %v1229
      %vm1715 = vcmask 392192
      %v1716 = vsel %vm1715, %v1683, %v1263
      %v1717 = vsel %vm1715, %v1684, %v1265
      %v1718 = vsel %vm1715, %v1685, %v1267
      %v1719 = vsel %vm1715, %v1686, %v1269
      %v1720 = vsel %vm1715, %v1687, %v1271
      %v1721 = vsel %vm1715, %v1688, %v1273
      %v1722 = vsel %vm1715, %v1689, %v1275
      %v1723 = vsel %vm1715, %v1690, %v1277
      %v1724 = vsel %vm1715, %v1691, %v1279
      %v1725 = vsel %vm1715, %v1692, %v1281
      %v1726 = vsel %vm1715, %v1693, %v1283
      %v1727 = vsel %vm1715, %v1694, %v1285
      %v1728 = vsel %vm1715, %v1695, %v1287
      %v1729 = vsel %vm1715, %v1696, %v1289
      %v1730 = vsel %vm1715, %v1697, %v1291
      %v1731 = vsel %vm1715, %v1698, %v1293
      %v1732 = vsel %vm1715, %v1699, %v1295
      %v1733 = vsel %vm1715, %v1700, %v1297
      %v1734 = vsel %vm1715, %v1701, %v1299
      %v1735 = vsel %vm1715, %v1702, %v1301
      %v1736 = vsel %vm1715, %v1703, %v1303
      %v1737 = vsel %vm1715, %v1704, %v1305
      %v1738 = vsel %vm1715, %v1705, %v1307
      %v1739 = vsel %vm1715, %v1706, %v1309
      %v1740 = vsel %vm1715, %v1707, %v1311
      %v1741 = vsel %vm1715, %v1708, %v1313
      %v1742 = vsel %vm1715, %v1709, %v1315
      %v1743 = vsel %vm1715, %v1710, %v1317
      %v1744 = vsel %vm1715, %v1711, %v1319
      %v1745 = vsel %vm1715, %v1712, %v1321
      %v1746 = vsel %vm1715, %v1713, %v1323
      %v1747 = vsel %vm1715, %v1714, %v1325
      %vm1748 = vcmask 457728
      %v1749 = vsel %vm1748, %v1716, %v1359
      %v1750 = vsel %vm1748, %v1717, %v1361
      %v1751 = vsel %vm1748, %v1718, %v1363
      %v1752 = vsel %vm1748, %v1719, %v1365
      %v1753 = vsel %vm1748, %v1720, %v1367
      %v1754 = vsel %vm1748, %v1721, %v1369
      %v1755 = vsel %vm1748, %v1722, %v1371
      %v1756 = vsel %vm1748, %v1723, %v1373
      %v1757 = vsel %vm1748, %v1724, %v1375
      %v1758 = vsel %vm1748, %v1725, %v1377
      %v1759 = vsel %vm1748, %v1726, %v1379
      %v1760 = vsel %vm1748, %v1727, %v1381
      %v1761 = vsel %vm1748, %v1728, %v1383
      %v1762 = vsel %vm1748, %v1729, %v1385
      %v1763 = vsel %vm1748, %v1730, %v1387
      %v1764 = vsel %vm1748, %v1731, %v1389
      %v1765 = vsel %vm1748, %v1732, %v1391
      %v1766 = vsel %vm1748, %v1733, %v1393
      %v1767 = vsel %vm1748, %v1734, %v1395
      %v1768 = vsel %vm1748, %v1735, %v1397
      %v1769 = vsel %vm1748, %v1736, %v1399
      %v1770 = vsel %vm1748, %v1737, %v1401
      %v1771 = vsel %vm1748, %v1738, %v1403
      %v1772 = vsel %vm1748, %v1739, %v1405
      %v1773 = vsel %vm1748, %v1740, %v1407
      %v1774 = vsel %vm1748, %v1741, %v1409
      %v1775 = vsel %vm1748, %v1742, %v1411
      %v1776 = vsel %vm1748, %v1743, %v1413
      %v1777 = vsel %vm1748, %v1744, %v1415
      %v1778 = vsel %vm1748, %v1745, %v1417
      %v1779 = vsel %vm1748, %v1746, %v1419
      %v1780 = vsel %vm1748, %v1747, %v1421
      %vm1781 = vcmask 523264
      %v1782 = vsel %vm1781, %v1749, %v1455
      %v1783 = vsel %vm1781, %v1750, %v1457
      %v1784 = vsel %vm1781, %v1751, %v1459
      %v1785 = vsel %vm1781, %v1752, %v1461
      %v1786 = vsel %vm1781, %v1753, %v1463
      %v1787 = vsel %vm1781, %v1754, %v1465
      %v1788 = vsel %vm1781, %v1755, %v1467
      %v1789 = vsel %vm1781, %v1756, %v1469
      %v1790 = vsel %vm1781, %v1757, %v1471
      %v1791 = vsel %vm1781, %v1758, %v1473
      %v1792 = vsel %vm1781, %v1759, %v1475
      %v1793 = vsel %vm1781, %v1760, %v1477
      %v1794 = vsel %vm1781, %v1761, %v1479
      %v1795 = vsel %vm1781, %v1762, %v1481
      %v1796 = vsel %vm1781, %v1763, %v1483
      %v1797 = vsel %vm1781, %v1764, %v1485
      %v1798 = vsel %vm1781, %v1765, %v1487
      %v1799 = vsel %vm1781, %v1766, %v1489
      %v1800 = vsel %vm1781, %v1767, %v1491
      %v1801 = vsel %vm1781, %v1768, %v1493
      %v1802 = vsel %vm1781, %v1769, %v1495
      %v1803 = vsel %vm1781, %v1770, %v1497
      %v1804 = vsel %vm1781, %v1771, %v1499
      %v1805 = vsel %vm1781, %v1772, %v1501
      %v1806 = vsel %vm1781, %v1773, %v1503
      %v1807 = vsel %vm1781, %v1774, %v1505
      %v1808 = vsel %vm1781, %v1775, %v1507
      %v1809 = vsel %vm1781, %v1776, %v1509
      %v1810 = vsel %vm1781, %v1777, %v1511
      %v1811 = vsel %vm1781, %v1778, %v1513
      %v1812 = vsel %vm1781, %v1779, %v1515
      %v1813 = vsel %vm1781, %v1780, %v1517
      %v1815 = vlaneseq
      %v1816 = vshrl.u32 %v1815, 7
      %v1817 = vsub.s32 0, %v1816
      %v1818 = vrot.slane %v408, %v1817
      %vm1820 = vcmask 588800
      %v1822 = vsel %vm1820, %v1782, 0
      %v1825 = vsel %vm1820, %v1783, 0
      %v1828 = vsel %vm1820, %v1784, 0
      %v1831 = vsel %vm1820, %v1785, 0
      %v1834 = vsel %vm1820, %v1786, 0
      %v1837 = vsel %vm1820, %v1787, 0
      %v1840 = vsel %vm1820, %v1788, 0
      %v1843 = vsel %vm1820, %v1789, 0
      %v1846 = vsel %vm1820, %v1790, 0
      %v1849 = vsel %vm1820, %v1791, 0
      %v1852 = vsel %vm1820, %v1792, 0
      %v1855 = vsel %vm1820, %v1793, 0
      %v1858 = vsel %vm1820, %v1794, 0
      %v1861 = vsel %vm1820, %v1795, 0
      %v1864 = vsel %vm1820, %v1796, 0
      %v1867 = vsel %vm1820, %v1797, 0
      %v1870 = vsel %vm1820, %v1798, 0
      %v1873 = vsel %vm1820, %v1799, 0
      %v1876 = vsel %vm1820, %v1800, 0
      %v1879 = vsel %vm1820, %v1801, 0
      %v1882 = vsel %vm1820, %v1802, 0
      %v1885 = vsel %vm1820, %v1803, 0
      %v1888 = vsel %vm1820, %v1804, 0
      %v1891 = vsel %vm1820, %v1805, 0
      %v1894 = vsel %vm1820, %v1806, 0
      %v1897 = vsel %vm1820, %v1807, 0
      %v1900 = vsel %vm1820, %v1808, 0
      %v1903 = vsel %vm1820, %v1809, 0
      %v1906 = vsel %vm1820, %v1810, 0
      %v1909 = vsel %vm1820, %v1811, 0
      %v1912 = vsel %vm1820, %v1812, 0
      %v1915 = vsel %vm1820, %v1813, 0
      %1917 = vmatprep.subr.mxu0 0.0
      %1918 = vmatpush1.msra.mxu0 0.0
      %1919 = vmatprep.subr.mxu0 0.0
      %1920 = vmatpush1.msra.mxu0 0.0
      %1921 = vmatprep.subr.mxu0 0.0
      %1922 = vmatpush1.msra.mxu0 0.0
      %1923 = vmatprep.subr.mxu0 0.0
      %1924 = vmatpush1.msra.mxu0 0.0
      %1925 = vmatprep.subr.mxu0 0.0
      %1926 = vmatpush1.msra.mxu0 0.0
      %1927 = vmatprep.subr.mxu0 0.0
      %1928 = vmatpush1.msra.mxu0 0.0
      %1929 = vmatprep.subr.mxu0 0.0
      %1930 = vmatpush1.msra.mxu0 0.0
      %1931 = vmatprep.subr.mxu0 0.0
      %1932 = vmatpush1.msra.mxu0 %v407
      %1933 = vmatprep.subr.mxu0 0.0
      %1934 = vmatpush1.msra.mxu0 %v406
      %1935 = vmatprep.subr.mxu0 0.0
      %1936 = vmatpush1.msra.mxu0 %v405
      %1937 = vmatprep.subr.mxu0 0.0
      %1938 = vmatpush1.msra.mxu0 %v404
      %1939 = vmatprep.subr.mxu0 0.0
      %1940 = vmatpush1.msra.mxu0 %v403
      %1941 = vmatprep.subr.mxu0 0.0
      %1942 = vmatpush1.msra.mxu0 %v402
      %1943 = vmatprep.subr.mxu0 0.0
      %1944 = vmatpush1.msra.mxu0 %v401
      %1945 = vmatprep.subr.mxu0 0.0
      %1946 = vmatpush1.msra.mxu0 %v400
      %1947 = vmatprep.subr.mxu0 0.0
      %1948 = vmatpush1.msra.mxu0 %v399
      %1949 = vmatprep.subr.mxu0 0.0
      %1950 = vmatpush2.msra.mxu0 0.0
      %1951 = vmatprep.subr.mxu0 0.0
      %1952 = vmatpush2.msra.mxu0 0.0
      %1953 = vmatprep.subr.mxu0 0.0
      %1954 = vmatpush2.msra.mxu0 0.0
      %1955 = vmatprep.subr.mxu0 0.0
      %1956 = vmatpush2.msra.mxu0 0.0
      %1957 = vmatprep.subr.mxu0 0.0
      %1958 = vmatpush2.msra.mxu0 0.0
      %1959 = vmatprep.subr.mxu0 0.0
      %1960 = vmatpush2.msra.mxu0 0.0
      %1961 = vmatprep.subr.mxu0 0.0
      %1962 = vmatpush2.msra.mxu0 0.0
      %1963 = vmatprep.subr.mxu0 0.0
      %1964 = vmatpush2.msra.mxu0 0.0
      %1965 = vmatprep.subr.mxu0 0.0
      %1966 = vmatpush2.msra.mxu0 0.0
      %1967 = vmatprep.subr.mxu0 0.0
      %1968 = vmatpush2.msra.mxu0 0.0
      %1969 = vmatprep.subr.mxu0 0.0
      %1970 = vmatpush2.msra.mxu0 0.0
      %1971 = vmatprep.subr.mxu0 0.0
      %1972 = vmatpush2.msra.mxu0 0.0
      %1973 = vmatprep.subr.mxu0 0.0
      %1974 = vmatpush2.msra.mxu0 0.0
      %1975 = vmatprep.subr.mxu0 0.0
      %1976 = vmatpush2.msra.mxu0 0.0
      %1977 = vmatprep.subr.mxu0 0.0
      %1978 = vmatpush2.msra.mxu0 0.0
      %1979 = vmatprep.subr.mxu0 0.0
      %1980 = vmatpush2.msra.mxu0 0.0
      %1981 = vmatprep.mubr.f32.mxu0 0.0
      %1982 = vmatmul.mubr.f32.gmra.mxu0 %v1822
      %v1983 = vpop.f32.mrf.mxu0
      %v1984 = vadd.f32 %v1818, %v1983
      %v1985 = vpop.f32.mrf.mxu0
      %1986 = vmatprep.mubr.f32.mxu0 0.0
      %1987 = vmatmul.mubr.f32.gmra.mxu0 %v1825
      %v1988 = vpop.f32.mrf.mxu0
      %v1989 = vadd.f32 %v1818, %v1988
      %v1990 = vpop.f32.mrf.mxu0
      %1991 = vmatprep.mubr.f32.mxu0 0.0
      %1992 = vmatmul.mubr.f32.gmra.mxu0 %v1828
      %v1993 = vpop.f32.mrf.mxu0
      %v1994 = vadd.f32 %v1818, %v1993
      %v1995 = vpop.f32.mrf.mxu0
      %1996 = vmatprep.mubr.f32.mxu0 0.0
      %1997 = vmatmul.mubr.f32.gmra.mxu0 %v1831
      %v1998 = vpop.f32.mrf.mxu0
      %v1999 = vadd.f32 %v1818, %v1998
      %v2000 = vpop.f32.mrf.mxu0
      %2001 = vmatprep.mubr.f32.mxu0 0.0
      %2002 = vmatmul.mubr.f32.gmra.mxu0 %v1834
      %v2003 = vpop.f32.mrf.mxu0
      %v2004 = vadd.f32 %v1818, %v2003
      %v2005 = vpop.f32.mrf.mxu0
      %2006 = vmatprep.mubr.f32.mxu0 0.0
      %2007 = vmatmul.mubr.f32.gmra.mxu0 %v1837
      %v2008 = vpop.f32.mrf.mxu0
      %v2009 = vadd.f32 %v1818, %v2008
      %v2010 = vpop.f32.mrf.mxu0
      %2011 = vmatprep.mubr.f32.mxu0 0.0
      %2012 = vmatmul.mubr.f32.gmra.mxu0 %v1840
      %v2013 = vpop.f32.mrf.mxu0
      %v2014 = vadd.f32 %v1818, %v2013
      %v2015 = vpop.f32.mrf.mxu0
      %2016 = vmatprep.mubr.f32.mxu0 0.0
      %2017 = vmatmul.mubr.f32.gmra.mxu0 %v1843
      %v2018 = vpop.f32.mrf.mxu0
      %v2019 = vadd.f32 %v1818, %v2018
      %v2020 = vpop.f32.mrf.mxu0
      %2021 = vmatprep.mubr.f32.mxu0 0.0
      %2022 = vmatmul.mubr.f32.gmra.mxu0 %v1846
      %v2023 = vpop.f32.mrf.mxu0
      %v2024 = vadd.f32 %v1818, %v2023
      %v2025 = vpop.f32.mrf.mxu0
      %2026 = vmatprep.mubr.f32.mxu0 0.0
      %2027 = vmatmul.mubr.f32.gmra.mxu0 %v1849
      %v2028 = vpop.f32.mrf.mxu0
      %v2029 = vadd.f32 %v1818, %v2028
      %v2030 = vpop.f32.mrf.mxu0
      %2031 = vmatprep.mubr.f32.mxu0 0.0
      %2032 = vmatmul.mubr.f32.gmra.mxu0 %v1852
      %v2033 = vpop.f32.mrf.mxu0
      %v2034 = vadd.f32 %v1818, %v2033
      %v2035 = vpop.f32.mrf.mxu0
      %2036 = vmatprep.mubr.f32.mxu0 0.0
      %2037 = vmatmul.mubr.f32.gmra.mxu0 %v1855
      %v2038 = vpop.f32.mrf.mxu0
      %v2039 = vadd.f32 %v1818, %v2038
      %v2040 = vpop.f32.mrf.mxu0
      %2041 = vmatprep.mubr.f32.mxu0 0.0
      %2042 = vmatmul.mubr.f32.gmra.mxu0 %v1858
      %v2043 = vpop.f32.mrf.mxu0
      %v2044 = vadd.f32 %v1818, %v2043
      %v2045 = vpop.f32.mrf.mxu0
      %2046 = vmatprep.mubr.f32.mxu0 0.0
      %2047 = vmatmul.mubr.f32.gmra.mxu0 %v1861
      %v2048 = vpop.f32.mrf.mxu0
      %v2049 = vadd.f32 %v1818, %v2048
      %v2050 = vpop.f32.mrf.mxu0
      %2051 = vmatprep.mubr.f32.mxu0 0.0
      %2052 = vmatmul.mubr.f32.gmra.mxu0 %v1864
      %v2053 = vpop.f32.mrf.mxu0
      %v2054 = vadd.f32 %v1818, %v2053
      %v2055 = vpop.f32.mrf.mxu0
      %2056 = vmatprep.mubr.f32.mxu0 0.0
      %2057 = vmatmul.mubr.f32.gmra.mxu0 %v1867
      %v2058 = vpop.f32.mrf.mxu0
      %v2059 = vadd.f32 %v1818, %v2058
      %v2060 = vpop.f32.mrf.mxu0
      %2061 = vmatprep.mubr.f32.mxu0 0.0
      %2062 = vmatmul.mubr.f32.gmra.mxu0 %v1870
      %v2063 = vpop.f32.mrf.mxu0
      %v2064 = vadd.f32 %v1818, %v2063
      %v2065 = vpop.f32.mrf.mxu0
      %2066 = vmatprep.mubr.f32.mxu0 0.0
      %2067 = vmatmul.mubr.f32.gmra.mxu0 %v1873
      %v2068 = vpop.f32.mrf.mxu0
      %v2069 = vadd.f32 %v1818, %v2068
      %v2070 = vpop.f32.mrf.mxu0
      %2071 = vmatprep.mubr.f32.mxu0 0.0
      %2072 = vmatmul.mubr.f32.gmra.mxu0 %v1876
      %v2073 = vpop.f32.mrf.mxu0
      %v2074 = vadd.f32 %v1818, %v2073
      %v2075 = vpop.f32.mrf.mxu0
      %2076 = vmatprep.mubr.f32.mxu0 0.0
      %2077 = vmatmul.mubr.f32.gmra.mxu0 %v1879
      %v2078 = vpop.f32.mrf.mxu0
      %v2079 = vadd.f32 %v1818, %v2078
      %v2080 = vpop.f32.mrf.mxu0
      %2081 = vmatprep.mubr.f32.mxu0 0.0
      %2082 = vmatmul.mubr.f32.gmra.mxu0 %v1882
      %v2083 = vpop.f32.mrf.mxu0
      %v2084 = vadd.f32 %v1818, %v2083
      %v2085 = vpop.f32.mrf.mxu0
      %2086 = vmatprep.mubr.f32.mxu0 0.0
      %2087 = vmatmul.mubr.f32.gmra.mxu0 %v1885
      %v2088 = vpop.f32.mrf.mxu0
      %v2089 = vadd.f32 %v1818, %v2088
      %v2090 = vpop.f32.mrf.mxu0
      %2091 = vmatprep.mubr.f32.mxu0 0.0
      %2092 = vmatmul.mubr.f32.gmra.mxu0 %v1888
      %v2093 = vpop.f32.mrf.mxu0
      %v2094 = vadd.f32 %v1818, %v2093
      %v2095 = vpop.f32.mrf.mxu0
      %2096 = vmatprep.mubr.f32.mxu0 0.0
      %2097 = vmatmul.mubr.f32.gmra.mxu0 %v1891
      %v2098 = vpop.f32.mrf.mxu0
      %v2099 = vadd.f32 %v1818, %v2098
      %v2100 = vpop.f32.mrf.mxu0
      %2101 = vmatprep.mubr.f32.mxu0 0.0
      %2102 = vmatmul.mubr.f32.gmra.mxu0 %v1894
      %v2103 = vpop.f32.mrf.mxu0
      %v2104 = vadd.f32 %v1818, %v2103
      %v2105 = vpop.f32.mrf.mxu0
      %2106 = vmatprep.mubr.f32.mxu0 0.0
      %2107 = vmatmul.mubr.f32.gmra.mxu0 %v1897
      %v2108 = vpop.f32.mrf.mxu0
      %v2109 = vadd.f32 %v1818, %v2108
      %v2110 = vpop.f32.mrf.mxu0
      %2111 = vmatprep.mubr.f32.mxu0 0.0
      %2112 = vmatmul.mubr.f32.gmra.mxu0 %v1900
      %v2113 = vpop.f32.mrf.mxu0
      %v2114 = vadd.f32 %v1818, %v2113
      %v2115 = vpop.f32.mrf.mxu0
      %2116 = vmatprep.mubr.f32.mxu0 0.0
      %2117 = vmatmul.mubr.f32.gmra.mxu0 %v1903
      %v2118 = vpop.f32.mrf.mxu0
      %v2119 = vadd.f32 %v1818, %v2118
      %v2120 = vpop.f32.mrf.mxu0
      %2121 = vmatprep.mubr.f32.mxu0 0.0
      %2122 = vmatmul.mubr.f32.gmra.mxu0 %v1906
      %v2123 = vpop.f32.mrf.mxu0
      %v2124 = vadd.f32 %v1818, %v2123
      %v2125 = vpop.f32.mrf.mxu0
      %2126 = vmatprep.mubr.f32.mxu0 0.0
      %2127 = vmatmul.mubr.f32.gmra.mxu0 %v1909
      %v2128 = vpop.f32.mrf.mxu0
      %v2129 = vadd.f32 %v1818, %v2128
      %v2130 = vpop.f32.mrf.mxu0
      %2131 = vmatprep.mubr.f32.mxu0 0.0
      %2132 = vmatmul.mubr.f32.gmra.mxu0 %v1912
      %v2133 = vpop.f32.mrf.mxu0
      %v2134 = vadd.f32 %v1818, %v2133
      %v2135 = vpop.f32.mrf.mxu0
      %2136 = vmatprep.mubr.f32.mxu0 0.0
      %2137 = vmatmul.mubr.f32.gmra.mxu0 %v1915
      %v2138 = vpop.f32.mrf.mxu0
      %v2139 = vadd.f32 %v1818, %v2138
      %v2140 = vpop.f32.mrf.mxu0
      %2141 = vdwg.mxu0
      %vm2142 = vcmp.ge.f32.partialorder %v1984, 0.0
      %vm2143 = vcmp.ge.f32.partialorder %v1989, 0.0
      %vm2144 = vcmp.ge.f32.partialorder %v1994, 0.0
      %vm2145 = vcmp.ge.f32.partialorder %v1999, 0.0
      %vm2146 = vcmp.ge.f32.partialorder %v2004, 0.0
      %vm2147 = vcmp.ge.f32.partialorder %v2009, 0.0
      %vm2148 = vcmp.ge.f32.partialorder %v2014, 0.0
      %vm2149 = vcmp.ge.f32.partialorder %v2019, 0.0
      %vm2150 = vcmp.ge.f32.partialorder %v2024, 0.0
      %vm2151 = vcmp.ge.f32.partialorder %v2029, 0.0
      %vm2152 = vcmp.ge.f32.partialorder %v2034, 0.0
      %vm2153 = vcmp.ge.f32.partialorder %v2039, 0.0
      %vm2154 = vcmp.ge.f32.partialorder %v2044, 0.0
      %vm2155 = vcmp.ge.f32.partialorder %v2049, 0.0
      %vm2156 = vcmp.ge.f32.partialorder %v2054, 0.0
      %vm2157 = vcmp.ge.f32.partialorder %v2059, 0.0
      %vm2158 = vcmp.ge.f32.partialorder %v2064, 0.0
      %vm2159 = vcmp.ge.f32.partialorder %v2069, 0.0
      %vm2160 = vcmp.ge.f32.partialorder %v2074, 0.0
      %vm2161 = vcmp.ge.f32.partialorder %v2079, 0.0
      %vm2162 = vcmp.ge.f32.partialorder %v2084, 0.0
      %vm2163 = vcmp.ge.f32.partialorder %v2089, 0.0
      %vm2164 = vcmp.ge.f32.partialorder %v2094, 0.0
      %vm2165 = vcmp.ge.f32.partialorder %v2099, 0.0
      %vm2166 = vcmp.ge.f32.partialorder %v2104, 0.0
      %vm2167 = vcmp.ge.f32.partialorder %v2109, 0.0
      %vm2168 = vcmp.ge.f32.partialorder %v2114, 0.0
      %vm2169 = vcmp.ge.f32.partialorder %v2119, 0.0
      %vm2170 = vcmp.ge.f32.partialorder %v2124, 0.0
      %vm2171 = vcmp.ge.f32.partialorder %v2129, 0.0
      %vm2172 = vcmp.ge.f32.partialorder %v2134, 0.0
      %vm2173 = vcmp.ge.f32.partialorder %v2139, 0.0
      %v2174 = vmul.f32 %v1984, 0.1
      %v2175 = vmul.f32 %v1989, 0.1
      %v2176 = vmul.f32 %v1994, 0.1
      %v2177 = vmul.f32 %v1999, 0.1
      %v2178 = vmul.f32 %v2004, 0.1
      %v2179 = vmul.f32 %v2009, 0.1
      %v2180 = vmul.f32 %v2014, 0.1
      %v2181 = vmul.f32 %v2019, 0.1
      %v2182 = vmul.f32 %v2024, 0.1
      %v2183 = vmul.f32 %v2029, 0.1
      %v2184 = vmul.f32 %v2034, 0.1
      %v2185 = vmul.f32 %v2039, 0.1
      %v2186 = vmul.f32 %v2044, 0.1
      %v2187 = vmul.f32 %v2049, 0.1
      %v2188 = vmul.f32 %v2054, 0.1
      %v2189 = vmul.f32 %v2059, 0.1
      %v2190 = vmul.f32 %v2064, 0.1
      %v2191 = vmul.f32 %v2069, 0.1
      %v2192 = vmul.f32 %v2074, 0.1
      %v2193 = vmul.f32 %v2079, 0.1
      %v2194 = vmul.f32 %v2084, 0.1
      %v2195 = vmul.f32 %v2089, 0.1
      %v2196 = vmul.f32 %v2094, 0.1
      %v2197 = vmul.f32 %v2099, 0.1
      %v2198 = vmul.f32 %v2104, 0.1
      %v2199 = vmul.f32 %v2109, 0.1
      %v2200 = vmul.f32 %v2114, 0.1
      %v2201 = vmul.f32 %v2119, 0.1
      %v2202 = vmul.f32 %v2124, 0.1
      %v2203 = vmul.f32 %v2129, 0.1
      %v2204 = vmul.f32 %v2134, 0.1
      %v2205 = vmul.f32 %v2139, 0.1
      %v2206 = vsel %vm2142, %v1984, %v2174
      %v2207 = vsel %vm2143, %v1989, %v2175
      %v2208 = vsel %vm2144, %v1994, %v2176
      %v2209 = vsel %vm2145, %v1999, %v2177
      %v2210 = vsel %vm2146, %v2004, %v2178
      %v2211 = vsel %vm2147, %v2009, %v2179
      %v2212 = vsel %vm2148, %v2014, %v2180
      %v2213 = vsel %vm2149, %v2019, %v2181
      %v2214 = vsel %vm2150, %v2024, %v2182
      %v2215 = vsel %vm2151, %v2029, %v2183
      %v2216 = vsel %vm2152, %v2034, %v2184
      %v2217 = vsel %vm2153, %v2039, %v2185
      %v2218 = vsel %vm2154, %v2044, %v2186
      %v2219 = vsel %vm2155, %v2049, %v2187
      %v2220 = vsel %vm2156, %v2054, %v2188
      %v2221 = vsel %vm2157, %v2059, %v2189
      %v2222 = vsel %vm2158, %v2064, %v2190
      %v2223 = vsel %vm2159, %v2069, %v2191
      %v2224 = vsel %vm2160, %v2074, %v2192
      %v2225 = vsel %vm2161, %v2079, %v2193
      %v2226 = vsel %vm2162, %v2084, %v2194
      %v2227 = vsel %vm2163, %v2089, %v2195
      %v2228 = vsel %vm2164, %v2094, %v2196
      %v2229 = vsel %vm2165, %v2099, %v2197
      %v2230 = vsel %vm2166, %v2104, %v2198
      %v2231 = vsel %vm2167, %v2109, %v2199
      %v2232 = vsel %vm2168, %v2114, %v2200
      %v2233 = vsel %vm2169, %v2119, %v2201
      %v2234 = vsel %vm2170, %v2124, %v2202
      %v2235 = vsel %vm2171, %v2129, %v2203
      %v2236 = vsel %vm2172, %v2134, %v2204
      %v2237 = vsel %vm2173, %v2139, %v2205
      %s2238 = scalar_lea.vmem %s1, 72
      %v2239 = vld [vmem:[%s2238] sm:$0xff]
      %v2240 = vld [vmem:[%s2238 + $0x8] sm:$0xff]
      %v2241 = vld [vmem:[%s2238 + $0x10] sm:$0xff]
      %v2242 = vld [vmem:[%s2238 + $0x18] sm:$0xff]
      %v2243 = vld [vmem:[%s2238 + $0x20] sm:$0xff]
      %v2244 = vld [vmem:[%s2238 + $0x28] sm:$0xff]
      %v2245 = vld [vmem:[%s2238 + $0x30] sm:$0xff]
      %v2246 = vld [vmem:[%s2238 + $0x38] sm:$0xff]
      %v2247 = vld [vmem:[%s2238 + $0x40] sm:$0xff]
      %s2248 = scalar_lea.vmem %s2, 1
      %v2249 = vld [vmem:[%s2248] sm:$0x1]
      %v2282 = vrot.slane %v2206, 7
      %v2283 = vrot.slane %v2207, 7
      %v2284 = vsel %vm442, %v2282, %v2283
      %v2285 = vrot.slane %v2208, 7
      %v2286 = vrot.slane %v2209, 7
      %v2287 = vsel %vm442, %v2285, %v2286
      %v2288 = vrot.slane %v2210, 7
      %v2289 = vrot.slane %v2211, 7
      %v2290 = vsel %vm442, %v2288, %v2289
      %v2291 = vrot.slane %v2212, 7
      %v2292 = vrot.slane %v2213, 7
      %v2293 = vsel %vm442, %v2291, %v2292
      %v2294 = vrot.slane %v2214, 7
      %v2295 = vrot.slane %v2215, 7
      %v2296 = vsel %vm442, %v2294, %v2295
      %v2297 = vrot.slane %v2216, 7
      %v2298 = vrot.slane %v2217, 7
      %v2299 = vsel %vm442, %v2297, %v2298
      %v2300 = vrot.slane %v2218, 7
      %v2301 = vrot.slane %v2219, 7
      %v2302 = vsel %vm442, %v2300, %v2301
      %v2303 = vrot.slane %v2220, 7
      %v2304 = vrot.slane %v2221, 7
      %v2305 = vsel %vm442, %v2303, %v2304
      %v2306 = vrot.slane %v2222, 7
      %v2307 = vrot.slane %v2223, 7
      %v2308 = vsel %vm442, %v2306, %v2307
      %v2309 = vrot.slane %v2224, 7
      %v2310 = vrot.slane %v2225, 7
      %v2311 = vsel %vm442, %v2309, %v2310
      %v2312 = vrot.slane %v2226, 7
      %v2313 = vrot.slane %v2227, 7
      %v2314 = vsel %vm442, %v2312, %v2313
      %v2315 = vrot.slane %v2228, 7
      %v2316 = vrot.slane %v2229, 7
      %v2317 = vsel %vm442, %v2315, %v2316
      %v2318 = vrot.slane %v2230, 7
      %v2319 = vrot.slane %v2231, 7
      %v2320 = vsel %vm442, %v2318, %v2319
      %v2321 = vrot.slane %v2232, 7
      %v2322 = vrot.slane %v2233, 7
      %v2323 = vsel %vm442, %v2321, %v2322
      %v2324 = vrot.slane %v2234, 7
      %v2325 = vrot.slane %v2235, 7
      %v2326 = vsel %vm442, %v2324, %v2325
      %v2327 = vrot.slane %v2236, 7
      %v2328 = vrot.slane %v2237, 7
      %v2329 = vsel %vm442, %v2327, %v2328
      %v2377 = vsel %vm442, 0.0, %v2282
      %v2378 = vsel %vm442, 0.0, %v2285
      %v2379 = vsel %vm442, 0.0, %v2288
      %v2380 = vsel %vm442, 0.0, %v2291
      %v2381 = vsel %vm442, 0.0, %v2294
      %v2382 = vsel %vm442, 0.0, %v2297
      %v2383 = vsel %vm442, 0.0, %v2300
      %v2384 = vsel %vm442, 0.0, %v2303
      %v2385 = vsel %vm442, 0.0, %v2306
      %v2386 = vsel %vm442, 0.0, %v2309
      %v2387 = vsel %vm442, 0.0, %v2312
      %v2388 = vsel %vm442, 0.0, %v2315
      %v2389 = vsel %vm442, 0.0, %v2318
      %v2390 = vsel %vm442, 0.0, %v2321
      %v2391 = vsel %vm442, 0.0, %v2324
      %v2392 = vsel %vm442, 0.0, %v2327
      %v2393 = vsel %vm442, %v2283, 0.0
      %v2394 = vsel %vm442, %v2286, 0.0
      %v2395 = vsel %vm442, %v2289, 0.0
      %v2396 = vsel %vm442, %v2292, 0.0
      %v2397 = vsel %vm442, %v2295, 0.0
      %v2398 = vsel %vm442, %v2298, 0.0
      %v2399 = vsel %vm442, %v2301, 0.0
      %v2400 = vsel %vm442, %v2304, 0.0
      %v2401 = vsel %vm442, %v2307, 0.0
      %v2402 = vsel %vm442, %v2310, 0.0
      %v2403 = vsel %vm442, %v2313, 0.0
      %v2404 = vsel %vm442, %v2316, 0.0
      %v2405 = vsel %vm442, %v2319, 0.0
      %v2406 = vsel %vm442, %v2322, 0.0
      %v2407 = vsel %vm442, %v2325, 0.0
      %v2408 = vsel %vm442, %v2328, 0.0
      %v2439 = vrot.slane %v2377, 1
      %v2440 = vrot.slane %v2284, 1
      %v2441 = vsel %vm608, %v2439, %v2440
      %v2442 = vrot.slane %v2393, 1
      %v2443 = vsel %vm608, %v2440, %v2442
      %v2444 = vrot.slane %v2378, 1
      %v2445 = vrot.slane %v2287, 1
      %v2446 = vsel %vm608, %v2444, %v2445
      %v2447 = vrot.slane %v2394, 1
      %v2448 = vsel %vm608, %v2445, %v2447
      %v2449 = vrot.slane %v2379, 1
      %v2450 = vrot.slane %v2290, 1
      %v2451 = vsel %vm608, %v2449, %v2450
      %v2452 = vrot.slane %v2395, 1
      %v2453 = vsel %vm608, %v2450, %v2452
      %v2454 = vrot.slane %v2380, 1
      %v2455 = vrot.slane %v2293, 1
      %v2456 = vsel %vm608, %v2454, %v2455
      %v2457 = vrot.slane %v2396, 1
      %v2458 = vsel %vm608, %v2455, %v2457
      %v2459 = vrot.slane %v2381, 1
      %v2460 = vrot.slane %v2296, 1
      %v2461 = vsel %vm608, %v2459, %v2460
      %v2462 = vrot.slane %v2397, 1
      %v2463 = vsel %vm608, %v2460, %v2462
      %v2464 = vrot.slane %v2382, 1
      %v2465 = vrot.slane %v2299, 1
      %v2466 = vsel %vm608, %v2464, %v2465
      %v2467 = vrot.slane %v2398, 1
      %v2468 = vsel %vm608, %v2465, %v2467
      %v2469 = vrot.slane %v2383, 1
      %v2470 = vrot.slane %v2302, 1
      %v2471 = vsel %vm608, %v2469, %v2470
      %v2472 = vrot.slane %v2399, 1
      %v2473 = vsel %vm608, %v2470, %v2472
      %v2474 = vrot.slane %v2384, 1
      %v2475 = vrot.slane %v2305, 1
      %v2476 = vsel %vm608, %v2474, %v2475
      %v2477 = vrot.slane %v2400, 1
      %v2478 = vsel %vm608, %v2475, %v2477
      %v2479 = vrot.slane %v2385, 1
      %v2480 = vrot.slane %v2308, 1
      %v2481 = vsel %vm608, %v2479, %v2480
      %v2482 = vrot.slane %v2401, 1
      %v2483 = vsel %vm608, %v2480, %v2482
      %v2484 = vrot.slane %v2386, 1
      %v2485 = vrot.slane %v2311, 1
      %v2486 = vsel %vm608, %v2484, %v2485
      %v2487 = vrot.slane %v2402, 1
      %v2488 = vsel %vm608, %v2485, %v2487
      %v2489 = vrot.slane %v2387, 1
      %v2490 = vrot.slane %v2314, 1
      %v2491 = vsel %vm608, %v2489, %v2490
      %v2492 = vrot.slane %v2403, 1
      %v2493 = vsel %vm608, %v2490, %v2492
      %v2494 = vrot.slane %v2388, 1
      %v2495 = vrot.slane %v2317, 1
      %v2496 = vsel %vm608, %v2494, %v2495
      %v2497 = vrot.slane %v2404, 1
      %v2498 = vsel %vm608, %v2495, %v2497
      %v2499 = vrot.slane %v2389, 1
      %v2500 = vrot.slane %v2320, 1
      %v2501 = vsel %vm608, %v2499, %v2500
      %v2502 = vrot.slane %v2405, 1
      %v2503 = vsel %vm608, %v2500, %v2502
      %v2504 = vrot.slane %v2390, 1
      %v2505 = vrot.slane %v2323, 1
      %v2506 = vsel %vm608, %v2504, %v2505
      %v2507 = vrot.slane %v2406, 1
      %v2508 = vsel %vm608, %v2505, %v2507
      %v2509 = vrot.slane %v2391, 1
      %v2510 = vrot.slane %v2326, 1
      %v2511 = vsel %vm608, %v2509, %v2510
      %v2512 = vrot.slane %v2407, 1
      %v2513 = vsel %vm608, %v2510, %v2512
      %2514 = vrot.lane.b32.xlu0 %v2441, 8
      %v2515 = vpop.permute.xlu0 %2514
      %2516 = vrot.lane.b32.xlu0 %v2443, 8
      %v2517 = vpop.permute.xlu0 %2516
      %2518 = vrot.lane.b32.xlu0 %v2446, 8
      %v2519 = vpop.permute.xlu0 %2518
      %2520 = vrot.lane.b32.xlu0 %v2448, 8
      %v2521 = vpop.permute.xlu0 %2520
      %2522 = vrot.lane.b32.xlu0 %v2451, 8
      %v2523 = vpop.permute.xlu0 %2522
      %2524 = vrot.lane.b32.xlu0 %v2453, 8
      %v2525 = vpop.permute.xlu0 %2524
      %2526 = vrot.lane.b32.xlu0 %v2456, 8
      %v2527 = vpop.permute.xlu0 %2526
      %2528 = vrot.lane.b32.xlu0 %v2458, 8
      %v2529 = vpop.permute.xlu0 %2528
      %2530 = vrot.lane.b32.xlu0 %v2461, 8
      %v2531 = vpop.permute.xlu0 %2530
      %2532 = vrot.lane.b32.xlu0 %v2463, 8
      %v2533 = vpop.permute.xlu0 %2532
      %2534 = vrot.lane.b32.xlu0 %v2466, 8
      %v2535 = vpop.permute.xlu0 %2534
      %2536 = vrot.lane.b32.xlu0 %v2468, 8
      %v2537 = vpop.permute.xlu0 %2536
      %2538 = vrot.lane.b32.xlu0 %v2471, 8
      %v2539 = vpop.permute.xlu0 %2538
      %2540 = vrot.lane.b32.xlu0 %v2473, 8
      %v2541 = vpop.permute.xlu0 %2540
      %2542 = vrot.lane.b32.xlu0 %v2476, 8
      %v2543 = vpop.permute.xlu0 %2542
      %2544 = vrot.lane.b32.xlu0 %v2478, 8
      %v2545 = vpop.permute.xlu0 %2544
      %2546 = vrot.lane.b32.xlu0 %v2481, 8
      %v2547 = vpop.permute.xlu0 %2546
      %2548 = vrot.lane.b32.xlu0 %v2483, 8
      %v2549 = vpop.permute.xlu0 %2548
      %2550 = vrot.lane.b32.xlu0 %v2486, 8
      %v2551 = vpop.permute.xlu0 %2550
      %2552 = vrot.lane.b32.xlu0 %v2488, 8
      %v2553 = vpop.permute.xlu0 %2552
      %2554 = vrot.lane.b32.xlu0 %v2491, 8
      %v2555 = vpop.permute.xlu0 %2554
      %2556 = vrot.lane.b32.xlu0 %v2493, 8
      %v2557 = vpop.permute.xlu0 %2556
      %2558 = vrot.lane.b32.xlu0 %v2496, 8
      %v2559 = vpop.permute.xlu0 %2558
      %2560 = vrot.lane.b32.xlu0 %v2498, 8
      %v2561 = vpop.permute.xlu0 %2560
      %2562 = vrot.lane.b32.xlu0 %v2501, 8
      %v2563 = vpop.permute.xlu0 %2562
      %2564 = vrot.lane.b32.xlu0 %v2503, 8
      %v2565 = vpop.permute.xlu0 %2564
      %2566 = vrot.lane.b32.xlu0 %v2506, 8
      %v2567 = vpop.permute.xlu0 %2566
      %2568 = vrot.lane.b32.xlu0 %v2508, 8
      %v2569 = vpop.permute.xlu0 %2568
      %2570 = vrot.lane.b32.xlu0 %v2511, 8
      %v2571 = vpop.permute.xlu0 %2570
      %2572 = vrot.lane.b32.xlu0 %v2513, 8
      %v2573 = vpop.permute.xlu0 %2572
      %v2604 = vrot.slane %v2377, 2
      %v2605 = vrot.slane %v2284, 2
      %v2606 = vsel %vm785, %v2604, %v2605
      %v2607 = vrot.slane %v2393, 2
      %v2608 = vsel %vm785, %v2605, %v2607
      %v2609 = vrot.slane %v2378, 2
      %v2610 = vrot.slane %v2287, 2
      %v2611 = vsel %vm785, %v2609, %v2610
      %v2612 = vrot.slane %v2394, 2
      %v2613 = vsel %vm785, %v2610, %v2612
      %v2614 = vrot.slane %v2379, 2
      %v2615 = vrot.slane %v2290, 2
      %v2616 = vsel %vm785, %v2614, %v2615
      %v2617 = vrot.slane %v2395, 2
      %v2618 = vsel %vm785, %v2615, %v2617
      %v2619 = vrot.slane %v2380, 2
      %v2620 = vrot.slane %v2293, 2
      %v2621 = vsel %vm785, %v2619, %v2620
      %v2622 = vrot.slane %v2396, 2
      %v2623 = vsel %vm785, %v2620, %v2622
      %v2624 = vrot.slane %v2381, 2
      %v2625 = vrot.slane %v2296, 2
      %v2626 = vsel %vm785, %v2624, %v2625
      %v2627 = vrot.slane %v2397, 2
      %v2628 = vsel %vm785, %v2625, %v2627
      %v2629 = vrot.slane %v2382, 2
      %v2630 = vrot.slane %v2299, 2
      %v2631 = vsel %vm785, %v2629, %v2630
      %v2632 = vrot.slane %v2398, 2
      %v2633 = vsel %vm785, %v2630, %v2632
      %v2634 = vrot.slane %v2383, 2
      %v2635 = vrot.slane %v2302, 2
      %v2636 = vsel %vm785, %v2634, %v2635
      %v2637 = vrot.slane %v2399, 2
      %v2638 = vsel %vm785, %v2635, %v2637
      %v2639 = vrot.slane %v2384, 2
      %v2640 = vrot.slane %v2305, 2
      %v2641 = vsel %vm785, %v2639, %v2640
      %v2642 = vrot.slane %v2400, 2
      %v2643 = vsel %vm785, %v2640, %v2642
      %v2644 = vrot.slane %v2385, 2
      %v2645 = vrot.slane %v2308, 2
      %v2646 = vsel %vm785, %v2644, %v2645
      %v2647 = vrot.slane %v2401, 2
      %v2648 = vsel %vm785, %v2645, %v2647
      %v2649 = vrot.slane %v2386, 2
      %v2650 = vrot.slane %v2311, 2
      %v2651 = vsel %vm785, %v2649, %v2650
      %v2652 = vrot.slane %v2402, 2
      %v2653 = vsel %vm785, %v2650, %v2652
      %v2654 = vrot.slane %v2387, 2
      %v2655 = vrot.slane %v2314, 2
      %v2656 = vsel %vm785, %v2654, %v2655
      %v2657 = vrot.slane %v2403, 2
      %v2658 = vsel %vm785, %v2655, %v2657
      %v2659 = vrot.slane %v2388, 2
      %v2660 = vrot.slane %v2317, 2
      %v2661 = vsel %vm785, %v2659, %v2660
      %v2662 = vrot.slane %v2404, 2
      %v2663 = vsel %vm785, %v2660, %v2662
      %v2664 = vrot.slane %v2389, 2
      %v2665 = vrot.slane %v2320, 2
      %v2666 = vsel %vm785, %v2664, %v2665
      %v2667 = vrot.slane %v2405, 2
      %v2668 = vsel %vm785, %v2665, %v2667
      %v2669 = vrot.slane %v2390, 2
      %v2670 = vrot.slane %v2323, 2
      %v2671 = vsel %vm785, %v2669, %v2670
      %v2672 = vrot.slane %v2406, 2
      %v2673 = vsel %vm785, %v2670, %v2672
      %v2674 = vrot.slane %v2391, 2
      %v2675 = vrot.slane %v2326, 2
      %v2676 = vsel %vm785, %v2674, %v2675
      %v2677 = vrot.slane %v2407, 2
      %v2678 = vsel %vm785, %v2675, %v2677
      %2679 = vrot.lane.b32.xlu0 %v2606, 16
      %v2680 = vpop.permute.xlu0 %2679
      %2681 = vrot.lane.b32.xlu0 %v2608, 16
      %v2682 = vpop.permute.xlu0 %2681
      %2683 = vrot.lane.b32.xlu0 %v2611, 16
      %v2684 = vpop.permute.xlu0 %2683
      %2685 = vrot.lane.b32.xlu0 %v2613, 16
      %v2686 = vpop.permute.xlu0 %2685
      %2687 = vrot.lane.b32.xlu0 %v2616, 16
      %v2688 = vpop.permute.xlu0 %2687
      %2689 = vrot.lane.b32.xlu0 %v2618, 16
      %v2690 = vpop.permute.xlu0 %2689
      %2691 = vrot.lane.b32.xlu0 %v2621, 16
      %v2692 = vpop.permute.xlu0 %2691
      %2693 = vrot.lane.b32.xlu0 %v2623, 16
      %v2694 = vpop.permute.xlu0 %2693
      %2695 = vrot.lane.b32.xlu0 %v2626, 16
      %v2696 = vpop.permute.xlu0 %2695
      %2697 = vrot.lane.b32.xlu0 %v2628, 16
      %v2698 = vpop.permute.xlu0 %2697
      %2699 = vrot.lane.b32.xlu0 %v2631, 16
      %v2700 = vpop.permute.xlu0 %2699
      %2701 = vrot.lane.b32.xlu0 %v2633, 16
      %v2702 = vpop.permute.xlu0 %2701
      %2703 = vrot.lane.b32.xlu0 %v2636, 16
      %v2704 = vpop.permute.xlu0 %2703
      %2705 = vrot.lane.b32.xlu0 %v2638, 16
      %v2706 = vpop.permute.xlu0 %2705
      %2707 = vrot.lane.b32.xlu0 %v2641, 16
      %v2708 = vpop.permute.xlu0 %2707
      %2709 = vrot.lane.b32.xlu0 %v2643, 16
      %v2710 = vpop.permute.xlu0 %2709
      %2711 = vrot.lane.b32.xlu0 %v2646, 16
      %v2712 = vpop.permute.xlu0 %2711
      %2713 = vrot.lane.b32.xlu0 %v2648, 16
      %v2714 = vpop.permute.xlu0 %2713
      %2715 = vrot.lane.b32.xlu0 %v2651, 16
      %v2716 = vpop.permute.xlu0 %2715
      %2717 = vrot.lane.b32.xlu0 %v2653, 16
      %v2718 = vpop.permute.xlu0 %2717
      %2719 = vrot.lane.b32.xlu0 %v2656, 16
      %v2720 = vpop.permute.xlu0 %2719
      %2721 = vrot.lane.b32.xlu0 %v2658, 16
      %v2722 = vpop.permute.xlu0 %2721
      %2723 = vrot.lane.b32.xlu0 %v2661, 16
      %v2724 = vpop.permute.xlu0 %2723
      %2725 = vrot.lane.b32.xlu0 %v2663, 16
      %v2726 = vpop.permute.xlu0 %2725
      %2727 = vrot.lane.b32.xlu0 %v2666, 16
      %v2728 = vpop.permute.xlu0 %2727
      %2729 = vrot.lane.b32.xlu0 %v2668, 16
      %v2730 = vpop.permute.xlu0 %2729
      %2731 = vrot.lane.b32.xlu0 %v2671, 16
      %v2732 = vpop.permute.xlu0 %2731
      %2733 = vrot.lane.b32.xlu0 %v2673, 16
      %v2734 = vpop.permute.xlu0 %2733
      %2735 = vrot.lane.b32.xlu0 %v2676, 16
      %v2736 = vpop.permute.xlu0 %2735
      %2737 = vrot.lane.b32.xlu0 %v2678, 16
      %v2738 = vpop.permute.xlu0 %2737
      %2770 = vrot.lane.b32.xlu0 %v2377, 24
      %v2771 = vpop.permute.xlu0 %2770
      %2772 = vrot.lane.b32.xlu0 %v2284, 24
      %v2773 = vpop.permute.xlu0 %2772
      %2774 = vrot.lane.b32.xlu0 %v2378, 24
      %v2775 = vpop.permute.xlu0 %2774
      %2776 = vrot.lane.b32.xlu0 %v2287, 24
      %v2777 = vpop.permute.xlu0 %2776
      %2778 = vrot.lane.b32.xlu0 %v2379, 24
      %v2779 = vpop.permute.xlu0 %2778
      %2780 = vrot.lane.b32.xlu0 %v2290, 24
      %v2781 = vpop.permute.xlu0 %2780
      %2782 = vrot.lane.b32.xlu0 %v2380, 24
      %v2783 = vpop.permute.xlu0 %2782
      %2784 = vrot.lane.b32.xlu0 %v2293, 24
      %v2785 = vpop.permute.xlu0 %2784
      %2786 = vrot.lane.b32.xlu0 %v2381, 24
      %v2787 = vpop.permute.xlu0 %2786
      %2788 = vrot.lane.b32.xlu0 %v2296, 24
      %v2789 = vpop.permute.xlu0 %2788
      %2790 = vrot.lane.b32.xlu0 %v2382, 24
      %v2791 = vpop.permute.xlu0 %2790
      %2792 = vrot.lane.b32.xlu0 %v2299, 24
      %v2793 = vpop.permute.xlu0 %2792
      %2794 = vrot.lane.b32.xlu0 %v2383, 24
      %v2795 = vpop.permute.xlu0 %2794
      %2796 = vrot.lane.b32.xlu0 %v2302, 24
      %v2797 = vpop.permute.xlu0 %2796
      %2798 = vrot.lane.b32.xlu0 %v2384, 24
      %v2799 = vpop.permute.xlu0 %2798
      %2800 = vrot.lane.b32.xlu0 %v2305, 24
      %v2801 = vpop.permute.xlu0 %2800
      %2802 = vrot.lane.b32.xlu0 %v2385, 24
      %v2803 = vpop.permute.xlu0 %2802
      %2804 = vrot.lane.b32.xlu0 %v2308, 24
      %v2805 = vpop.permute.xlu0 %2804
      %2806 = vrot.lane.b32.xlu0 %v2386, 24
      %v2807 = vpop.permute.xlu0 %2806
      %2808 = vrot.lane.b32.xlu0 %v2311, 24
      %v2809 = vpop.permute.xlu0 %2808
      %2810 = vrot.lane.b32.xlu0 %v2387, 24
      %v2811 = vpop.permute.xlu0 %2810
      %2812 = vrot.lane.b32.xlu0 %v2314, 24
      %v2813 = vpop.permute.xlu0 %2812
      %2814 = vrot.lane.b32.xlu0 %v2388, 24
      %v2815 = vpop.permute.xlu0 %2814
      %2816 = vrot.lane.b32.xlu0 %v2317, 24
      %v2817 = vpop.permute.xlu0 %2816
      %2818 = vrot.lane.b32.xlu0 %v2389, 24
      %v2819 = vpop.permute.xlu0 %2818
      %2820 = vrot.lane.b32.xlu0 %v2320, 24
      %v2821 = vpop.permute.xlu0 %2820
      %2822 = vrot.lane.b32.xlu0 %v2390, 24
      %v2823 = vpop.permute.xlu0 %2822
      %2824 = vrot.lane.b32.xlu0 %v2323, 24
      %v2825 = vpop.permute.xlu0 %2824
      %2826 = vrot.lane.b32.xlu0 %v2391, 24
      %v2827 = vpop.permute.xlu0 %2826
      %2828 = vrot.lane.b32.xlu0 %v2326, 24
      %v2829 = vpop.permute.xlu0 %2828
      %2830 = vrot.lane.b32.xlu0 %v2392, 24
      %v2831 = vpop.permute.xlu0 %2830
      %2832 = vrot.lane.b32.xlu0 %v2329, 24
      %v2833 = vpop.permute.xlu0 %2832
      %v2867 = vrot.slane %v2392, 1
      %v2868 = vrot.slane %v2329, 1
      %v2869 = vsel %vm608, %v2867, %v2868
      %v2870 = vrot.slane %v2408, 1
      %v2871 = vsel %vm608, %v2868, %v2870
      %2872 = vrot.lane.b32.xlu0 %v2441, 32
      %v2873 = vpop.permute.xlu0 %2872
      %2874 = vrot.lane.b32.xlu0 %v2443, 32
      %v2875 = vpop.permute.xlu0 %2874
      %2876 = vrot.lane.b32.xlu0 %v2446, 32
      %v2877 = vpop.permute.xlu0 %2876
      %2878 = vrot.lane.b32.xlu0 %v2448, 32
      %v2879 = vpop.permute.xlu0 %2878
      %2880 = vrot.lane.b32.xlu0 %v2451, 32
      %v2881 = vpop.permute.xlu0 %2880
      %2882 = vrot.lane.b32.xlu0 %v2453, 32
      %v2883 = vpop.permute.xlu0 %2882
      %2884 = vrot.lane.b32.xlu0 %v2456, 32
      %v2885 = vpop.permute.xlu0 %2884
      %2886 = vrot.lane.b32.xlu0 %v2458, 32
      %v2887 = vpop.permute.xlu0 %2886
      %2888 = vrot.lane.b32.xlu0 %v2461, 32
      %v2889 = vpop.permute.xlu0 %2888
      %2890 = vrot.lane.b32.xlu0 %v2463, 32
      %v2891 = vpop.permute.xlu0 %2890
      %2892 = vrot.lane.b32.xlu0 %v2466, 32
      %v2893 = vpop.permute.xlu0 %2892
      %2894 = vrot.lane.b32.xlu0 %v2468, 32
      %v2895 = vpop.permute.xlu0 %2894
      %2896 = vrot.lane.b32.xlu0 %v2471, 32
      %v2897 = vpop.permute.xlu0 %2896
      %2898 = vrot.lane.b32.xlu0 %v2473, 32
      %v2899 = vpop.permute.xlu0 %2898
      %2900 = vrot.lane.b32.xlu0 %v2476, 32
      %v2901 = vpop.permute.xlu0 %2900
      %2902 = vrot.lane.b32.xlu0 %v2478, 32
      %v2903 = vpop.permute.xlu0 %2902
      %2904 = vrot.lane.b32.xlu0 %v2481, 32
      %v2905 = vpop.permute.xlu0 %2904
      %2906 = vrot.lane.b32.xlu0 %v2483, 32
      %v2907 = vpop.permute.xlu0 %2906
      %2908 = vrot.lane.b32.xlu0 %v2486, 32
      %v2909 = vpop.permute.xlu0 %2908
      %2910 = vrot.lane.b32.xlu0 %v2488, 32
      %v2911 = vpop.permute.xlu0 %2910
      %2912 = vrot.lane.b32.xlu0 %v2491, 32
      %v2913 = vpop.permute.xlu0 %2912
      %2914 = vrot.lane.b32.xlu0 %v2493, 32
      %v2915 = vpop.permute.xlu0 %2914
      %2916 = vrot.lane.b32.xlu0 %v2496, 32
      %v2917 = vpop.permute.xlu0 %2916
      %2918 = vrot.lane.b32.xlu0 %v2498, 32
      %v2919 = vpop.permute.xlu0 %2918
      %2920 = vrot.lane.b32.xlu0 %v2501, 32
      %v2921 = vpop.permute.xlu0 %2920
      %2922 = vrot.lane.b32.xlu0 %v2503, 32
      %v2923 = vpop.permute.xlu0 %2922
      %2924 = vrot.lane.b32.xlu0 %v2506, 32
      %v2925 = vpop.permute.xlu0 %2924
      %2926 = vrot.lane.b32.xlu0 %v2508, 32
      %v2927 = vpop.permute.xlu0 %2926
      %2928 = vrot.lane.b32.xlu0 %v2511, 32
      %v2929 = vpop.permute.xlu0 %2928
      %2930 = vrot.lane.b32.xlu0 %v2513, 32
      %v2931 = vpop.permute.xlu0 %2930
      %2932 = vrot.lane.b32.xlu0 %v2869, 32
      %v2933 = vpop.permute.xlu0 %2932
      %2934 = vrot.lane.b32.xlu0 %v2871, 32
      %v2935 = vpop.permute.xlu0 %2934
      %v2968 = vrot.slane %v2392, 2
      %v2969 = vrot.slane %v2329, 2
      %v2970 = vsel %vm785, %v2968, %v2969
      %v2971 = vrot.slane %v2408, 2
      %v2972 = vsel %vm785, %v2969, %v2971
      %2973 = vrot.lane.b32.xlu0 %v2606, 40
      %v2974 = vpop.permute.xlu0 %2973
      %2975 = vrot.lane.b32.xlu0 %v2608, 40
      %v2976 = vpop.permute.xlu0 %2975
      %2977 = vrot.lane.b32.xlu0 %v2611, 40
      %v2978 = vpop.permute.xlu0 %2977
      %2979 = vrot.lane.b32.xlu0 %v2613, 40
      %v2980 = vpop.permute.xlu0 %2979
      %2981 = vrot.lane.b32.xlu0 %v2616, 40
      %v2982 = vpop.permute.xlu0 %2981
      %2983 = vrot.lane.b32.xlu0 %v2618, 40
      %v2984 = vpop.permute.xlu0 %2983
      %2985 = vrot.lane.b32.xlu0 %v2621, 40
      %v2986 = vpop.permute.xlu0 %2985
      %2987 = vrot.lane.b32.xlu0 %v2623, 40
      %v2988 = vpop.permute.xlu0 %2987
      %2989 = vrot.lane.b32.xlu0 %v2626, 40
      %v2990 = vpop.permute.xlu0 %2989
      %2991 = vrot.lane.b32.xlu0 %v2628, 40
      %v2992 = vpop.permute.xlu0 %2991
      %2993 = vrot.lane.b32.xlu0 %v2631, 40
      %v2994 = vpop.permute.xlu0 %2993
      %2995 = vrot.lane.b32.xlu0 %v2633, 40
      %v2996 = vpop.permute.xlu0 %2995
      %2997 = vrot.lane.b32.xlu0 %v2636, 40
      %v2998 = vpop.permute.xlu0 %2997
      %2999 = vrot.lane.b32.xlu0 %v2638, 40
      %v3000 = vpop.permute.xlu0 %2999
      %3001 = vrot.lane.b32.xlu0 %v2641, 40
      %v3002 = vpop.permute.xlu0 %3001
      %3003 = vrot.lane.b32.xlu0 %v2643, 40
      %v3004 = vpop.permute.xlu0 %3003
      %3005 = vrot.lane.b32.xlu0 %v2646, 40
      %v3006 = vpop.permute.xlu0 %3005
      %3007 = vrot.lane.b32.xlu0 %v2648, 40
      %v3008 = vpop.permute.xlu0 %3007
      %3009 = vrot.lane.b32.xlu0 %v2651, 40
      %v3010 = vpop.permute.xlu0 %3009
      %3011 = vrot.lane.b32.xlu0 %v2653, 40
      %v3012 = vpop.permute.xlu0 %3011
      %3013 = vrot.lane.b32.xlu0 %v2656, 40
      %v3014 = vpop.permute.xlu0 %3013
      %3015 = vrot.lane.b32.xlu0 %v2658, 40
      %v3016 = vpop.permute.xlu0 %3015
      %3017 = vrot.lane.b32.xlu0 %v2661, 40
      %v3018 = vpop.permute.xlu0 %3017
      %3019 = vrot.lane.b32.xlu0 %v2663, 40
      %v3020 = vpop.permute.xlu0 %3019
      %3021 = vrot.lane.b32.xlu0 %v2666, 40
      %v3022 = vpop.permute.xlu0 %3021
      %3023 = vrot.lane.b32.xlu0 %v2668, 40
      %v3024 = vpop.permute.xlu0 %3023
      %3025 = vrot.lane.b32.xlu0 %v2671, 40
      %v3026 = vpop.permute.xlu0 %3025
      %3027 = vrot.lane.b32.xlu0 %v2673, 40
      %v3028 = vpop.permute.xlu0 %3027
      %3029 = vrot.lane.b32.xlu0 %v2676, 40
      %v3030 = vpop.permute.xlu0 %3029
      %3031 = vrot.lane.b32.xlu0 %v2678, 40
      %v3032 = vpop.permute.xlu0 %3031
      %3033 = vrot.lane.b32.xlu0 %v2970, 40
      %v3034 = vpop.permute.xlu0 %3033
      %3035 = vrot.lane.b32.xlu0 %v2972, 40
      %v3036 = vpop.permute.xlu0 %3035
      %3069 = vrot.lane.b32.xlu0 %v2378, 48
      %v3070 = vpop.permute.xlu0 %3069
      %3071 = vrot.lane.b32.xlu0 %v2287, 48
      %v3072 = vpop.permute.xlu0 %3071
      %3073 = vrot.lane.b32.xlu0 %v2379, 48
      %v3074 = vpop.permute.xlu0 %3073
      %3075 = vrot.lane.b32.xlu0 %v2290, 48
      %v3076 = vpop.permute.xlu0 %3075
      %3077 = vrot.lane.b32.xlu0 %v2380, 48
      %v3078 = vpop.permute.xlu0 %3077
      %3079 = vrot.lane.b32.xlu0 %v2293, 48
      %v3080 = vpop.permute.xlu0 %3079
      %3081 = vrot.lane.b32.xlu0 %v2381, 48
      %v3082 = vpop.permute.xlu0 %3081
      %3083 = vrot.lane.b32.xlu0 %v2296, 48
      %v3084 = vpop.permute.xlu0 %3083
      %3085 = vrot.lane.b32.xlu0 %v2382, 48
      %v3086 = vpop.permute.xlu0 %3085
      %3087 = vrot.lane.b32.xlu0 %v2299, 48
      %v3088 = vpop.permute.xlu0 %3087
      %3089 = vrot.lane.b32.xlu0 %v2383, 48
      %v3090 = vpop.permute.xlu0 %3089
      %3091 = vrot.lane.b32.xlu0 %v2302, 48
      %v3092 = vpop.permute.xlu0 %3091
      %3093 = vrot.lane.b32.xlu0 %v2384, 48
      %v3094 = vpop.permute.xlu0 %3093
      %3095 = vrot.lane.b32.xlu0 %v2305, 48
      %v3096 = vpop.permute.xlu0 %3095
      %3097 = vrot.lane.b32.xlu0 %v2385, 48
      %v3098 = vpop.permute.xlu0 %3097
      %3099 = vrot.lane.b32.xlu0 %v2308, 48
      %v3100 = vpop.permute.xlu0 %3099
      %3101 = vrot.lane.b32.xlu0 %v2386, 48
      %v3102 = vpop.permute.xlu0 %3101
      %3103 = vrot.lane.b32.xlu0 %v2311, 48
      %v3104 = vpop.permute.xlu0 %3103
      %3105 = vrot.lane.b32.xlu0 %v2387, 48
      %v3106 = vpop.permute.xlu0 %3105
      %3107 = vrot.lane.b32.xlu0 %v2314, 48
      %v3108 = vpop.permute.xlu0 %3107
      %3109 = vrot.lane.b32.xlu0 %v2388, 48
      %v3110 = vpop.permute.xlu0 %3109
      %3111 = vrot.lane.b32.xlu0 %v2317, 48
      %v3112 = vpop.permute.xlu0 %3111
      %3113 = vrot.lane.b32.xlu0 %v2389, 48
      %v3114 = vpop.permute.xlu0 %3113
      %3115 = vrot.lane.b32.xlu0 %v2320, 48
      %v3116 = vpop.permute.xlu0 %3115
      %3117 = vrot.lane.b32.xlu0 %v2390, 48
      %v3118 = vpop.permute.xlu0 %3117
      %3119 = vrot.lane.b32.xlu0 %v2323, 48
      %v3120 = vpop.permute.xlu0 %3119
      %3121 = vrot.lane.b32.xlu0 %v2391, 48
      %v3122 = vpop.permute.xlu0 %3121
      %3123 = vrot.lane.b32.xlu0 %v2326, 48
      %v3124 = vpop.permute.xlu0 %3123
      %3125 = vrot.lane.b32.xlu0 %v2392, 48
      %v3126 = vpop.permute.xlu0 %3125
      %3127 = vrot.lane.b32.xlu0 %v2329, 48
      %v3128 = vpop.permute.xlu0 %3127
      %3159 = vrot.lane.b32.xlu0 %v2446, 56
      %v3160 = vpop.permute.xlu0 %3159
      %3161 = vrot.lane.b32.xlu0 %v2448, 56
      %v3162 = vpop.permute.xlu0 %3161
      %3163 = vrot.lane.b32.xlu0 %v2451, 56
      %v3164 = vpop.permute.xlu0 %3163
      %3165 = vrot.lane.b32.xlu0 %v2453, 56
      %v3166 = vpop.permute.xlu0 %3165
      %3167 = vrot.lane.b32.xlu0 %v2456, 56
      %v3168 = vpop.permute.xlu0 %3167
      %3169 = vrot.lane.b32.xlu0 %v2458, 56
      %v3170 = vpop.permute.xlu0 %3169
      %3171 = vrot.lane.b32.xlu0 %v2461, 56
      %v3172 = vpop.permute.xlu0 %3171
      %3173 = vrot.lane.b32.xlu0 %v2463, 56
      %v3174 = vpop.permute.xlu0 %3173
      %3175 = vrot.lane.b32.xlu0 %v2466, 56
      %v3176 = vpop.permute.xlu0 %3175
      %3177 = vrot.lane.b32.xlu0 %v2468, 56
      %v3178 = vpop.permute.xlu0 %3177
      %3179 = vrot.lane.b32.xlu0 %v2471, 56
      %v3180 = vpop.permute.xlu0 %3179
      %3181 = vrot.lane.b32.xlu0 %v2473, 56
      %v3182 = vpop.permute.xlu0 %3181
      %3183 = vrot.lane.b32.xlu0 %v2476, 56
      %v3184 = vpop.permute.xlu0 %3183
      %3185 = vrot.lane.b32.xlu0 %v2478, 56
      %v3186 = vpop.permute.xlu0 %3185
      %3187 = vrot.lane.b32.xlu0 %v2481, 56
      %v3188 = vpop.permute.xlu0 %3187
      %3189 = vrot.lane.b32.xlu0 %v2483, 56
      %v3190 = vpop.permute.xlu0 %3189
      %3191 = vrot.lane.b32.xlu0 %v2486, 56
      %v3192 = vpop.permute.xlu0 %3191
      %3193 = vrot.lane.b32.xlu0 %v2488, 56
      %v3194 = vpop.permute.xlu0 %3193
      %3195 = vrot.lane.b32.xlu0 %v2491, 56
      %v3196 = vpop.permute.xlu0 %3195
      %3197 = vrot.lane.b32.xlu0 %v2493, 56
      %v3198 = vpop.permute.xlu0 %3197
      %3199 = vrot.lane.b32.xlu0 %v2496, 56
      %v3200 = vpop.permute.xlu0 %3199
      %3201 = vrot.lane.b32.xlu0 %v2498, 56
      %v3202 = vpop.permute.xlu0 %3201
      %3203 = vrot.lane.b32.xlu0 %v2501, 56
      %v3204 = vpop.permute.xlu0 %3203
      %3205 = vrot.lane.b32.xlu0 %v2503, 56
      %v3206 = vpop.permute.xlu0 %3205
      %3207 = vrot.lane.b32.xlu0 %v2506, 56
      %v3208 = vpop.permute.xlu0 %3207
      %3209 = vrot.lane.b32.xlu0 %v2508, 56
      %v3210 = vpop.permute.xlu0 %3209
      %3211 = vrot.lane.b32.xlu0 %v2511, 56
      %v3212 = vpop.permute.xlu0 %3211
      %3213 = vrot.lane.b32.xlu0 %v2513, 56
      %v3214 = vpop.permute.xlu0 %3213
      %3215 = vrot.lane.b32.xlu0 %v2869, 56
      %v3216 = vpop.permute.xlu0 %3215
      %3217 = vrot.lane.b32.xlu0 %v2871, 56
      %v3218 = vpop.permute.xlu0 %3217
      %3249 = vrot.lane.b32.xlu0 %v2611, 64
      %v3250 = vpop.permute.xlu0 %3249
      %3251 = vrot.lane.b32.xlu0 %v2613, 64
      %v3252 = vpop.permute.xlu0 %3251
      %3253 = vrot.lane.b32.xlu0 %v2616, 64
      %v3254 = vpop.permute.xlu0 %3253
      %3255 = vrot.lane.b32.xlu0 %v2618, 64
      %v3256 = vpop.permute.xlu0 %3255
      %3257 = vrot.lane.b32.xlu0 %v2621, 64
      %v3258 = vpop.permute.xlu0 %3257
      %3259 = vrot.lane.b32.xlu0 %v2623, 64
      %v3260 = vpop.permute.xlu0 %3259
      %3261 = vrot.lane.b32.xlu0 %v2626, 64
      %v3262 = vpop.permute.xlu0 %3261
      %3263 = vrot.lane.b32.xlu0 %v2628, 64
      %v3264 = vpop.permute.xlu0 %3263
      %3265 = vrot.lane.b32.xlu0 %v2631, 64
      %v3266 = vpop.permute.xlu0 %3265
      %3267 = vrot.lane.b32.xlu0 %v2633, 64
      %v3268 = vpop.permute.xlu0 %3267
      %3269 = vrot.lane.b32.xlu0 %v2636, 64
      %v3270 = vpop.permute.xlu0 %3269
      %3271 = vrot.lane.b32.xlu0 %v2638, 64
      %v3272 = vpop.permute.xlu0 %3271
      %3273 = vrot.lane.b32.xlu0 %v2641, 64
      %v3274 = vpop.permute.xlu0 %3273
      %3275 = vrot.lane.b32.xlu0 %v2643, 64
      %v3276 = vpop.permute.xlu0 %3275
      %3277 = vrot.lane.b32.xlu0 %v2646, 64
      %v3278 = vpop.permute.xlu0 %3277
      %3279 = vrot.lane.b32.xlu0 %v2648, 64
      %v3280 = vpop.permute.xlu0 %3279
      %3281 = vrot.lane.b32.xlu0 %v2651, 64
      %v3282 = vpop.permute.xlu0 %3281
      %3283 = vrot.lane.b32.xlu0 %v2653, 64
      %v3284 = vpop.permute.xlu0 %3283
      %3285 = vrot.lane.b32.xlu0 %v2656, 64
      %v3286 = vpop.permute.xlu0 %3285
      %3287 = vrot.lane.b32.xlu0 %v2658, 64
      %v3288 = vpop.permute.xlu0 %3287
      %3289 = vrot.lane.b32.xlu0 %v2661, 64
      %v3290 = vpop.permute.xlu0 %3289
      %3291 = vrot.lane.b32.xlu0 %v2663, 64
      %v3292 = vpop.permute.xlu0 %3291
      %3293 = vrot.lane.b32.xlu0 %v2666, 64
      %v3294 = vpop.permute.xlu0 %3293
      %3295 = vrot.lane.b32.xlu0 %v2668, 64
      %v3296 = vpop.permute.xlu0 %3295
      %3297 = vrot.lane.b32.xlu0 %v2671, 64
      %v3298 = vpop.permute.xlu0 %3297
      %3299 = vrot.lane.b32.xlu0 %v2673, 64
      %v3300 = vpop.permute.xlu0 %3299
      %3301 = vrot.lane.b32.xlu0 %v2676, 64
      %v3302 = vpop.permute.xlu0 %3301
      %3303 = vrot.lane.b32.xlu0 %v2678, 64
      %v3304 = vpop.permute.xlu0 %3303
      %3305 = vrot.lane.b32.xlu0 %v2970, 64
      %v3306 = vpop.permute.xlu0 %3305
      %3307 = vrot.lane.b32.xlu0 %v2972, 64
      %v3308 = vpop.permute.xlu0 %3307
      %v3339 = vsel %vm1550, %v2377, %v2515
      %v3340 = vsel %vm1550, %v2284, %v2517
      %v3341 = vsel %vm1550, %v2378, %v2519
      %v3342 = vsel %vm1550, %v2287, %v2521
      %v3343 = vsel %vm1550, %v2379, %v2523
      %v3344 = vsel %vm1550, %v2290, %v2525
      %v3345 = vsel %vm1550, %v2380, %v2527
      %v3346 = vsel %vm1550, %v2293, %v2529
      %v3347 = vsel %vm1550, %v2381, %v2531
      %v3348 = vsel %vm1550, %v2296, %v2533
      %v3349 = vsel %vm1550, %v2382, %v2535
      %v3350 = vsel %vm1550, %v2299, %v2537
      %v3351 = vsel %vm1550, %v2383, %v2539
      %v3352 = vsel %vm1550, %v2302, %v2541
      %v3353 = vsel %vm1550, %v2384, %v2543
      %v3354 = vsel %vm1550, %v2305, %v2545
      %v3355 = vsel %vm1550, %v2385, %v2547
      %v3356 = vsel %vm1550, %v2308, %v2549
      %v3357 = vsel %vm1550, %v2386, %v2551
      %v3358 = vsel %vm1550, %v2311, %v2553
      %v3359 = vsel %vm1550, %v2387, %v2555
      %v3360 = vsel %vm1550, %v2314, %v2557
      %v3361 = vsel %vm1550, %v2388, %v2559
      %v3362 = vsel %vm1550, %v2317, %v2561
      %v3363 = vsel %vm1550, %v2389, %v2563
      %v3364 = vsel %vm1550, %v2320, %v2565
      %v3365 = vsel %vm1550, %v2390, %v2567
      %v3366 = vsel %vm1550, %v2323, %v2569
      %v3367 = vsel %vm1550, %v2391, %v2571
      %v3368 = vsel %vm1550, %v2326, %v2573
      %v3369 = vsel %vm1583, %v3339, %v2680
      %v3370 = vsel %vm1583, %v3340, %v2682
      %v3371 = vsel %vm1583, %v3341, %v2684
      %v3372 = vsel %vm1583, %v3342, %v2686
      %v3373 = vsel %vm1583, %v3343, %v2688
      %v3374 = vsel %vm1583, %v3344, %v2690
      %v3375 = vsel %vm1583, %v3345, %v2692
      %v3376 = vsel %vm1583, %v3346, %v2694
      %v3377 = vsel %vm1583, %v3347, %v2696
      %v3378 = vsel %vm1583, %v3348, %v2698
      %v3379 = vsel %vm1583, %v3349, %v2700
      %v3380 = vsel %vm1583, %v3350, %v2702
      %v3381 = vsel %vm1583, %v3351, %v2704
      %v3382 = vsel %vm1583, %v3352, %v2706
      %v3383 = vsel %vm1583, %v3353, %v2708
      %v3384 = vsel %vm1583, %v3354, %v2710
      %v3385 = vsel %vm1583, %v3355, %v2712
      %v3386 = vsel %vm1583, %v3356, %v2714
      %v3387 = vsel %vm1583, %v3357, %v2716
      %v3388 = vsel %vm1583, %v3358, %v2718
      %v3389 = vsel %vm1583, %v3359, %v2720
      %v3390 = vsel %vm1583, %v3360, %v2722
      %v3391 = vsel %vm1583, %v3361, %v2724
      %v3392 = vsel %vm1583, %v3362, %v2726
      %v3393 = vsel %vm1583, %v3363, %v2728
      %v3394 = vsel %vm1583, %v3364, %v2730
      %v3395 = vsel %vm1583, %v3365, %v2732
      %v3396 = vsel %vm1583, %v3366, %v2734
      %v3397 = vsel %vm1583, %v3367, %v2736
      %v3398 = vsel %vm1583, %v3368, %v2738
      %v3399 = vsel %vm1616, %v1584, %v2771
      %v3400 = vsel %vm1616, %v1585, %v2773
      %v3401 = vsel %vm1616, %v3369, %v2775
      %v3402 = vsel %vm1616, %v3370, %v2777
      %v3403 = vsel %vm1616, %v3371, %v2779
      %v3404 = vsel %vm1616, %v3372, %v2781
      %v3405 = vsel %vm1616, %v3373, %v2783
      %v3406 = vsel %vm1616, %v3374, %v2785
      %v3407 = vsel %vm1616, %v3375, %v2787
      %v3408 = vsel %vm1616, %v3376, %v2789
      %v3409 = vsel %vm1616, %v3377, %v2791
      %v3410 = vsel %vm1616, %v3378, %v2793
      %v3411 = vsel %vm1616, %v3379, %v2795
      %v3412 = vsel %vm1616, %v3380, %v2797
      %v3413 = vsel %vm1616, %v3381, %v2799
      %v3414 = vsel %vm1616, %v3382, %v2801
      %v3415 = vsel %vm1616, %v3383, %v2803
      %v3416 = vsel %vm1616, %v3384, %v2805
      %v3417 = vsel %vm1616, %v3385, %v2807
      %v3418 = vsel %vm1616, %v3386, %v2809
      %v3419 = vsel %vm1616, %v3387, %v2811
      %v3420 = vsel %vm1616, %v3388, %v2813
      %v3421 = vsel %vm1616, %v3389, %v2815
      %v3422 = vsel %vm1616, %v3390, %v2817
      %v3423 = vsel %vm1616, %v3391, %v2819
      %v3424 = vsel %vm1616, %v3392, %v2821
      %v3425 = vsel %vm1616, %v3393, %v2823
      %v3426 = vsel %vm1616, %v3394, %v2825
      %v3427 = vsel %vm1616, %v3395, %v2827
      %v3428 = vsel %vm1616, %v3396, %v2829
      %v3429 = vsel %vm1616, %v3397, %v2831
      %v3430 = vsel %vm1616, %v3398, %v2833
      %v3431 = vsel %vm1649, %v3399, %v2873
      %v3432 = vsel %vm1649, %v3400, %v2875
      %v3433 = vsel %vm1649, %v3401, %v2877
      %v3434 = vsel %vm1649, %v3402, %v2879
      %v3435 = vsel %vm1649, %v3403, %v2881
      %v3436 = vsel %vm1649, %v3404, %v2883
      %v3437 = vsel %vm1649, %v3405, %v2885
      %v3438 = vsel %vm1649, %v3406, %v2887
      %v3439 = vsel %vm1649, %v3407, %v2889
      %v3440 = vsel %vm1649, %v3408, %v2891
      %v3441 = vsel %vm1649, %v3409, %v2893
      %v3442 = vsel %vm1649, %v3410, %v2895
      %v3443 = vsel %vm1649, %v3411, %v2897
      %v3444 = vsel %vm1649, %v3412, %v2899
      %v3445 = vsel %vm1649, %v3413, %v2901
      %v3446 = vsel %vm1649, %v3414, %v2903
      %v3447 = vsel %vm1649, %v3415, %v2905
      %v3448 = vsel %vm1649, %v3416, %v2907
      %v3449 = vsel %vm1649, %v3417, %v2909
      %v3450 = vsel %vm1649, %v3418, %v2911
      %v3451 = vsel %vm1649, %v3419, %v2913
      %v3452 = vsel %vm1649, %v3420, %v2915
      %v3453 = vsel %vm1649, %v3421, %v2917
      %v3454 = vsel %vm1649, %v3422, %v2919
      %v3455 = vsel %vm1649, %v3423, %v2921
      %v3456 = vsel %vm1649, %v3424, %v2923
      %v3457 = vsel %vm1649, %v3425, %v2925
      %v3458 = vsel %vm1649, %v3426, %v2927
      %v3459 = vsel %vm1649, %v3427, %v2929
      %v3460 = vsel %vm1649, %v3428, %v2931
      %v3461 = vsel %vm1649, %v3429, %v2933
      %v3462 = vsel %vm1649, %v3430, %v2935
      %v3463 = vsel %vm1682, %v3431, %v2974
      %v3464 = vsel %vm1682, %v3432, %v2976
      %v3465 = vsel %vm1682, %v3433, %v2978
      %v3466 = vsel %vm1682, %v3434, %v2980
      %v3467 = vsel %vm1682, %v3435, %v2982
      %v3468 = vsel %vm1682, %v3436, %v2984
      %v3469 = vsel %vm1682, %v3437, %v2986
      %v3470 = vsel %vm1682, %v3438, %v2988
      %v3471 = vsel %vm1682, %v3439, %v2990
      %v3472 = vsel %vm1682, %v3440, %v2992
      %v3473 = vsel %vm1682, %v3441, %v2994
      %v3474 = vsel %vm1682, %v3442, %v2996
      %v3475 = vsel %vm1682, %v3443, %v2998
      %v3476 = vsel %vm1682, %v3444, %v3000
      %v3477 = vsel %vm1682, %v3445, %v3002
      %v3478 = vsel %vm1682, %v3446, %v3004
      %v3479 = vsel %vm1682, %v3447, %v3006
      %v3480 = vsel %vm1682, %v3448, %v3008
      %v3481 = vsel %vm1682, %v3449, %v3010
      %v3482 = vsel %vm1682, %v3450, %v3012
      %v3483 = vsel %vm1682, %v3451, %v3014
      %v3484 = vsel %vm1682, %v3452, %v3016
      %v3485 = vsel %vm1682, %v3453, %v3018
      %v3486 = vsel %vm1682, %v3454, %v3020
      %v3487 = vsel %vm1682, %v3455, %v3022
      %v3488 = vsel %vm1682, %v3456, %v3024
      %v3489 = vsel %vm1682, %v3457, %v3026
      %v3490 = vsel %vm1682, %v3458, %v3028
      %v3491 = vsel %vm1682, %v3459, %v3030
      %v3492 = vsel %vm1682, %v3460, %v3032
      %v3493 = vsel %vm1682, %v3461, %v3034
      %v3494 = vsel %vm1682, %v3462, %v3036
      %v3495 = vsel %vm1715, %v3463, %v3070
      %v3496 = vsel %vm1715, %v3464, %v3072
      %v3497 = vsel %vm1715, %v3465, %v3074
      %v3498 = vsel %vm1715, %v3466, %v3076
      %v3499 = vsel %vm1715, %v3467, %v3078
      %v3500 = vsel %vm1715, %v3468, %v3080
      %v3501 = vsel %vm1715, %v3469, %v3082
      %v3502 = vsel %vm1715, %v3470, %v3084
      %v3503 = vsel %vm1715, %v3471, %v3086
      %v3504 = vsel %vm1715, %v3472, %v3088
      %v3505 = vsel %vm1715, %v3473, %v3090
      %v3506 = vsel %vm1715, %v3474, %v3092
      %v3507 = vsel %vm1715, %v3475, %v3094
      %v3508 = vsel %vm1715, %v3476, %v3096
      %v3509 = vsel %vm1715, %v3477, %v3098
      %v3510 = vsel %vm1715, %v3478, %v3100
      %v3511 = vsel %vm1715, %v3479, %v3102
      %v3512 = vsel %vm1715, %v3480, %v3104
      %v3513 = vsel %vm1715, %v3481, %v3106
      %v3514 = vsel %vm1715, %v3482, %v3108
      %v3515 = vsel %vm1715, %v3483, %v3110
      %v3516 = vsel %vm1715, %v3484, %v3112
      %v3517 = vsel %vm1715, %v3485, %v3114
      %v3518 = vsel %vm1715, %v3486, %v3116
      %v3519 = vsel %vm1715, %v3487, %v3118
      %v3520 = vsel %vm1715, %v3488, %v3120
      %v3521 = vsel %vm1715, %v3489, %v3122
      %v3522 = vsel %vm1715, %v3490, %v3124
      %v3523 = vsel %vm1715, %v3491, %v3126
      %v3524 = vsel %vm1715, %v3492, %v3128
      %v3525 = vsel %vm1715, %v3493, %v1323
      %v3526 = vsel %vm1715, %v3494, %v1325
      %v3527 = vsel %vm1748, %v3495, %v3160
      %v3528 = vsel %vm1748, %v3496, %v3162
      %v3529 = vsel %vm1748, %v3497, %v3164
      %v3530 = vsel %vm1748, %v3498, %v3166
      %v3531 = vsel %vm1748, %v3499, %v3168
      %v3532 = vsel %vm1748, %v3500, %v3170
      %v3533 = vsel %vm1748, %v3501, %v3172
      %v3534 = vsel %vm1748, %v3502, %v3174
      %v3535 = vsel %vm1748, %v3503, %v3176
      %v3536 = vsel %vm1748, %v3504, %v3178
      %v3537 = vsel %vm1748, %v3505, %v3180
      %v3538 = vsel %vm1748, %v3506, %v3182
      %v3539 = vsel %vm1748, %v3507, %v3184
      %v3540 = vsel %vm1748, %v3508, %v3186
      %v3541 = vsel %vm1748, %v3509, %v3188
      %v3542 = vsel %vm1748, %v3510, %v3190
      %v3543 = vsel %vm1748, %v3511, %v3192
      %v3544 = vsel %vm1748, %v3512, %v3194
      %v3545 = vsel %vm1748, %v3513, %v3196
      %v3546 = vsel %vm1748, %v3514, %v3198
      %v3547 = vsel %vm1748, %v3515, %v3200
      %v3548 = vsel %vm1748, %v3516, %v3202
      %v3549 = vsel %vm1748, %v3517, %v3204
      %v3550 = vsel %vm1748, %v3518, %v3206
      %v3551 = vsel %vm1748, %v3519, %v3208
      %v3552 = vsel %vm1748, %v3520, %v3210
      %v3553 = vsel %vm1748, %v3521, %v3212
      %v3554 = vsel %vm1748, %v3522, %v3214
      %v3555 = vsel %vm1748, %v3523, %v3216
      %v3556 = vsel %vm1748, %v3524, %v3218
      %v3557 = vsel %vm1748, %v3525, %v1419
      %v3558 = vsel %vm1748, %v3526, %v1421
      %v3559 = vsel %vm1781, %v3527, %v3250
      %v3560 = vsel %vm1781, %v3528, %v3252
      %v3561 = vsel %vm1781, %v3529, %v3254
      %v3562 = vsel %vm1781, %v3530, %v3256
      %v3563 = vsel %vm1781, %v3531, %v3258
      %v3564 = vsel %vm1781, %v3532, %v3260
      %v3565 = vsel %vm1781, %v3533, %v3262
      %v3566 = vsel %vm1781, %v3534, %v3264
      %v3567 = vsel %vm1781, %v3535, %v3266
      %v3568 = vsel %vm1781, %v3536, %v3268
      %v3569 = vsel %vm1781, %v3537, %v3270
      %v3570 = vsel %vm1781, %v3538, %v3272
      %v3571 = vsel %vm1781, %v3539, %v3274
      %v3572 = vsel %vm1781, %v3540, %v3276
      %v3573 = vsel %vm1781, %v3541, %v3278
      %v3574 = vsel %vm1781, %v3542, %v3280
      %v3575 = vsel %vm1781, %v3543, %v3282
      %v3576 = vsel %vm1781, %v3544, %v3284
      %v3577 = vsel %vm1781, %v3545, %v3286
      %v3578 = vsel %vm1781, %v3546, %v3288
      %v3579 = vsel %vm1781, %v3547, %v3290
      %v3580 = vsel %vm1781, %v3548, %v3292
      %v3581 = vsel %vm1781, %v3549, %v3294
      %v3582 = vsel %vm1781, %v3550, %v3296
      %v3583 = vsel %vm1781, %v3551, %v3298
      %v3584 = vsel %vm1781, %v3552, %v3300
      %v3585 = vsel %vm1781, %v3553, %v3302
      %v3586 = vsel %vm1781, %v3554, %v3304
      %v3587 = vsel %vm1781, %v3555, %v3306
      %v3588 = vsel %vm1781, %v3556, %v3308
      %v3589 = vsel %vm1781, %v3557, %v1515
      %v3590 = vsel %vm1781, %v3558, %v1517
      %v3592 = vlaneseq
      %v3593 = vshrl.u32 %v3592, 7
      %v3594 = vsub.s32 0, %v3593
      %v3595 = vrot.slane %v2249, %v3594
      %v3598 = vsel %vm1820, %v3559, 0
      %v3601 = vsel %vm1820, %v3560, 0
      %v3604 = vsel %vm1820, %v3561, 0
      %v3607 = vsel %vm1820, %v3562, 0
      %v3610 = vsel %vm1820, %v3563, 0
      %v3613 = vsel %vm1820, %v3564, 0
      %v3616 = vsel %vm1820, %v3565, 0
      %v3619 = vsel %vm1820, %v3566, 0
      %v3622 = vsel %vm1820, %v3567, 0
      %v3625 = vsel %vm1820, %v3568, 0
      %v3628 = vsel %vm1820, %v3569, 0
      %v3631 = vsel %vm1820, %v3570, 0
      %v3634 = vsel %vm1820, %v3571, 0
      %v3637 = vsel %vm1820, %v3572, 0
      %v3640 = vsel %vm1820, %v3573, 0
      %v3643 = vsel %vm1820, %v3574, 0
      %v3646 = vsel %vm1820, %v3575, 0
      %v3649 = vsel %vm1820, %v3576, 0
      %v3652 = vsel %vm1820, %v3577, 0
      %v3655 = vsel %vm1820, %v3578, 0
      %v3658 = vsel %vm1820, %v3579, 0
      %v3661 = vsel %vm1820, %v3580, 0
      %v3664 = vsel %vm1820, %v3581, 0
      %v3667 = vsel %vm1820, %v3582, 0
      %v3670 = vsel %vm1820, %v3583, 0
      %v3673 = vsel %vm1820, %v3584, 0
      %v3676 = vsel %vm1820, %v3585, 0
      %v3679 = vsel %vm1820, %v3586, 0
      %v3682 = vsel %vm1820, %v3587, 0
      %v3685 = vsel %vm1820, %v3588, 0
      %v3688 = vsel %vm1820, %v3589, 0
      %v3691 = vsel %vm1820, %v3590, 0
      %3693 = vmatprep.subr.mxu0 0.0
      %3694 = vmatpush1.msra.mxu0 0.0
      %3695 = vmatprep.subr.mxu0 0.0
      %3696 = vmatpush1.msra.mxu0 0.0
      %3697 = vmatprep.subr.mxu0 0.0
      %3698 = vmatpush1.msra.mxu0 0.0
      %3699 = vmatprep.subr.mxu0 0.0
      %3700 = vmatpush1.msra.mxu0 0.0
      %3701 = vmatprep.subr.mxu0 0.0
      %3702 = vmatpush1.msra.mxu0 0.0
      %3703 = vmatprep.subr.mxu0 0.0
      %3704 = vmatpush1.msra.mxu0 0.0
      %3705 = vmatprep.subr.mxu0 0.0
      %3706 = vmatpush1.msra.mxu0 0.0
      %3707 = vmatprep.subr.mxu0 0.0
      %3708 = vmatpush1.msra.mxu0 %v2247
      %3709 = vmatprep.subr.mxu0 0.0
      %3710 = vmatpush1.msra.mxu0 %v2246
      %3711 = vmatprep.subr.mxu0 0.0
      %3712 = vmatpush1.msra.mxu0 %v2245
      %3713 = vmatprep.subr.mxu0 0.0
      %3714 = vmatpush1.msra.mxu0 %v2244
      %3715 = vmatprep.subr.mxu0 0.0
      %3716 = vmatpush1.msra.mxu0 %v2243
      %3717 = vmatprep.subr.mxu0 0.0
      %3718 = vmatpush1.msra.mxu0 %v2242
      %3719 = vmatprep.subr.mxu0 0.0
      %3720 = vmatpush1.msra.mxu0 %v2241
      %3721 = vmatprep.subr.mxu0 0.0
      %3722 = vmatpush1.msra.mxu0 %v2240
      %3723 = vmatprep.subr.mxu0 0.0
      %3724 = vmatpush1.msra.mxu0 %v2239
      %3725 = vmatprep.subr.mxu0 0.0
      %3726 = vmatpush2.msra.mxu0 0.0
      %3727 = vmatprep.subr.mxu0 0.0
      %3728 = vmatpush2.msra.mxu0 0.0
      %3729 = vmatprep.subr.mxu0 0.0
      %3730 = vmatpush2.msra.mxu0 0.0
      %3731 = vmatprep.subr.mxu0 0.0
      %3732 = vmatpush2.msra.mxu0 0.0
      %3733 = vmatprep.subr.mxu0 0.0
      %3734 = vmatpush2.msra.mxu0 0.0
      %3735 = vmatprep.subr.mxu0 0.0
      %3736 = vmatpush2.msra.mxu0 0.0
      %3737 = vmatprep.subr.mxu0 0.0
      %3738 = vmatpush2.msra.mxu0 0.0
      %3739 = vmatprep.subr.mxu0 0.0
      %3740 = vmatpush2.msra.mxu0 0.0
      %3741 = vmatprep.subr.mxu0 0.0
      %3742 = vmatpush2.msra.mxu0 0.0
      %3743 = vmatprep.subr.mxu0 0.0
      %3744 = vmatpush2.msra.mxu0 0.0
      %3745 = vmatprep.subr.mxu0 0.0
      %3746 = vmatpush2.msra.mxu0 0.0
      %3747 = vmatprep.subr.mxu0 0.0
      %3748 = vmatpush2.msra.mxu0 0.0
      %3749 = vmatprep.subr.mxu0 0.0
      %3750 = vmatpush2.msra.mxu0 0.0
      %3751 = vmatprep.subr.mxu0 0.0
      %3752 = vmatpush2.msra.mxu0 0.0
      %3753 = vmatprep.subr.mxu0 0.0
      %3754 = vmatpush2.msra.mxu0 0.0
      %3755 = vmatprep.subr.mxu0 0.0
      %3756 = vmatpush2.msra.mxu0 0.0
      %3757 = vmatprep.mubr.f32.mxu0 0.0
      %3758 = vmatmul.mubr.f32.gmra.mxu0 %v3598
      %v3759 = vpop.f32.mrf.mxu0
      %v3760 = vadd.f32 %v3595, %v3759
      %v3761 = vpop.f32.mrf.mxu0
      %3762 = vmatprep.mubr.f32.mxu0 0.0
      %3763 = vmatmul.mubr.f32.gmra.mxu0 %v3601
      %v3764 = vpop.f32.mrf.mxu0
      %v3765 = vadd.f32 %v3595, %v3764
      %v3766 = vpop.f32.mrf.mxu0
      %3767 = vmatprep.mubr.f32.mxu0 0.0
      %3768 = vmatmul.mubr.f32.gmra.mxu0 %v3604
      %v3769 = vpop.f32.mrf.mxu0
      %v3770 = vadd.f32 %v3595, %v3769
      %v3771 = vpop.f32.mrf.mxu0
      %3772 = vmatprep.mubr.f32.mxu0 0.0
      %3773 = vmatmul.mubr.f32.gmra.mxu0 %v3607
      %v3774 = vpop.f32.mrf.mxu0
      %v3775 = vadd.f32 %v3595, %v3774
      %v3776 = vpop.f32.mrf.mxu0
      %3777 = vmatprep.mubr.f32.mxu0 0.0
      %3778 = vmatmul.mubr.f32.gmra.mxu0 %v3610
      %v3779 = vpop.f32.mrf.mxu0
      %v3780 = vadd.f32 %v3595, %v3779
      %v3781 = vpop.f32.mrf.mxu0
      %3782 = vmatprep.mubr.f32.mxu0 0.0
      %3783 = vmatmul.mubr.f32.gmra.mxu0 %v3613
      %v3784 = vpop.f32.mrf.mxu0
      %v3785 = vadd.f32 %v3595, %v3784
      %v3786 = vpop.f32.mrf.mxu0
      %3787 = vmatprep.mubr.f32.mxu0 0.0
      %3788 = vmatmul.mubr.f32.gmra.mxu0 %v3616
      %v3789 = vpop.f32.mrf.mxu0
      %v3790 = vadd.f32 %v3595, %v3789
      %v3791 = vpop.f32.mrf.mxu0
      %3792 = vmatprep.mubr.f32.mxu0 0.0
      %3793 = vmatmul.mubr.f32.gmra.mxu0 %v3619
      %v3794 = vpop.f32.mrf.mxu0
      %v3795 = vadd.f32 %v3595, %v3794
      %v3796 = vpop.f32.mrf.mxu0
      %3797 = vmatprep.mubr.f32.mxu0 0.0
      %3798 = vmatmul.mubr.f32.gmra.mxu0 %v3622
      %v3799 = vpop.f32.mrf.mxu0
      %v3800 = vadd.f32 %v3595, %v3799
      %v3801 = vpop.f32.mrf.mxu0
      %3802 = vmatprep.mubr.f32.mxu0 0.0
      %3803 = vmatmul.mubr.f32.gmra.mxu0 %v3625
      %v3804 = vpop.f32.mrf.mxu0
      %v3805 = vadd.f32 %v3595, %v3804
      %v3806 = vpop.f32.mrf.mxu0
      %3807 = vmatprep.mubr.f32.mxu0 0.0
      %3808 = vmatmul.mubr.f32.gmra.mxu0 %v3628
      %v3809 = vpop.f32.mrf.mxu0
      %v3810 = vadd.f32 %v3595, %v3809
      %v3811 = vpop.f32.mrf.mxu0
      %3812 = vmatprep.mubr.f32.mxu0 0.0
      %3813 = vmatmul.mubr.f32.gmra.mxu0 %v3631
      %v3814 = vpop.f32.mrf.mxu0
      %v3815 = vadd.f32 %v3595, %v3814
      %v3816 = vpop.f32.mrf.mxu0
      %3817 = vmatprep.mubr.f32.mxu0 0.0
      %3818 = vmatmul.mubr.f32.gmra.mxu0 %v3634
      %v3819 = vpop.f32.mrf.mxu0
      %v3820 = vadd.f32 %v3595, %v3819
      %v3821 = vpop.f32.mrf.mxu0
      %3822 = vmatprep.mubr.f32.mxu0 0.0
      %3823 = vmatmul.mubr.f32.gmra.mxu0 %v3637
      %v3824 = vpop.f32.mrf.mxu0
      %v3825 = vadd.f32 %v3595, %v3824
      %v3826 = vpop.f32.mrf.mxu0
      %3827 = vmatprep.mubr.f32.mxu0 0.0
      %3828 = vmatmul.mubr.f32.gmra.mxu0 %v3640
      %v3829 = vpop.f32.mrf.mxu0
      %v3830 = vadd.f32 %v3595, %v3829
      %v3831 = vpop.f32.mrf.mxu0
      %3832 = vmatprep.mubr.f32.mxu0 0.0
      %3833 = vmatmul.mubr.f32.gmra.mxu0 %v3643
      %v3834 = vpop.f32.mrf.mxu0
      %v3835 = vadd.f32 %v3595, %v3834
      %v3836 = vpop.f32.mrf.mxu0
      %3837 = vmatprep.mubr.f32.mxu0 0.0
      %3838 = vmatmul.mubr.f32.gmra.mxu0 %v3646
      %v3839 = vpop.f32.mrf.mxu0
      %v3840 = vadd.f32 %v3595, %v3839
      %v3841 = vpop.f32.mrf.mxu0
      %3842 = vmatprep.mubr.f32.mxu0 0.0
      %3843 = vmatmul.mubr.f32.gmra.mxu0 %v3649
      %v3844 = vpop.f32.mrf.mxu0
      %v3845 = vadd.f32 %v3595, %v3844
      %v3846 = vpop.f32.mrf.mxu0
      %3847 = vmatprep.mubr.f32.mxu0 0.0
      %3848 = vmatmul.mubr.f32.gmra.mxu0 %v3652
      %v3849 = vpop.f32.mrf.mxu0
      %v3850 = vadd.f32 %v3595, %v3849
      %v3851 = vpop.f32.mrf.mxu0
      %3852 = vmatprep.mubr.f32.mxu0 0.0
      %3853 = vmatmul.mubr.f32.gmra.mxu0 %v3655
      %v3854 = vpop.f32.mrf.mxu0
      %v3855 = vadd.f32 %v3595, %v3854
      %v3856 = vpop.f32.mrf.mxu0
      %3857 = vmatprep.mubr.f32.mxu0 0.0
      %3858 = vmatmul.mubr.f32.gmra.mxu0 %v3658
      %v3859 = vpop.f32.mrf.mxu0
      %v3860 = vadd.f32 %v3595, %v3859
      %v3861 = vpop.f32.mrf.mxu0
      %3862 = vmatprep.mubr.f32.mxu0 0.0
      %3863 = vmatmul.mubr.f32.gmra.mxu0 %v3661
      %v3864 = vpop.f32.mrf.mxu0
      %v3865 = vadd.f32 %v3595, %v3864
      %v3866 = vpop.f32.mrf.mxu0
      %3867 = vmatprep.mubr.f32.mxu0 0.0
      %3868 = vmatmul.mubr.f32.gmra.mxu0 %v3664
      %v3869 = vpop.f32.mrf.mxu0
      %v3870 = vadd.f32 %v3595, %v3869
      %v3871 = vpop.f32.mrf.mxu0
      %3872 = vmatprep.mubr.f32.mxu0 0.0
      %3873 = vmatmul.mubr.f32.gmra.mxu0 %v3667
      %v3874 = vpop.f32.mrf.mxu0
      %v3875 = vadd.f32 %v3595, %v3874
      %v3876 = vpop.f32.mrf.mxu0
      %3877 = vmatprep.mubr.f32.mxu0 0.0
      %3878 = vmatmul.mubr.f32.gmra.mxu0 %v3670
      %v3879 = vpop.f32.mrf.mxu0
      %v3880 = vadd.f32 %v3595, %v3879
      %v3881 = vpop.f32.mrf.mxu0
      %3882 = vmatprep.mubr.f32.mxu0 0.0
      %3883 = vmatmul.mubr.f32.gmra.mxu0 %v3673
      %v3884 = vpop.f32.mrf.mxu0
      %v3885 = vadd.f32 %v3595, %v3884
      %v3886 = vpop.f32.mrf.mxu0
      %3887 = vmatprep.mubr.f32.mxu0 0.0
      %3888 = vmatmul.mubr.f32.gmra.mxu0 %v3676
      %v3889 = vpop.f32.mrf.mxu0
      %v3890 = vadd.f32 %v3595, %v3889
      %v3891 = vpop.f32.mrf.mxu0
      %3892 = vmatprep.mubr.f32.mxu0 0.0
      %3893 = vmatmul.mubr.f32.gmra.mxu0 %v3679
      %v3894 = vpop.f32.mrf.mxu0
      %v3895 = vadd.f32 %v3595, %v3894
      %v3896 = vpop.f32.mrf.mxu0
      %3897 = vmatprep.mubr.f32.mxu0 0.0
      %3898 = vmatmul.mubr.f32.gmra.mxu0 %v3682
      %v3899 = vpop.f32.mrf.mxu0
      %v3900 = vadd.f32 %v3595, %v3899
      %v3901 = vpop.f32.mrf.mxu0
      %3902 = vmatprep.mubr.f32.mxu0 0.0
      %3903 = vmatmul.mubr.f32.gmra.mxu0 %v3685
      %v3904 = vpop.f32.mrf.mxu0
      %v3905 = vadd.f32 %v3595, %v3904
      %v3906 = vpop.f32.mrf.mxu0
      %3907 = vmatprep.mubr.f32.mxu0 0.0
      %3908 = vmatmul.mubr.f32.gmra.mxu0 %v3688
      %v3909 = vpop.f32.mrf.mxu0
      %v3910 = vadd.f32 %v3595, %v3909
      %v3911 = vpop.f32.mrf.mxu0
      %3912 = vmatprep.mubr.f32.mxu0 0.0
      %3913 = vmatmul.mubr.f32.gmra.mxu0 %v3691
      %v3914 = vpop.f32.mrf.mxu0
      %v3915 = vadd.f32 %v3595, %v3914
      %v3916 = vpop.f32.mrf.mxu0
      %3917 = vdwg.mxu0
      %v3918 = vsel %vm1550, %v3760, 0.0
      %v3919 = vsel %vm1550, %v3765, 0.0
      %v3920 = vadd.f32 %v3918, %v3919
      %v3921 = vsel %vm1550, %v3770, 0.0
      %v3922 = vadd.f32 %v3920, %v3921
      %v3923 = vsel %vm1550, %v3775, 0.0
      %v3924 = vadd.f32 %v3922, %v3923
      %v3925 = vsel %vm1550, %v3780, 0.0
      %v3926 = vadd.f32 %v3924, %v3925
      %v3927 = vsel %vm1550, %v3785, 0.0
      %v3928 = vadd.f32 %v3926, %v3927
      %v3929 = vsel %vm1550, %v3790, 0.0
      %v3930 = vadd.f32 %v3928, %v3929
      %v3931 = vsel %vm1550, %v3795, 0.0
      %v3932 = vadd.f32 %v3930, %v3931
      %v3933 = vsel %vm1550, %v3800, 0.0
      %v3934 = vadd.f32 %v3932, %v3933
      %v3935 = vsel %vm1550, %v3805, 0.0
      %v3936 = vadd.f32 %v3934, %v3935
      %v3937 = vsel %vm1550, %v3810, 0.0
      %v3938 = vadd.f32 %v3936, %v3937
      %v3939 = vsel %vm1550, %v3815, 0.0
      %v3940 = vadd.f32 %v3938, %v3939
      %v3941 = vsel %vm1550, %v3820, 0.0
      %v3942 = vadd.f32 %v3940, %v3941
      %v3943 = vsel %vm1550, %v3825, 0.0
      %v3944 = vadd.f32 %v3942, %v3943
      %v3945 = vsel %vm1550, %v3830, 0.0
      %v3946 = vadd.f32 %v3944, %v3945
      %v3947 = vsel %vm1550, %v3835, 0.0
      %v3948 = vadd.f32 %v3946, %v3947
      %v3949 = vsel %vm1550, %v3840, 0.0
      %v3950 = vadd.f32 %v3948, %v3949
      %v3951 = vsel %vm1550, %v3845, 0.0
      %v3952 = vadd.f32 %v3950, %v3951
      %v3953 = vsel %vm1550, %v3850, 0.0
      %v3954 = vadd.f32 %v3952, %v3953
      %v3955 = vsel %vm1550, %v3855, 0.0
      %v3956 = vadd.f32 %v3954, %v3955
      %v3957 = vsel %vm1550, %v3860, 0.0
      %v3958 = vadd.f32 %v3956, %v3957
      %v3959 = vsel %vm1550, %v3865, 0.0
      %v3960 = vadd.f32 %v3958, %v3959
      %v3961 = vsel %vm1550, %v3870, 0.0
      %v3962 = vadd.f32 %v3960, %v3961
      %v3963 = vsel %vm1550, %v3875, 0.0
      %v3964 = vadd.f32 %v3962, %v3963
      %v3965 = vsel %vm1550, %v3880, 0.0
      %v3966 = vadd.f32 %v3964, %v3965
      %v3967 = vsel %vm1550, %v3885, 0.0
      %v3968 = vadd.f32 %v3966, %v3967
      %v3969 = vsel %vm1550, %v3890, 0.0
      %v3970 = vadd.f32 %v3968, %v3969
      %v3971 = vsel %vm1550, %v3895, 0.0
      %v3972 = vadd.f32 %v3970, %v3971
      %v3973 = vsel %vm1550, %v3900, 0.0
      %v3974 = vadd.f32 %v3972, %v3973
      %v3975 = vsel %vm1550, %v3905, 0.0
      %v3976 = vadd.f32 %v3974, %v3975
      %v3977 = vsel %vm1550, %v3910, 0.0
      %v3978 = vadd.f32 %v3976, %v3977
      %v3979 = vsel %vm1550, %v3915, 0.0
      %v3980 = vadd.f32 %v3978, %v3979
      %v3981 = vrot.slane %v3980, 4
      %v3982 = vadd.f32 %v3980, %v3981
      %v3983 = vrot.slane %v3982, 2
      %v3984 = vadd.f32 %v3982, %v3983
      %v3985 = vrot.slane %v3984, 1
      %v3986 = vadd.f32 %v3984, %v3985
      %v3987 = vrcp.pop 256.0
      %v3988 = vmul.f32 %v3986, %v3987
      %v3989 = vld [vmem:[%s3] sm:$0xff]
      %v3990 = vld [vmem:[%s4] sm:$0x1]
      %v3992 = vsel %vm1550, %v3988, 0
      %3994 = vmatprep.subr.mxu0 0.0
      %3995 = vmatpush1.msra.mxu0 0.0
      %3996 = vmatprep.subr.mxu0 0.0
      %3997 = vmatpush1.msra.mxu0 0.0
      %3998 = vmatprep.subr.mxu0 0.0
      %3999 = vmatpush1.msra.mxu0 0.0
      %4000 = vmatprep.subr.mxu0 0.0
      %4001 = vmatpush1.msra.mxu0 0.0
      %4002 = vmatprep.subr.mxu0 0.0
      %4003 = vmatpush1.msra.mxu0 0.0
      %4004 = vmatprep.subr.mxu0 0.0
      %4005 = vmatpush1.msra.mxu0 0.0
      %4006 = vmatprep.subr.mxu0 0.0
      %4007 = vmatpush1.msra.mxu0 0.0
      %4008 = vmatprep.subr.mxu0 0.0
      %4009 = vmatpush1.msra.mxu0 0.0
      %4010 = vmatprep.subr.mxu0 0.0
      %4011 = vmatpush1.msra.mxu0 0.0
      %4012 = vmatprep.subr.mxu0 0.0
      %4013 = vmatpush1.msra.mxu0 0.0
      %4014 = vmatprep.subr.mxu0 0.0
      %4015 = vmatpush1.msra.mxu0 0.0
      %4016 = vmatprep.subr.mxu0 0.0
      %4017 = vmatpush1.msra.mxu0 0.0
      %4018 = vmatprep.subr.mxu0 0.0
      %4019 = vmatpush1.msra.mxu0 0.0
      %4020 = vmatprep.subr.mxu0 0.0
      %4021 = vmatpush1.msra.mxu0 0.0
      %4022 = vmatprep.subr.mxu0 0.0
      %4023 = vmatpush1.msra.mxu0 0.0
      %4024 = vmatprep.subr.mxu0 0.0
      %4025 = vmatpush1.msra.mxu0 %v3989
      %4026 = vmatprep.subr.mxu0 0.0
      %4027 = vmatpush2.msra.mxu0 0.0
      %4028 = vmatprep.subr.mxu0 0.0
      %4029 = vmatpush2.msra.mxu0 0.0
      %4030 = vmatprep.subr.mxu0 0.0
      %4031 = vmatpush2.msra.mxu0 0.0
      %4032 = vmatprep.subr.mxu0 0.0
      %4033 = vmatpush2.msra.mxu0 0.0
      %4034 = vmatprep.subr.mxu0 0.0
      %4035 = vmatpush2.msra.mxu0 0.0
      %4036 = vmatprep.subr.mxu0 0.0
      %4037 = vmatpush2.msra.mxu0 0.0
      %4038 = vmatprep.subr.mxu0 0.0
      %4039 = vmatpush2.msra.mxu0 0.0
      %4040 = vmatprep.subr.mxu0 0.0
      %4041 = vmatpush2.msra.mxu0 0.0
      %4042 = vmatprep.subr.mxu0 0.0
      %4043 = vmatpush2.msra.mxu0 0.0
      %4044 = vmatprep.subr.mxu0 0.0
      %4045 = vmatpush2.msra.mxu0 0.0
      %4046 = vmatprep.subr.mxu0 0.0
      %4047 = vmatpush2.msra.mxu0 0.0
      %4048 = vmatprep.subr.mxu0 0.0
      %4049 = vmatpush2.msra.mxu0 0.0
      %4050 = vmatprep.subr.mxu0 0.0
      %4051 = vmatpush2.msra.mxu0 0.0
      %4052 = vmatprep.subr.mxu0 0.0
      %4053 = vmatpush2.msra.mxu0 0.0
      %4054 = vmatprep.subr.mxu0 0.0
      %4055 = vmatpush2.msra.mxu0 0.0
      %4056 = vmatprep.subr.mxu0 0.0
      %4057 = vmatpush2.msra.mxu0 0.0
      %4058 = vmatprep.mubr.f32.mxu0 0.0
      %4059 = vmatmul.mubr.f32.gmra.mxu0 %v3992
      %v4060 = vpop.f32.mrf.mxu0
      %v4061 = vadd.f32 %v3990, %v4060
      %v4062 = vpop.f32.mrf.mxu0
      %4063 = vdwg.mxu0
      %vm4064 = vcmp.ge.f32.partialorder %v4061, 0.0
      %v4065 = vmul.f32 %v4061, 0.1
      %v4066 = vsel %vm4064, %v4061, %v4065
      %v4067 = vld [vmem:[%s5] sm:$0xf]
      %v4068 = vld [vmem:[%s6] sm:$0x1]
      %vm4069 = vcmask 31744
      %v4071 = vsel %vm4069, %v4066, 0
      %vm4073 = vcmask 1043456
      %v4075 = vsel %vm4073, %v4067, 0
      %4077 = vmatprep.subr.mxu0 0.0
      %4078 = vmatpush1.msra.mxu0 0.0
      %4079 = vmatprep.subr.mxu0 0.0
      %4080 = vmatpush1.msra.mxu0 0.0
      %4081 = vmatprep.subr.mxu0 0.0
      %4082 = vmatpush1.msra.mxu0 0.0
      %4083 = vmatprep.subr.mxu0 0.0
      %4084 = vmatpush1.msra.mxu0 0.0
      %4085 = vmatprep.subr.mxu0 0.0
      %4086 = vmatpush1.msra.mxu0 0.0
      %4087 = vmatprep.subr.mxu0 0.0
      %4088 = vmatpush1.msra.mxu0 0.0
      %4089 = vmatprep.subr.mxu0 0.0
      %4090 = vmatpush1.msra.mxu0 0.0
      %4091 = vmatprep.subr.mxu0 0.0
      %4092 = vmatpush1.msra.mxu0 0.0
      %4093 = vmatprep.subr.mxu0 0.0
      %4094 = vmatpush1.msra.mxu0 0.0
      %4095 = vmatprep.subr.mxu0 0.0
      %4096 = vmatpush1.msra.mxu0 0.0
      %4097 = vmatprep.subr.mxu0 0.0
      %4098 = vmatpush1.msra.mxu0 0.0
      %4099 = vmatprep.subr.mxu0 0.0
      %4100 = vmatpush1.msra.mxu0 0.0
      %4101 = vmatprep.subr.mxu0 0.0
      %4102 = vmatpush1.msra.mxu0 0.0
      %4103 = vmatprep.subr.mxu0 0.0
      %4104 = vmatpush1.msra.mxu0 0.0
      %4105 = vmatprep.subr.mxu0 0.0
      %4106 = vmatpush1.msra.mxu0 0.0
      %4107 = vmatprep.subr.mxu0 0.0
      %4108 = vmatpush1.msra.mxu0 %v4075
      %4109 = vmatprep.subr.mxu0 0.0
      %4110 = vmatpush2.msra.mxu0 0.0
      %4111 = vmatprep.subr.mxu0 0.0
      %4112 = vmatpush2.msra.mxu0 0.0
      %4113 = vmatprep.subr.mxu0 0.0
      %4114 = vmatpush2.msra.mxu0 0.0
      %4115 = vmatprep.subr.mxu0 0.0
      %4116 = vmatpush2.msra.mxu0 0.0
      %4117 = vmatprep.subr.mxu0 0.0
      %4118 = vmatpush2.msra.mxu0 0.0
      %4119 = vmatprep.subr.mxu0 0.0
      %4120 = vmatpush2.msra.mxu0 0.0
      %4121 = vmatprep.subr.mxu0 0.0
      %4122 = vmatpush2.msra.mxu0 0.0
      %4123 = vmatprep.subr.mxu0 0.0
      %4124 = vmatpush2.msra.mxu0 0.0
      %4125 = vmatprep.subr.mxu0 0.0
      %4126 = vmatpush2.msra.mxu0 0.0
      %4127 = vmatprep.subr.mxu0 0.0
      %4128 = vmatpush2.msra.mxu0 0.0
      %4129 = vmatprep.subr.mxu0 0.0
      %4130 = vmatpush2.msra.mxu0 0.0
      %4131 = vmatprep.subr.mxu0 0.0
      %4132 = vmatpush2.msra.mxu0 0.0
      %4133 = vmatprep.subr.mxu0 0.0
      %4134 = vmatpush2.msra.mxu0 0.0
      %4135 = vmatprep.subr.mxu0 0.0
      %4136 = vmatpush2.msra.mxu0 0.0
      %4137 = vmatprep.subr.mxu0 0.0
      %4138 = vmatpush2.msra.mxu0 0.0
      %4139 = vmatprep.subr.mxu0 0.0
      %4140 = vmatpush2.msra.mxu0 0.0
      %4141 = vmatprep.mubr.f32.mxu0 0.0
      %4142 = vmatmul.mubr.f32.gmra.mxu0 %v4071
      %v4143 = vpop.f32.mrf.mxu0
      %v4144 = vadd.f32 %v4068, %v4143
      %v4145 = vpop.f32.mrf.mxu0
      %4146 = vdwg.mxu0
      %v4147 = vxor.u32 %v4144, 2147483648
      %v4148 = vmul.f32 %v4147, 1.442695
      %v4149 = vpow.pop %v4148
      %v4150 = vadd.f32 %v4149, 1.0
      %v4151 = vrcp.pop %v4150
      %v4152 = vmul.f32 1.0, %v4151
      %v4153 = vlaneseq
      %v4154 = vshrl.u32 %v4153, 7
      %v4155 = vsub.s32 0, %v4154
      %v4156 = vrot.slane %v4152, %v4155
      %v4157 = vmul.f32 %v3760, %v4156
      %v4158 = vmul.f32 %v3765, %v4156
      %v4159 = vmul.f32 %v3770, %v4156
      %v4160 = vmul.f32 %v3775, %v4156
      %v4161 = vmul.f32 %v3780, %v4156
      %v4162 = vmul.f32 %v3785, %v4156
      %v4163 = vmul.f32 %v3790, %v4156
      %v4164 = vmul.f32 %v3795, %v4156
      %v4165 = vmul.f32 %v3800, %v4156
      %v4166 = vmul.f32 %v3805, %v4156
      %v4167 = vmul.f32 %v3810, %v4156
      %v4168 = vmul.f32 %v3815, %v4156
      %v4169 = vmul.f32 %v3820, %v4156
      %v4170 = vmul.f32 %v3825, %v4156
      %v4171 = vmul.f32 %v3830, %v4156
      %v4172 = vmul.f32 %v3835, %v4156
      %v4173 = vmul.f32 %v3840, %v4156
      %v4174 = vmul.f32 %v3845, %v4156
      %v4175 = vmul.f32 %v3850, %v4156
      %v4176 = vmul.f32 %v3855, %v4156
      %v4177 = vmul.f32 %v3860, %v4156
      %v4178 = vmul.f32 %v3865, %v4156
      %v4179 = vmul.f32 %v3870, %v4156
      %v4180 = vmul.f32 %v3875, %v4156
      %v4181 = vmul.f32 %v3880, %v4156
      %v4182 = vmul.f32 %v3885, %v4156
      %v4183 = vmul.f32 %v3890, %v4156
      %v4184 = vmul.f32 %v3895, %v4156
      %v4185 = vmul.f32 %v3900, %v4156
      %v4186 = vmul.f32 %v3905, %v4156
      %v4187 = vmul.f32 %v3910, %v4156
      %v4188 = vmul.f32 %v3915, %v4156
      %v4189 = vadd.f32 %v4157, %v351
      %v4190 = vadd.f32 %v4158, %v352
      %v4191 = vadd.f32 %v4159, %v353
      %v4192 = vadd.f32 %v4160, %v354
      %v4193 = vadd.f32 %v4161, %v355
      %v4194 = vadd.f32 %v4162, %v356
      %v4195 = vadd.f32 %v4163, %v357
      %v4196 = vadd.f32 %v4164, %v358
      %v4197 = vadd.f32 %v4165, %v359
      %v4198 = vadd.f32 %v4166, %v360
      %v4199 = vadd.f32 %v4167, %v361
      %v4200 = vadd.f32 %v4168, %v362
      %v4201 = vadd.f32 %v4169, %v363
      %v4202 = vadd.f32 %v4170, %v364
      %v4203 = vadd.f32 %v4171, %v365
      %v4204 = vadd.f32 %v4172, %v366
      %v4205 = vadd.f32 %v4173, %v383
      %v4206 = vadd.f32 %v4174, %v384
      %v4207 = vadd.f32 %v4175, %v385
      %v4208 = vadd.f32 %v4176, %v386
      %v4209 = vadd.f32 %v4177, %v387
      %v4210 = vadd.f32 %v4178, %v388
      %v4211 = vadd.f32 %v4179, %v389
      %v4212 = vadd.f32 %v4180, %v390
      %v4213 = vadd.f32 %v4181, %v391
      %v4214 = vadd.f32 %v4182, %v392
      %v4215 = vadd.f32 %v4183, %v393
      %v4216 = vadd.f32 %v4184, %v394
      %v4217 = vadd.f32 %v4185, %v395
      %v4218 = vadd.f32 %v4186, %v396
      %v4219 = vadd.f32 %v4187, %v397
      %v4220 = vadd.f32 %v4188, %v398
      %s4221 = scalar_lea.vmem %s1, 144
      %v4222 = vld [vmem:[%s4221] sm:$0xff]
      %v4223 = vld [vmem:[%s4221 + $0x8] sm:$0xff]
      %v4224 = vld [vmem:[%s4221 + $0x10] sm:$0xff]
      %v4225 = vld [vmem:[%s4221 + $0x18] sm:$0xff]
      %v4226 = vld [vmem:[%s4221 + $0x20] sm:$0xff]
      %v4227 = vld [vmem:[%s4221 + $0x28] sm:$0xff]
      %v4228 = vld [vmem:[%s4221 + $0x30] sm:$0xff]
      %v4229 = vld [vmem:[%s4221 + $0x38] sm:$0xff]
      %v4230 = vld [vmem:[%s4221 + $0x40] sm:$0xff]
      %s4231 = scalar_lea.vmem %s2, 2
      %v4232 = vld [vmem:[%s4231] sm:$0x1]
      %v4265 = vrot.slane %v4189, 7
      %v4266 = vrot.slane %v4190, 7
      %v4267 = vsel %vm442, %v4265, %v4266
      %v4268 = vrot.slane %v4191, 7
      %v4269 = vrot.slane %v4192, 7
      %v4270 = vsel %vm442, %v4268, %v4269
      %v4271 = vrot.slane %v4193, 7
      %v4272 = vrot.slane %v4194, 7
      %v4273 = vsel %vm442, %v4271, %v4272
      %v4274 = vrot.slane %v4195, 7
      %v4275 = vrot.slane %v4196, 7
      %v4276 = vsel %vm442, %v4274, %v4275
      %v4277 = vrot.slane %v4197, 7
      %v4278 = vrot.slane %v4198, 7
      %v4279 = vsel %vm442, %v4277, %v4278
      %v4280 = vrot.slane %v4199, 7
      %v4281 = vrot.slane %v4200, 7
      %v4282 = vsel %vm442, %v4280, %v4281
      %v4283 = vrot.slane %v4201, 7
      %v4284 = vrot.slane %v4202, 7
      %v4285 = vsel %vm442, %v4283, %v4284
      %v4286 = vrot.slane %v4203, 7
      %v4287 = vrot.slane %v4204, 7
      %v4288 = vsel %vm442, %v4286, %v4287
      %v4289 = vrot.slane %v4205, 7
      %v4290 = vrot.slane %v4206, 7
      %v4291 = vsel %vm442, %v4289, %v4290
      %v4292 = vrot.slane %v4207, 7
      %v4293 = vrot.slane %v4208, 7
      %v4294 = vsel %vm442, %v4292, %v4293
      %v4295 = vrot.slane %v4209, 7
      %v4296 = vrot.slane %v4210, 7
      %v4297 = vsel %vm442, %v4295, %v4296
      %v4298 = vrot.slane %v4211, 7
      %v4299 = vrot.slane %v4212, 7
      %v4300 = vsel %vm442, %v4298, %v4299
      %v4301 = vrot.slane %v4213, 7
      %v4302 = vrot.slane %v4214, 7
      %v4303 = vsel %vm442, %v4301, %v4302
      %v4304 = vrot.slane %v4215, 7
      %v4305 = vrot.slane %v4216, 7
      %v4306 = vsel %vm442, %v4304, %v4305
      %v4307 = vrot.slane %v4217, 7
      %v4308 = vrot.slane %v4218, 7
      %v4309 = vsel %vm442, %v4307, %v4308
      %v4310 = vrot.slane %v4219, 7
      %v4311 = vrot.slane %v4220, 7
      %v4312 = vsel %vm442, %v4310, %v4311
      %v4360 = vsel %vm442, 0.0, %v4265
      %v4361 = vsel %vm442, 0.0, %v4268
      %v4362 = vsel %vm442, 0.0, %v4271
      %v4363 = vsel %vm442, 0.0, %v4274
      %v4364 = vsel %vm442, 0.0, %v4277
      %v4365 = vsel %vm442, 0.0, %v4280
      %v4366 = vsel %vm442, 0.0, %v4283
      %v4367 = vsel %vm442, 0.0, %v4286
      %v4368 = vsel %vm442, 0.0, %v4289
      %v4369 = vsel %vm442, 0.0, %v4292
      %v4370 = vsel %vm442, 0.0, %v4295
      %v4371 = vsel %vm442, 0.0, %v4298
      %v4372 = vsel %vm442, 0.0, %v4301
      %v4373 = vsel %vm442, 0.0, %v4304
      %v4374 = vsel %vm442, 0.0, %v4307
      %v4375 = vsel %vm442, 0.0, %v4310
      %v4376 = vsel %vm442, %v4266, 0.0
      %v4377 = vsel %vm442, %v4269, 0.0
      %v4378 = vsel %vm442, %v4272, 0.0
      %v4379 = vsel %vm442, %v4275, 0.0
      %v4380 = vsel %vm442, %v4278, 0.0
      %v4381 = vsel %vm442, %v4281, 0.0
      %v4382 = vsel %vm442, %v4284, 0.0
      %v4383 = vsel %vm442, %v4287, 0.0
      %v4384 = vsel %vm442, %v4290, 0.0
      %v4385 = vsel %vm442, %v4293, 0.0
      %v4386 = vsel %vm442, %v4296, 0.0
      %v4387 = vsel %vm442, %v4299, 0.0
      %v4388 = vsel %vm442, %v4302, 0.0
      %v4389 = vsel %vm442, %v4305, 0.0
      %v4390 = vsel %vm442, %v4308, 0.0
      %v4391 = vsel %vm442, %v4311, 0.0
      %v4422 = vrot.slane %v4360, 1
      %v4423 = vrot.slane %v4267, 1
      %v4424 = vsel %vm608, %v4422, %v4423
      %v4425 = vrot.slane %v4376, 1
      %v4426 = vsel %vm608, %v4423, %v4425
      %v4427 = vrot.slane %v4361, 1
      %v4428 = vrot.slane %v4270, 1
      %v4429 = vsel %vm608, %v4427, %v4428
      %v4430 = vrot.slane %v4377, 1
      %v4431 = vsel %vm608, %v4428, %v4430
      %v4432 = vrot.slane %v4362, 1
      %v4433 = vrot.slane %v4273, 1
      %v4434 = vsel %vm608, %v4432, %v4433
      %v4435 = vrot.slane %v4378, 1
      %v4436 = vsel %vm608, %v4433, %v4435
      %v4437 = vrot.slane %v4363, 1
      %v4438 = vrot.slane %v4276, 1
      %v4439 = vsel %vm608, %v4437, %v4438
      %v4440 = vrot.slane %v4379, 1
      %v4441 = vsel %vm608, %v4438, %v4440
      %v4442 = vrot.slane %v4364, 1
      %v4443 = vrot.slane %v4279, 1
      %v4444 = vsel %vm608, %v4442, %v4443
      %v4445 = vrot.slane %v4380, 1
      %v4446 = vsel %vm608, %v4443, %v4445
      %v4447 = vrot.slane %v4365, 1
      %v4448 = vrot.slane %v4282, 1
      %v4449 = vsel %vm608, %v4447, %v4448
      %v4450 = vrot.slane %v4381, 1
      %v4451 = vsel %vm608, %v4448, %v4450
      %v4452 = vrot.slane %v4366, 1
      %v4453 = vrot.slane %v4285, 1
      %v4454 = vsel %vm608, %v4452, %v4453
      %v4455 = vrot.slane %v4382, 1
      %v4456 = vsel %vm608, %v4453, %v4455
      %v4457 = vrot.slane %v4367, 1
      %v4458 = vrot.slane %v4288, 1
      %v4459 = vsel %vm608, %v4457, %v4458
      %v4460 = vrot.slane %v4383, 1
      %v4461 = vsel %vm608, %v4458, %v4460
      %v4462 = vrot.slane %v4368, 1
      %v4463 = vrot.slane %v4291, 1
      %v4464 = vsel %vm608, %v4462, %v4463
      %v4465 = vrot.slane %v4384, 1
      %v4466 = vsel %vm608, %v4463, %v4465
      %v4467 = vrot.slane %v4369, 1
      %v4468 = vrot.slane %v4294, 1
      %v4469 = vsel %vm608, %v4467, %v4468
      %v4470 = vrot.slane %v4385, 1
      %v4471 = vsel %vm608, %v4468, %v4470
      %v4472 = vrot.slane %v4370, 1
      %v4473 = vrot.slane %v4297, 1
      %v4474 = vsel %vm608, %v4472, %v4473
      %v4475 = vrot.slane %v4386, 1
      %v4476 = vsel %vm608, %v4473, %v4475
      %v4477 = vrot.slane %v4371, 1
      %v4478 = vrot.slane %v4300, 1
      %v4479 = vsel %vm608, %v4477, %v4478
      %v4480 = vrot.slane %v4387, 1
      %v4481 = vsel %vm608, %v4478, %v4480
      %v4482 = vrot.slane %v4372, 1
      %v4483 = vrot.slane %v4303, 1
      %v4484 = vsel %vm608, %v4482, %v4483
      %v4485 = vrot.slane %v4388, 1
      %v4486 = vsel %vm608, %v4483, %v4485
      %v4487 = vrot.slane %v4373, 1
      %v4488 = vrot.slane %v4306, 1
      %v4489 = vsel %vm608, %v4487, %v4488
      %v4490 = vrot.slane %v4389, 1
      %v4491 = vsel %vm608, %v4488, %v4490
      %v4492 = vrot.slane %v4374, 1
      %v4493 = vrot.slane %v4309, 1
      %v4494 = vsel %vm608, %v4492, %v4493
      %v4495 = vrot.slane %v4390, 1
      %v4496 = vsel %vm608, %v4493, %v4495
      %4497 = vrot.lane.b32.xlu0 %v4424, 8
      %v4498 = vpop.permute.xlu0 %4497
      %4499 = vrot.lane.b32.xlu0 %v4426, 8
      %v4500 = vpop.permute.xlu0 %4499
      %4501 = vrot.lane.b32.xlu0 %v4429, 8
      %v4502 = vpop.permute.xlu0 %4501
      %4503 = vrot.lane.b32.xlu0 %v4431, 8
      %v4504 = vpop.permute.xlu0 %4503
      %4505 = vrot.lane.b32.xlu0 %v4434, 8
      %v4506 = vpop.permute.xlu0 %4505
      %4507 = vrot.lane.b32.xlu0 %v4436, 8
      %v4508 = vpop.permute.xlu0 %4507
      %4509 = vrot.lane.b32.xlu0 %v4439, 8
      %v4510 = vpop.permute.xlu0 %4509
      %4511 = vrot.lane.b32.xlu0 %v4441, 8
      %v4512 = vpop.permute.xlu0 %4511
      %4513 = vrot.lane.b32.xlu0 %v4444, 8
      %v4514 = vpop.permute.xlu0 %4513
      %4515 = vrot.lane.b32.xlu0 %v4446, 8
      %v4516 = vpop.permute.xlu0 %4515
      %4517 = vrot.lane.b32.xlu0 %v4449, 8
      %v4518 = vpop.permute.xlu0 %4517
      %4519 = vrot.lane.b32.xlu0 %v4451, 8
      %v4520 = vpop.permute.xlu0 %4519
      %4521 = vrot.lane.b32.xlu0 %v4454, 8
      %v4522 = vpop.permute.xlu0 %4521
      %4523 = vrot.lane.b32.xlu0 %v4456, 8
      %v4524 = vpop.permute.xlu0 %4523
      %4525 = vrot.lane.b32.xlu0 %v4459, 8
      %v4526 = vpop.permute.xlu0 %4525
      %4527 = vrot.lane.b32.xlu0 %v4461, 8
      %v4528 = vpop.permute.xlu0 %4527
      %4529 = vrot.lane.b32.xlu0 %v4464, 8
      %v4530 = vpop.permute.xlu0 %4529
      %4531 = vrot.lane.b32.xlu0 %v4466, 8
      %v4532 = vpop.permute.xlu0 %4531
      %4533 = vrot.lane.b32.xlu0 %v4469, 8
      %v4534 = vpop.permute.xlu0 %4533
      %4535 = vrot.lane.b32.xlu0 %v4471, 8
      %v4536 = vpop.permute.xlu0 %4535
      %4537 = vrot.lane.b32.xlu0 %v4474, 8
      %v4538 = vpop.permute.xlu0 %4537
      %4539 = vrot.lane.b32.xlu0 %v4476, 8
      %v4540 = vpop.permute.xlu0 %4539
      %4541 = vrot.lane.b32.xlu0 %v4479, 8
      %v4542 = vpop.permute.xlu0 %4541
      %4543 = vrot.lane.b32.xlu0 %v4481, 8
      %v4544 = vpop.permute.xlu0 %4543
      %4545 = vrot.lane.b32.xlu0 %v4484, 8
      %v4546 = vpop.permute.xlu0 %4545
      %4547 = vrot.lane.b32.xlu0 %v4486, 8
      %v4548 = vpop.permute.xlu0 %4547
      %4549 = vrot.lane.b32.xlu0 %v4489, 8
      %v4550 = vpop.permute.xlu0 %4549
      %4551 = vrot.lane.b32.xlu0 %v4491, 8
      %v4552 = vpop.permute.xlu0 %4551
      %4553 = vrot.lane.b32.xlu0 %v4494, 8
      %v4554 = vpop.permute.xlu0 %4553
      %4555 = vrot.lane.b32.xlu0 %v4496, 8
      %v4556 = vpop.permute.xlu0 %4555
      %v4587 = vrot.slane %v4360, 2
      %v4588 = vrot.slane %v4267, 2
      %v4589 = vsel %vm785, %v4587, %v4588
      %v4590 = vrot.slane %v4376, 2
      %v4591 = vsel %vm785, %v4588, %v4590
      %v4592 = vrot.slane %v4361, 2
      %v4593 = vrot.slane %v4270, 2
      %v4594 = vsel %vm785, %v4592, %v4593
      %v4595 = vrot.slane %v4377, 2
      %v4596 = vsel %vm785, %v4593, %v4595
      %v4597 = vrot.slane %v4362, 2
      %v4598 = vrot.slane %v4273, 2
      %v4599 = vsel %vm785, %v4597, %v4598
      %v4600 = vrot.slane %v4378, 2
      %v4601 = vsel %vm785, %v4598, %v4600
      %v4602 = vrot.slane %v4363, 2
      %v4603 = vrot.slane %v4276, 2
      %v4604 = vsel %vm785, %v4602, %v4603
      %v4605 = vrot.slane %v4379, 2
      %v4606 = vsel %vm785, %v4603, %v4605
      %v4607 = vrot.slane %v4364, 2
      %v4608 = vrot.slane %v4279, 2
      %v4609 = vsel %vm785, %v4607, %v4608
      %v4610 = vrot.slane %v4380, 2
      %v4611 = vsel %vm785, %v4608, %v4610
      %v4612 = vrot.slane %v4365, 2
      %v4613 = vrot.slane %v4282, 2
      %v4614 = vsel %vm785, %v4612, %v4613
      %v4615 = vrot.slane %v4381, 2
      %v4616 = vsel %vm785, %v4613, %v4615
      %v4617 = vrot.slane %v4366, 2
      %v4618 = vrot.slane %v4285, 2
      %v4619 = vsel %vm785, %v4617, %v4618
      %v4620 = vrot.slane %v4382, 2
      %v4621 = vsel %vm785, %v4618, %v4620
      %v4622 = vrot.slane %v4367, 2
      %v4623 = vrot.slane %v4288, 2
      %v4624 = vsel %vm785, %v4622, %v4623
      %v4625 = vrot.slane %v4383, 2
      %v4626 = vsel %vm785, %v4623, %v4625
      %v4627 = vrot.slane %v4368, 2
      %v4628 = vrot.slane %v4291, 2
      %v4629 = vsel %vm785, %v4627, %v4628
      %v4630 = vrot.slane %v4384, 2
      %v4631 = vsel %vm785, %v4628, %v4630
      %v4632 = vrot.slane %v4369, 2
      %v4633 = vrot.slane %v4294, 2
      %v4634 = vsel %vm785, %v4632, %v4633
      %v4635 = vrot.slane %v4385, 2
      %v4636 = vsel %vm785, %v4633, %v4635
      %v4637 = vrot.slane %v4370, 2
      %v4638 = vrot.slane %v4297, 2
      %v4639 = vsel %vm785, %v4637, %v4638
      %v4640 = vrot.slane %v4386, 2
      %v4641 = vsel %vm785, %v4638, %v4640
      %v4642 = vrot.slane %v4371, 2
      %v4643 = vrot.slane %v4300, 2
      %v4644 = vsel %vm785, %v4642, %v4643
      %v4645 = vrot.slane %v4387, 2
      %v4646 = vsel %vm785, %v4643, %v4645
      %v4647 = vrot.slane %v4372, 2
      %v4648 = vrot.slane %v4303, 2
      %v4649 = vsel %vm785, %v4647, %v4648
      %v4650 = vrot.slane %v4388, 2
      %v4651 = vsel %vm785, %v4648, %v4650
      %v4652 = vrot.slane %v4373, 2
      %v4653 = vrot.slane %v4306, 2
      %v4654 = vsel %vm785, %v4652, %v4653
      %v4655 = vrot.slane %v4389, 2
      %v4656 = vsel %vm785, %v4653, %v4655
      %v4657 = vrot.slane %v4374, 2
      %v4658 = vrot.slane %v4309, 2
      %v4659 = vsel %vm785, %v4657, %v4658
      %v4660 = vrot.slane %v4390, 2
      %v4661 = vsel %vm785, %v4658, %v4660
      %4662 = vrot.lane.b32.xlu0 %v4589, 16
      %v4663 = vpop.permute.xlu0 %4662
      %4664 = vrot.lane.b32.xlu0 %v4591, 16
      %v4665 = vpop.permute.xlu0 %4664
      %4666 = vrot.lane.b32.xlu0 %v4594, 16
      %v4667 = vpop.permute.xlu0 %4666
      %4668 = vrot.lane.b32.xlu0 %v4596, 16
      %v4669 = vpop.permute.xlu0 %4668
      %4670 = vrot.lane.b32.xlu0 %v4599, 16
      %v4671 = vpop.permute.xlu0 %4670
      %4672 = vrot.lane.b32.xlu0 %v4601, 16
      %v4673 = vpop.permute.xlu0 %4672
      %4674 = vrot.lane.b32.xlu0 %v4604, 16
      %v4675 = vpop.permute.xlu0 %4674
      %4676 = vrot.lane.b32.xlu0 %v4606, 16
      %v4677 = vpop.permute.xlu0 %4676
      %4678 = vrot.lane.b32.xlu0 %v4609, 16
      %v4679 = vpop.permute.xlu0 %4678
      %4680 = vrot.lane.b32.xlu0 %v4611, 16
      %v4681 = vpop.permute.xlu0 %4680
      %4682 = vrot.lane.b32.xlu0 %v4614, 16
      %v4683 = vpop.permute.xlu0 %4682
      %4684 = vrot.lane.b32.xlu0 %v4616, 16
      %v4685 = vpop.permute.xlu0 %4684
      %4686 = vrot.lane.b32.xlu0 %v4619, 16
      %v4687 = vpop.permute.xlu0 %4686
      %4688 = vrot.lane.b32.xlu0 %v4621, 16
      %v4689 = vpop.permute.xlu0 %4688
      %4690 = vrot.lane.b32.xlu0 %v4624, 16
      %v4691 = vpop.permute.xlu0 %4690
      %4692 = vrot.lane.b32.xlu0 %v4626, 16
      %v4693 = vpop.permute.xlu0 %4692
      %4694 = vrot.lane.b32.xlu0 %v4629, 16
      %v4695 = vpop.permute.xlu0 %4694
      %4696 = vrot.lane.b32.xlu0 %v4631, 16
      %v4697 = vpop.permute.xlu0 %4696
      %4698 = vrot.lane.b32.xlu0 %v4634, 16
      %v4699 = vpop.permute.xlu0 %4698
      %4700 = vrot.lane.b32.xlu0 %v4636, 16
      %v4701 = vpop.permute.xlu0 %4700
      %4702 = vrot.lane.b32.xlu0 %v4639, 16
      %v4703 = vpop.permute.xlu0 %4702
      %4704 = vrot.lane.b32.xlu0 %v4641, 16
      %v4705 = vpop.permute.xlu0 %4704
      %4706 = vrot.lane.b32.xlu0 %v4644, 16
      %v4707 = vpop.permute.xlu0 %4706
      %4708 = vrot.lane.b32.xlu0 %v4646, 16
      %v4709 = vpop.permute.xlu0 %4708
      %4710 = vrot.lane.b32.xlu0 %v4649, 16
      %v4711 = vpop.permute.xlu0 %4710
      %4712 = vrot.lane.b32.xlu0 %v4651, 16
      %v4713 = vpop.permute.xlu0 %4712
      %4714 = vrot.lane.b32.xlu0 %v4654, 16
      %v4715 = vpop.permute.xlu0 %4714
      %4716 = vrot.lane.b32.xlu0 %v4656, 16
      %v4717 = vpop.permute.xlu0 %4716
      %4718 = vrot.lane.b32.xlu0 %v4659, 16
      %v4719 = vpop.permute.xlu0 %4718
      %4720 = vrot.lane.b32.xlu0 %v4661, 16
      %v4721 = vpop.permute.xlu0 %4720
      %4753 = vrot.lane.b32.xlu0 %v4360, 24
      %v4754 = vpop.permute.xlu0 %4753
      %4755 = vrot.lane.b32.xlu0 %v4267, 24
      %v4756 = vpop.permute.xlu0 %4755
      %4757 = vrot.lane.b32.xlu0 %v4361, 24
      %v4758 = vpop.permute.xlu0 %4757
      %4759 = vrot.lane.b32.xlu0 %v4270, 24
      %v4760 = vpop.permute.xlu0 %4759
      %4761 = vrot.lane.b32.xlu0 %v4362, 24
      %v4762 = vpop.permute.xlu0 %4761
      %4763 = vrot.lane.b32.xlu0 %v4273, 24
      %v4764 = vpop.permute.xlu0 %4763
      %4765 = vrot.lane.b32.xlu0 %v4363, 24
      %v4766 = vpop.permute.xlu0 %4765
      %4767 = vrot.lane.b32.xlu0 %v4276, 24
      %v4768 = vpop.permute.xlu0 %4767
      %4769 = vrot.lane.b32.xlu0 %v4364, 24
      %v4770 = vpop.permute.xlu0 %4769
      %4771 = vrot.lane.b32.xlu0 %v4279, 24
      %v4772 = vpop.permute.xlu0 %4771
      %4773 = vrot.lane.b32.xlu0 %v4365, 24
      %v4774 = vpop.permute.xlu0 %4773
      %4775 = vrot.lane.b32.xlu0 %v4282, 24
      %v4776 = vpop.permute.xlu0 %4775
      %4777 = vrot.lane.b32.xlu0 %v4366, 24
      %v4778 = vpop.permute.xlu0 %4777
      %4779 = vrot.lane.b32.xlu0 %v4285, 24
      %v4780 = vpop.permute.xlu0 %4779
      %4781 = vrot.lane.b32.xlu0 %v4367, 24
      %v4782 = vpop.permute.xlu0 %4781
      %4783 = vrot.lane.b32.xlu0 %v4288, 24
      %v4784 = vpop.permute.xlu0 %4783
      %4785 = vrot.lane.b32.xlu0 %v4368, 24
      %v4786 = vpop.permute.xlu0 %4785
      %4787 = vrot.lane.b32.xlu0 %v4291, 24
      %v4788 = vpop.permute.xlu0 %4787
      %4789 = vrot.lane.b32.xlu0 %v4369, 24
      %v4790 = vpop.permute.xlu0 %4789
      %4791 = vrot.lane.b32.xlu0 %v4294, 24
      %v4792 = vpop.permute.xlu0 %4791
      %4793 = vrot.lane.b32.xlu0 %v4370, 24
      %v4794 = vpop.permute.xlu0 %4793
      %4795 = vrot.lane.b32.xlu0 %v4297, 24
      %v4796 = vpop.permute.xlu0 %4795
      %4797 = vrot.lane.b32.xlu0 %v4371, 24
      %v4798 = vpop.permute.xlu0 %4797
      %4799 = vrot.lane.b32.xlu0 %v4300, 24
      %v4800 = vpop.permute.xlu0 %4799
      %4801 = vrot.lane.b32.xlu0 %v4372, 24
      %v4802 = vpop.permute.xlu0 %4801
      %4803 = vrot.lane.b32.xlu0 %v4303, 24
      %v4804 = vpop.permute.xlu0 %4803
      %4805 = vrot.lane.b32.xlu0 %v4373, 24
      %v4806 = vpop.permute.xlu0 %4805
      %4807 = vrot.lane.b32.xlu0 %v4306, 24
      %v4808 = vpop.permute.xlu0 %4807
      %4809 = vrot.lane.b32.xlu0 %v4374, 24
      %v4810 = vpop.permute.xlu0 %4809
      %4811 = vrot.lane.b32.xlu0 %v4309, 24
      %v4812 = vpop.permute.xlu0 %4811
      %4813 = vrot.lane.b32.xlu0 %v4375, 24
      %v4814 = vpop.permute.xlu0 %4813
      %4815 = vrot.lane.b32.xlu0 %v4312, 24
      %v4816 = vpop.permute.xlu0 %4815
      %v4850 = vrot.slane %v4375, 1
      %v4851 = vrot.slane %v4312, 1
      %v4852 = vsel %vm608, %v4850, %v4851
      %v4853 = vrot.slane %v4391, 1
      %v4854 = vsel %vm608, %v4851, %v4853
      %4855 = vrot.lane.b32.xlu0 %v4424, 32
      %v4856 = vpop.permute.xlu0 %4855
      %4857 = vrot.lane.b32.xlu0 %v4426, 32
      %v4858 = vpop.permute.xlu0 %4857
      %4859 = vrot.lane.b32.xlu0 %v4429, 32
      %v4860 = vpop.permute.xlu0 %4859
      %4861 = vrot.lane.b32.xlu0 %v4431, 32
      %v4862 = vpop.permute.xlu0 %4861
      %4863 = vrot.lane.b32.xlu0 %v4434, 32
      %v4864 = vpop.permute.xlu0 %4863
      %4865 = vrot.lane.b32.xlu0 %v4436, 32
      %v4866 = vpop.permute.xlu0 %4865
      %4867 = vrot.lane.b32.xlu0 %v4439, 32
      %v4868 = vpop.permute.xlu0 %4867
      %4869 = vrot.lane.b32.xlu0 %v4441, 32
      %v4870 = vpop.permute.xlu0 %4869
      %4871 = vrot.lane.b32.xlu0 %v4444, 32
      %v4872 = vpop.permute.xlu0 %4871
      %4873 = vrot.lane.b32.xlu0 %v4446, 32
      %v4874 = vpop.permute.xlu0 %4873
      %4875 = vrot.lane.b32.xlu0 %v4449, 32
      %v4876 = vpop.permute.xlu0 %4875
      %4877 = vrot.lane.b32.xlu0 %v4451, 32
      %v4878 = vpop.permute.xlu0 %4877
      %4879 = vrot.lane.b32.xlu0 %v4454, 32
      %v4880 = vpop.permute.xlu0 %4879
      %4881 = vrot.lane.b32.xlu0 %v4456, 32
      %v4882 = vpop.permute.xlu0 %4881
      %4883 = vrot.lane.b32.xlu0 %v4459, 32
      %v4884 = vpop.permute.xlu0 %4883
      %4885 = vrot.lane.b32.xlu0 %v4461, 32
      %v4886 = vpop.permute.xlu0 %4885
      %4887 = vrot.lane.b32.xlu0 %v4464, 32
      %v4888 = vpop.permute.xlu0 %4887
      %4889 = vrot.lane.b32.xlu0 %v4466, 32
      %v4890 = vpop.permute.xlu0 %4889
      %4891 = vrot.lane.b32.xlu0 %v4469, 32
      %v4892 = vpop.permute.xlu0 %4891
      %4893 = vrot.lane.b32.xlu0 %v4471, 32
      %v4894 = vpop.permute.xlu0 %4893
      %4895 = vrot.lane.b32.xlu0 %v4474, 32
      %v4896 = vpop.permute.xlu0 %4895
      %4897 = vrot.lane.b32.xlu0 %v4476, 32
      %v4898 = vpop.permute.xlu0 %4897
      %4899 = vrot.lane.b32.xlu0 %v4479, 32
      %v4900 = vpop.permute.xlu0 %4899
      %4901 = vrot.lane.b32.xlu0 %v4481, 32
      %v4902 = vpop.permute.xlu0 %4901
      %4903 = vrot.lane.b32.xlu0 %v4484, 32
      %v4904 = vpop.permute.xlu0 %4903
      %4905 = vrot.lane.b32.xlu0 %v4486, 32
      %v4906 = vpop.permute.xlu0 %4905
      %4907 = vrot.lane.b32.xlu0 %v4489, 32
      %v4908 = vpop.permute.xlu0 %4907
      %4909 = vrot.lane.b32.xlu0 %v4491, 32
      %v4910 = vpop.permute.xlu0 %4909
      %4911 = vrot.lane.b32.xlu0 %v4494, 32
      %v4912 = vpop.permute.xlu0 %4911
      %4913 = vrot.lane.b32.xlu0 %v4496, 32
      %v4914 = vpop.permute.xlu0 %4913
      %4915 = vrot.lane.b32.xlu0 %v4852, 32
      %v4916 = vpop.permute.xlu0 %4915
      %4917 = vrot.lane.b32.xlu0 %v4854, 32
      %v4918 = vpop.permute.xlu0 %4917
      %v4951 = vrot.slane %v4375, 2
      %v4952 = vrot.slane %v4312, 2
      %v4953 = vsel %vm785, %v4951, %v4952
      %v4954 = vrot.slane %v4391, 2
      %v4955 = vsel %vm785, %v4952, %v4954
      %4956 = vrot.lane.b32.xlu0 %v4589, 40
      %v4957 = vpop.permute.xlu0 %4956
      %4958 = vrot.lane.b32.xlu0 %v4591, 40
      %v4959 = vpop.permute.xlu0 %4958
      %4960 = vrot.lane.b32.xlu0 %v4594, 40
      %v4961 = vpop.permute.xlu0 %4960
      %4962 = vrot.lane.b32.xlu0 %v4596, 40
      %v4963 = vpop.permute.xlu0 %4962
      %4964 = vrot.lane.b32.xlu0 %v4599, 40
      %v4965 = vpop.permute.xlu0 %4964
      %4966 = vrot.lane.b32.xlu0 %v4601, 40
      %v4967 = vpop.permute.xlu0 %4966
      %4968 = vrot.lane.b32.xlu0 %v4604, 40
      %v4969 = vpop.permute.xlu0 %4968
      %4970 = vrot.lane.b32.xlu0 %v4606, 40
      %v4971 = vpop.permute.xlu0 %4970
      %4972 = vrot.lane.b32.xlu0 %v4609, 40
      %v4973 = vpop.permute.xlu0 %4972
      %4974 = vrot.lane.b32.xlu0 %v4611, 40
      %v4975 = vpop.permute.xlu0 %4974
      %4976 = vrot.lane.b32.xlu0 %v4614, 40
      %v4977 = vpop.permute.xlu0 %4976
      %4978 = vrot.lane.b32.xlu0 %v4616, 40
      %v4979 = vpop.permute.xlu0 %4978
      %4980 = vrot.lane.b32.xlu0 %v4619, 40
      %v4981 = vpop.permute.xlu0 %4980
      %4982 = vrot.lane.b32.xlu0 %v4621, 40
      %v4983 = vpop.permute.xlu0 %4982
      %4984 = vrot.lane.b32.xlu0 %v4624, 40
      %v4985 = vpop.permute.xlu0 %4984
      %4986 = vrot.lane.b32.xlu0 %v4626, 40
      %v4987 = vpop.permute.xlu0 %4986
      %4988 = vrot.lane.b32.xlu0 %v4629, 40
      %v4989 = vpop.permute.xlu0 %4988
      %4990 = vrot.lane.b32.xlu0 %v4631, 40
      %v4991 = vpop.permute.xlu0 %4990
      %4992 = vrot.lane.b32.xlu0 %v4634, 40
      %v4993 = vpop.permute.xlu0 %4992
      %4994 = vrot.lane.b32.xlu0 %v4636, 40
      %v4995 = vpop.permute.xlu0 %4994
      %4996 = vrot.lane.b32.xlu0 %v4639, 40
      %v4997 = vpop.permute.xlu0 %4996
      %4998 = vrot.lane.b32.xlu0 %v4641, 40
      %v4999 = vpop.permute.xlu0 %4998
      %5000 = vrot.lane.b32.xlu0 %v4644, 40
      %v5001 = vpop.permute.xlu0 %5000
      %5002 = vrot.lane.b32.xlu0 %v4646, 40
      %v5003 = vpop.permute.xlu0 %5002
      %5004 = vrot.lane.b32.xlu0 %v4649, 40
      %v5005 = vpop.permute.xlu0 %5004
      %5006 = vrot.lane.b32.xlu0 %v4651, 40
      %v5007 = vpop.permute.xlu0 %5006
      %5008 = vrot.lane.b32.xlu0 %v4654, 40
      %v5009 = vpop.permute.xlu0 %5008
      %5010 = vrot.lane.b32.xlu0 %v4656, 40
      %v5011 = vpop.permute.xlu0 %5010
      %5012 = vrot.lane.b32.xlu0 %v4659, 40
      %v5013 = vpop.permute.xlu0 %5012
      %5014 = vrot.lane.b32.xlu0 %v4661, 40
      %v5015 = vpop.permute.xlu0 %5014
      %5016 = vrot.lane.b32.xlu0 %v4953, 40
      %v5017 = vpop.permute.xlu0 %5016
      %5018 = vrot.lane.b32.xlu0 %v4955, 40
      %v5019 = vpop.permute.xlu0 %5018
      %5052 = vrot.lane.b32.xlu0 %v4361, 48
      %v5053 = vpop.permute.xlu0 %5052
      %5054 = vrot.lane.b32.xlu0 %v4270, 48
      %v5055 = vpop.permute.xlu0 %5054
      %5056 = vrot.lane.b32.xlu0 %v4362, 48
      %v5057 = vpop.permute.xlu0 %5056
      %5058 = vrot.lane.b32.xlu0 %v4273, 48
      %v5059 = vpop.permute.xlu0 %5058
      %5060 = vrot.lane.b32.xlu0 %v4363, 48
      %v5061 = vpop.permute.xlu0 %5060
      %5062 = vrot.lane.b32.xlu0 %v4276, 48
      %v5063 = vpop.permute.xlu0 %5062
      %5064 = vrot.lane.b32.xlu0 %v4364, 48
      %v5065 = vpop.permute.xlu0 %5064
      %5066 = vrot.lane.b32.xlu0 %v4279, 48
      %v5067 = vpop.permute.xlu0 %5066
      %5068 = vrot.lane.b32.xlu0 %v4365, 48
      %v5069 = vpop.permute.xlu0 %5068
      %5070 = vrot.lane.b32.xlu0 %v4282, 48
      %v5071 = vpop.permute.xlu0 %5070
      %5072 = vrot.lane.b32.xlu0 %v4366, 48
      %v5073 = vpop.permute.xlu0 %5072
      %5074 = vrot.lane.b32.xlu0 %v4285, 48
      %v5075 = vpop.permute.xlu0 %5074
      %5076 = vrot.lane.b32.xlu0 %v4367, 48
      %v5077 = vpop.permute.xlu0 %5076
      %5078 = vrot.lane.b32.xlu0 %v4288, 48
      %v5079 = vpop.permute.xlu0 %5078
      %5080 = vrot.lane.b32.xlu0 %v4368, 48
      %v5081 = vpop.permute.xlu0 %5080
      %5082 = vrot.lane.b32.xlu0 %v4291, 48
      %v5083 = vpop.permute.xlu0 %5082
      %5084 = vrot.lane.b32.xlu0 %v4369, 48
      %v5085 = vpop.permute.xlu0 %5084
      %5086 = vrot.lane.b32.xlu0 %v4294, 48
      %v5087 = vpop.permute.xlu0 %5086
      %5088 = vrot.lane.b32.xlu0 %v4370, 48
      %v5089 = vpop.permute.xlu0 %5088
      %5090 = vrot.lane.b32.xlu0 %v4297, 48
      %v5091 = vpop.permute.xlu0 %5090
      %5092 = vrot.lane.b32.xlu0 %v4371, 48
      %v5093 = vpop.permute.xlu0 %5092
      %5094 = vrot.lane.b32.xlu0 %v4300, 48
      %v5095 = vpop.permute.xlu0 %5094
      %5096 = vrot.lane.b32.xlu0 %v4372, 48
      %v5097 = vpop.permute.xlu0 %5096
      %5098 = vrot.lane.b32.xlu0 %v4303, 48
      %v5099 = vpop.permute.xlu0 %5098
      %5100 = vrot.lane.b32.xlu0 %v4373, 48
      %v5101 = vpop.permute.xlu0 %5100
      %5102 = vrot.lane.b32.xlu0 %v4306, 48
      %v5103 = vpop.permute.xlu0 %5102
      %5104 = vrot.lane.b32.xlu0 %v4374, 48
      %v5105 = vpop.permute.xlu0 %5104
      %5106 = vrot.lane.b32.xlu0 %v4309, 48
      %v5107 = vpop.permute.xlu0 %5106
      %5108 = vrot.lane.b32.xlu0 %v4375, 48
      %v5109 = vpop.permute.xlu0 %5108
      %5110 = vrot.lane.b32.xlu0 %v4312, 48
      %v5111 = vpop.permute.xlu0 %5110
      %5142 = vrot.lane.b32.xlu0 %v4429, 56
      %v5143 = vpop.permute.xlu0 %5142
      %5144 = vrot.lane.b32.xlu0 %v4431, 56
      %v5145 = vpop.permute.xlu0 %5144
      %5146 = vrot.lane.b32.xlu0 %v4434, 56
      %v5147 = vpop.permute.xlu0 %5146
      %5148 = vrot.lane.b32.xlu0 %v4436, 56
      %v5149 = vpop.permute.xlu0 %5148
      %5150 = vrot.lane.b32.xlu0 %v4439, 56
      %v5151 = vpop.permute.xlu0 %5150
      %5152 = vrot.lane.b32.xlu0 %v4441, 56
      %v5153 = vpop.permute.xlu0 %5152
      %5154 = vrot.lane.b32.xlu0 %v4444, 56
      %v5155 = vpop.permute.xlu0 %5154
      %5156 = vrot.lane.b32.xlu0 %v4446, 56
      %v5157 = vpop.permute.xlu0 %5156
      %5158 = vrot.lane.b32.xlu0 %v4449, 56
      %v5159 = vpop.permute.xlu0 %5158
      %5160 = vrot.lane.b32.xlu0 %v4451, 56
      %v5161 = vpop.permute.xlu0 %5160
      %5162 = vrot.lane.b32.xlu0 %v4454, 56
      %v5163 = vpop.permute.xlu0 %5162
      %5164 = vrot.lane.b32.xlu0 %v4456, 56
      %v5165 = vpop.permute.xlu0 %5164
      %5166 = vrot.lane.b32.xlu0 %v4459, 56
      %v5167 = vpop.permute.xlu0 %5166
      %5168 = vrot.lane.b32.xlu0 %v4461, 56
      %v5169 = vpop.permute.xlu0 %5168
      %5170 = vrot.lane.b32.xlu0 %v4464, 56
      %v5171 = vpop.permute.xlu0 %5170
      %5172 = vrot.lane.b32.xlu0 %v4466, 56
      %v5173 = vpop.permute.xlu0 %5172
      %5174 = vrot.lane.b32.xlu0 %v4469, 56
      %v5175 = vpop.permute.xlu0 %5174
      %5176 = vrot.lane.b32.xlu0 %v4471, 56
      %v5177 = vpop.permute.xlu0 %5176
      %5178 = vrot.lane.b32.xlu0 %v4474, 56
      %v5179 = vpop.permute.xlu0 %5178
      %5180 = vrot.lane.b32.xlu0 %v4476, 56
      %v5181 = vpop.permute.xlu0 %5180
      %5182 = vrot.lane.b32.xlu0 %v4479, 56
      %v5183 = vpop.permute.xlu0 %5182
      %5184 = vrot.lane.b32.xlu0 %v4481, 56
      %v5185 = vpop.permute.xlu0 %5184
      %5186 = vrot.lane.b32.xlu0 %v4484, 56
      %v5187 = vpop.permute.xlu0 %5186
      %5188 = vrot.lane.b32.xlu0 %v4486, 56
      %v5189 = vpop.permute.xlu0 %5188
      %5190 = vrot.lane.b32.xlu0 %v4489, 56
      %v5191 = vpop.permute.xlu0 %5190
      %5192 = vrot.lane.b32.xlu0 %v4491, 56
      %v5193 = vpop.permute.xlu0 %5192
      %5194 = vrot.lane.b32.xlu0 %v4494, 56
      %v5195 = vpop.permute.xlu0 %5194
      %5196 = vrot.lane.b32.xlu0 %v4496, 56
      %v5197 = vpop.permute.xlu0 %5196
      %5198 = vrot.lane.b32.xlu0 %v4852, 56
      %v5199 = vpop.permute.xlu0 %5198
      %5200 = vrot.lane.b32.xlu0 %v4854, 56
      %v5201 = vpop.permute.xlu0 %5200
      %5232 = vrot.lane.b32.xlu0 %v4594, 64
      %v5233 = vpop.permute.xlu0 %5232
      %5234 = vrot.lane.b32.xlu0 %v4596, 64
      %v5235 = vpop.permute.xlu0 %5234
      %5236 = vrot.lane.b32.xlu0 %v4599, 64
      %v5237 = vpop.permute.xlu0 %5236
      %5238 = vrot.lane.b32.xlu0 %v4601, 64
      %v5239 = vpop.permute.xlu0 %5238
      %5240 = vrot.lane.b32.xlu0 %v4604, 64
      %v5241 = vpop.permute.xlu0 %5240
      %5242 = vrot.lane.b32.xlu0 %v4606, 64
      %v5243 = vpop.permute.xlu0 %5242
      %5244 = vrot.lane.b32.xlu0 %v4609, 64
      %v5245 = vpop.permute.xlu0 %5244
      %5246 = vrot.lane.b32.xlu0 %v4611, 64
      %v5247 = vpop.permute.xlu0 %5246
      %5248 = vrot.lane.b32.xlu0 %v4614, 64
      %v5249 = vpop.permute.xlu0 %5248
      %5250 = vrot.lane.b32.xlu0 %v4616, 64
      %v5251 = vpop.permute.xlu0 %5250
      %5252 = vrot.lane.b32.xlu0 %v4619, 64
      %v5253 = vpop.permute.xlu0 %5252
      %5254 = vrot.lane.b32.xlu0 %v4621, 64
      %v5255 = vpop.permute.xlu0 %5254
      %5256 = vrot.lane.b32.xlu0 %v4624, 64
      %v5257 = vpop.permute.xlu0 %5256
      %5258 = vrot.lane.b32.xlu0 %v4626, 64
      %v5259 = vpop.permute.xlu0 %5258
      %5260 = vrot.lane.b32.xlu0 %v4629, 64
      %v5261 = vpop.permute.xlu0 %5260
      %5262 = vrot.lane.b32.xlu0 %v4631, 64
      %v5263 = vpop.permute.xlu0 %5262
      %5264 = vrot.lane.b32.xlu0 %v4634, 64
      %v5265 = vpop.permute.xlu0 %5264
      %5266 = vrot.lane.b32.xlu0 %v4636, 64
      %v5267 = vpop.permute.xlu0 %5266
      %5268 = vrot.lane.b32.xlu0 %v4639, 64
      %v5269 = vpop.permute.xlu0 %5268
      %5270 = vrot.lane.b32.xlu0 %v4641, 64
      %v5271 = vpop.permute.xlu0 %5270
      %5272 = vrot.lane.b32.xlu0 %v4644, 64
      %v5273 = vpop.permute.xlu0 %5272
      %5274 = vrot.lane.b32.xlu0 %v4646, 64
      %v5275 = vpop.permute.xlu0 %5274
      %5276 = vrot.lane.b32.xlu0 %v4649, 64
      %v5277 = vpop.permute.xlu0 %5276
      %5278 = vrot.lane.b32.xlu0 %v4651, 64
      %v5279 = vpop.permute.xlu0 %5278
      %5280 = vrot.lane.b32.xlu0 %v4654, 64
      %v5281 = vpop.permute.xlu0 %5280
      %5282 = vrot.lane.b32.xlu0 %v4656, 64
      %v5283 = vpop.permute.xlu0 %5282
      %5284 = vrot.lane.b32.xlu0 %v4659, 64
      %v5285 = vpop.permute.xlu0 %5284
      %5286 = vrot.lane.b32.xlu0 %v4661, 64
      %v5287 = vpop.permute.xlu0 %5286
      %5288 = vrot.lane.b32.xlu0 %v4953, 64
      %v5289 = vpop.permute.xlu0 %5288
      %5290 = vrot.lane.b32.xlu0 %v4955, 64
      %v5291 = vpop.permute.xlu0 %5290
      %v5322 = vsel %vm1550, %v4360, %v4498
      %v5323 = vsel %vm1550, %v4267, %v4500
      %v5324 = vsel %vm1550, %v4361, %v4502
      %v5325 = vsel %vm1550, %v4270, %v4504
      %v5326 = vsel %vm1550, %v4362, %v4506
      %v5327 = vsel %vm1550, %v4273, %v4508
      %v5328 = vsel %vm1550, %v4363, %v4510
      %v5329 = vsel %vm1550, %v4276, %v4512
      %v5330 = vsel %vm1550, %v4364, %v4514
      %v5331 = vsel %vm1550, %v4279, %v4516
      %v5332 = vsel %vm1550, %v4365, %v4518
      %v5333 = vsel %vm1550, %v4282, %v4520
      %v5334 = vsel %vm1550, %v4366, %v4522
      %v5335 = vsel %vm1550, %v4285, %v4524
      %v5336 = vsel %vm1550, %v4367, %v4526
      %v5337 = vsel %vm1550, %v4288, %v4528
      %v5338 = vsel %vm1550, %v4368, %v4530
      %v5339 = vsel %vm1550, %v4291, %v4532
      %v5340 = vsel %vm1550, %v4369, %v4534
      %v5341 = vsel %vm1550, %v4294, %v4536
      %v5342 = vsel %vm1550, %v4370, %v4538
      %v5343 = vsel %vm1550, %v4297, %v4540
      %v5344 = vsel %vm1550, %v4371, %v4542
      %v5345 = vsel %vm1550, %v4300, %v4544
      %v5346 = vsel %vm1550, %v4372, %v4546
      %v5347 = vsel %vm1550, %v4303, %v4548
      %v5348 = vsel %vm1550, %v4373, %v4550
      %v5349 = vsel %vm1550, %v4306, %v4552
      %v5350 = vsel %vm1550, %v4374, %v4554
      %v5351 = vsel %vm1550, %v4309, %v4556
      %v5352 = vsel %vm1583, %v5322, %v4663
      %v5353 = vsel %vm1583, %v5323, %v4665
      %v5354 = vsel %vm1583, %v5324, %v4667
      %v5355 = vsel %vm1583, %v5325, %v4669
      %v5356 = vsel %vm1583, %v5326, %v4671
      %v5357 = vsel %vm1583, %v5327, %v4673
      %v5358 = vsel %vm1583, %v5328, %v4675
      %v5359 = vsel %vm1583, %v5329, %v4677
      %v5360 = vsel %vm1583, %v5330, %v4679
      %v5361 = vsel %vm1583, %v5331, %v4681
      %v5362 = vsel %vm1583, %v5332, %v4683
      %v5363 = vsel %vm1583, %v5333, %v4685
      %v5364 = vsel %vm1583, %v5334, %v4687
      %v5365 = vsel %vm1583, %v5335, %v4689
      %v5366 = vsel %vm1583, %v5336, %v4691
      %v5367 = vsel %vm1583, %v5337, %v4693
      %v5368 = vsel %vm1583, %v5338, %v4695
      %v5369 = vsel %vm1583, %v5339, %v4697
      %v5370 = vsel %vm1583, %v5340, %v4699
      %v5371 = vsel %vm1583, %v5341, %v4701
      %v5372 = vsel %vm1583, %v5342, %v4703
      %v5373 = vsel %vm1583, %v5343, %v4705
      %v5374 = vsel %vm1583, %v5344, %v4707
      %v5375 = vsel %vm1583, %v5345, %v4709
      %v5376 = vsel %vm1583, %v5346, %v4711
      %v5377 = vsel %vm1583, %v5347, %v4713
      %v5378 = vsel %vm1583, %v5348, %v4715
      %v5379 = vsel %vm1583, %v5349, %v4717
      %v5380 = vsel %vm1583, %v5350, %v4719
      %v5381 = vsel %vm1583, %v5351, %v4721
      %v5382 = vsel %vm1616, %v1584, %v4754
      %v5383 = vsel %vm1616, %v1585, %v4756
      %v5384 = vsel %vm1616, %v5352, %v4758
      %v5385 = vsel %vm1616, %v5353, %v4760
      %v5386 = vsel %vm1616, %v5354, %v4762
      %v5387 = vsel %vm1616, %v5355, %v4764
      %v5388 = vsel %vm1616, %v5356, %v4766
      %v5389 = vsel %vm1616, %v5357, %v4768
      %v5390 = vsel %vm1616, %v5358, %v4770
      %v5391 = vsel %vm1616, %v5359, %v4772
      %v5392 = vsel %vm1616, %v5360, %v4774
      %v5393 = vsel %vm1616, %v5361, %v4776
      %v5394 = vsel %vm1616, %v5362, %v4778
      %v5395 = vsel %vm1616, %v5363, %v4780
      %v5396 = vsel %vm1616, %v5364, %v4782
      %v5397 = vsel %vm1616, %v5365, %v4784
      %v5398 = vsel %vm1616, %v5366, %v4786
      %v5399 = vsel %vm1616, %v5367, %v4788
      %v5400 = vsel %vm1616, %v5368, %v4790
      %v5401 = vsel %vm1616, %v5369, %v4792
      %v5402 = vsel %vm1616, %v5370, %v4794
      %v5403 = vsel %vm1616, %v5371, %v4796
      %v5404 = vsel %vm1616, %v5372, %v4798
      %v5405 = vsel %vm1616, %v5373, %v4800
      %v5406 = vsel %vm1616, %v5374, %v4802
      %v5407 = vsel %vm1616, %v5375, %v4804
      %v5408 = vsel %vm1616, %v5376, %v4806
      %v5409 = vsel %vm1616, %v5377, %v4808
      %v5410 = vsel %vm1616, %v5378, %v4810
      %v5411 = vsel %vm1616, %v5379, %v4812
      %v5412 = vsel %vm1616, %v5380, %v4814
      %v5413 = vsel %vm1616, %v5381, %v4816
      %v5414 = vsel %vm1649, %v5382, %v4856
      %v5415 = vsel %vm1649, %v5383, %v4858
      %v5416 = vsel %vm1649, %v5384, %v4860
      %v5417 = vsel %vm1649, %v5385, %v4862
      %v5418 = vsel %vm1649, %v5386, %v4864
      %v5419 = vsel %vm1649, %v5387, %v4866
      %v5420 = vsel %vm1649, %v5388, %v4868
      %v5421 = vsel %vm1649, %v5389, %v4870
      %v5422 = vsel %vm1649, %v5390, %v4872
      %v5423 = vsel %vm1649, %v5391, %v4874
      %v5424 = vsel %vm1649, %v5392, %v4876
      %v5425 = vsel %vm1649, %v5393, %v4878
      %v5426 = vsel %vm1649, %v5394, %v4880
      %v5427 = vsel %vm1649, %v5395, %v4882
      %v5428 = vsel %vm1649, %v5396, %v4884
      %v5429 = vsel %vm1649, %v5397, %v4886
      %v5430 = vsel %vm1649, %v5398, %v4888
      %v5431 = vsel %vm1649, %v5399, %v4890
      %v5432 = vsel %vm1649, %v5400, %v4892
      %v5433 = vsel %vm1649, %v5401, %v4894
      %v5434 = vsel %vm1649, %v5402, %v4896
      %v5435 = vsel %vm1649, %v5403, %v4898
      %v5436 = vsel %vm1649, %v5404, %v4900
      %v5437 = vsel %vm1649, %v5405, %v4902
      %v5438 = vsel %vm1649, %v5406, %v4904
      %v5439 = vsel %vm1649, %v5407, %v4906
      %v5440 = vsel %vm1649, %v5408, %v4908
      %v5441 = vsel %vm1649, %v5409, %v4910
      %v5442 = vsel %vm1649, %v5410, %v4912
      %v5443 = vsel %vm1649, %v5411, %v4914
      %v5444 = vsel %vm1649, %v5412, %v4916
      %v5445 = vsel %vm1649, %v5413, %v4918
      %v5446 = vsel %vm1682, %v5414, %v4957
      %v5447 = vsel %vm1682, %v5415, %v4959
      %v5448 = vsel %vm1682, %v5416, %v4961
      %v5449 = vsel %vm1682, %v5417, %v4963
      %v5450 = vsel %vm1682, %v5418, %v4965
      %v5451 = vsel %vm1682, %v5419, %v4967
      %v5452 = vsel %vm1682, %v5420, %v4969
      %v5453 = vsel %vm1682, %v5421, %v4971
      %v5454 = vsel %vm1682, %v5422, %v4973
      %v5455 = vsel %vm1682, %v5423, %v4975
      %v5456 = vsel %vm1682, %v5424, %v4977
      %v5457 = vsel %vm1682, %v5425, %v4979
      %v5458 = vsel %vm1682, %v5426, %v4981
      %v5459 = vsel %vm1682, %v5427, %v4983
      %v5460 = vsel %vm1682, %v5428, %v4985
      %v5461 = vsel %vm1682, %v5429, %v4987
      %v5462 = vsel %vm1682, %v5430, %v4989
      %v5463 = vsel %vm1682, %v5431, %v4991
      %v5464 = vsel %vm1682, %v5432, %v4993
      %v5465 = vsel %vm1682, %v5433, %v4995
      %v5466 = vsel %vm1682, %v5434, %v4997
      %v5467 = vsel %vm1682, %v5435, %v4999
      %v5468 = vsel %vm1682, %v5436, %v5001
      %v5469 = vsel %vm1682, %v5437, %v5003
      %v5470 = vsel %vm1682, %v5438, %v5005
      %v5471 = vsel %vm1682, %v5439, %v5007
      %v5472 = vsel %vm1682, %v5440, %v5009
      %v5473 = vsel %vm1682, %v5441, %v5011
      %v5474 = vsel %vm1682, %v5442, %v5013
      %v5475 = vsel %vm1682, %v5443, %v5015
      %v5476 = vsel %vm1682, %v5444, %v5017
      %v5477 = vsel %vm1682, %v5445, %v5019
      %v5478 = vsel %vm1715, %v5446, %v5053
      %v5479 = vsel %vm1715, %v5447, %v5055
      %v5480 = vsel %vm1715, %v5448, %v5057
      %v5481 = vsel %vm1715, %v5449, %v5059
      %v5482 = vsel %vm1715, %v5450, %v5061
      %v5483 = vsel %vm1715, %v5451, %v5063
      %v5484 = vsel %vm1715, %v5452, %v5065
      %v5485 = vsel %vm1715, %v5453, %v5067
      %v5486 = vsel %vm1715, %v5454, %v5069
      %v5487 = vsel %vm1715, %v5455, %v5071
      %v5488 = vsel %vm1715, %v5456, %v5073
      %v5489 = vsel %vm1715, %v5457, %v5075
      %v5490 = vsel %vm1715, %v5458, %v5077
      %v5491 = vsel %vm1715, %v5459, %v5079
      %v5492 = vsel %vm1715, %v5460, %v5081
      %v5493 = vsel %vm1715, %v5461, %v5083
      %v5494 = vsel %vm1715, %v5462, %v5085
      %v5495 = vsel %vm1715, %v5463, %v5087
      %v5496 = vsel %vm1715, %v5464, %v5089
      %v5497 = vsel %vm1715, %v5465, %v5091
      %v5498 = vsel %vm1715, %v5466, %v5093
      %v5499 = vsel %vm1715, %v5467, %v5095
      %v5500 = vsel %vm1715, %v5468, %v5097
      %v5501 = vsel %vm1715, %v5469, %v5099
      %v5502 = vsel %vm1715, %v5470, %v5101
      %v5503 = vsel %vm1715, %v5471, %v5103
      %v5504 = vsel %vm1715, %v5472, %v5105
      %v5505 = vsel %vm1715, %v5473, %v5107
      %v5506 = vsel %vm1715, %v5474, %v5109
      %v5507 = vsel %vm1715, %v5475, %v5111
      %v5508 = vsel %vm1715, %v5476, %v1323
      %v5509 = vsel %vm1715, %v5477, %v1325
      %v5510 = vsel %vm1748, %v5478, %v5143
      %v5511 = vsel %vm1748, %v5479, %v5145
      %v5512 = vsel %vm1748, %v5480, %v5147
      %v5513 = vsel %vm1748, %v5481, %v5149
      %v5514 = vsel %vm1748, %v5482, %v5151
      %v5515 = vsel %vm1748, %v5483, %v5153
      %v5516 = vsel %vm1748, %v5484, %v5155
      %v5517 = vsel %vm1748, %v5485, %v5157
      %v5518 = vsel %vm1748, %v5486, %v5159
      %v5519 = vsel %vm1748, %v5487, %v5161
      %v5520 = vsel %vm1748, %v5488, %v5163
      %v5521 = vsel %vm1748, %v5489, %v5165
      %v5522 = vsel %vm1748, %v5490, %v5167
      %v5523 = vsel %vm1748, %v5491, %v5169
      %v5524 = vsel %vm1748, %v5492, %v5171
      %v5525 = vsel %vm1748, %v5493, %v5173
      %v5526 = vsel %vm1748, %v5494, %v5175
      %v5527 = vsel %vm1748, %v5495, %v5177
      %v5528 = vsel %vm1748, %v5496, %v5179
      %v5529 = vsel %vm1748, %v5497, %v5181
      %v5530 = vsel %vm1748, %v5498, %v5183
      %v5531 = vsel %vm1748, %v5499, %v5185
      %v5532 = vsel %vm1748, %v5500, %v5187
      %v5533 = vsel %vm1748, %v5501, %v5189
      %v5534 = vsel %vm1748, %v5502, %v5191
      %v5535 = vsel %vm1748, %v5503, %v5193
      %v5536 = vsel %vm1748, %v5504, %v5195
      %v5537 = vsel %vm1748, %v5505, %v5197
      %v5538 = vsel %vm1748, %v5506, %v5199
      %v5539 = vsel %vm1748, %v5507, %v5201
      %v5540 = vsel %vm1748, %v5508, %v1419
      %v5541 = vsel %vm1748, %v5509, %v1421
      %v5542 = vsel %vm1781, %v5510, %v5233
      %v5543 = vsel %vm1781, %v5511, %v5235
      %v5544 = vsel %vm1781, %v5512, %v5237
      %v5545 = vsel %vm1781, %v5513, %v5239
      %v5546 = vsel %vm1781, %v5514, %v5241
      %v5547 = vsel %vm1781, %v5515, %v5243
      %v5548 = vsel %vm1781, %v5516, %v5245
      %v5549 = vsel %vm1781, %v5517, %v5247
      %v5550 = vsel %vm1781, %v5518, %v5249
      %v5551 = vsel %vm1781, %v5519, %v5251
      %v5552 = vsel %vm1781, %v5520, %v5253
      %v5553 = vsel %vm1781, %v5521, %v5255
      %v5554 = vsel %vm1781, %v5522, %v5257
      %v5555 = vsel %vm1781, %v5523, %v5259
      %v5556 = vsel %vm1781, %v5524, %v5261
      %v5557 = vsel %vm1781, %v5525, %v5263
      %v5558 = vsel %vm1781, %v5526, %v5265
      %v5559 = vsel %vm1781, %v5527, %v5267
      %v5560 = vsel %vm1781, %v5528, %v5269
      %v5561 = vsel %vm1781, %v5529, %v5271
      %v5562 = vsel %vm1781, %v5530, %v5273
      %v5563 = vsel %vm1781, %v5531, %v5275
      %v5564 = vsel %vm1781, %v5532, %v5277
      %v5565 = vsel %vm1781, %v5533, %v5279
      %v5566 = vsel %vm1781, %v5534, %v5281
      %v5567 = vsel %vm1781, %v5535, %v5283
      %v5568 = vsel %vm1781, %v5536, %v5285
      %v5569 = vsel %vm1781, %v5537, %v5287
      %v5570 = vsel %vm1781, %v5538, %v5289
      %v5571 = vsel %vm1781, %v5539, %v5291
      %v5572 = vsel %vm1781, %v5540, %v1515
      %v5573 = vsel %vm1781, %v5541, %v1517
      %v5575 = vlaneseq
      %v5576 = vshrl.u32 %v5575, 7
      %v5577 = vsub.s32 0, %v5576
      %v5578 = vrot.slane %v4232, %v5577
      %v5581 = vsel %vm1820, %v5542, 0
      %v5584 = vsel %vm1820, %v5543, 0
      %v5587 = vsel %vm1820, %v5544, 0
      %v5590 = vsel %vm1820, %v5545, 0
      %v5593 = vsel %vm1820, %v5546, 0
      %v5596 = vsel %vm1820, %v5547, 0
      %v5599 = vsel %vm1820, %v5548, 0
      %v5602 = vsel %vm1820, %v5549, 0
      %v5605 = vsel %vm1820, %v5550, 0
      %v5608 = vsel %vm1820, %v5551, 0
      %v5611 = vsel %vm1820, %v5552, 0
      %v5614 = vsel %vm1820, %v5553, 0
      %v5617 = vsel %vm1820, %v5554, 0
      %v5620 = vsel %vm1820, %v5555, 0
      %v5623 = vsel %vm1820, %v5556, 0
      %v5626 = vsel %vm1820, %v5557, 0
      %v5629 = vsel %vm1820, %v5558, 0
      %v5632 = vsel %vm1820, %v5559, 0
      %v5635 = vsel %vm1820, %v5560, 0
      %v5638 = vsel %vm1820, %v5561, 0
      %v5641 = vsel %vm1820, %v5562, 0
      %v5644 = vsel %vm1820, %v5563, 0
      %v5647 = vsel %vm1820, %v5564, 0
      %v5650 = vsel %vm1820, %v5565, 0
      %v5653 = vsel %vm1820, %v5566, 0
      %v5656 = vsel %vm1820, %v5567, 0
      %v5659 = vsel %vm1820, %v5568, 0
      %v5662 = vsel %vm1820, %v5569, 0
      %v5665 = vsel %vm1820, %v5570, 0
      %v5668 = vsel %vm1820, %v5571, 0
      %v5671 = vsel %vm1820, %v5572, 0
      %v5674 = vsel %vm1820, %v5573, 0
      %5676 = vmatprep.subr.mxu0 0.0
      %5677 = vmatpush1.msra.mxu0 0.0
      %5678 = vmatprep.subr.mxu0 0.0
      %5679 = vmatpush1.msra.mxu0 0.0
      %5680 = vmatprep.subr.mxu0 0.0
      %5681 = vmatpush1.msra.mxu0 0.0
      %5682 = vmatprep.subr.mxu0 0.0
      %5683 = vmatpush1.msra.mxu0 0.0
      %5684 = vmatprep.subr.mxu0 0.0
      %5685 = vmatpush1.msra.mxu0 0.0
      %5686 = vmatprep.subr.mxu0 0.0
      %5687 = vmatpush1.msra.mxu0 0.0
      %5688 = vmatprep.subr.mxu0 0.0
      %5689 = vmatpush1.msra.mxu0 0.0
      %5690 = vmatprep.subr.mxu0 0.0
      %5691 = vmatpush1.msra.mxu0 %v4230
      %5692 = vmatprep.subr.mxu0 0.0
      %5693 = vmatpush1.msra.mxu0 %v4229
      %5694 = vmatprep.subr.mxu0 0.0
      %5695 = vmatpush1.msra.mxu0 %v4228
      %5696 = vmatprep.subr.mxu0 0.0
      %5697 = vmatpush1.msra.mxu0 %v4227
      %5698 = vmatprep.subr.mxu0 0.0
      %5699 = vmatpush1.msra.mxu0 %v4226
      %5700 = vmatprep.subr.mxu0 0.0
      %5701 = vmatpush1.msra.mxu0 %v4225
      %5702 = vmatprep.subr.mxu0 0.0
      %5703 = vmatpush1.msra.mxu0 %v4224
      %5704 = vmatprep.subr.mxu0 0.0
      %5705 = vmatpush1.msra.mxu0 %v4223
      %5706 = vmatprep.subr.mxu0 0.0
      %5707 = vmatpush1.msra.mxu0 %v4222
      %5708 = vmatprep.subr.mxu0 0.0
      %5709 = vmatpush2.msra.mxu0 0.0
      %5710 = vmatprep.subr.mxu0 0.0
      %5711 = vmatpush2.msra.mxu0 0.0
      %5712 = vmatprep.subr.mxu0 0.0
      %5713 = vmatpush2.msra.mxu0 0.0
      %5714 = vmatprep.subr.mxu0 0.0
      %5715 = vmatpush2.msra.mxu0 0.0
      %5716 = vmatprep.subr.mxu0 0.0
      %5717 = vmatpush2.msra.mxu0 0.0
      %5718 = vmatprep.subr.mxu0 0.0
      %5719 = vmatpush2.msra.mxu0 0.0
      %5720 = vmatprep.subr.mxu0 0.0
      %5721 = vmatpush2.msra.mxu0 0.0
      %5722 = vmatprep.subr.mxu0 0.0
      %5723 = vmatpush2.msra.mxu0 0.0
      %5724 = vmatprep.subr.mxu0 0.0
      %5725 = vmatpush2.msra.mxu0 0.0
      %5726 = vmatprep.subr.mxu0 0.0
      %5727 = vmatpush2.msra.mxu0 0.0
      %5728 = vmatprep.subr.mxu0 0.0
      %5729 = vmatpush2.msra.mxu0 0.0
      %5730 = vmatprep.subr.mxu0 0.0
      %5731 = vmatpush2.msra.mxu0 0.0
      %5732 = vmatprep.subr.mxu0 0.0
      %5733 = vmatpush2.msra.mxu0 0.0
      %5734 = vmatprep.subr.mxu0 0.0
      %5735 = vmatpush2.msra.mxu0 0.0
      %5736 = vmatprep.subr.mxu0 0.0
      %5737 = vmatpush2.msra.mxu0 0.0
      %5738 = vmatprep.subr.mxu0 0.0
      %5739 = vmatpush2.msra.mxu0 0.0
      %5740 = vmatprep.mubr.f32.mxu0 0.0
      %5741 = vmatmul.mubr.f32.gmra.mxu0 %v5581
      %v5742 = vpop.f32.mrf.mxu0
      %v5743 = vadd.f32 %v5578, %v5742
      %v5744 = vpop.f32.mrf.mxu0
      %5745 = vmatprep.mubr.f32.mxu0 0.0
      %5746 = vmatmul.mubr.f32.gmra.mxu0 %v5584
      %v5747 = vpop.f32.mrf.mxu0
      %v5748 = vadd.f32 %v5578, %v5747
      %v5749 = vpop.f32.mrf.mxu0
      %5750 = vmatprep.mubr.f32.mxu0 0.0
      %5751 = vmatmul.mubr.f32.gmra.mxu0 %v5587
      %v5752 = vpop.f32.mrf.mxu0
      %v5753 = vadd.f32 %v5578, %v5752
      %v5754 = vpop.f32.mrf.mxu0
      %5755 = vmatprep.mubr.f32.mxu0 0.0
      %5756 = vmatmul.mubr.f32.gmra.mxu0 %v5590
      %v5757 = vpop.f32.mrf.mxu0
      %v5758 = vadd.f32 %v5578, %v5757
      %v5759 = vpop.f32.mrf.mxu0
      %5760 = vmatprep.mubr.f32.mxu0 0.0
      %5761 = vmatmul.mubr.f32.gmra.mxu0 %v5593
      %v5762 = vpop.f32.mrf.mxu0
      %v5763 = vadd.f32 %v5578, %v5762
      %v5764 = vpop.f32.mrf.mxu0
      %5765 = vmatprep.mubr.f32.mxu0 0.0
      %5766 = vmatmul.mubr.f32.gmra.mxu0 %v5596
      %v5767 = vpop.f32.mrf.mxu0
      %v5768 = vadd.f32 %v5578, %v5767
      %v5769 = vpop.f32.mrf.mxu0
      %5770 = vmatprep.mubr.f32.mxu0 0.0
      %5771 = vmatmul.mubr.f32.gmra.mxu0 %v5599
      %v5772 = vpop.f32.mrf.mxu0
      %v5773 = vadd.f32 %v5578, %v5772
      %v5774 = vpop.f32.mrf.mxu0
      %5775 = vmatprep.mubr.f32.mxu0 0.0
      %5776 = vmatmul.mubr.f32.gmra.mxu0 %v5602
      %v5777 = vpop.f32.mrf.mxu0
      %v5778 = vadd.f32 %v5578, %v5777
      %v5779 = vpop.f32.mrf.mxu0
      %5780 = vmatprep.mubr.f32.mxu0 0.0
      %5781 = vmatmul.mubr.f32.gmra.mxu0 %v5605
      %v5782 = vpop.f32.mrf.mxu0
      %v5783 = vadd.f32 %v5578, %v5782
      %v5784 = vpop.f32.mrf.mxu0
      %5785 = vmatprep.mubr.f32.mxu0 0.0
      %5786 = vmatmul.mubr.f32.gmra.mxu0 %v5608
      %v5787 = vpop.f32.mrf.mxu0
      %v5788 = vadd.f32 %v5578, %v5787
      %v5789 = vpop.f32.mrf.mxu0
      %5790 = vmatprep.mubr.f32.mxu0 0.0
      %5791 = vmatmul.mubr.f32.gmra.mxu0 %v5611
      %v5792 = vpop.f32.mrf.mxu0
      %v5793 = vadd.f32 %v5578, %v5792
      %v5794 = vpop.f32.mrf.mxu0
      %5795 = vmatprep.mubr.f32.mxu0 0.0
      %5796 = vmatmul.mubr.f32.gmra.mxu0 %v5614
      %v5797 = vpop.f32.mrf.mxu0
      %v5798 = vadd.f32 %v5578, %v5797
      %v5799 = vpop.f32.mrf.mxu0
      %5800 = vmatprep.mubr.f32.mxu0 0.0
      %5801 = vmatmul.mubr.f32.gmra.mxu0 %v5617
      %v5802 = vpop.f32.mrf.mxu0
      %v5803 = vadd.f32 %v5578, %v5802
      %v5804 = vpop.f32.mrf.mxu0
      %5805 = vmatprep.mubr.f32.mxu0 0.0
      %5806 = vmatmul.mubr.f32.gmra.mxu0 %v5620
      %v5807 = vpop.f32.mrf.mxu0
      %v5808 = vadd.f32 %v5578, %v5807
      %v5809 = vpop.f32.mrf.mxu0
      %5810 = vmatprep.mubr.f32.mxu0 0.0
      %5811 = vmatmul.mubr.f32.gmra.mxu0 %v5623
      %v5812 = vpop.f32.mrf.mxu0
      %v5813 = vadd.f32 %v5578, %v5812
      %v5814 = vpop.f32.mrf.mxu0
      %5815 = vmatprep.mubr.f32.mxu0 0.0
      %5816 = vmatmul.mubr.f32.gmra.mxu0 %v5626
      %v5817 = vpop.f32.mrf.mxu0
      %v5818 = vadd.f32 %v5578, %v5817
      %v5819 = vpop.f32.mrf.mxu0
      %5820 = vmatprep.mubr.f32.mxu0 0.0
      %5821 = vmatmul.mubr.f32.gmra.mxu0 %v5629
      %v5822 = vpop.f32.mrf.mxu0
      %v5823 = vadd.f32 %v5578, %v5822
      %v5824 = vpop.f32.mrf.mxu0
      %5825 = vmatprep.mubr.f32.mxu0 0.0
      %5826 = vmatmul.mubr.f32.gmra.mxu0 %v5632
      %v5827 = vpop.f32.mrf.mxu0
      %v5828 = vadd.f32 %v5578, %v5827
      %v5829 = vpop.f32.mrf.mxu0
      %5830 = vmatprep.mubr.f32.mxu0 0.0
      %5831 = vmatmul.mubr.f32.gmra.mxu0 %v5635
      %v5832 = vpop.f32.mrf.mxu0
      %v5833 = vadd.f32 %v5578, %v5832
      %v5834 = vpop.f32.mrf.mxu0
      %5835 = vmatprep.mubr.f32.mxu0 0.0
      %5836 = vmatmul.mubr.f32.gmra.mxu0 %v5638
      %v5837 = vpop.f32.mrf.mxu0
      %v5838 = vadd.f32 %v5578, %v5837
      %v5839 = vpop.f32.mrf.mxu0
      %5840 = vmatprep.mubr.f32.mxu0 0.0
      %5841 = vmatmul.mubr.f32.gmra.mxu0 %v5641
      %v5842 = vpop.f32.mrf.mxu0
      %v5843 = vadd.f32 %v5578, %v5842
      %v5844 = vpop.f32.mrf.mxu0
      %5845 = vmatprep.mubr.f32.mxu0 0.0
      %5846 = vmatmul.mubr.f32.gmra.mxu0 %v5644
      %v5847 = vpop.f32.mrf.mxu0
      %v5848 = vadd.f32 %v5578, %v5847
      %v5849 = vpop.f32.mrf.mxu0
      %5850 = vmatprep.mubr.f32.mxu0 0.0
      %5851 = vmatmul.mubr.f32.gmra.mxu0 %v5647
      %v5852 = vpop.f32.mrf.mxu0
      %v5853 = vadd.f32 %v5578, %v5852
      %v5854 = vpop.f32.mrf.mxu0
      %5855 = vmatprep.mubr.f32.mxu0 0.0
      %5856 = vmatmul.mubr.f32.gmra.mxu0 %v5650
      %v5857 = vpop.f32.mrf.mxu0
      %v5858 = vadd.f32 %v5578, %v5857
      %v5859 = vpop.f32.mrf.mxu0
      %5860 = vmatprep.mubr.f32.mxu0 0.0
      %5861 = vmatmul.mubr.f32.gmra.mxu0 %v5653
      %v5862 = vpop.f32.mrf.mxu0
      %v5863 = vadd.f32 %v5578, %v5862
      %v5864 = vpop.f32.mrf.mxu0
      %5865 = vmatprep.mubr.f32.mxu0 0.0
      %5866 = vmatmul.mubr.f32.gmra.mxu0 %v5656
      %v5867 = vpop.f32.mrf.mxu0
      %v5868 = vadd.f32 %v5578, %v5867
      %v5869 = vpop.f32.mrf.mxu0
      %5870 = vmatprep.mubr.f32.mxu0 0.0
      %5871 = vmatmul.mubr.f32.gmra.mxu0 %v5659
      %v5872 = vpop.f32.mrf.mxu0
      %v5873 = vadd.f32 %v5578, %v5872
      %v5874 = vpop.f32.mrf.mxu0
      %5875 = vmatprep.mubr.f32.mxu0 0.0
      %5876 = vmatmul.mubr.f32.gmra.mxu0 %v5662
      %v5877 = vpop.f32.mrf.mxu0
      %v5878 = vadd.f32 %v5578, %v5877
      %v5879 = vpop.f32.mrf.mxu0
      %5880 = vmatprep.mubr.f32.mxu0 0.0
      %5881 = vmatmul.mubr.f32.gmra.mxu0 %v5665
      %v5882 = vpop.f32.mrf.mxu0
      %v5883 = vadd.f32 %v5578, %v5882
      %v5884 = vpop.f32.mrf.mxu0
      %5885 = vmatprep.mubr.f32.mxu0 0.0
      %5886 = vmatmul.mubr.f32.gmra.mxu0 %v5668
      %v5887 = vpop.f32.mrf.mxu0
      %v5888 = vadd.f32 %v5578, %v5887
      %v5889 = vpop.f32.mrf.mxu0
      %5890 = vmatprep.mubr.f32.mxu0 0.0
      %5891 = vmatmul.mubr.f32.gmra.mxu0 %v5671
      %v5892 = vpop.f32.mrf.mxu0
      %v5893 = vadd.f32 %v5578, %v5892
      %v5894 = vpop.f32.mrf.mxu0
      %5895 = vmatprep.mubr.f32.mxu0 0.0
      %5896 = vmatmul.mubr.f32.gmra.mxu0 %v5674
      %v5897 = vpop.f32.mrf.mxu0
      %v5898 = vadd.f32 %v5578, %v5897
      %v5899 = vpop.f32.mrf.mxu0
      %5900 = vdwg.mxu0
      %vm5901 = vcmp.ge.f32.partialorder %v5743, 0.0
      %vm5902 = vcmp.ge.f32.partialorder %v5748, 0.0
      %vm5903 = vcmp.ge.f32.partialorder %v5753, 0.0
      %vm5904 = vcmp.ge.f32.partialorder %v5758, 0.0
      %vm5905 = vcmp.ge.f32.partialorder %v5763, 0.0
      %vm5906 = vcmp.ge.f32.partialorder %v5768, 0.0
      %vm5907 = vcmp.ge.f32.partialorder %v5773, 0.0
      %vm5908 = vcmp.ge.f32.partialorder %v5778, 0.0
      %vm5909 = vcmp.ge.f32.partialorder %v5783, 0.0
      %vm5910 = vcmp.ge.f32.partialorder %v5788, 0.0
      %vm5911 = vcmp.ge.f32.partialorder %v5793, 0.0
      %vm5912 = vcmp.ge.f32.partialorder %v5798, 0.0
      %vm5913 = vcmp.ge.f32.partialorder %v5803, 0.0
      %vm5914 = vcmp.ge.f32.partialorder %v5808, 0.0
      %vm5915 = vcmp.ge.f32.partialorder %v5813, 0.0
      %vm5916 = vcmp.ge.f32.partialorder %v5818, 0.0
      %vm5917 = vcmp.ge.f32.partialorder %v5823, 0.0
      %vm5918 = vcmp.ge.f32.partialorder %v5828, 0.0
      %vm5919 = vcmp.ge.f32.partialorder %v5833, 0.0
      %vm5920 = vcmp.ge.f32.partialorder %v5838, 0.0
      %vm5921 = vcmp.ge.f32.partialorder %v5843, 0.0
      %vm5922 = vcmp.ge.f32.partialorder %v5848, 0.0
      %vm5923 = vcmp.ge.f32.partialorder %v5853, 0.0
      %vm5924 = vcmp.ge.f32.partialorder %v5858, 0.0
      %vm5925 = vcmp.ge.f32.partialorder %v5863, 0.0
      %vm5926 = vcmp.ge.f32.partialorder %v5868, 0.0
      %vm5927 = vcmp.ge.f32.partialorder %v5873, 0.0
      %vm5928 = vcmp.ge.f32.partialorder %v5878, 0.0
      %vm5929 = vcmp.ge.f32.partialorder %v5883, 0.0
      %vm5930 = vcmp.ge.f32.partialorder %v5888, 0.0
      %vm5931 = vcmp.ge.f32.partialorder %v5893, 0.0
      %vm5932 = vcmp.ge.f32.partialorder %v5898, 0.0
      %v5933 = vmul.f32 %v5743, 0.1
      %v5934 = vmul.f32 %v5748, 0.1
      %v5935 = vmul.f32 %v5753, 0.1
      %v5936 = vmul.f32 %v5758, 0.1
      %v5937 = vmul.f32 %v5763, 0.1
      %v5938 = vmul.f32 %v5768, 0.1
      %v5939 = vmul.f32 %v5773, 0.1
      %v5940 = vmul.f32 %v5778, 0.1
      %v5941 = vmul.f32 %v5783, 0.1
      %v5942 = vmul.f32 %v5788, 0.1
      %v5943 = vmul.f32 %v5793, 0.1
      %v5944 = vmul.f32 %v5798, 0.1
      %v5945 = vmul.f32 %v5803, 0.1
      %v5946 = vmul.f32 %v5808, 0.1
      %v5947 = vmul.f32 %v5813, 0.1
      %v5948 = vmul.f32 %v5818, 0.1
      %v5949 = vmul.f32 %v5823, 0.1
      %v5950 = vmul.f32 %v5828, 0.1
      %v5951 = vmul.f32 %v5833, 0.1
      %v5952 = vmul.f32 %v5838, 0.1
      %v5953 = vmul.f32 %v5843, 0.1
      %v5954 = vmul.f32 %v5848, 0.1
      %v5955 = vmul.f32 %v5853, 0.1
      %v5956 = vmul.f32 %v5858, 0.1
      %v5957 = vmul.f32 %v5863, 0.1
      %v5958 = vmul.f32 %v5868, 0.1
      %v5959 = vmul.f32 %v5873, 0.1
      %v5960 = vmul.f32 %v5878, 0.1
      %v5961 = vmul.f32 %v5883, 0.1
      %v5962 = vmul.f32 %v5888, 0.1
      %v5963 = vmul.f32 %v5893, 0.1
      %v5964 = vmul.f32 %v5898, 0.1
      %v5965 = vsel %vm5901, %v5743, %v5933
      %v5966 = vsel %vm5902, %v5748, %v5934
      %v5967 = vsel %vm5903, %v5753, %v5935
      %v5968 = vsel %vm5904, %v5758, %v5936
      %v5969 = vsel %vm5905, %v5763, %v5937
      %v5970 = vsel %vm5906, %v5768, %v5938
      %v5971 = vsel %vm5907, %v5773, %v5939
      %v5972 = vsel %vm5908, %v5778, %v5940
      %v5973 = vsel %vm5909, %v5783, %v5941
      %v5974 = vsel %vm5910, %v5788, %v5942
      %v5975 = vsel %vm5911, %v5793, %v5943
      %v5976 = vsel %vm5912, %v5798, %v5944
      %v5977 = vsel %vm5913, %v5803, %v5945
      %v5978 = vsel %vm5914, %v5808, %v5946
      %v5979 = vsel %vm5915, %v5813, %v5947
      %v5980 = vsel %vm5916, %v5818, %v5948
      %v5981 = vsel %vm5917, %v5823, %v5949
      %v5982 = vsel %vm5918, %v5828, %v5950
      %v5983 = vsel %vm5919, %v5833, %v5951
      %v5984 = vsel %vm5920, %v5838, %v5952
      %v5985 = vsel %vm5921, %v5843, %v5953
      %v5986 = vsel %vm5922, %v5848, %v5954
      %v5987 = vsel %vm5923, %v5853, %v5955
      %v5988 = vsel %vm5924, %v5858, %v5956
      %v5989 = vsel %vm5925, %v5863, %v5957
      %v5990 = vsel %vm5926, %v5868, %v5958
      %v5991 = vsel %vm5927, %v5873, %v5959
      %v5992 = vsel %vm5928, %v5878, %v5960
      %v5993 = vsel %vm5929, %v5883, %v5961
      %v5994 = vsel %vm5930, %v5888, %v5962
      %v5995 = vsel %vm5931, %v5893, %v5963
      %v5996 = vsel %vm5932, %v5898, %v5964
      %s5997 = scalar_lea.vmem %s1, 216
      %v5998 = vld [vmem:[%s5997] sm:$0xff]
      %v5999 = vld [vmem:[%s5997 + $0x8] sm:$0xff]
      %v6000 = vld [vmem:[%s5997 + $0x10] sm:$0xff]
      %v6001 = vld [vmem:[%s5997 + $0x18] sm:$0xff]
      %v6002 = vld [vmem:[%s5997 + $0x20] sm:$0xff]
      %v6003 = vld [vmem:[%s5997 + $0x28] sm:$0xff]
      %v6004 = vld [vmem:[%s5997 + $0x30] sm:$0xff]
      %v6005 = vld [vmem:[%s5997 + $0x38] sm:$0xff]
      %v6006 = vld [vmem:[%s5997 + $0x40] sm:$0xff]
      %s6007 = scalar_lea.vmem %s2, 3
      %v6008 = vld [vmem:[%s6007] sm:$0x1]
      %v6041 = vrot.slane %v5965, 7
      %v6042 = vrot.slane %v5966, 7
      %v6043 = vsel %vm442, %v6041, %v6042
      %v6044 = vrot.slane %v5967, 7
      %v6045 = vrot.slane %v5968, 7
      %v6046 = vsel %vm442, %v6044, %v6045
      %v6047 = vrot.slane %v5969, 7
      %v6048 = vrot.slane %v5970, 7
      %v6049 = vsel %vm442, %v6047, %v6048
      %v6050 = vrot.slane %v5971, 7
      %v6051 = vrot.slane %v5972, 7
      %v6052 = vsel %vm442, %v6050, %v6051
      %v6053 = vrot.slane %v5973, 7
      %v6054 = vrot.slane %v5974, 7
      %v6055 = vsel %vm442, %v6053, %v6054
      %v6056 = vrot.slane %v5975, 7
      %v6057 = vrot.slane %v5976, 7
      %v6058 = vsel %vm442, %v6056, %v6057
      %v6059 = vrot.slane %v5977, 7
      %v6060 = vrot.slane %v5978, 7
      %v6061 = vsel %vm442, %v6059, %v6060
      %v6062 = vrot.slane %v5979, 7
      %v6063 = vrot.slane %v5980, 7
      %v6064 = vsel %vm442, %v6062, %v6063
      %v6065 = vrot.slane %v5981, 7
      %v6066 = vrot.slane %v5982, 7
      %v6067 = vsel %vm442, %v6065, %v6066
      %v6068 = vrot.slane %v5983, 7
      %v6069 = vrot.slane %v5984, 7
      %v6070 = vsel %vm442, %v6068, %v6069
      %v6071 = vrot.slane %v5985, 7
      %v6072 = vrot.slane %v5986, 7
      %v6073 = vsel %vm442, %v6071, %v6072
      %v6074 = vrot.slane %v5987, 7
      %v6075 = vrot.slane %v5988, 7
      %v6076 = vsel %vm442, %v6074, %v6075
      %v6077 = vrot.slane %v5989, 7
      %v6078 = vrot.slane %v5990, 7
      %v6079 = vsel %vm442, %v6077, %v6078
      %v6080 = vrot.slane %v5991, 7
      %v6081 = vrot.slane %v5992, 7
      %v6082 = vsel %vm442, %v6080, %v6081
      %v6083 = vrot.slane %v5993, 7
      %v6084 = vrot.slane %v5994, 7
      %v6085 = vsel %vm442, %v6083, %v6084
      %v6086 = vrot.slane %v5995, 7
      %v6087 = vrot.slane %v5996, 7
      %v6088 = vsel %vm442, %v6086, %v6087
      %v6136 = vsel %vm442, 0.0, %v6041
      %v6137 = vsel %vm442, 0.0, %v6044
      %v6138 = vsel %vm442, 0.0, %v6047
      %v6139 = vsel %vm442, 0.0, %v6050
      %v6140 = vsel %vm442, 0.0, %v6053
      %v6141 = vsel %vm442, 0.0, %v6056
      %v6142 = vsel %vm442, 0.0, %v6059
      %v6143 = vsel %vm442, 0.0, %v6062
      %v6144 = vsel %vm442, 0.0, %v6065
      %v6145 = vsel %vm442, 0.0, %v6068
      %v6146 = vsel %vm442, 0.0, %v6071
      %v6147 = vsel %vm442, 0.0, %v6074
      %v6148 = vsel %vm442, 0.0, %v6077
      %v6149 = vsel %vm442, 0.0, %v6080
      %v6150 = vsel %vm442, 0.0, %v6083
      %v6151 = vsel %vm442, 0.0, %v6086
      %v6152 = vsel %vm442, %v6042, 0.0
      %v6153 = vsel %vm442, %v6045, 0.0
      %v6154 = vsel %vm442, %v6048, 0.0
      %v6155 = vsel %vm442, %v6051, 0.0
      %v6156 = vsel %vm442, %v6054, 0.0
      %v6157 = vsel %vm442, %v6057, 0.0
      %v6158 = vsel %vm442, %v6060, 0.0
      %v6159 = vsel %vm442, %v6063, 0.0
      %v6160 = vsel %vm442, %v6066, 0.0
      %v6161 = vsel %vm442, %v6069, 0.0
      %v6162 = vsel %vm442, %v6072, 0.0
      %v6163 = vsel %vm442, %v6075, 0.0
      %v6164 = vsel %vm442, %v6078, 0.0
      %v6165 = vsel %vm442, %v6081, 0.0
      %v6166 = vsel %vm442, %v6084, 0.0
      %v6167 = vsel %vm442, %v6087, 0.0
      %v6198 = vrot.slane %v6136, 1
      %v6199 = vrot.slane %v6043, 1
      %v6200 = vsel %vm608, %v6198, %v6199
      %v6201 = vrot.slane %v6152, 1
      %v6202 = vsel %vm608, %v6199, %v6201
      %v6203 = vrot.slane %v6137, 1
      %v6204 = vrot.slane %v6046, 1
      %v6205 = vsel %vm608, %v6203, %v6204
      %v6206 = vrot.slane %v6153, 1
      %v6207 = vsel %vm608, %v6204, %v6206
      %v6208 = vrot.slane %v6138, 1
      %v6209 = vrot.slane %v6049, 1
      %v6210 = vsel %vm608, %v6208, %v6209
      %v6211 = vrot.slane %v6154, 1
      %v6212 = vsel %vm608, %v6209, %v6211
      %v6213 = vrot.slane %v6139, 1
      %v6214 = vrot.slane %v6052, 1
      %v6215 = vsel %vm608, %v6213, %v6214
      %v6216 = vrot.slane %v6155, 1
      %v6217 = vsel %vm608, %v6214, %v6216
      %v6218 = vrot.slane %v6140, 1
      %v6219 = vrot.slane %v6055, 1
      %v6220 = vsel %vm608, %v6218, %v6219
      %v6221 = vrot.slane %v6156, 1
      %v6222 = vsel %vm608, %v6219, %v6221
      %v6223 = vrot.slane %v6141, 1
      %v6224 = vrot.slane %v6058, 1
      %v6225 = vsel %vm608, %v6223, %v6224
      %v6226 = vrot.slane %v6157, 1
      %v6227 = vsel %vm608, %v6224, %v6226
      %v6228 = vrot.slane %v6142, 1
      %v6229 = vrot.slane %v6061, 1
      %v6230 = vsel %vm608, %v6228, %v6229
      %v6231 = vrot.slane %v6158, 1
      %v6232 = vsel %vm608, %v6229, %v6231
      %v6233 = vrot.slane %v6143, 1
      %v6234 = vrot.slane %v6064, 1
      %v6235 = vsel %vm608, %v6233, %v6234
      %v6236 = vrot.slane %v6159, 1
      %v6237 = vsel %vm608, %v6234, %v6236
      %v6238 = vrot.slane %v6144, 1
      %v6239 = vrot.slane %v6067, 1
      %v6240 = vsel %vm608, %v6238, %v6239
      %v6241 = vrot.slane %v6160, 1
      %v6242 = vsel %vm608, %v6239, %v6241
      %v6243 = vrot.slane %v6145, 1
      %v6244 = vrot.slane %v6070, 1
      %v6245 = vsel %vm608, %v6243, %v6244
      %v6246 = vrot.slane %v6161, 1
      %v6247 = vsel %vm608, %v6244, %v6246
      %v6248 = vrot.slane %v6146, 1
      %v6249 = vrot.slane %v6073, 1
      %v6250 = vsel %vm608, %v6248, %v6249
      %v6251 = vrot.slane %v6162, 1
      %v6252 = vsel %vm608, %v6249, %v6251
      %v6253 = vrot.slane %v6147, 1
      %v6254 = vrot.slane %v6076, 1
      %v6255 = vsel %vm608, %v6253, %v6254
      %v6256 = vrot.slane %v6163, 1
      %v6257 = vsel %vm608, %v6254, %v6256
      %v6258 = vrot.slane %v6148, 1
      %v6259 = vrot.slane %v6079, 1
      %v6260 = vsel %vm608, %v6258, %v6259
      %v6261 = vrot.slane %v6164, 1
      %v6262 = vsel %vm608, %v6259, %v6261
      %v6263 = vrot.slane %v6149, 1
      %v6264 = vrot.slane %v6082, 1
      %v6265 = vsel %vm608, %v6263, %v6264
      %v6266 = vrot.slane %v6165, 1
      %v6267 = vsel %vm608, %v6264, %v6266
      %v6268 = vrot.slane %v6150, 1
      %v6269 = vrot.slane %v6085, 1
      %v6270 = vsel %vm608, %v6268, %v6269
      %v6271 = vrot.slane %v6166, 1
      %v6272 = vsel %vm608, %v6269, %v6271
      %6273 = vrot.lane.b32.xlu0 %v6200, 8
      %v6274 = vpop.permute.xlu0 %6273
      %6275 = vrot.lane.b32.xlu0 %v6202, 8
      %v6276 = vpop.permute.xlu0 %6275
      %6277 = vrot.lane.b32.xlu0 %v6205, 8
      %v6278 = vpop.permute.xlu0 %6277
      %6279 = vrot.lane.b32.xlu0 %v6207, 8
      %v6280 = vpop.permute.xlu0 %6279
      %6281 = vrot.lane.b32.xlu0 %v6210, 8
      %v6282 = vpop.permute.xlu0 %6281
      %6283 = vrot.lane.b32.xlu0 %v6212, 8
      %v6284 = vpop.permute.xlu0 %6283
      %6285 = vrot.lane.b32.xlu0 %v6215, 8
      %v6286 = vpop.permute.xlu0 %6285
      %6287 = vrot.lane.b32.xlu0 %v6217, 8
      %v6288 = vpop.permute.xlu0 %6287
      %6289 = vrot.lane.b32.xlu0 %v6220, 8
      %v6290 = vpop.permute.xlu0 %6289
      %6291 = vrot.lane.b32.xlu0 %v6222, 8
      %v6292 = vpop.permute.xlu0 %6291
      %6293 = vrot.lane.b32.xlu0 %v6225, 8
      %v6294 = vpop.permute.xlu0 %6293
      %6295 = vrot.lane.b32.xlu0 %v6227, 8
      %v6296 = vpop.permute.xlu0 %6295
      %6297 = vrot.lane.b32.xlu0 %v6230, 8
      %v6298 = vpop.permute.xlu0 %6297
      %6299 = vrot.lane.b32.xlu0 %v6232, 8
      %v6300 = vpop.permute.xlu0 %6299
      %6301 = vrot.lane.b32.xlu0 %v6235, 8
      %v6302 = vpop.permute.xlu0 %6301
      %6303 = vrot.lane.b32.xlu0 %v6237, 8
      %v6304 = vpop.permute.xlu0 %6303
      %6305 = vrot.lane.b32.xlu0 %v6240, 8
      %v6306 = vpop.permute.xlu0 %6305
      %6307 = vrot.lane.b32.xlu0 %v6242, 8
      %v6308 = vpop.permute.xlu0 %6307
      %6309 = vrot.lane.b32.xlu0 %v6245, 8
      %v6310 = vpop.permute.xlu0 %6309
      %6311 = vrot.lane.b32.xlu0 %v6247, 8
      %v6312 = vpop.permute.xlu0 %6311
      %6313 = vrot.lane.b32.xlu0 %v6250, 8
      %v6314 = vpop.permute.xlu0 %6313
      %6315 = vrot.lane.b32.xlu0 %v6252, 8
      %v6316 = vpop.permute.xlu0 %6315
      %6317 = vrot.lane.b32.xlu0 %v6255, 8
      %v6318 = vpop.permute.xlu0 %6317
      %6319 = vrot.lane.b32.xlu0 %v6257, 8
      %v6320 = vpop.permute.xlu0 %6319
      %6321 = vrot.lane.b32.xlu0 %v6260, 8
      %v6322 = vpop.permute.xlu0 %6321
      %6323 = vrot.lane.b32.xlu0 %v6262, 8
      %v6324 = vpop.permute.xlu0 %6323
      %6325 = vrot.lane.b32.xlu0 %v6265, 8
      %v6326 = vpop.permute.xlu0 %6325
      %6327 = vrot.lane.b32.xlu0 %v6267, 8
      %v6328 = vpop.permute.xlu0 %6327
      %6329 = vrot.lane.b32.xlu0 %v6270, 8
      %v6330 = vpop.permute.xlu0 %6329
      %6331 = vrot.lane.b32.xlu0 %v6272, 8
      %v6332 = vpop.permute.xlu0 %6331
      %v6363 = vrot.slane %v6136, 2
      %v6364 = vrot.slane %v6043, 2
      %v6365 = vsel %vm785, %v6363, %v6364
      %v6366 = vrot.slane %v6152, 2
      %v6367 = vsel %vm785, %v6364, %v6366
      %v6368 = vrot.slane %v6137, 2
      %v6369 = vrot.slane %v6046, 2
      %v6370 = vsel %vm785, %v6368, %v6369
      %v6371 = vrot.slane %v6153, 2
      %v6372 = vsel %vm785, %v6369, %v6371
      %v6373 = vrot.slane %v6138, 2
      %v6374 = vrot.slane %v6049, 2
      %v6375 = vsel %vm785, %v6373, %v6374
      %v6376 = vrot.slane %v6154, 2
      %v6377 = vsel %vm785, %v6374, %v6376
      %v6378 = vrot.slane %v6139, 2
      %v6379 = vrot.slane %v6052, 2
      %v6380 = vsel %vm785, %v6378, %v6379
      %v6381 = vrot.slane %v6155, 2
      %v6382 = vsel %vm785, %v6379, %v6381
      %v6383 = vrot.slane %v6140, 2
      %v6384 = vrot.slane %v6055, 2
      %v6385 = vsel %vm785, %v6383, %v6384
      %v6386 = vrot.slane %v6156, 2
      %v6387 = vsel %vm785, %v6384, %v6386
      %v6388 = vrot.slane %v6141, 2
      %v6389 = vrot.slane %v6058, 2
      %v6390 = vsel %vm785, %v6388, %v6389
      %v6391 = vrot.slane %v6157, 2
      %v6392 = vsel %vm785, %v6389, %v6391
      %v6393 = vrot.slane %v6142, 2
      %v6394 = vrot.slane %v6061, 2
      %v6395 = vsel %vm785, %v6393, %v6394
      %v6396 = vrot.slane %v6158, 2
      %v6397 = vsel %vm785, %v6394, %v6396
      %v6398 = vrot.slane %v6143, 2
      %v6399 = vrot.slane %v6064, 2
      %v6400 = vsel %vm785, %v6398, %v6399
      %v6401 = vrot.slane %v6159, 2
      %v6402 = vsel %vm785, %v6399, %v6401
      %v6403 = vrot.slane %v6144, 2
      %v6404 = vrot.slane %v6067, 2
      %v6405 = vsel %vm785, %v6403, %v6404
      %v6406 = vrot.slane %v6160, 2
      %v6407 = vsel %vm785, %v6404, %v6406
      %v6408 = vrot.slane %v6145, 2
      %v6409 = vrot.slane %v6070, 2
      %v6410 = vsel %vm785, %v6408, %v6409
      %v6411 = vrot.slane %v6161, 2
      %v6412 = vsel %vm785, %v6409, %v6411
      %v6413 = vrot.slane %v6146, 2
      %v6414 = vrot.slane %v6073, 2
      %v6415 = vsel %vm785, %v6413, %v6414
      %v6416 = vrot.slane %v6162, 2
      %v6417 = vsel %vm785, %v6414, %v6416
      %v6418 = vrot.slane %v6147, 2
      %v6419 = vrot.slane %v6076, 2
      %v6420 = vsel %vm785, %v6418, %v6419
      %v6421 = vrot.slane %v6163, 2
      %v6422 = vsel %vm785, %v6419, %v6421
      %v6423 = vrot.slane %v6148, 2
      %v6424 = vrot.slane %v6079, 2
      %v6425 = vsel %vm785, %v6423, %v6424
      %v6426 = vrot.slane %v6164, 2
      %v6427 = vsel %vm785, %v6424, %v6426
      %v6428 = vrot.slane %v6149, 2
      %v6429 = vrot.slane %v6082, 2
      %v6430 = vsel %vm785, %v6428, %v6429
      %v6431 = vrot.slane %v6165, 2
      %v6432 = vsel %vm785, %v6429, %v6431
      %v6433 = vrot.slane %v6150, 2
      %v6434 = vrot.slane %v6085, 2
      %v6435 = vsel %vm785, %v6433, %v6434
      %v6436 = vrot.slane %v6166, 2
      %v6437 = vsel %vm785, %v6434, %v6436
      %6438 = vrot.lane.b32.xlu0 %v6365, 16
      %v6439 = vpop.permute.xlu0 %6438
      %6440 = vrot.lane.b32.xlu0 %v6367, 16
      %v6441 = vpop.permute.xlu0 %6440
      %6442 = vrot.lane.b32.xlu0 %v6370, 16
      %v6443 = vpop.permute.xlu0 %6442
      %6444 = vrot.lane.b32.xlu0 %v6372, 16
      %v6445 = vpop.permute.xlu0 %6444
      %6446 = vrot.lane.b32.xlu0 %v6375, 16
      %v6447 = vpop.permute.xlu0 %6446
      %6448 = vrot.lane.b32.xlu0 %v6377, 16
      %v6449 = vpop.permute.xlu0 %6448
      %6450 = vrot.lane.b32.xlu0 %v6380, 16
      %v6451 = vpop.permute.xlu0 %6450
      %6452 = vrot.lane.b32.xlu0 %v6382, 16
      %v6453 = vpop.permute.xlu0 %6452
      %6454 = vrot.lane.b32.xlu0 %v6385, 16
      %v6455 = vpop.permute.xlu0 %6454
      %6456 = vrot.lane.b32.xlu0 %v6387, 16
      %v6457 = vpop.permute.xlu0 %6456
      %6458 = vrot.lane.b32.xlu0 %v6390, 16
      %v6459 = vpop.permute.xlu0 %6458
      %6460 = vrot.lane.b32.xlu0 %v6392, 16
      %v6461 = vpop.permute.xlu0 %6460
      %6462 = vrot.lane.b32.xlu0 %v6395, 16
      %v6463 = vpop.permute.xlu0 %6462
      %6464 = vrot.lane.b32.xlu0 %v6397, 16
      %v6465 = vpop.permute.xlu0 %6464
      %6466 = vrot.lane.b32.xlu0 %v6400, 16
      %v6467 = vpop.permute.xlu0 %6466
      %6468 = vrot.lane.b32.xlu0 %v6402, 16
      %v6469 = vpop.permute.xlu0 %6468
      %6470 = vrot.lane.b32.xlu0 %v6405, 16
      %v6471 = vpop.permute.xlu0 %6470
      %6472 = vrot.lane.b32.xlu0 %v6407, 16
      %v6473 = vpop.permute.xlu0 %6472
      %6474 = vrot.lane.b32.xlu0 %v6410, 16
      %v6475 = vpop.permute.xlu0 %6474
      %6476 = vrot.lane.b32.xlu0 %v6412, 16
      %v6477 = vpop.permute.xlu0 %6476
      %6478 = vrot.lane.b32.xlu0 %v6415, 16
      %v6479 = vpop.permute.xlu0 %6478
      %6480 = vrot.lane.b32.xlu0 %v6417, 16
      %v6481 = vpop.permute.xlu0 %6480
      %6482 = vrot.lane.b32.xlu0 %v6420, 16
      %v6483 = vpop.permute.xlu0 %6482
      %6484 = vrot.lane.b32.xlu0 %v6422, 16
      %v6485 = vpop.permute.xlu0 %6484
      %6486 = vrot.lane.b32.xlu0 %v6425, 16
      %v6487 = vpop.permute.xlu0 %6486
      %6488 = vrot.lane.b32.xlu0 %v6427, 16
      %v6489 = vpop.permute.xlu0 %6488
      %6490 = vrot.lane.b32.xlu0 %v6430, 16
      %v6491 = vpop.permute.xlu0 %6490
      %6492 = vrot.lane.b32.xlu0 %v6432, 16
      %v6493 = vpop.permute.xlu0 %6492
      %6494 = vrot.lane.b32.xlu0 %v6435, 16
      %v6495 = vpop.permute.xlu0 %6494
      %6496 = vrot.lane.b32.xlu0 %v6437, 16
      %v6497 = vpop.permute.xlu0 %6496
      %6529 = vrot.lane.b32.xlu0 %v6136, 24
      %v6530 = vpop.permute.xlu0 %6529
      %6531 = vrot.lane.b32.xlu0 %v6043, 24
      %v6532 = vpop.permute.xlu0 %6531
      %6533 = vrot.lane.b32.xlu0 %v6137, 24
      %v6534 = vpop.permute.xlu0 %6533
      %6535 = vrot.lane.b32.xlu0 %v6046, 24
      %v6536 = vpop.permute.xlu0 %6535
      %6537 = vrot.lane.b32.xlu0 %v6138, 24
      %v6538 = vpop.permute.xlu0 %6537
      %6539 = vrot.lane.b32.xlu0 %v6049, 24
      %v6540 = vpop.permute.xlu0 %6539
      %6541 = vrot.lane.b32.xlu0 %v6139, 24
      %v6542 = vpop.permute.xlu0 %6541
      %6543 = vrot.lane.b32.xlu0 %v6052, 24
      %v6544 = vpop.permute.xlu0 %6543
      %6545 = vrot.lane.b32.xlu0 %v6140, 24
      %v6546 = vpop.permute.xlu0 %6545
      %6547 = vrot.lane.b32.xlu0 %v6055, 24
      %v6548 = vpop.permute.xlu0 %6547
      %6549 = vrot.lane.b32.xlu0 %v6141, 24
      %v6550 = vpop.permute.xlu0 %6549
      %6551 = vrot.lane.b32.xlu0 %v6058, 24
      %v6552 = vpop.permute.xlu0 %6551
      %6553 = vrot.lane.b32.xlu0 %v6142, 24
      %v6554 = vpop.permute.xlu0 %6553
      %6555 = vrot.lane.b32.xlu0 %v6061, 24
      %v6556 = vpop.permute.xlu0 %6555
      %6557 = vrot.lane.b32.xlu0 %v6143, 24
      %v6558 = vpop.permute.xlu0 %6557
      %6559 = vrot.lane.b32.xlu0 %v6064, 24
      %v6560 = vpop.permute.xlu0 %6559
      %6561 = vrot.lane.b32.xlu0 %v6144, 24
      %v6562 = vpop.permute.xlu0 %6561
      %6563 = vrot.lane.b32.xlu0 %v6067, 24
      %v6564 = vpop.permute.xlu0 %6563
      %6565 = vrot.lane.b32.xlu0 %v6145, 24
      %v6566 = vpop.permute.xlu0 %6565
      %6567 = vrot.lane.b32.xlu0 %v6070, 24
      %v6568 = vpop.permute.xlu0 %6567
      %6569 = vrot.lane.b32.xlu0 %v6146, 24
      %v6570 = vpop.permute.xlu0 %6569
      %6571 = vrot.lane.b32.xlu0 %v6073, 24
      %v6572 = vpop.permute.xlu0 %6571
      %6573 = vrot.lane.b32.xlu0 %v6147, 24
      %v6574 = vpop.permute.xlu0 %6573
      %6575 = vrot.lane.b32.xlu0 %v6076, 24
      %v6576 = vpop.permute.xlu0 %6575
      %6577 = vrot.lane.b32.xlu0 %v6148, 24
      %v6578 = vpop.permute.xlu0 %6577
      %6579 = vrot.lane.b32.xlu0 %v6079, 24
      %v6580 = vpop.permute.xlu0 %6579
      %6581 = vrot.lane.b32.xlu0 %v6149, 24
      %v6582 = vpop.permute.xlu0 %6581
      %6583 = vrot.lane.b32.xlu0 %v6082, 24
      %v6584 = vpop.permute.xlu0 %6583
      %6585 = vrot.lane.b32.xlu0 %v6150, 24
      %v6586 = vpop.permute.xlu0 %6585
      %6587 = vrot.lane.b32.xlu0 %v6085, 24
      %v6588 = vpop.permute.xlu0 %6587
      %6589 = vrot.lane.b32.xlu0 %v6151, 24
      %v6590 = vpop.permute.xlu0 %6589
      %6591 = vrot.lane.b32.xlu0 %v6088, 24
      %v6592 = vpop.permute.xlu0 %6591
      %v6626 = vrot.slane %v6151, 1
      %v6627 = vrot.slane %v6088, 1
      %v6628 = vsel %vm608, %v6626, %v6627
      %v6629 = vrot.slane %v6167, 1
      %v6630 = vsel %vm608, %v6627, %v6629
      %6631 = vrot.lane.b32.xlu0 %v6200, 32
      %v6632 = vpop.permute.xlu0 %6631
      %6633 = vrot.lane.b32.xlu0 %v6202, 32
      %v6634 = vpop.permute.xlu0 %6633
      %6635 = vrot.lane.b32.xlu0 %v6205, 32
      %v6636 = vpop.permute.xlu0 %6635
      %6637 = vrot.lane.b32.xlu0 %v6207, 32
      %v6638 = vpop.permute.xlu0 %6637
      %6639 = vrot.lane.b32.xlu0 %v6210, 32
      %v6640 = vpop.permute.xlu0 %6639
      %6641 = vrot.lane.b32.xlu0 %v6212, 32
      %v6642 = vpop.permute.xlu0 %6641
      %6643 = vrot.lane.b32.xlu0 %v6215, 32
      %v6644 = vpop.permute.xlu0 %6643
      %6645 = vrot.lane.b32.xlu0 %v6217, 32
      %v6646 = vpop.permute.xlu0 %6645
      %6647 = vrot.lane.b32.xlu0 %v6220, 32
      %v6648 = vpop.permute.xlu0 %6647
      %6649 = vrot.lane.b32.xlu0 %v6222, 32
      %v6650 = vpop.permute.xlu0 %6649
      %6651 = vrot.lane.b32.xlu0 %v6225, 32
      %v6652 = vpop.permute.xlu0 %6651
      %6653 = vrot.lane.b32.xlu0 %v6227, 32
      %v6654 = vpop.permute.xlu0 %6653
      %6655 = vrot.lane.b32.xlu0 %v6230, 32
      %v6656 = vpop.permute.xlu0 %6655
      %6657 = vrot.lane.b32.xlu0 %v6232, 32
      %v6658 = vpop.permute.xlu0 %6657
      %6659 = vrot.lane.b32.xlu0 %v6235, 32
      %v6660 = vpop.permute.xlu0 %6659
      %6661 = vrot.lane.b32.xlu0 %v6237, 32
      %v6662 = vpop.permute.xlu0 %6661
      %6663 = vrot.lane.b32.xlu0 %v6240, 32
      %v6664 = vpop.permute.xlu0 %6663
      %6665 = vrot.lane.b32.xlu0 %v6242, 32
      %v6666 = vpop.permute.xlu0 %6665
      %6667 = vrot.lane.b32.xlu0 %v6245, 32
      %v6668 = vpop.permute.xlu0 %6667
      %6669 = vrot.lane.b32.xlu0 %v6247, 32
      %v6670 = vpop.permute.xlu0 %6669
      %6671 = vrot.lane.b32.xlu0 %v6250, 32
      %v6672 = vpop.permute.xlu0 %6671
      %6673 = vrot.lane.b32.xlu0 %v6252, 32
      %v6674 = vpop.permute.xlu0 %6673
      %6675 = vrot.lane.b32.xlu0 %v6255, 32
      %v6676 = vpop.permute.xlu0 %6675
      %6677 = vrot.lane.b32.xlu0 %v6257, 32
      %v6678 = vpop.permute.xlu0 %6677
      %6679 = vrot.lane.b32.xlu0 %v6260, 32
      %v6680 = vpop.permute.xlu0 %6679
      %6681 = vrot.lane.b32.xlu0 %v6262, 32
      %v6682 = vpop.permute.xlu0 %6681
      %6683 = vrot.lane.b32.xlu0 %v6265, 32
      %v6684 = vpop.permute.xlu0 %6683
      %6685 = vrot.lane.b32.xlu0 %v6267, 32
      %v6686 = vpop.permute.xlu0 %6685
      %6687 = vrot.lane.b32.xlu0 %v6270, 32
      %v6688 = vpop.permute.xlu0 %6687
      %6689 = vrot.lane.b32.xlu0 %v6272, 32
      %v6690 = vpop.permute.xlu0 %6689
      %6691 = vrot.lane.b32.xlu0 %v6628, 32
      %v6692 = vpop.permute.xlu0 %6691
      %6693 = vrot.lane.b32.xlu0 %v6630, 32
      %v6694 = vpop.permute.xlu0 %6693
      %v6727 = vrot.slane %v6151, 2
      %v6728 = vrot.slane %v6088, 2
      %v6729 = vsel %vm785, %v6727, %v6728
      %v6730 = vrot.slane %v6167, 2
      %v6731 = vsel %vm785, %v6728, %v6730
      %6732 = vrot.lane.b32.xlu0 %v6365, 40
      %v6733 = vpop.permute.xlu0 %6732
      %6734 = vrot.lane.b32.xlu0 %v6367, 40
      %v6735 = vpop.permute.xlu0 %6734
      %6736 = vrot.lane.b32.xlu0 %v6370, 40
      %v6737 = vpop.permute.xlu0 %6736
      %6738 = vrot.lane.b32.xlu0 %v6372, 40
      %v6739 = vpop.permute.xlu0 %6738
      %6740 = vrot.lane.b32.xlu0 %v6375, 40
      %v6741 = vpop.permute.xlu0 %6740
      %6742 = vrot.lane.b32.xlu0 %v6377, 40
      %v6743 = vpop.permute.xlu0 %6742
      %6744 = vrot.lane.b32.xlu0 %v6380, 40
      %v6745 = vpop.permute.xlu0 %6744
      %6746 = vrot.lane.b32.xlu0 %v6382, 40
      %v6747 = vpop.permute.xlu0 %6746
      %6748 = vrot.lane.b32.xlu0 %v6385, 40
      %v6749 = vpop.permute.xlu0 %6748
      %6750 = vrot.lane.b32.xlu0 %v6387, 40
      %v6751 = vpop.permute.xlu0 %6750
      %6752 = vrot.lane.b32.xlu0 %v6390, 40
      %v6753 = vpop.permute.xlu0 %6752
      %6754 = vrot.lane.b32.xlu0 %v6392, 40
      %v6755 = vpop.permute.xlu0 %6754
      %6756 = vrot.lane.b32.xlu0 %v6395, 40
      %v6757 = vpop.permute.xlu0 %6756
      %6758 = vrot.lane.b32.xlu0 %v6397, 40
      %v6759 = vpop.permute.xlu0 %6758
      %6760 = vrot.lane.b32.xlu0 %v6400, 40
      %v6761 = vpop.permute.xlu0 %6760
      %6762 = vrot.lane.b32.xlu0 %v6402, 40
      %v6763 = vpop.permute.xlu0 %6762
      %6764 = vrot.lane.b32.xlu0 %v6405, 40
      %v6765 = vpop.permute.xlu0 %6764
      %6766 = vrot.lane.b32.xlu0 %v6407, 40
      %v6767 = vpop.permute.xlu0 %6766
      %6768 = vrot.lane.b32.xlu0 %v6410, 40
      %v6769 = vpop.permute.xlu0 %6768
      %6770 = vrot.lane.b32.xlu0 %v6412, 40
      %v6771 = vpop.permute.xlu0 %6770
      %6772 = vrot.lane.b32.xlu0 %v6415, 40
      %v6773 = vpop.permute.xlu0 %6772
      %6774 = vrot.lane.b32.xlu0 %v6417, 40
      %v6775 = vpop.permute.xlu0 %6774
      %6776 = vrot.lane.b32.xlu0 %v6420, 40
      %v6777 = vpop.permute.xlu0 %6776
      %6778 = vrot.lane.b32.xlu0 %v6422, 40
      %v6779 = vpop.permute.xlu0 %6778
      %6780 = vrot.lane.b32.xlu0 %v6425, 40
      %v6781 = vpop.permute.xlu0 %6780
      %6782 = vrot.lane.b32.xlu0 %v6427, 40
      %v6783 = vpop.permute.xlu0 %6782
      %6784 = vrot.lane.b32.xlu0 %v6430, 40
      %v6785 = vpop.permute.xlu0 %6784
      %6786 = vrot.lane.b32.xlu0 %v6432, 40
      %v6787 = vpop.permute.xlu0 %6786
      %6788 = vrot.lane.b32.xlu0 %v6435, 40
      %v6789 = vpop.permute.xlu0 %6788
      %6790 = vrot.lane.b32.xlu0 %v6437, 40
      %v6791 = vpop.permute.xlu0 %6790
      %6792 = vrot.lane.b32.xlu0 %v6729, 40
      %v6793 = vpop.permute.xlu0 %6792
      %6794 = vrot.lane.b32.xlu0 %v6731, 40
      %v6795 = vpop.permute.xlu0 %6794
      %6828 = vrot.lane.b32.xlu0 %v6137, 48
      %v6829 = vpop.permute.xlu0 %6828
      %6830 = vrot.lane.b32.xlu0 %v6046, 48
      %v6831 = vpop.permute.xlu0 %6830
      %6832 = vrot.lane.b32.xlu0 %v6138, 48
      %v6833 = vpop.permute.xlu0 %6832
      %6834 = vrot.lane.b32.xlu0 %v6049, 48
      %v6835 = vpop.permute.xlu0 %6834
      %6836 = vrot.lane.b32.xlu0 %v6139, 48
      %v6837 = vpop.permute.xlu0 %6836
      %6838 = vrot.lane.b32.xlu0 %v6052, 48
      %v6839 = vpop.permute.xlu0 %6838
      %6840 = vrot.lane.b32.xlu0 %v6140, 48
      %v6841 = vpop.permute.xlu0 %6840
      %6842 = vrot.lane.b32.xlu0 %v6055, 48
      %v6843 = vpop.permute.xlu0 %6842
      %6844 = vrot.lane.b32.xlu0 %v6141, 48
      %v6845 = vpop.permute.xlu0 %6844
      %6846 = vrot.lane.b32.xlu0 %v6058, 48
      %v6847 = vpop.permute.xlu0 %6846
      %6848 = vrot.lane.b32.xlu0 %v6142, 48
      %v6849 = vpop.permute.xlu0 %6848
      %6850 = vrot.lane.b32.xlu0 %v6061, 48
      %v6851 = vpop.permute.xlu0 %6850
      %6852 = vrot.lane.b32.xlu0 %v6143, 48
      %v6853 = vpop.permute.xlu0 %6852
      %6854 = vrot.lane.b32.xlu0 %v6064, 48
      %v6855 = vpop.permute.xlu0 %6854
      %6856 = vrot.lane.b32.xlu0 %v6144, 48
      %v6857 = vpop.permute.xlu0 %6856
      %6858 = vrot.lane.b32.xlu0 %v6067, 48
      %v6859 = vpop.permute.xlu0 %6858
      %6860 = vrot.lane.b32.xlu0 %v6145, 48
      %v6861 = vpop.permute.xlu0 %6860
      %6862 = vrot.lane.b32.xlu0 %v6070, 48
      %v6863 = vpop.permute.xlu0 %6862
      %6864 = vrot.lane.b32.xlu0 %v6146, 48
      %v6865 = vpop.permute.xlu0 %6864
      %6866 = vrot.lane.b32.xlu0 %v6073, 48
      %v6867 = vpop.permute.xlu0 %6866
      %6868 = vrot.lane.b32.xlu0 %v6147, 48
      %v6869 = vpop.permute.xlu0 %6868
      %6870 = vrot.lane.b32.xlu0 %v6076, 48
      %v6871 = vpop.permute.xlu0 %6870
      %6872 = vrot.lane.b32.xlu0 %v6148, 48
      %v6873 = vpop.permute.xlu0 %6872
      %6874 = vrot.lane.b32.xlu0 %v6079, 48
      %v6875 = vpop.permute.xlu0 %6874
      %6876 = vrot.lane.b32.xlu0 %v6149, 48
      %v6877 = vpop.permute.xlu0 %6876
      %6878 = vrot.lane.b32.xlu0 %v6082, 48
      %v6879 = vpop.permute.xlu0 %6878
      %6880 = vrot.lane.b32.xlu0 %v6150, 48
      %v6881 = vpop.permute.xlu0 %6880
      %6882 = vrot.lane.b32.xlu0 %v6085, 48
      %v6883 = vpop.permute.xlu0 %6882
      %6884 = vrot.lane.b32.xlu0 %v6151, 48
      %v6885 = vpop.permute.xlu0 %6884
      %6886 = vrot.lane.b32.xlu0 %v6088, 48
      %v6887 = vpop.permute.xlu0 %6886
      %6918 = vrot.lane.b32.xlu0 %v6205, 56
      %v6919 = vpop.permute.xlu0 %6918
      %6920 = vrot.lane.b32.xlu0 %v6207, 56
      %v6921 = vpop.permute.xlu0 %6920
      %6922 = vrot.lane.b32.xlu0 %v6210, 56
      %v6923 = vpop.permute.xlu0 %6922
      %6924 = vrot.lane.b32.xlu0 %v6212, 56
      %v6925 = vpop.permute.xlu0 %6924
      %6926 = vrot.lane.b32.xlu0 %v6215, 56
      %v6927 = vpop.permute.xlu0 %6926
      %6928 = vrot.lane.b32.xlu0 %v6217, 56
      %v6929 = vpop.permute.xlu0 %6928
      %6930 = vrot.lane.b32.xlu0 %v6220, 56
      %v6931 = vpop.permute.xlu0 %6930
      %6932 = vrot.lane.b32.xlu0 %v6222, 56
      %v6933 = vpop.permute.xlu0 %6932
      %6934 = vrot.lane.b32.xlu0 %v6225, 56
      %v6935 = vpop.permute.xlu0 %6934
      %6936 = vrot.lane.b32.xlu0 %v6227, 56
      %v6937 = vpop.permute.xlu0 %6936
      %6938 = vrot.lane.b32.xlu0 %v6230, 56
      %v6939 = vpop.permute.xlu0 %6938
      %6940 = vrot.lane.b32.xlu0 %v6232, 56
      %v6941 = vpop.permute.xlu0 %6940
      %6942 = vrot.lane.b32.xlu0 %v6235, 56
      %v6943 = vpop.permute.xlu0 %6942
      %6944 = vrot.lane.b32.xlu0 %v6237, 56
      %v6945 = vpop.permute.xlu0 %6944
      %6946 = vrot.lane.b32.xlu0 %v6240, 56
      %v6947 = vpop.permute.xlu0 %6946
      %6948 = vrot.lane.b32.xlu0 %v6242, 56
      %v6949 = vpop.permute.xlu0 %6948
      %6950 = vrot.lane.b32.xlu0 %v6245, 56
      %v6951 = vpop.permute.xlu0 %6950
      %6952 = vrot.lane.b32.xlu0 %v6247, 56
      %v6953 = vpop.permute.xlu0 %6952
      %6954 = vrot.lane.b32.xlu0 %v6250, 56
      %v6955 = vpop.permute.xlu0 %6954
      %6956 = vrot.lane.b32.xlu0 %v6252, 56
      %v6957 = vpop.permute.xlu0 %6956
      %6958 = vrot.lane.b32.xlu0 %v6255, 56
      %v6959 = vpop.permute.xlu0 %6958
      %6960 = vrot.lane.b32.xlu0 %v6257, 56
      %v6961 = vpop.permute.xlu0 %6960
      %6962 = vrot.lane.b32.xlu0 %v6260, 56
      %v6963 = vpop.permute.xlu0 %6962
      %6964 = vrot.lane.b32.xlu0 %v6262, 56
      %v6965 = vpop.permute.xlu0 %6964
      %6966 = vrot.lane.b32.xlu0 %v6265, 56
      %v6967 = vpop.permute.xlu0 %6966
      %6968 = vrot.lane.b32.xlu0 %v6267, 56
      %v6969 = vpop.permute.xlu0 %6968
      %6970 = vrot.lane.b32.xlu0 %v6270, 56
      %v6971 = vpop.permute.xlu0 %6970
      %6972 = vrot.lane.b32.xlu0 %v6272, 56
      %v6973 = vpop.permute.xlu0 %6972
      %6974 = vrot.lane.b32.xlu0 %v6628, 56
      %v6975 = vpop.permute.xlu0 %6974
      %6976 = vrot.lane.b32.xlu0 %v6630, 56
      %v6977 = vpop.permute.xlu0 %6976
      %7008 = vrot.lane.b32.xlu0 %v6370, 64
      %v7009 = vpop.permute.xlu0 %7008
      %7010 = vrot.lane.b32.xlu0 %v6372, 64
      %v7011 = vpop.permute.xlu0 %7010
      %7012 = vrot.lane.b32.xlu0 %v6375, 64
      %v7013 = vpop.permute.xlu0 %7012
      %7014 = vrot.lane.b32.xlu0 %v6377, 64
      %v7015 = vpop.permute.xlu0 %7014
      %7016 = vrot.lane.b32.xlu0 %v6380, 64
      %v7017 = vpop.permute.xlu0 %7016
      %7018 = vrot.lane.b32.xlu0 %v6382, 64
      %v7019 = vpop.permute.xlu0 %7018
      %7020 = vrot.lane.b32.xlu0 %v6385, 64
      %v7021 = vpop.permute.xlu0 %7020
      %7022 = vrot.lane.b32.xlu0 %v6387, 64
      %v7023 = vpop.permute.xlu0 %7022
      %7024 = vrot.lane.b32.xlu0 %v6390, 64
      %v7025 = vpop.permute.xlu0 %7024
      %7026 = vrot.lane.b32.xlu0 %v6392, 64
      %v7027 = vpop.permute.xlu0 %7026
      %7028 = vrot.lane.b32.xlu0 %v6395, 64
      %v7029 = vpop.permute.xlu0 %7028
      %7030 = vrot.lane.b32.xlu0 %v6397, 64
      %v7031 = vpop.permute.xlu0 %7030
      %7032 = vrot.lane.b32.xlu0 %v6400, 64
      %v7033 = vpop.permute.xlu0 %7032
      %7034 = vrot.lane.b32.xlu0 %v6402, 64
      %v7035 = vpop.permute.xlu0 %7034
      %7036 = vrot.lane.b32.xlu0 %v6405, 64
      %v7037 = vpop.permute.xlu0 %7036
      %7038 = vrot.lane.b32.xlu0 %v6407, 64
      %v7039 = vpop.permute.xlu0 %7038
      %7040 = vrot.lane.b32.xlu0 %v6410, 64
      %v7041 = vpop.permute.xlu0 %7040
      %7042 = vrot.lane.b32.xlu0 %v6412, 64
      %v7043 = vpop.permute.xlu0 %7042
      %7044 = vrot.lane.b32.xlu0 %v6415, 64
      %v7045 = vpop.permute.xlu0 %7044
      %7046 = vrot.lane.b32.xlu0 %v6417, 64
      %v7047 = vpop.permute.xlu0 %7046
      %7048 = vrot.lane.b32.xlu0 %v6420, 64
      %v7049 = vpop.permute.xlu0 %7048
      %7050 = vrot.lane.b32.xlu0 %v6422, 64
      %v7051 = vpop.permute.xlu0 %7050
      %7052 = vrot.lane.b32.xlu0 %v6425, 64
      %v7053 = vpop.permute.xlu0 %7052
      %7054 = vrot.lane.b32.xlu0 %v6427, 64
      %v7055 = vpop.permute.xlu0 %7054
      %7056 = vrot.lane.b32.xlu0 %v6430, 64
      %v7057 = vpop.permute.xlu0 %7056
      %7058 = vrot.lane.b32.xlu0 %v6432, 64
      %v7059 = vpop.permute.xlu0 %7058
      %7060 = vrot.lane.b32.xlu0 %v6435, 64
      %v7061 = vpop.permute.xlu0 %7060
      %7062 = vrot.lane.b32.xlu0 %v6437, 64
      %v7063 = vpop.permute.xlu0 %7062
      %7064 = vrot.lane.b32.xlu0 %v6729, 64
      %v7065 = vpop.permute.xlu0 %7064
      %7066 = vrot.lane.b32.xlu0 %v6731, 64
      %v7067 = vpop.permute.xlu0 %7066
      %v7098 = vsel %vm1550, %v6136, %v6274
      %v7099 = vsel %vm1550, %v6043, %v6276
      %v7100 = vsel %vm1550, %v6137, %v6278
      %v7101 = vsel %vm1550, %v6046, %v6280
      %v7102 = vsel %vm1550, %v6138, %v6282
      %v7103 = vsel %vm1550, %v6049, %v6284
      %v7104 = vsel %vm1550, %v6139, %v6286
      %v7105 = vsel %vm1550, %v6052, %v6288
      %v7106 = vsel %vm1550, %v6140, %v6290
      %v7107 = vsel %vm1550, %v6055, %v6292
      %v7108 = vsel %vm1550, %v6141, %v6294
      %v7109 = vsel %vm1550, %v6058, %v6296
      %v7110 = vsel %vm1550, %v6142, %v6298
      %v7111 = vsel %vm1550, %v6061, %v6300
      %v7112 = vsel %vm1550, %v6143, %v6302
      %v7113 = vsel %vm1550, %v6064, %v6304
      %v7114 = vsel %vm1550, %v6144, %v6306
      %v7115 = vsel %vm1550, %v6067, %v6308
      %v7116 = vsel %vm1550, %v6145, %v6310
      %v7117 = vsel %vm1550, %v6070, %v6312
      %v7118 = vsel %vm1550, %v6146, %v6314
      %v7119 = vsel %vm1550, %v6073, %v6316
      %v7120 = vsel %vm1550, %v6147, %v6318
      %v7121 = vsel %vm1550, %v6076, %v6320
      %v7122 = vsel %vm1550, %v6148, %v6322
      %v7123 = vsel %vm1550, %v6079, %v6324
      %v7124 = vsel %vm1550, %v6149, %v6326
      %v7125 = vsel %vm1550, %v6082, %v6328
      %v7126 = vsel %vm1550, %v6150, %v6330
      %v7127 = vsel %vm1550, %v6085, %v6332
      %v7128 = vsel %vm1583, %v7098, %v6439
      %v7129 = vsel %vm1583, %v7099, %v6441
      %v7130 = vsel %vm1583, %v7100, %v6443
      %v7131 = vsel %vm1583, %v7101, %v6445
      %v7132 = vsel %vm1583, %v7102, %v6447
      %v7133 = vsel %vm1583, %v7103, %v6449
      %v7134 = vsel %vm1583, %v7104, %v6451
      %v7135 = vsel %vm1583, %v7105, %v6453
      %v7136 = vsel %vm1583, %v7106, %v6455
      %v7137 = vsel %vm1583, %v7107, %v6457
      %v7138 = vsel %vm1583, %v7108, %v6459
      %v7139 = vsel %vm1583, %v7109, %v6461
      %v7140 = vsel %vm1583, %v7110, %v6463
      %v7141 = vsel %vm1583, %v7111, %v6465
      %v7142 = vsel %vm1583, %v7112, %v6467
      %v7143 = vsel %vm1583, %v7113, %v6469
      %v7144 = vsel %vm1583, %v7114, %v6471
      %v7145 = vsel %vm1583, %v7115, %v6473
      %v7146 = vsel %vm1583, %v7116, %v6475
      %v7147 = vsel %vm1583, %v7117, %v6477
      %v7148 = vsel %vm1583, %v7118, %v6479
      %v7149 = vsel %vm1583, %v7119, %v6481
      %v7150 = vsel %vm1583, %v7120, %v6483
      %v7151 = vsel %vm1583, %v7121, %v6485
      %v7152 = vsel %vm1583, %v7122, %v6487
      %v7153 = vsel %vm1583, %v7123, %v6489
      %v7154 = vsel %vm1583, %v7124, %v6491
      %v7155 = vsel %vm1583, %v7125, %v6493
      %v7156 = vsel %vm1583, %v7126, %v6495
      %v7157 = vsel %vm1583, %v7127, %v6497
      %v7158 = vsel %vm1616, %v1584, %v6530
      %v7159 = vsel %vm1616, %v1585, %v6532
      %v7160 = vsel %vm1616, %v7128, %v6534
      %v7161 = vsel %vm1616, %v7129, %v6536
      %v7162 = vsel %vm1616, %v7130, %v6538
      %v7163 = vsel %vm1616, %v7131, %v6540
      %v7164 = vsel %vm1616, %v7132, %v6542
      %v7165 = vsel %vm1616, %v7133, %v6544
      %v7166 = vsel %vm1616, %v7134, %v6546
      %v7167 = vsel %vm1616, %v7135, %v6548
      %v7168 = vsel %vm1616, %v7136, %v6550
      %v7169 = vsel %vm1616, %v7137, %v6552
      %v7170 = vsel %vm1616, %v7138, %v6554
      %v7171 = vsel %vm1616, %v7139, %v6556
      %v7172 = vsel %vm1616, %v7140, %v6558
      %v7173 = vsel %vm1616, %v7141, %v6560
      %v7174 = vsel %vm1616, %v7142, %v6562
      %v7175 = vsel %vm1616, %v7143, %v6564
      %v7176 = vsel %vm1616, %v7144, %v6566
      %v7177 = vsel %vm1616, %v7145, %v6568
      %v7178 = vsel %vm1616, %v7146, %v6570
      %v7179 = vsel %vm1616, %v7147, %v6572
      %v7180 = vsel %vm1616, %v7148, %v6574
      %v7181 = vsel %vm1616, %v7149, %v6576
      %v7182 = vsel %vm1616, %v7150, %v6578
      %v7183 = vsel %vm1616, %v7151, %v6580
      %v7184 = vsel %vm1616, %v7152, %v6582
      %v7185 = vsel %vm1616, %v7153, %v6584
      %v7186 = vsel %vm1616, %v7154, %v6586
      %v7187 = vsel %vm1616, %v7155, %v6588
      %v7188 = vsel %vm1616, %v7156, %v6590
      %v7189 = vsel %vm1616, %v7157, %v6592
      %v7190 = vsel %vm1649, %v7158, %v6632
      %v7191 = vsel %vm1649, %v7159, %v6634
      %v7192 = vsel %vm1649, %v7160, %v6636
      %v7193 = vsel %vm1649, %v7161, %v6638
      %v7194 = vsel %vm1649, %v7162, %v6640
      %v7195 = vsel %vm1649, %v7163, %v6642
      %v7196 = vsel %vm1649, %v7164, %v6644
      %v7197 = vsel %vm1649, %v7165, %v6646
      %v7198 = vsel %vm1649, %v7166, %v6648
      %v7199 = vsel %vm1649, %v7167, %v6650
      %v7200 = vsel %vm1649, %v7168, %v6652
      %v7201 = vsel %vm1649, %v7169, %v6654
      %v7202 = vsel %vm1649, %v7170, %v6656
      %v7203 = vsel %vm1649, %v7171, %v6658
      %v7204 = vsel %vm1649, %v7172, %v6660
      %v7205 = vsel %vm1649, %v7173, %v6662
      %v7206 = vsel %vm1649, %v7174, %v6664
      %v7207 = vsel %vm1649, %v7175, %v6666
      %v7208 = vsel %vm1649, %v7176, %v6668
      %v7209 = vsel %vm1649, %v7177, %v6670
      %v7210 = vsel %vm1649, %v7178, %v6672
      %v7211 = vsel %vm1649, %v7179, %v6674
      %v7212 = vsel %vm1649, %v7180, %v6676
      %v7213 = vsel %vm1649, %v7181, %v6678
      %v7214 = vsel %vm1649, %v7182, %v6680
      %v7215 = vsel %vm1649, %v7183, %v6682
      %v7216 = vsel %vm1649, %v7184, %v6684
      %v7217 = vsel %vm1649, %v7185, %v6686
      %v7218 = vsel %vm1649, %v7186, %v6688
      %v7219 = vsel %vm1649, %v7187, %v6690
      %v7220 = vsel %vm1649, %v7188, %v6692
      %v7221 = vsel %vm1649, %v7189, %v6694
      %v7222 = vsel %vm1682, %v7190, %v6733
      %v7223 = vsel %vm1682, %v7191, %v6735
      %v7224 = vsel %vm1682, %v7192, %v6737
      %v7225 = vsel %vm1682, %v7193, %v6739
      %v7226 = vsel %vm1682, %v7194, %v6741
      %v7227 = vsel %vm1682, %v7195, %v6743
      %v7228 = vsel %vm1682, %v7196, %v6745
      %v7229 = vsel %vm1682, %v7197, %v6747
      %v7230 = vsel %vm1682, %v7198, %v6749
      %v7231 = vsel %vm1682, %v7199, %v6751
      %v7232 = vsel %vm1682, %v7200, %v6753
      %v7233 = vsel %vm1682, %v7201, %v6755
      %v7234 = vsel %vm1682, %v7202, %v6757
      %v7235 = vsel %vm1682, %v7203, %v6759
      %v7236 = vsel %vm1682, %v7204, %v6761
      %v7237 = vsel %vm1682, %v7205, %v6763
      %v7238 = vsel %vm1682, %v7206, %v6765
      %v7239 = vsel %vm1682, %v7207, %v6767
      %v7240 = vsel %vm1682, %v7208, %v6769
      %v7241 = vsel %vm1682, %v7209, %v6771
      %v7242 = vsel %vm1682, %v7210, %v6773
      %v7243 = vsel %vm1682, %v7211, %v6775
      %v7244 = vsel %vm1682, %v7212, %v6777
      %v7245 = vsel %vm1682, %v7213, %v6779
      %v7246 = vsel %vm1682, %v7214, %v6781
      %v7247 = vsel %vm1682, %v7215, %v6783
      %v7248 = vsel %vm1682, %v7216, %v6785
      %v7249 = vsel %vm1682, %v7217, %v6787
      %v7250 = vsel %vm1682, %v7218, %v6789
      %v7251 = vsel %vm1682, %v7219, %v6791
      %v7252 = vsel %vm1682, %v7220, %v6793
      %v7253 = vsel %vm1682, %v7221, %v6795
      %v7254 = vsel %vm1715, %v7222, %v6829
      %v7255 = vsel %vm1715, %v7223, %v6831
      %v7256 = vsel %vm1715, %v7224, %v6833
      %v7257 = vsel %vm1715, %v7225, %v6835
      %v7258 = vsel %vm1715, %v7226, %v6837
      %v7259 = vsel %vm1715, %v7227, %v6839
      %v7260 = vsel %vm1715, %v7228, %v6841
      %v7261 = vsel %vm1715, %v7229, %v6843
      %v7262 = vsel %vm1715, %v7230, %v6845
      %v7263 = vsel %vm1715, %v7231, %v6847
      %v7264 = vsel %vm1715, %v7232, %v6849
      %v7265 = vsel %vm1715, %v7233, %v6851
      %v7266 = vsel %vm1715, %v7234, %v6853
      %v7267 = vsel %vm1715, %v7235, %v6855
      %v7268 = vsel %vm1715, %v7236, %v6857
      %v7269 = vsel %vm1715, %v7237, %v6859
      %v7270 = vsel %vm1715, %v7238, %v6861
      %v7271 = vsel %vm1715, %v7239, %v6863
      %v7272 = vsel %vm1715, %v7240, %v6865
      %v7273 = vsel %vm1715, %v7241, %v6867
      %v7274 = vsel %vm1715, %v7242, %v6869
      %v7275 = vsel %vm1715, %v7243, %v6871
      %v7276 = vsel %vm1715, %v7244, %v6873
      %v7277 = vsel %vm1715, %v7245, %v6875
      %v7278 = vsel %vm1715, %v7246, %v6877
      %v7279 = vsel %vm1715, %v7247, %v6879
      %v7280 = vsel %vm1715, %v7248, %v6881
      %v7281 = vsel %vm1715, %v7249, %v6883
      %v7282 = vsel %vm1715, %v7250, %v6885
      %v7283 = vsel %vm1715, %v7251, %v6887
      %v7284 = vsel %vm1715, %v7252, %v1323
      %v7285 = vsel %vm1715, %v7253, %v1325
      %v7286 = vsel %vm1748, %v7254, %v6919
      %v7287 = vsel %vm1748, %v7255, %v6921
      %v7288 = vsel %vm1748, %v7256, %v6923
      %v7289 = vsel %vm1748, %v7257, %v6925
      %v7290 = vsel %vm1748, %v7258, %v6927
      %v7291 = vsel %vm1748, %v7259, %v6929
      %v7292 = vsel %vm1748, %v7260, %v6931
      %v7293 = vsel %vm1748, %v7261, %v6933
      %v7294 = vsel %vm1748, %v7262, %v6935
      %v7295 = vsel %vm1748, %v7263, %v6937
      %v7296 = vsel %vm1748, %v7264, %v6939
      %v7297 = vsel %vm1748, %v7265, %v6941
      %v7298 = vsel %vm1748, %v7266, %v6943
      %v7299 = vsel %vm1748, %v7267, %v6945
      %v7300 = vsel %vm1748, %v7268, %v6947
      %v7301 = vsel %vm1748, %v7269, %v6949
      %v7302 = vsel %vm1748, %v7270, %v6951
      %v7303 = vsel %vm1748, %v7271, %v6953
      %v7304 = vsel %vm1748, %v7272, %v6955
      %v7305 = vsel %vm1748, %v7273, %v6957
      %v7306 = vsel %vm1748, %v7274, %v6959
      %v7307 = vsel %vm1748, %v7275, %v6961
      %v7308 = vsel %vm1748, %v7276, %v6963
      %v7309 = vsel %vm1748, %v7277, %v6965
      %v7310 = vsel %vm1748, %v7278, %v6967
      %v7311 = vsel %vm1748, %v7279, %v6969
      %v7312 = vsel %vm1748, %v7280, %v6971
      %v7313 = vsel %vm1748, %v7281, %v6973
      %v7314 = vsel %vm1748, %v7282, %v6975
      %v7315 = vsel %vm1748, %v7283, %v6977
      %v7316 = vsel %vm1748, %v7284, %v1419
      %v7317 = vsel %vm1748, %v7285, %v1421
      %v7318 = vsel %vm1781, %v7286, %v7009
      %v7319 = vsel %vm1781, %v7287, %v7011
      %v7320 = vsel %vm1781, %v7288, %v7013
      %v7321 = vsel %vm1781, %v7289, %v7015
      %v7322 = vsel %vm1781, %v7290, %v7017
      %v7323 = vsel %vm1781, %v7291, %v7019
      %v7324 = vsel %vm1781, %v7292, %v7021
      %v7325 = vsel %vm1781, %v7293, %v7023
      %v7326 = vsel %vm1781, %v7294, %v7025
      %v7327 = vsel %vm1781, %v7295, %v7027
      %v7328 = vsel %vm1781, %v7296, %v7029
      %v7329 = vsel %vm1781, %v7297, %v7031
      %v7330 = vsel %vm1781, %v7298, %v7033
      %v7331 = vsel %vm1781, %v7299, %v7035
      %v7332 = vsel %vm1781, %v7300, %v7037
      %v7333 = vsel %vm1781, %v7301, %v7039
      %v7334 = vsel %vm1781, %v7302, %v7041
      %v7335 = vsel %vm1781, %v7303, %v7043
      %v7336 = vsel %vm1781, %v7304, %v7045
      %v7337 = vsel %vm1781, %v7305, %v7047
      %v7338 = vsel %vm1781, %v7306, %v7049
      %v7339 = vsel %vm1781, %v7307, %v7051
      %v7340 = vsel %vm1781, %v7308, %v7053
      %v7341 = vsel %vm1781, %v7309, %v7055
      %v7342 = vsel %vm1781, %v7310, %v7057
      %v7343 = vsel %vm1781, %v7311, %v7059
      %v7344 = vsel %vm1781, %v7312, %v7061
      %v7345 = vsel %vm1781, %v7313, %v7063
      %v7346 = vsel %vm1781, %v7314, %v7065
      %v7347 = vsel %vm1781, %v7315, %v7067
      %v7348 = vsel %vm1781, %v7316, %v1515
      %v7349 = vsel %vm1781, %v7317, %v1517
      %v7351 = vlaneseq
      %v7352 = vshrl.u32 %v7351, 7
      %v7353 = vsub.s32 0, %v7352
      %v7354 = vrot.slane %v6008, %v7353
      %v7357 = vsel %vm1820, %v7318, 0
      %v7360 = vsel %vm1820, %v7319, 0
      %v7363 = vsel %vm1820, %v7320, 0
      %v7366 = vsel %vm1820, %v7321, 0
      %v7369 = vsel %vm1820, %v7322, 0
      %v7372 = vsel %vm1820, %v7323, 0
      %v7375 = vsel %vm1820, %v7324, 0
      %v7378 = vsel %vm1820, %v7325, 0
      %v7381 = vsel %vm1820, %v7326, 0
      %v7384 = vsel %vm1820, %v7327, 0
      %v7387 = vsel %vm1820, %v7328, 0
      %v7390 = vsel %vm1820, %v7329, 0
      %v7393 = vsel %vm1820, %v7330, 0
      %v7396 = vsel %vm1820, %v7331, 0
      %v7399 = vsel %vm1820, %v7332, 0
      %v7402 = vsel %vm1820, %v7333, 0
      %v7405 = vsel %vm1820, %v7334, 0
      %v7408 = vsel %vm1820, %v7335, 0
      %v7411 = vsel %vm1820, %v7336, 0
      %v7414 = vsel %vm1820, %v7337, 0
      %v7417 = vsel %vm1820, %v7338, 0
      %v7420 = vsel %vm1820, %v7339, 0
      %v7423 = vsel %vm1820, %v7340, 0
      %v7426 = vsel %vm1820, %v7341, 0
      %v7429 = vsel %vm1820, %v7342, 0
      %v7432 = vsel %vm1820, %v7343, 0
      %v7435 = vsel %vm1820, %v7344, 0
      %v7438 = vsel %vm1820, %v7345, 0
      %v7441 = vsel %vm1820, %v7346, 0
      %v7444 = vsel %vm1820, %v7347, 0
      %v7447 = vsel %vm1820, %v7348, 0
      %v7450 = vsel %vm1820, %v7349, 0
      %7452 = vmatprep.subr.mxu0 0.0
      %7453 = vmatpush1.msra.mxu0 0.0
      %7454 = vmatprep.subr.mxu0 0.0
      %7455 = vmatpush1.msra.mxu0 0.0
      %7456 = vmatprep.subr.mxu0 0.0
      %7457 = vmatpush1.msra.mxu0 0.0
      %7458 = vmatprep.subr.mxu0 0.0
      %7459 = vmatpush1.msra.mxu0 0.0
      %7460 = vmatprep.subr.mxu0 0.0
      %7461 = vmatpush1.msra.mxu0 0.0
      %7462 = vmatprep.subr.mxu0 0.0
      %7463 = vmatpush1.msra.mxu0 0.0
      %7464 = vmatprep.subr.mxu0 0.0
      %7465 = vmatpush1.msra.mxu0 0.0
      %7466 = vmatprep.subr.mxu0 0.0
      %7467 = vmatpush1.msra.mxu0 %v6006
      %7468 = vmatprep.subr.mxu0 0.0
      %7469 = vmatpush1.msra.mxu0 %v6005
      %7470 = vmatprep.subr.mxu0 0.0
      %7471 = vmatpush1.msra.mxu0 %v6004
      %7472 = vmatprep.subr.mxu0 0.0
      %7473 = vmatpush1.msra.mxu0 %v6003
      %7474 = vmatprep.subr.mxu0 0.0
      %7475 = vmatpush1.msra.mxu0 %v6002
      %7476 = vmatprep.subr.mxu0 0.0
      %7477 = vmatpush1.msra.mxu0 %v6001
      %7478 = vmatprep.subr.mxu0 0.0
      %7479 = vmatpush1.msra.mxu0 %v6000
      %7480 = vmatprep.subr.mxu0 0.0
      %7481 = vmatpush1.msra.mxu0 %v5999
      %7482 = vmatprep.subr.mxu0 0.0
      %7483 = vmatpush1.msra.mxu0 %v5998
      %7484 = vmatprep.subr.mxu0 0.0
      %7485 = vmatpush2.msra.mxu0 0.0
      %7486 = vmatprep.subr.mxu0 0.0
      %7487 = vmatpush2.msra.mxu0 0.0
      %7488 = vmatprep.subr.mxu0 0.0
      %7489 = vmatpush2.msra.mxu0 0.0
      %7490 = vmatprep.subr.mxu0 0.0
      %7491 = vmatpush2.msra.mxu0 0.0
      %7492 = vmatprep.subr.mxu0 0.0
      %7493 = vmatpush2.msra.mxu0 0.0
      %7494 = vmatprep.subr.mxu0 0.0
      %7495 = vmatpush2.msra.mxu0 0.0
      %7496 = vmatprep.subr.mxu0 0.0
      %7497 = vmatpush2.msra.mxu0 0.0
      %7498 = vmatprep.subr.mxu0 0.0
      %7499 = vmatpush2.msra.mxu0 0.0
      %7500 = vmatprep.subr.mxu0 0.0
      %7501 = vmatpush2.msra.mxu0 0.0
      %7502 = vmatprep.subr.mxu0 0.0
      %7503 = vmatpush2.msra.mxu0 0.0
      %7504 = vmatprep.subr.mxu0 0.0
      %7505 = vmatpush2.msra.mxu0 0.0
      %7506 = vmatprep.subr.mxu0 0.0
      %7507 = vmatpush2.msra.mxu0 0.0
      %7508 = vmatprep.subr.mxu0 0.0
      %7509 = vmatpush2.msra.mxu0 0.0
      %7510 = vmatprep.subr.mxu0 0.0
      %7511 = vmatpush2.msra.mxu0 0.0
      %7512 = vmatprep.subr.mxu0 0.0
      %7513 = vmatpush2.msra.mxu0 0.0
      %7514 = vmatprep.subr.mxu0 0.0
      %7515 = vmatpush2.msra.mxu0 0.0
      %7516 = vmatprep.mubr.f32.mxu0 0.0
      %7517 = vmatmul.mubr.f32.gmra.mxu0 %v7357
      %v7518 = vpop.f32.mrf.mxu0
      %v7519 = vadd.f32 %v7354, %v7518
      %v7520 = vpop.f32.mrf.mxu0
      %7521 = vmatprep.mubr.f32.mxu0 0.0
      %7522 = vmatmul.mubr.f32.gmra.mxu0 %v7360
      %v7523 = vpop.f32.mrf.mxu0
      %v7524 = vadd.f32 %v7354, %v7523
      %v7525 = vpop.f32.mrf.mxu0
      %7526 = vmatprep.mubr.f32.mxu0 0.0
      %7527 = vmatmul.mubr.f32.gmra.mxu0 %v7363
      %v7528 = vpop.f32.mrf.mxu0
      %v7529 = vadd.f32 %v7354, %v7528
      %v7530 = vpop.f32.mrf.mxu0
      %7531 = vmatprep.mubr.f32.mxu0 0.0
      %7532 = vmatmul.mubr.f32.gmra.mxu0 %v7366
      %v7533 = vpop.f32.mrf.mxu0
      %v7534 = vadd.f32 %v7354, %v7533
      %v7535 = vpop.f32.mrf.mxu0
      %7536 = vmatprep.mubr.f32.mxu0 0.0
      %7537 = vmatmul.mubr.f32.gmra.mxu0 %v7369
      %v7538 = vpop.f32.mrf.mxu0
      %v7539 = vadd.f32 %v7354, %v7538
      %v7540 = vpop.f32.mrf.mxu0
      %7541 = vmatprep.mubr.f32.mxu0 0.0
      %7542 = vmatmul.mubr.f32.gmra.mxu0 %v7372
      %v7543 = vpop.f32.mrf.mxu0
      %v7544 = vadd.f32 %v7354, %v7543
      %v7545 = vpop.f32.mrf.mxu0
      %7546 = vmatprep.mubr.f32.mxu0 0.0
      %7547 = vmatmul.mubr.f32.gmra.mxu0 %v7375
      %v7548 = vpop.f32.mrf.mxu0
      %v7549 = vadd.f32 %v7354, %v7548
      %v7550 = vpop.f32.mrf.mxu0
      %7551 = vmatprep.mubr.f32.mxu0 0.0
      %7552 = vmatmul.mubr.f32.gmra.mxu0 %v7378
      %v7553 = vpop.f32.mrf.mxu0
      %v7554 = vadd.f32 %v7354, %v7553
      %v7555 = vpop.f32.mrf.mxu0
      %7556 = vmatprep.mubr.f32.mxu0 0.0
      %7557 = vmatmul.mubr.f32.gmra.mxu0 %v7381
      %v7558 = vpop.f32.mrf.mxu0
      %v7559 = vadd.f32 %v7354, %v7558
      %v7560 = vpop.f32.mrf.mxu0
      %7561 = vmatprep.mubr.f32.mxu0 0.0
      %7562 = vmatmul.mubr.f32.gmra.mxu0 %v7384
      %v7563 = vpop.f32.mrf.mxu0
      %v7564 = vadd.f32 %v7354, %v7563
      %v7565 = vpop.f32.mrf.mxu0
      %7566 = vmatprep.mubr.f32.mxu0 0.0
      %7567 = vmatmul.mubr.f32.gmra.mxu0 %v7387
      %v7568 = vpop.f32.mrf.mxu0
      %v7569 = vadd.f32 %v7354, %v7568
      %v7570 = vpop.f32.mrf.mxu0
      %7571 = vmatprep.mubr.f32.mxu0 0.0
      %7572 = vmatmul.mubr.f32.gmra.mxu0 %v7390
      %v7573 = vpop.f32.mrf.mxu0
      %v7574 = vadd.f32 %v7354, %v7573
      %v7575 = vpop.f32.mrf.mxu0
      %7576 = vmatprep.mubr.f32.mxu0 0.0
      %7577 = vmatmul.mubr.f32.gmra.mxu0 %v7393
      %v7578 = vpop.f32.mrf.mxu0
      %v7579 = vadd.f32 %v7354, %v7578
      %v7580 = vpop.f32.mrf.mxu0
      %7581 = vmatprep.mubr.f32.mxu0 0.0
      %7582 = vmatmul.mubr.f32.gmra.mxu0 %v7396
      %v7583 = vpop.f32.mrf.mxu0
      %v7584 = vadd.f32 %v7354, %v7583
      %v7585 = vpop.f32.mrf.mxu0
      %7586 = vmatprep.mubr.f32.mxu0 0.0
      %7587 = vmatmul.mubr.f32.gmra.mxu0 %v7399
      %v7588 = vpop.f32.mrf.mxu0
      %v7589 = vadd.f32 %v7354, %v7588
      %v7590 = vpop.f32.mrf.mxu0
      %7591 = vmatprep.mubr.f32.mxu0 0.0
      %7592 = vmatmul.mubr.f32.gmra.mxu0 %v7402
      %v7593 = vpop.f32.mrf.mxu0
      %v7594 = vadd.f32 %v7354, %v7593
      %v7595 = vpop.f32.mrf.mxu0
      %7596 = vmatprep.mubr.f32.mxu0 0.0
      %7597 = vmatmul.mubr.f32.gmra.mxu0 %v7405
      %v7598 = vpop.f32.mrf.mxu0
      %v7599 = vadd.f32 %v7354, %v7598
      %v7600 = vpop.f32.mrf.mxu0
      %7601 = vmatprep.mubr.f32.mxu0 0.0
      %7602 = vmatmul.mubr.f32.gmra.mxu0 %v7408
      %v7603 = vpop.f32.mrf.mxu0
      %v7604 = vadd.f32 %v7354, %v7603
      %v7605 = vpop.f32.mrf.mxu0
      %7606 = vmatprep.mubr.f32.mxu0 0.0
      %7607 = vmatmul.mubr.f32.gmra.mxu0 %v7411
      %v7608 = vpop.f32.mrf.mxu0
      %v7609 = vadd.f32 %v7354, %v7608
      %v7610 = vpop.f32.mrf.mxu0
      %7611 = vmatprep.mubr.f32.mxu0 0.0
      %7612 = vmatmul.mubr.f32.gmra.mxu0 %v7414
      %v7613 = vpop.f32.mrf.mxu0
      %v7614 = vadd.f32 %v7354, %v7613
      %v7615 = vpop.f32.mrf.mxu0
      %7616 = vmatprep.mubr.f32.mxu0 0.0
      %7617 = vmatmul.mubr.f32.gmra.mxu0 %v7417
      %v7618 = vpop.f32.mrf.mxu0
      %v7619 = vadd.f32 %v7354, %v7618
      %v7620 = vpop.f32.mrf.mxu0
      %7621 = vmatprep.mubr.f32.mxu0 0.0
      %7622 = vmatmul.mubr.f32.gmra.mxu0 %v7420
      %v7623 = vpop.f32.mrf.mxu0
      %v7624 = vadd.f32 %v7354, %v7623
      %v7625 = vpop.f32.mrf.mxu0
      %7626 = vmatprep.mubr.f32.mxu0 0.0
      %7627 = vmatmul.mubr.f32.gmra.mxu0 %v7423
      %v7628 = vpop.f32.mrf.mxu0
      %v7629 = vadd.f32 %v7354, %v7628
      %v7630 = vpop.f32.mrf.mxu0
      %7631 = vmatprep.mubr.f32.mxu0 0.0
      %7632 = vmatmul.mubr.f32.gmra.mxu0 %v7426
      %v7633 = vpop.f32.mrf.mxu0
      %v7634 = vadd.f32 %v7354, %v7633
      %v7635 = vpop.f32.mrf.mxu0
      %7636 = vmatprep.mubr.f32.mxu0 0.0
      %7637 = vmatmul.mubr.f32.gmra.mxu0 %v7429
      %v7638 = vpop.f32.mrf.mxu0
      %v7639 = vadd.f32 %v7354, %v7638
      %v7640 = vpop.f32.mrf.mxu0
      %7641 = vmatprep.mubr.f32.mxu0 0.0
      %7642 = vmatmul.mubr.f32.gmra.mxu0 %v7432
      %v7643 = vpop.f32.mrf.mxu0
      %v7644 = vadd.f32 %v7354, %v7643
      %v7645 = vpop.f32.mrf.mxu0
      %7646 = vmatprep.mubr.f32.mxu0 0.0
      %7647 = vmatmul.mubr.f32.gmra.mxu0 %v7435
      %v7648 = vpop.f32.mrf.mxu0
      %v7649 = vadd.f32 %v7354, %v7648
      %v7650 = vpop.f32.mrf.mxu0
      %7651 = vmatprep.mubr.f32.mxu0 0.0
      %7652 = vmatmul.mubr.f32.gmra.mxu0 %v7438
      %v7653 = vpop.f32.mrf.mxu0
      %v7654 = vadd.f32 %v7354, %v7653
      %v7655 = vpop.f32.mrf.mxu0
      %7656 = vmatprep.mubr.f32.mxu0 0.0
      %7657 = vmatmul.mubr.f32.gmra.mxu0 %v7441
      %v7658 = vpop.f32.mrf.mxu0
      %v7659 = vadd.f32 %v7354, %v7658
      %v7660 = vpop.f32.mrf.mxu0
      %7661 = vmatprep.mubr.f32.mxu0 0.0
      %7662 = vmatmul.mubr.f32.gmra.mxu0 %v7444
      %v7663 = vpop.f32.mrf.mxu0
      %v7664 = vadd.f32 %v7354, %v7663
      %v7665 = vpop.f32.mrf.mxu0
      %7666 = vmatprep.mubr.f32.mxu0 0.0
      %7667 = vmatmul.mubr.f32.gmra.mxu0 %v7447
      %v7668 = vpop.f32.mrf.mxu0
      %v7669 = vadd.f32 %v7354, %v7668
      %v7670 = vpop.f32.mrf.mxu0
      %7671 = vmatprep.mubr.f32.mxu0 0.0
      %7672 = vmatmul.mubr.f32.gmra.mxu0 %v7450
      %v7673 = vpop.f32.mrf.mxu0
      %v7674 = vadd.f32 %v7354, %v7673
      %v7675 = vpop.f32.mrf.mxu0
      %7676 = vdwg.mxu0
      %v7677 = vsel %vm1550, %v7519, 0.0
      %v7678 = vsel %vm1550, %v7524, 0.0
      %v7679 = vadd.f32 %v7677, %v7678
      %v7680 = vsel %vm1550, %v7529, 0.0
      %v7681 = vadd.f32 %v7679, %v7680
      %v7682 = vsel %vm1550, %v7534, 0.0
      %v7683 = vadd.f32 %v7681, %v7682
      %v7684 = vsel %vm1550, %v7539, 0.0
      %v7685 = vadd.f32 %v7683, %v7684
      %v7686 = vsel %vm1550, %v7544, 0.0
      %v7687 = vadd.f32 %v7685, %v7686
      %v7688 = vsel %vm1550, %v7549, 0.0
      %v7689 = vadd.f32 %v7687, %v7688
      %v7690 = vsel %vm1550, %v7554, 0.0
      %v7691 = vadd.f32 %v7689, %v7690
      %v7692 = vsel %vm1550, %v7559, 0.0
      %v7693 = vadd.f32 %v7691, %v7692
      %v7694 = vsel %vm1550, %v7564, 0.0
      %v7695 = vadd.f32 %v7693, %v7694
      %v7696 = vsel %vm1550, %v7569, 0.0
      %v7697 = vadd.f32 %v7695, %v7696
      %v7698 = vsel %vm1550, %v7574, 0.0
      %v7699 = vadd.f32 %v7697, %v7698
      %v7700 = vsel %vm1550, %v7579, 0.0
      %v7701 = vadd.f32 %v7699, %v7700
      %v7702 = vsel %vm1550, %v7584, 0.0
      %v7703 = vadd.f32 %v7701, %v7702
      %v7704 = vsel %vm1550, %v7589, 0.0
      %v7705 = vadd.f32 %v7703, %v7704
      %v7706 = vsel %vm1550, %v7594, 0.0
      %v7707 = vadd.f32 %v7705, %v7706
      %v7708 = vsel %vm1550, %v7599, 0.0
      %v7709 = vadd.f32 %v7707, %v7708
      %v7710 = vsel %vm1550, %v7604, 0.0
      %v7711 = vadd.f32 %v7709, %v7710
      %v7712 = vsel %vm1550, %v7609, 0.0
      %v7713 = vadd.f32 %v7711, %v7712
      %v7714 = vsel %vm1550, %v7614, 0.0
      %v7715 = vadd.f32 %v7713, %v7714
      %v7716 = vsel %vm1550, %v7619, 0.0
      %v7717 = vadd.f32 %v7715, %v7716
      %v7718 = vsel %vm1550, %v7624, 0.0
      %v7719 = vadd.f32 %v7717, %v7718
      %v7720 = vsel %vm1550, %v7629, 0.0
      %v7721 = vadd.f32 %v7719, %v7720
      %v7722 = vsel %vm1550, %v7634, 0.0
      %v7723 = vadd.f32 %v7721, %v7722
      %v7724 = vsel %vm1550, %v7639, 0.0
      %v7725 = vadd.f32 %v7723, %v7724
      %v7726 = vsel %vm1550, %v7644, 0.0
      %v7727 = vadd.f32 %v7725, %v7726
      %v7728 = vsel %vm1550, %v7649, 0.0
      %v7729 = vadd.f32 %v7727, %v7728
      %v7730 = vsel %vm1550, %v7654, 0.0
      %v7731 = vadd.f32 %v7729, %v7730
      %v7732 = vsel %vm1550, %v7659, 0.0
      %v7733 = vadd.f32 %v7731, %v7732
      %v7734 = vsel %vm1550, %v7664, 0.0
      %v7735 = vadd.f32 %v7733, %v7734
      %v7736 = vsel %vm1550, %v7669, 0.0
      %v7737 = vadd.f32 %v7735, %v7736
      %v7738 = vsel %vm1550, %v7674, 0.0
      %v7739 = vadd.f32 %v7737, %v7738
      %v7740 = vrot.slane %v7739, 4
      %v7741 = vadd.f32 %v7739, %v7740
      %v7742 = vrot.slane %v7741, 2
      %v7743 = vadd.f32 %v7741, %v7742
      %v7744 = vrot.slane %v7743, 1
      %v7745 = vadd.f32 %v7743, %v7744
      %v7746 = vmul.f32 %v7745, %v3987
      %s7747 = scalar_lea.vmem %s3, 8
      %v7748 = vld [vmem:[%s7747] sm:$0xff]
      %s7749 = scalar_lea.vmem %s4, 1
      %v7750 = vld [vmem:[%s7749] sm:$0x1]
      %v7752 = vsel %vm1550, %v7746, 0
      %7754 = vmatprep.subr.mxu0 0.0
      %7755 = vmatpush1.msra.mxu0 0.0
      %7756 = vmatprep.subr.mxu0 0.0
      %7757 = vmatpush1.msra.mxu0 0.0
      %7758 = vmatprep.subr.mxu0 0.0
      %7759 = vmatpush1.msra.mxu0 0.0
      %7760 = vmatprep.subr.mxu0 0.0
      %7761 = vmatpush1.msra.mxu0 0.0
      %7762 = vmatprep.subr.mxu0 0.0
      %7763 = vmatpush1.msra.mxu0 0.0
      %7764 = vmatprep.subr.mxu0 0.0
      %7765 = vmatpush1.msra.mxu0 0.0
      %7766 = vmatprep.subr.mxu0 0.0
      %7767 = vmatpush1.msra.mxu0 0.0
      %7768 = vmatprep.subr.mxu0 0.0
      %7769 = vmatpush1.msra.mxu0 0.0
      %7770 = vmatprep.subr.mxu0 0.0
      %7771 = vmatpush1.msra.mxu0 0.0
      %7772 = vmatprep.subr.mxu0 0.0
      %7773 = vmatpush1.msra.mxu0 0.0
      %7774 = vmatprep.subr.mxu0 0.0
      %7775 = vmatpush1.msra.mxu0 0.0
      %7776 = vmatprep.subr.mxu0 0.0
      %7777 = vmatpush1.msra.mxu0 0.0
      %7778 = vmatprep.subr.mxu0 0.0
      %7779 = vmatpush1.msra.mxu0 0.0
      %7780 = vmatprep.subr.mxu0 0.0
      %7781 = vmatpush1.msra.mxu0 0.0
      %7782 = vmatprep.subr.mxu0 0.0
      %7783 = vmatpush1.msra.mxu0 0.0
      %7784 = vmatprep.subr.mxu0 0.0
      %7785 = vmatpush1.msra.mxu0 %v7748
      %7786 = vmatprep.subr.mxu0 0.0
      %7787 = vmatpush2.msra.mxu0 0.0
      %7788 = vmatprep.subr.mxu0 0.0
      %7789 = vmatpush2.msra.mxu0 0.0
      %7790 = vmatprep.subr.mxu0 0.0
      %7791 = vmatpush2.msra.mxu0 0.0
      %7792 = vmatprep.subr.mxu0 0.0
      %7793 = vmatpush2.msra.mxu0 0.0
      %7794 = vmatprep.subr.mxu0 0.0
      %7795 = vmatpush2.msra.mxu0 0.0
      %7796 = vmatprep.subr.mxu0 0.0
      %7797 = vmatpush2.msra.mxu0 0.0
      %7798 = vmatprep.subr.mxu0 0.0
      %7799 = vmatpush2.msra.mxu0 0.0
      %7800 = vmatprep.subr.mxu0 0.0
      %7801 = vmatpush2.msra.mxu0 0.0
      %7802 = vmatprep.subr.mxu0 0.0
      %7803 = vmatpush2.msra.mxu0 0.0
      %7804 = vmatprep.subr.mxu0 0.0
      %7805 = vmatpush2.msra.mxu0 0.0
      %7806 = vmatprep.subr.mxu0 0.0
      %7807 = vmatpush2.msra.mxu0 0.0
      %7808 = vmatprep.subr.mxu0 0.0
      %7809 = vmatpush2.msra.mxu0 0.0
      %7810 = vmatprep.subr.mxu0 0.0
      %7811 = vmatpush2.msra.mxu0 0.0
      %7812 = vmatprep.subr.mxu0 0.0
      %7813 = vmatpush2.msra.mxu0 0.0
      %7814 = vmatprep.subr.mxu0 0.0
      %7815 = vmatpush2.msra.mxu0 0.0
      %7816 = vmatprep.subr.mxu0 0.0
      %7817 = vmatpush2.msra.mxu0 0.0
      %7818 = vmatprep.mubr.f32.mxu0 0.0
      %7819 = vmatmul.mubr.f32.gmra.mxu0 %v7752
      %v7820 = vpop.f32.mrf.mxu0
      %v7821 = vadd.f32 %v7750, %v7820
      %v7822 = vpop.f32.mrf.mxu0
      %7823 = vdwg.mxu0
      %vm7824 = vcmp.ge.f32.partialorder %v7821, 0.0
      %v7825 = vmul.f32 %v7821, 0.1
      %v7826 = vsel %vm7824, %v7821, %v7825
      %s7827 = scalar_lea.vmem %s5, 4
      %v7828 = vld [vmem:[%s7827] sm:$0xf]
      %s7829 = scalar_lea.vmem %s6, 1
      %v7830 = vld [vmem:[%s7829] sm:$0x1]
      %v7832 = vsel %vm4069, %v7826, 0
      %v7835 = vsel %vm4073, %v7828, 0
      %7837 = vmatprep.subr.mxu0 0.0
      %7838 = vmatpush1.msra.mxu0 0.0
      %7839 = vmatprep.subr.mxu0 0.0
      %7840 = vmatpush1.msra.mxu0 0.0
      %7841 = vmatprep.subr.mxu0 0.0
      %7842 = vmatpush1.msra.mxu0 0.0
      %7843 = vmatprep.subr.mxu0 0.0
      %7844 = vmatpush1.msra.mxu0 0.0
      %7845 = vmatprep.subr.mxu0 0.0
      %7846 = vmatpush1.msra.mxu0 0.0
      %7847 = vmatprep.subr.mxu0 0.0
      %7848 = vmatpush1.msra.mxu0 0.0
      %7849 = vmatprep.subr.mxu0 0.0
      %7850 = vmatpush1.msra.mxu0 0.0
      %7851 = vmatprep.subr.mxu0 0.0
      %7852 = vmatpush1.msra.mxu0 0.0
      %7853 = vmatprep.subr.mxu0 0.0
      %7854 = vmatpush1.msra.mxu0 0.0
      %7855 = vmatprep.subr.mxu0 0.0
      %7856 = vmatpush1.msra.mxu0 0.0
      %7857 = vmatprep.subr.mxu0 0.0
      %7858 = vmatpush1.msra.mxu0 0.0
      %7859 = vmatprep.subr.mxu0 0.0
      %7860 = vmatpush1.msra.mxu0 0.0
      %7861 = vmatprep.subr.mxu0 0.0
      %7862 = vmatpush1.msra.mxu0 0.0
      %7863 = vmatprep.subr.mxu0 0.0
      %7864 = vmatpush1.msra.mxu0 0.0
      %7865 = vmatprep.subr.mxu0 0.0
      %7866 = vmatpush1.msra.mxu0 0.0
      %7867 = vmatprep.subr.mxu0 0.0
      %7868 = vmatpush1.msra.mxu0 %v7835
      %7869 = vmatprep.subr.mxu0 0.0
      %7870 = vmatpush2.msra.mxu0 0.0
      %7871 = vmatprep.subr.mxu0 0.0
      %7872 = vmatpush2.msra.mxu0 0.0
      %7873 = vmatprep.subr.mxu0 0.0
      %7874 = vmatpush2.msra.mxu0 0.0
      %7875 = vmatprep.subr.mxu0 0.0
      %7876 = vmatpush2.msra.mxu0 0.0
      %7877 = vmatprep.subr.mxu0 0.0
      %7878 = vmatpush2.msra.mxu0 0.0
      %7879 = vmatprep.subr.mxu0 0.0
      %7880 = vmatpush2.msra.mxu0 0.0
      %7881 = vmatprep.subr.mxu0 0.0
      %7882 = vmatpush2.msra.mxu0 0.0
      %7883 = vmatprep.subr.mxu0 0.0
      %7884 = vmatpush2.msra.mxu0 0.0
      %7885 = vmatprep.subr.mxu0 0.0
      %7886 = vmatpush2.msra.mxu0 0.0
      %7887 = vmatprep.subr.mxu0 0.0
      %7888 = vmatpush2.msra.mxu0 0.0
      %7889 = vmatprep.subr.mxu0 0.0
      %7890 = vmatpush2.msra.mxu0 0.0
      %7891 = vmatprep.subr.mxu0 0.0
      %7892 = vmatpush2.msra.mxu0 0.0
      %7893 = vmatprep.subr.mxu0 0.0
      %7894 = vmatpush2.msra.mxu0 0.0
      %7895 = vmatprep.subr.mxu0 0.0
      %7896 = vmatpush2.msra.mxu0 0.0
      %7897 = vmatprep.subr.mxu0 0.0
      %7898 = vmatpush2.msra.mxu0 0.0
      %7899 = vmatprep.subr.mxu0 0.0
      %7900 = vmatpush2.msra.mxu0 0.0
      %7901 = vmatprep.mubr.f32.mxu0 0.0
      %7902 = vmatmul.mubr.f32.gmra.mxu0 %v7832
      %v7903 = vpop.f32.mrf.mxu0
      %v7904 = vadd.f32 %v7830, %v7903
      %v7905 = vpop.f32.mrf.mxu0
      %7906 = vdwg.mxu0
      %v7907 = vxor.u32 %v7904, 2147483648
      %v7908 = vmul.f32 %v7907, 1.442695
      %v7909 = vpow.pop %v7908
      %v7910 = vadd.f32 %v7909, 1.0
      %v7911 = vrcp.pop %v7910
      %v7912 = vmul.f32 1.0, %v7911
      %v7913 = vlaneseq
      %v7914 = vshrl.u32 %v7913, 7
      %v7915 = vsub.s32 0, %v7914
      %v7916 = vrot.slane %v7912, %v7915
      %v7917 = vmul.f32 %v7519, %v7916
      %v7918 = vmul.f32 %v7524, %v7916
      %v7919 = vmul.f32 %v7529, %v7916
      %v7920 = vmul.f32 %v7534, %v7916
      %v7921 = vmul.f32 %v7539, %v7916
      %v7922 = vmul.f32 %v7544, %v7916
      %v7923 = vmul.f32 %v7549, %v7916
      %v7924 = vmul.f32 %v7554, %v7916
      %v7925 = vmul.f32 %v7559, %v7916
      %v7926 = vmul.f32 %v7564, %v7916
      %v7927 = vmul.f32 %v7569, %v7916
      %v7928 = vmul.f32 %v7574, %v7916
      %v7929 = vmul.f32 %v7579, %v7916
      %v7930 = vmul.f32 %v7584, %v7916
      %v7931 = vmul.f32 %v7589, %v7916
      %v7932 = vmul.f32 %v7594, %v7916
      %v7933 = vmul.f32 %v7599, %v7916
      %v7934 = vmul.f32 %v7604, %v7916
      %v7935 = vmul.f32 %v7609, %v7916
      %v7936 = vmul.f32 %v7614, %v7916
      %v7937 = vmul.f32 %v7619, %v7916
      %v7938 = vmul.f32 %v7624, %v7916
      %v7939 = vmul.f32 %v7629, %v7916
      %v7940 = vmul.f32 %v7634, %v7916
      %v7941 = vmul.f32 %v7639, %v7916
      %v7942 = vmul.f32 %v7644, %v7916
      %v7943 = vmul.f32 %v7649, %v7916
      %v7944 = vmul.f32 %v7654, %v7916
      %v7945 = vmul.f32 %v7659, %v7916
      %v7946 = vmul.f32 %v7664, %v7916
      %v7947 = vmul.f32 %v7669, %v7916
      %v7948 = vmul.f32 %v7674, %v7916
      %v7949 = vadd.f32 %v7917, %v4189
      %v7950 = vadd.f32 %v7918, %v4190
      %v7951 = vadd.f32 %v7919, %v4191
      %v7952 = vadd.f32 %v7920, %v4192
      %v7953 = vadd.f32 %v7921, %v4193
      %v7954 = vadd.f32 %v7922, %v4194
      %v7955 = vadd.f32 %v7923, %v4195
      %v7956 = vadd.f32 %v7924, %v4196
      %v7957 = vadd.f32 %v7925, %v4197
      %v7958 = vadd.f32 %v7926, %v4198
      %v7959 = vadd.f32 %v7927, %v4199
      %v7960 = vadd.f32 %v7928, %v4200
      %v7961 = vadd.f32 %v7929, %v4201
      %v7962 = vadd.f32 %v7930, %v4202
      %v7963 = vadd.f32 %v7931, %v4203
      %v7964 = vadd.f32 %v7932, %v4204
      %v7965 = vadd.f32 %v7933, %v4205
      %v7966 = vadd.f32 %v7934, %v4206
      %v7967 = vadd.f32 %v7935, %v4207
      %v7968 = vadd.f32 %v7936, %v4208
      %v7969 = vadd.f32 %v7937, %v4209
      %v7970 = vadd.f32 %v7938, %v4210
      %v7971 = vadd.f32 %v7939, %v4211
      %v7972 = vadd.f32 %v7940, %v4212
      %v7973 = vadd.f32 %v7941, %v4213
      %v7974 = vadd.f32 %v7942, %v4214
      %v7975 = vadd.f32 %v7943, %v4215
      %v7976 = vadd.f32 %v7944, %v4216
      %v7977 = vadd.f32 %v7945, %v4217
      %v7978 = vadd.f32 %v7946, %v4218
      %v7979 = vadd.f32 %v7947, %v4219
      %v7980 = vadd.f32 %v7948, %v4220
      %v7981 = vld [vmem:[%s7] sm:$0xff]
      %v7982 = vld [vmem:[%s7 + $0x8] sm:$0xff]
      %v7983 = vld [vmem:[%s7 + $0x10] sm:$0xff]
      %v7984 = vld [vmem:[%s7 + $0x18] sm:$0xff]
      %v7985 = vld [vmem:[%s7 + $0x20] sm:$0xff]
      %v7986 = vld [vmem:[%s7 + $0x28] sm:$0xff]
      %v7987 = vld [vmem:[%s7 + $0x30] sm:$0xff]
      %v7988 = vld [vmem:[%s7 + $0x38] sm:$0xff]
      %v7989 = vld [vmem:[%s7 + $0x40] sm:$0xff]
      %v7990 = vld [vmem:[%s8] sm:$0x1]
      %v8023 = vrot.slane %v7949, 7
      %v8024 = vrot.slane %v7950, 7
      %v8025 = vsel %vm442, %v8023, %v8024
      %v8026 = vrot.slane %v7951, 7
      %v8027 = vrot.slane %v7952, 7
      %v8028 = vsel %vm442, %v8026, %v8027
      %v8029 = vrot.slane %v7953, 7
      %v8030 = vrot.slane %v7954, 7
      %v8031 = vsel %vm442, %v8029, %v8030
      %v8032 = vrot.slane %v7955, 7
      %v8033 = vrot.slane %v7956, 7
      %v8034 = vsel %vm442, %v8032, %v8033
      %v8035 = vrot.slane %v7957, 7
      %v8036 = vrot.slane %v7958, 7
      %v8037 = vsel %vm442, %v8035, %v8036
      %v8038 = vrot.slane %v7959, 7
      %v8039 = vrot.slane %v7960, 7
      %v8040 = vsel %vm442, %v8038, %v8039
      %v8041 = vrot.slane %v7961, 7
      %v8042 = vrot.slane %v7962, 7
      %v8043 = vsel %vm442, %v8041, %v8042
      %v8044 = vrot.slane %v7963, 7
      %v8045 = vrot.slane %v7964, 7
      %v8046 = vsel %vm442, %v8044, %v8045
      %v8047 = vrot.slane %v7965, 7
      %v8048 = vrot.slane %v7966, 7
      %v8049 = vsel %vm442, %v8047, %v8048
      %v8050 = vrot.slane %v7967, 7
      %v8051 = vrot.slane %v7968, 7
      %v8052 = vsel %vm442, %v8050, %v8051
      %v8053 = vrot.slane %v7969, 7
      %v8054 = vrot.slane %v7970, 7
      %v8055 = vsel %vm442, %v8053, %v8054
      %v8056 = vrot.slane %v7971, 7
      %v8057 = vrot.slane %v7972, 7
      %v8058 = vsel %vm442, %v8056, %v8057
      %v8059 = vrot.slane %v7973, 7
      %v8060 = vrot.slane %v7974, 7
      %v8061 = vsel %vm442, %v8059, %v8060
      %v8062 = vrot.slane %v7975, 7
      %v8063 = vrot.slane %v7976, 7
      %v8064 = vsel %vm442, %v8062, %v8063
      %v8065 = vrot.slane %v7977, 7
      %v8066 = vrot.slane %v7978, 7
      %v8067 = vsel %vm442, %v8065, %v8066
      %v8068 = vrot.slane %v7979, 7
      %v8069 = vrot.slane %v7980, 7
      %v8070 = vsel %vm442, %v8068, %v8069
      %v8118 = vsel %vm442, 0.0, %v8023
      %v8119 = vsel %vm442, 0.0, %v8026
      %v8120 = vsel %vm442, 0.0, %v8029
      %v8121 = vsel %vm442, 0.0, %v8032
      %v8122 = vsel %vm442, 0.0, %v8035
      %v8123 = vsel %vm442, 0.0, %v8038
      %v8124 = vsel %vm442, 0.0, %v8041
      %v8125 = vsel %vm442, 0.0, %v8044
      %v8126 = vsel %vm442, 0.0, %v8047
      %v8127 = vsel %vm442, 0.0, %v8050
      %v8128 = vsel %vm442, 0.0, %v8053
      %v8129 = vsel %vm442, 0.0, %v8056
      %v8130 = vsel %vm442, 0.0, %v8059
      %v8131 = vsel %vm442, 0.0, %v8062
      %v8132 = vsel %vm442, 0.0, %v8065
      %v8133 = vsel %vm442, 0.0, %v8068
      %v8134 = vsel %vm442, %v8024, 0.0
      %v8135 = vsel %vm442, %v8027, 0.0
      %v8136 = vsel %vm442, %v8030, 0.0
      %v8137 = vsel %vm442, %v8033, 0.0
      %v8138 = vsel %vm442, %v8036, 0.0
      %v8139 = vsel %vm442, %v8039, 0.0
      %v8140 = vsel %vm442, %v8042, 0.0
      %v8141 = vsel %vm442, %v8045, 0.0
      %v8142 = vsel %vm442, %v8048, 0.0
      %v8143 = vsel %vm442, %v8051, 0.0
      %v8144 = vsel %vm442, %v8054, 0.0
      %v8145 = vsel %vm442, %v8057, 0.0
      %v8146 = vsel %vm442, %v8060, 0.0
      %v8147 = vsel %vm442, %v8063, 0.0
      %v8148 = vsel %vm442, %v8066, 0.0
      %v8149 = vsel %vm442, %v8069, 0.0
      %v8180 = vrot.slane %v8118, 1
      %v8181 = vrot.slane %v8025, 1
      %v8182 = vsel %vm608, %v8180, %v8181
      %v8183 = vrot.slane %v8134, 1
      %v8184 = vsel %vm608, %v8181, %v8183
      %v8185 = vrot.slane %v8119, 1
      %v8186 = vrot.slane %v8028, 1
      %v8187 = vsel %vm608, %v8185, %v8186
      %v8188 = vrot.slane %v8135, 1
      %v8189 = vsel %vm608, %v8186, %v8188
      %v8190 = vrot.slane %v8120, 1
      %v8191 = vrot.slane %v8031, 1
      %v8192 = vsel %vm608, %v8190, %v8191
      %v8193 = vrot.slane %v8136, 1
      %v8194 = vsel %vm608, %v8191, %v8193
      %v8195 = vrot.slane %v8121, 1
      %v8196 = vrot.slane %v8034, 1
      %v8197 = vsel %vm608, %v8195, %v8196
      %v8198 = vrot.slane %v8137, 1
      %v8199 = vsel %vm608, %v8196, %v8198
      %v8200 = vrot.slane %v8122, 1
      %v8201 = vrot.slane %v8037, 1
      %v8202 = vsel %vm608, %v8200, %v8201
      %v8203 = vrot.slane %v8138, 1
      %v8204 = vsel %vm608, %v8201, %v8203
      %v8205 = vrot.slane %v8123, 1
      %v8206 = vrot.slane %v8040, 1
      %v8207 = vsel %vm608, %v8205, %v8206
      %v8208 = vrot.slane %v8139, 1
      %v8209 = vsel %vm608, %v8206, %v8208
      %v8210 = vrot.slane %v8124, 1
      %v8211 = vrot.slane %v8043, 1
      %v8212 = vsel %vm608, %v8210, %v8211
      %v8213 = vrot.slane %v8140, 1
      %v8214 = vsel %vm608, %v8211, %v8213
      %v8215 = vrot.slane %v8125, 1
      %v8216 = vrot.slane %v8046, 1
      %v8217 = vsel %vm608, %v8215, %v8216
      %v8218 = vrot.slane %v8141, 1
      %v8219 = vsel %vm608, %v8216, %v8218
      %v8220 = vrot.slane %v8126, 1
      %v8221 = vrot.slane %v8049, 1
      %v8222 = vsel %vm608, %v8220, %v8221
      %v8223 = vrot.slane %v8142, 1
      %v8224 = vsel %vm608, %v8221, %v8223
      %v8225 = vrot.slane %v8127, 1
      %v8226 = vrot.slane %v8052, 1
      %v8227 = vsel %vm608, %v8225, %v8226
      %v8228 = vrot.slane %v8143, 1
      %v8229 = vsel %vm608, %v8226, %v8228
      %v8230 = vrot.slane %v8128, 1
      %v8231 = vrot.slane %v8055, 1
      %v8232 = vsel %vm608, %v8230, %v8231
      %v8233 = vrot.slane %v8144, 1
      %v8234 = vsel %vm608, %v8231, %v8233
      %v8235 = vrot.slane %v8129, 1
      %v8236 = vrot.slane %v8058, 1
      %v8237 = vsel %vm608, %v8235, %v8236
      %v8238 = vrot.slane %v8145, 1
      %v8239 = vsel %vm608, %v8236, %v8238
      %v8240 = vrot.slane %v8130, 1
      %v8241 = vrot.slane %v8061, 1
      %v8242 = vsel %vm608, %v8240, %v8241
      %v8243 = vrot.slane %v8146, 1
      %v8244 = vsel %vm608, %v8241, %v8243
      %v8245 = vrot.slane %v8131, 1
      %v8246 = vrot.slane %v8064, 1
      %v8247 = vsel %vm608, %v8245, %v8246
      %v8248 = vrot.slane %v8147, 1
      %v8249 = vsel %vm608, %v8246, %v8248
      %v8250 = vrot.slane %v8132, 1
      %v8251 = vrot.slane %v8067, 1
      %v8252 = vsel %vm608, %v8250, %v8251
      %v8253 = vrot.slane %v8148, 1
      %v8254 = vsel %vm608, %v8251, %v8253
      %8255 = vrot.lane.b32.xlu0 %v8182, 8
      %v8256 = vpop.permute.xlu0 %8255
      %8257 = vrot.lane.b32.xlu0 %v8184, 8
      %v8258 = vpop.permute.xlu0 %8257
      %8259 = vrot.lane.b32.xlu0 %v8187, 8
      %v8260 = vpop.permute.xlu0 %8259
      %8261 = vrot.lane.b32.xlu0 %v8189, 8
      %v8262 = vpop.permute.xlu0 %8261
      %8263 = vrot.lane.b32.xlu0 %v8192, 8
      %v8264 = vpop.permute.xlu0 %8263
      %8265 = vrot.lane.b32.xlu0 %v8194, 8
      %v8266 = vpop.permute.xlu0 %8265
      %8267 = vrot.lane.b32.xlu0 %v8197, 8
      %v8268 = vpop.permute.xlu0 %8267
      %8269 = vrot.lane.b32.xlu0 %v8199, 8
      %v8270 = vpop.permute.xlu0 %8269
      %8271 = vrot.lane.b32.xlu0 %v8202, 8
      %v8272 = vpop.permute.xlu0 %8271
      %8273 = vrot.lane.b32.xlu0 %v8204, 8
      %v8274 = vpop.permute.xlu0 %8273
      %8275 = vrot.lane.b32.xlu0 %v8207, 8
      %v8276 = vpop.permute.xlu0 %8275
      %8277 = vrot.lane.b32.xlu0 %v8209, 8
      %v8278 = vpop.permute.xlu0 %8277
      %8279 = vrot.lane.b32.xlu0 %v8212, 8
      %v8280 = vpop.permute.xlu0 %8279
      %8281 = vrot.lane.b32.xlu0 %v8214, 8
      %v8282 = vpop.permute.xlu0 %8281
      %8283 = vrot.lane.b32.xlu0 %v8217, 8
      %v8284 = vpop.permute.xlu0 %8283
      %8285 = vrot.lane.b32.xlu0 %v8219, 8
      %v8286 = vpop.permute.xlu0 %8285
      %8287 = vrot.lane.b32.xlu0 %v8222, 8
      %v8288 = vpop.permute.xlu0 %8287
      %8289 = vrot.lane.b32.xlu0 %v8224, 8
      %v8290 = vpop.permute.xlu0 %8289
      %8291 = vrot.lane.b32.xlu0 %v8227, 8
      %v8292 = vpop.permute.xlu0 %8291
      %8293 = vrot.lane.b32.xlu0 %v8229, 8
      %v8294 = vpop.permute.xlu0 %8293
      %8295 = vrot.lane.b32.xlu0 %v8232, 8
      %v8296 = vpop.permute.xlu0 %8295
      %8297 = vrot.lane.b32.xlu0 %v8234, 8
      %v8298 = vpop.permute.xlu0 %8297
      %8299 = vrot.lane.b32.xlu0 %v8237, 8
      %v8300 = vpop.permute.xlu0 %8299
      %8301 = vrot.lane.b32.xlu0 %v8239, 8
      %v8302 = vpop.permute.xlu0 %8301
      %8303 = vrot.lane.b32.xlu0 %v8242, 8
      %v8304 = vpop.permute.xlu0 %8303
      %8305 = vrot.lane.b32.xlu0 %v8244, 8
      %v8306 = vpop.permute.xlu0 %8305
      %8307 = vrot.lane.b32.xlu0 %v8247, 8
      %v8308 = vpop.permute.xlu0 %8307
      %8309 = vrot.lane.b32.xlu0 %v8249, 8
      %v8310 = vpop.permute.xlu0 %8309
      %8311 = vrot.lane.b32.xlu0 %v8252, 8
      %v8312 = vpop.permute.xlu0 %8311
      %8313 = vrot.lane.b32.xlu0 %v8254, 8
      %v8314 = vpop.permute.xlu0 %8313
      %v8345 = vrot.slane %v8118, 2
      %v8346 = vrot.slane %v8025, 2
      %v8347 = vsel %vm785, %v8345, %v8346
      %v8348 = vrot.slane %v8134, 2
      %v8349 = vsel %vm785, %v8346, %v8348
      %v8350 = vrot.slane %v8119, 2
      %v8351 = vrot.slane %v8028, 2
      %v8352 = vsel %vm785, %v8350, %v8351
      %v8353 = vrot.slane %v8135, 2
      %v8354 = vsel %vm785, %v8351, %v8353
      %v8355 = vrot.slane %v8120, 2
      %v8356 = vrot.slane %v8031, 2
      %v8357 = vsel %vm785, %v8355, %v8356
      %v8358 = vrot.slane %v8136, 2
      %v8359 = vsel %vm785, %v8356, %v8358
      %v8360 = vrot.slane %v8121, 2
      %v8361 = vrot.slane %v8034, 2
      %v8362 = vsel %vm785, %v8360, %v8361
      %v8363 = vrot.slane %v8137, 2
      %v8364 = vsel %vm785, %v8361, %v8363
      %v8365 = vrot.slane %v8122, 2
      %v8366 = vrot.slane %v8037, 2
      %v8367 = vsel %vm785, %v8365, %v8366
      %v8368 = vrot.slane %v8138, 2
      %v8369 = vsel %vm785, %v8366, %v8368
      %v8370 = vrot.slane %v8123, 2
      %v8371 = vrot.slane %v8040, 2
      %v8372 = vsel %vm785, %v8370, %v8371
      %v8373 = vrot.slane %v8139, 2
      %v8374 = vsel %vm785, %v8371, %v8373
      %v8375 = vrot.slane %v8124, 2
      %v8376 = vrot.slane %v8043, 2
      %v8377 = vsel %vm785, %v8375, %v8376
      %v8378 = vrot.slane %v8140, 2
      %v8379 = vsel %vm785, %v8376, %v8378
      %v8380 = vrot.slane %v8125, 2
      %v8381 = vrot.slane %v8046, 2
      %v8382 = vsel %vm785, %v8380, %v8381
      %v8383 = vrot.slane %v8141, 2
      %v8384 = vsel %vm785, %v8381, %v8383
      %v8385 = vrot.slane %v8126, 2
      %v8386 = vrot.slane %v8049, 2
      %v8387 = vsel %vm785, %v8385, %v8386
      %v8388 = vrot.slane %v8142, 2
      %v8389 = vsel %vm785, %v8386, %v8388
      %v8390 = vrot.slane %v8127, 2
      %v8391 = vrot.slane %v8052, 2
      %v8392 = vsel %vm785, %v8390, %v8391
      %v8393 = vrot.slane %v8143, 2
      %v8394 = vsel %vm785, %v8391, %v8393
      %v8395 = vrot.slane %v8128, 2
      %v8396 = vrot.slane %v8055, 2
      %v8397 = vsel %vm785, %v8395, %v8396
      %v8398 = vrot.slane %v8144, 2
      %v8399 = vsel %vm785, %v8396, %v8398
      %v8400 = vrot.slane %v8129, 2
      %v8401 = vrot.slane %v8058, 2
      %v8402 = vsel %vm785, %v8400, %v8401
      %v8403 = vrot.slane %v8145, 2
      %v8404 = vsel %vm785, %v8401, %v8403
      %v8405 = vrot.slane %v8130, 2
      %v8406 = vrot.slane %v8061, 2
      %v8407 = vsel %vm785, %v8405, %v8406
      %v8408 = vrot.slane %v8146, 2
      %v8409 = vsel %vm785, %v8406, %v8408
      %v8410 = vrot.slane %v8131, 2
      %v8411 = vrot.slane %v8064, 2
      %v8412 = vsel %vm785, %v8410, %v8411
      %v8413 = vrot.slane %v8147, 2
      %v8414 = vsel %vm785, %v8411, %v8413
      %v8415 = vrot.slane %v8132, 2
      %v8416 = vrot.slane %v8067, 2
      %v8417 = vsel %vm785, %v8415, %v8416
      %v8418 = vrot.slane %v8148, 2
      %v8419 = vsel %vm785, %v8416, %v8418
      %8420 = vrot.lane.b32.xlu0 %v8347, 16
      %v8421 = vpop.permute.xlu0 %8420
      %8422 = vrot.lane.b32.xlu0 %v8349, 16
      %v8423 = vpop.permute.xlu0 %8422
      %8424 = vrot.lane.b32.xlu0 %v8352, 16
      %v8425 = vpop.permute.xlu0 %8424
      %8426 = vrot.lane.b32.xlu0 %v8354, 16
      %v8427 = vpop.permute.xlu0 %8426
      %8428 = vrot.lane.b32.xlu0 %v8357, 16
      %v8429 = vpop.permute.xlu0 %8428
      %8430 = vrot.lane.b32.xlu0 %v8359, 16
      %v8431 = vpop.permute.xlu0 %8430
      %8432 = vrot.lane.b32.xlu0 %v8362, 16
      %v8433 = vpop.permute.xlu0 %8432
      %8434 = vrot.lane.b32.xlu0 %v8364, 16
      %v8435 = vpop.permute.xlu0 %8434
      %8436 = vrot.lane.b32.xlu0 %v8367, 16
      %v8437 = vpop.permute.xlu0 %8436
      %8438 = vrot.lane.b32.xlu0 %v8369, 16
      %v8439 = vpop.permute.xlu0 %8438
      %8440 = vrot.lane.b32.xlu0 %v8372, 16
      %v8441 = vpop.permute.xlu0 %8440
      %8442 = vrot.lane.b32.xlu0 %v8374, 16
      %v8443 = vpop.permute.xlu0 %8442
      %8444 = vrot.lane.b32.xlu0 %v8377, 16
      %v8445 = vpop.permute.xlu0 %8444
      %8446 = vrot.lane.b32.xlu0 %v8379, 16
      %v8447 = vpop.permute.xlu0 %8446
      %8448 = vrot.lane.b32.xlu0 %v8382, 16
      %v8449 = vpop.permute.xlu0 %8448
      %8450 = vrot.lane.b32.xlu0 %v8384, 16
      %v8451 = vpop.permute.xlu0 %8450
      %8452 = vrot.lane.b32.xlu0 %v8387, 16
      %v8453 = vpop.permute.xlu0 %8452
      %8454 = vrot.lane.b32.xlu0 %v8389, 16
      %v8455 = vpop.permute.xlu0 %8454
      %8456 = vrot.lane.b32.xlu0 %v8392, 16
      %v8457 = vpop.permute.xlu0 %8456
      %8458 = vrot.lane.b32.xlu0 %v8394, 16
      %v8459 = vpop.permute.xlu0 %8458
      %8460 = vrot.lane.b32.xlu0 %v8397, 16
      %v8461 = vpop.permute.xlu0 %8460
      %8462 = vrot.lane.b32.xlu0 %v8399, 16
      %v8463 = vpop.permute.xlu0 %8462
      %8464 = vrot.lane.b32.xlu0 %v8402, 16
      %v8465 = vpop.permute.xlu0 %8464
      %8466 = vrot.lane.b32.xlu0 %v8404, 16
      %v8467 = vpop.permute.xlu0 %8466
      %8468 = vrot.lane.b32.xlu0 %v8407, 16
      %v8469 = vpop.permute.xlu0 %8468
      %8470 = vrot.lane.b32.xlu0 %v8409, 16
      %v8471 = vpop.permute.xlu0 %8470
      %8472 = vrot.lane.b32.xlu0 %v8412, 16
      %v8473 = vpop.permute.xlu0 %8472
      %8474 = vrot.lane.b32.xlu0 %v8414, 16
      %v8475 = vpop.permute.xlu0 %8474
      %8476 = vrot.lane.b32.xlu0 %v8417, 16
      %v8477 = vpop.permute.xlu0 %8476
      %8478 = vrot.lane.b32.xlu0 %v8419, 16
      %v8479 = vpop.permute.xlu0 %8478
      %8511 = vrot.lane.b32.xlu0 %v8118, 24
      %v8512 = vpop.permute.xlu0 %8511
      %8513 = vrot.lane.b32.xlu0 %v8025, 24
      %v8514 = vpop.permute.xlu0 %8513
      %8515 = vrot.lane.b32.xlu0 %v8119, 24
      %v8516 = vpop.permute.xlu0 %8515
      %8517 = vrot.lane.b32.xlu0 %v8028, 24
      %v8518 = vpop.permute.xlu0 %8517
      %8519 = vrot.lane.b32.xlu0 %v8120, 24
      %v8520 = vpop.permute.xlu0 %8519
      %8521 = vrot.lane.b32.xlu0 %v8031, 24
      %v8522 = vpop.permute.xlu0 %8521
      %8523 = vrot.lane.b32.xlu0 %v8121, 24
      %v8524 = vpop.permute.xlu0 %8523
      %8525 = vrot.lane.b32.xlu0 %v8034, 24
      %v8526 = vpop.permute.xlu0 %8525
      %8527 = vrot.lane.b32.xlu0 %v8122, 24
      %v8528 = vpop.permute.xlu0 %8527
      %8529 = vrot.lane.b32.xlu0 %v8037, 24
      %v8530 = vpop.permute.xlu0 %8529
      %8531 = vrot.lane.b32.xlu0 %v8123, 24
      %v8532 = vpop.permute.xlu0 %8531
      %8533 = vrot.lane.b32.xlu0 %v8040, 24
      %v8534 = vpop.permute.xlu0 %8533
      %8535 = vrot.lane.b32.xlu0 %v8124, 24
      %v8536 = vpop.permute.xlu0 %8535
      %8537 = vrot.lane.b32.xlu0 %v8043, 24
      %v8538 = vpop.permute.xlu0 %8537
      %8539 = vrot.lane.b32.xlu0 %v8125, 24
      %v8540 = vpop.permute.xlu0 %8539
      %8541 = vrot.lane.b32.xlu0 %v8046, 24
      %v8542 = vpop.permute.xlu0 %8541
      %8543 = vrot.lane.b32.xlu0 %v8126, 24
      %v8544 = vpop.permute.xlu0 %8543
      %8545 = vrot.lane.b32.xlu0 %v8049, 24
      %v8546 = vpop.permute.xlu0 %8545
      %8547 = vrot.lane.b32.xlu0 %v8127, 24
      %v8548 = vpop.permute.xlu0 %8547
      %8549 = vrot.lane.b32.xlu0 %v8052, 24
      %v8550 = vpop.permute.xlu0 %8549
      %8551 = vrot.lane.b32.xlu0 %v8128, 24
      %v8552 = vpop.permute.xlu0 %8551
      %8553 = vrot.lane.b32.xlu0 %v8055, 24
      %v8554 = vpop.permute.xlu0 %8553
      %8555 = vrot.lane.b32.xlu0 %v8129, 24
      %v8556 = vpop.permute.xlu0 %8555
      %8557 = vrot.lane.b32.xlu0 %v8058, 24
      %v8558 = vpop.permute.xlu0 %8557
      %8559 = vrot.lane.b32.xlu0 %v8130, 24
      %v8560 = vpop.permute.xlu0 %8559
      %8561 = vrot.lane.b32.xlu0 %v8061, 24
      %v8562 = vpop.permute.xlu0 %8561
      %8563 = vrot.lane.b32.xlu0 %v8131, 24
      %v8564 = vpop.permute.xlu0 %8563
      %8565 = vrot.lane.b32.xlu0 %v8064, 24
      %v8566 = vpop.permute.xlu0 %8565
      %8567 = vrot.lane.b32.xlu0 %v8132, 24
      %v8568 = vpop.permute.xlu0 %8567
      %8569 = vrot.lane.b32.xlu0 %v8067, 24
      %v8570 = vpop.permute.xlu0 %8569
      %8571 = vrot.lane.b32.xlu0 %v8133, 24
      %v8572 = vpop.permute.xlu0 %8571
      %8573 = vrot.lane.b32.xlu0 %v8070, 24
      %v8574 = vpop.permute.xlu0 %8573
      %v8608 = vrot.slane %v8133, 1
      %v8609 = vrot.slane %v8070, 1
      %v8610 = vsel %vm608, %v8608, %v8609
      %v8611 = vrot.slane %v8149, 1
      %v8612 = vsel %vm608, %v8609, %v8611
      %8613 = vrot.lane.b32.xlu0 %v8182, 32
      %v8614 = vpop.permute.xlu0 %8613
      %8615 = vrot.lane.b32.xlu0 %v8184, 32
      %v8616 = vpop.permute.xlu0 %8615
      %8617 = vrot.lane.b32.xlu0 %v8187, 32
      %v8618 = vpop.permute.xlu0 %8617
      %8619 = vrot.lane.b32.xlu0 %v8189, 32
      %v8620 = vpop.permute.xlu0 %8619
      %8621 = vrot.lane.b32.xlu0 %v8192, 32
      %v8622 = vpop.permute.xlu0 %8621
      %8623 = vrot.lane.b32.xlu0 %v8194, 32
      %v8624 = vpop.permute.xlu0 %8623
      %8625 = vrot.lane.b32.xlu0 %v8197, 32
      %v8626 = vpop.permute.xlu0 %8625
      %8627 = vrot.lane.b32.xlu0 %v8199, 32
      %v8628 = vpop.permute.xlu0 %8627
      %8629 = vrot.lane.b32.xlu0 %v8202, 32
      %v8630 = vpop.permute.xlu0 %8629
      %8631 = vrot.lane.b32.xlu0 %v8204, 32
      %v8632 = vpop.permute.xlu0 %8631
      %8633 = vrot.lane.b32.xlu0 %v8207, 32
      %v8634 = vpop.permute.xlu0 %8633
      %8635 = vrot.lane.b32.xlu0 %v8209, 32
      %v8636 = vpop.permute.xlu0 %8635
      %8637 = vrot.lane.b32.xlu0 %v8212, 32
      %v8638 = vpop.permute.xlu0 %8637
      %8639 = vrot.lane.b32.xlu0 %v8214, 32
      %v8640 = vpop.permute.xlu0 %8639
      %8641 = vrot.lane.b32.xlu0 %v8217, 32
      %v8642 = vpop.permute.xlu0 %8641
      %8643 = vrot.lane.b32.xlu0 %v8219, 32
      %v8644 = vpop.permute.xlu0 %8643
      %8645 = vrot.lane.b32.xlu0 %v8222, 32
      %v8646 = vpop.permute.xlu0 %8645
      %8647 = vrot.lane.b32.xlu0 %v8224, 32
      %v8648 = vpop.permute.xlu0 %8647
      %8649 = vrot.lane.b32.xlu0 %v8227, 32
      %v8650 = vpop.permute.xlu0 %8649
      %8651 = vrot.lane.b32.xlu0 %v8229, 32
      %v8652 = vpop.permute.xlu0 %8651
      %8653 = vrot.lane.b32.xlu0 %v8232, 32
      %v8654 = vpop.permute.xlu0 %8653
      %8655 = vrot.lane.b32.xlu0 %v8234, 32
      %v8656 = vpop.permute.xlu0 %8655
      %8657 = vrot.lane.b32.xlu0 %v8237, 32
      %v8658 = vpop.permute.xlu0 %8657
      %8659 = vrot.lane.b32.xlu0 %v8239, 32
      %v8660 = vpop.permute.xlu0 %8659
      %8661 = vrot.lane.b32.xlu0 %v8242, 32
      %v8662 = vpop.permute.xlu0 %8661
      %8663 = vrot.lane.b32.xlu0 %v8244, 32
      %v8664 = vpop.permute.xlu0 %8663
      %8665 = vrot.lane.b32.xlu0 %v8247, 32
      %v8666 = vpop.permute.xlu0 %8665
      %8667 = vrot.lane.b32.xlu0 %v8249, 32
      %v8668 = vpop.permute.xlu0 %8667
      %8669 = vrot.lane.b32.xlu0 %v8252, 32
      %v8670 = vpop.permute.xlu0 %8669
      %8671 = vrot.lane.b32.xlu0 %v8254, 32
      %v8672 = vpop.permute.xlu0 %8671
      %8673 = vrot.lane.b32.xlu0 %v8610, 32
      %v8674 = vpop.permute.xlu0 %8673
      %8675 = vrot.lane.b32.xlu0 %v8612, 32
      %v8676 = vpop.permute.xlu0 %8675
      %v8709 = vrot.slane %v8133, 2
      %v8710 = vrot.slane %v8070, 2
      %v8711 = vsel %vm785, %v8709, %v8710
      %v8712 = vrot.slane %v8149, 2
      %v8713 = vsel %vm785, %v8710, %v8712
      %8714 = vrot.lane.b32.xlu0 %v8347, 40
      %v8715 = vpop.permute.xlu0 %8714
      %8716 = vrot.lane.b32.xlu0 %v8349, 40
      %v8717 = vpop.permute.xlu0 %8716
      %8718 = vrot.lane.b32.xlu0 %v8352, 40
      %v8719 = vpop.permute.xlu0 %8718
      %8720 = vrot.lane.b32.xlu0 %v8354, 40
      %v8721 = vpop.permute.xlu0 %8720
      %8722 = vrot.lane.b32.xlu0 %v8357, 40
      %v8723 = vpop.permute.xlu0 %8722
      %8724 = vrot.lane.b32.xlu0 %v8359, 40
      %v8725 = vpop.permute.xlu0 %8724
      %8726 = vrot.lane.b32.xlu0 %v8362, 40
      %v8727 = vpop.permute.xlu0 %8726
      %8728 = vrot.lane.b32.xlu0 %v8364, 40
      %v8729 = vpop.permute.xlu0 %8728
      %8730 = vrot.lane.b32.xlu0 %v8367, 40
      %v8731 = vpop.permute.xlu0 %8730
      %8732 = vrot.lane.b32.xlu0 %v8369, 40
      %v8733 = vpop.permute.xlu0 %8732
      %8734 = vrot.lane.b32.xlu0 %v8372, 40
      %v8735 = vpop.permute.xlu0 %8734
      %8736 = vrot.lane.b32.xlu0 %v8374, 40
      %v8737 = vpop.permute.xlu0 %8736
      %8738 = vrot.lane.b32.xlu0 %v8377, 40
      %v8739 = vpop.permute.xlu0 %8738
      %8740 = vrot.lane.b32.xlu0 %v8379, 40
      %v8741 = vpop.permute.xlu0 %8740
      %8742 = vrot.lane.b32.xlu0 %v8382, 40
      %v8743 = vpop.permute.xlu0 %8742
      %8744 = vrot.lane.b32.xlu0 %v8384, 40
      %v8745 = vpop.permute.xlu0 %8744
      %8746 = vrot.lane.b32.xlu0 %v8387, 40
      %v8747 = vpop.permute.xlu0 %8746
      %8748 = vrot.lane.b32.xlu0 %v8389, 40
      %v8749 = vpop.permute.xlu0 %8748
      %8750 = vrot.lane.b32.xlu0 %v8392, 40
      %v8751 = vpop.permute.xlu0 %8750
      %8752 = vrot.lane.b32.xlu0 %v8394, 40
      %v8753 = vpop.permute.xlu0 %8752
      %8754 = vrot.lane.b32.xlu0 %v8397, 40
      %v8755 = vpop.permute.xlu0 %8754
      %8756 = vrot.lane.b32.xlu0 %v8399, 40
      %v8757 = vpop.permute.xlu0 %8756
      %8758 = vrot.lane.b32.xlu0 %v8402, 40
      %v8759 = vpop.permute.xlu0 %8758
      %8760 = vrot.lane.b32.xlu0 %v8404, 40
      %v8761 = vpop.permute.xlu0 %8760
      %8762 = vrot.lane.b32.xlu0 %v8407, 40
      %v8763 = vpop.permute.xlu0 %8762
      %8764 = vrot.lane.b32.xlu0 %v8409, 40
      %v8765 = vpop.permute.xlu0 %8764
      %8766 = vrot.lane.b32.xlu0 %v8412, 40
      %v8767 = vpop.permute.xlu0 %8766
      %8768 = vrot.lane.b32.xlu0 %v8414, 40
      %v8769 = vpop.permute.xlu0 %8768
      %8770 = vrot.lane.b32.xlu0 %v8417, 40
      %v8771 = vpop.permute.xlu0 %8770
      %8772 = vrot.lane.b32.xlu0 %v8419, 40
      %v8773 = vpop.permute.xlu0 %8772
      %8774 = vrot.lane.b32.xlu0 %v8711, 40
      %v8775 = vpop.permute.xlu0 %8774
      %8776 = vrot.lane.b32.xlu0 %v8713, 40
      %v8777 = vpop.permute.xlu0 %8776
      %8810 = vrot.lane.b32.xlu0 %v8119, 48
      %v8811 = vpop.permute.xlu0 %8810
      %8812 = vrot.lane.b32.xlu0 %v8028, 48
      %v8813 = vpop.permute.xlu0 %8812
      %8814 = vrot.lane.b32.xlu0 %v8120, 48
      %v8815 = vpop.permute.xlu0 %8814
      %8816 = vrot.lane.b32.xlu0 %v8031, 48
      %v8817 = vpop.permute.xlu0 %8816
      %8818 = vrot.lane.b32.xlu0 %v8121, 48
      %v8819 = vpop.permute.xlu0 %8818
      %8820 = vrot.lane.b32.xlu0 %v8034, 48
      %v8821 = vpop.permute.xlu0 %8820
      %8822 = vrot.lane.b32.xlu0 %v8122, 48
      %v8823 = vpop.permute.xlu0 %8822
      %8824 = vrot.lane.b32.xlu0 %v8037, 48
      %v8825 = vpop.permute.xlu0 %8824
      %8826 = vrot.lane.b32.xlu0 %v8123, 48
      %v8827 = vpop.permute.xlu0 %8826
      %8828 = vrot.lane.b32.xlu0 %v8040, 48
      %v8829 = vpop.permute.xlu0 %8828
      %8830 = vrot.lane.b32.xlu0 %v8124, 48
      %v8831 = vpop.permute.xlu0 %8830
      %8832 = vrot.lane.b32.xlu0 %v8043, 48
      %v8833 = vpop.permute.xlu0 %8832
      %8834 = vrot.lane.b32.xlu0 %v8125, 48
      %v8835 = vpop.permute.xlu0 %8834
      %8836 = vrot.lane.b32.xlu0 %v8046, 48
      %v8837 = vpop.permute.xlu0 %8836
      %8838 = vrot.lane.b32.xlu0 %v8126, 48
      %v8839 = vpop.permute.xlu0 %8838
      %8840 = vrot.lane.b32.xlu0 %v8049, 48
      %v8841 = vpop.permute.xlu0 %8840
      %8842 = vrot.lane.b32.xlu0 %v8127, 48
      %v8843 = vpop.permute.xlu0 %8842
      %8844 = vrot.lane.b32.xlu0 %v8052, 48
      %v8845 = vpop.permute.xlu0 %8844
      %8846 = vrot.lane.b32.xlu0 %v8128, 48
      %v8847 = vpop.permute.xlu0 %8846
      %8848 = vrot.lane.b32.xlu0 %v8055, 48
      %v8849 = vpop.permute.xlu0 %8848
      %8850 = vrot.lane.b32.xlu0 %v8129, 48
      %v8851 = vpop.permute.xlu0 %8850
      %8852 = vrot.lane.b32.xlu0 %v8058, 48
      %v8853 = vpop.permute.xlu0 %8852
      %8854 = vrot.lane.b32.xlu0 %v8130, 48
      %v8855 = vpop.permute.xlu0 %8854
      %8856 = vrot.lane.b32.xlu0 %v8061, 48
      %v8857 = vpop.permute.xlu0 %8856
      %8858 = vrot.lane.b32.xlu0 %v8131, 48
      %v8859 = vpop.permute.xlu0 %8858
      %8860 = vrot.lane.b32.xlu0 %v8064, 48
      %v8861 = vpop.permute.xlu0 %8860
      %8862 = vrot.lane.b32.xlu0 %v8132, 48
      %v8863 = vpop.permute.xlu0 %8862
      %8864 = vrot.lane.b32.xlu0 %v8067, 48
      %v8865 = vpop.permute.xlu0 %8864
      %8866 = vrot.lane.b32.xlu0 %v8133, 48
      %v8867 = vpop.permute.xlu0 %8866
      %8868 = vrot.lane.b32.xlu0 %v8070, 48
      %v8869 = vpop.permute.xlu0 %8868
      %8900 = vrot.lane.b32.xlu0 %v8187, 56
      %v8901 = vpop.permute.xlu0 %8900
      %8902 = vrot.lane.b32.xlu0 %v8189, 56
      %v8903 = vpop.permute.xlu0 %8902
      %8904 = vrot.lane.b32.xlu0 %v8192, 56
      %v8905 = vpop.permute.xlu0 %8904
      %8906 = vrot.lane.b32.xlu0 %v8194, 56
      %v8907 = vpop.permute.xlu0 %8906
      %8908 = vrot.lane.b32.xlu0 %v8197, 56
      %v8909 = vpop.permute.xlu0 %8908
      %8910 = vrot.lane.b32.xlu0 %v8199, 56
      %v8911 = vpop.permute.xlu0 %8910
      %8912 = vrot.lane.b32.xlu0 %v8202, 56
      %v8913 = vpop.permute.xlu0 %8912
      %8914 = vrot.lane.b32.xlu0 %v8204, 56
      %v8915 = vpop.permute.xlu0 %8914
      %8916 = vrot.lane.b32.xlu0 %v8207, 56
      %v8917 = vpop.permute.xlu0 %8916
      %8918 = vrot.lane.b32.xlu0 %v8209, 56
      %v8919 = vpop.permute.xlu0 %8918
      %8920 = vrot.lane.b32.xlu0 %v8212, 56
      %v8921 = vpop.permute.xlu0 %8920
      %8922 = vrot.lane.b32.xlu0 %v8214, 56
      %v8923 = vpop.permute.xlu0 %8922
      %8924 = vrot.lane.b32.xlu0 %v8217, 56
      %v8925 = vpop.permute.xlu0 %8924
      %8926 = vrot.lane.b32.xlu0 %v8219, 56
      %v8927 = vpop.permute.xlu0 %8926
      %8928 = vrot.lane.b32.xlu0 %v8222, 56
      %v8929 = vpop.permute.xlu0 %8928
      %8930 = vrot.lane.b32.xlu0 %v8224, 56
      %v8931 = vpop.permute.xlu0 %8930
      %8932 = vrot.lane.b32.xlu0 %v8227, 56
      %v8933 = vpop.permute.xlu0 %8932
      %8934 = vrot.lane.b32.xlu0 %v8229, 56
      %v8935 = vpop.permute.xlu0 %8934
      %8936 = vrot.lane.b32.xlu0 %v8232, 56
      %v8937 = vpop.permute.xlu0 %8936
      %8938 = vrot.lane.b32.xlu0 %v8234, 56
      %v8939 = vpop.permute.xlu0 %8938
      %8940 = vrot.lane.b32.xlu0 %v8237, 56
      %v8941 = vpop.permute.xlu0 %8940
      %8942 = vrot.lane.b32.xlu0 %v8239, 56
      %v8943 = vpop.permute.xlu0 %8942
      %8944 = vrot.lane.b32.xlu0 %v8242, 56
      %v8945 = vpop.permute.xlu0 %8944
      %8946 = vrot.lane.b32.xlu0 %v8244, 56
      %v8947 = vpop.permute.xlu0 %8946
      %8948 = vrot.lane.b32.xlu0 %v8247, 56
      %v8949 = vpop.permute.xlu0 %8948
      %8950 = vrot.lane.b32.xlu0 %v8249, 56
      %v8951 = vpop.permute.xlu0 %8950
      %8952 = vrot.lane.b32.xlu0 %v8252, 56
      %v8953 = vpop.permute.xlu0 %8952
      %8954 = vrot.lane.b32.xlu0 %v8254, 56
      %v8955 = vpop.permute.xlu0 %8954
      %8956 = vrot.lane.b32.xlu0 %v8610, 56
      %v8957 = vpop.permute.xlu0 %8956
      %8958 = vrot.lane.b32.xlu0 %v8612, 56
      %v8959 = vpop.permute.xlu0 %8958
      %8990 = vrot.lane.b32.xlu0 %v8352, 64
      %v8991 = vpop.permute.xlu0 %8990
      %8992 = vrot.lane.b32.xlu0 %v8354, 64
      %v8993 = vpop.permute.xlu0 %8992
      %8994 = vrot.lane.b32.xlu0 %v8357, 64
      %v8995 = vpop.permute.xlu0 %8994
      %8996 = vrot.lane.b32.xlu0 %v8359, 64
      %v8997 = vpop.permute.xlu0 %8996
      %8998 = vrot.lane.b32.xlu0 %v8362, 64
      %v8999 = vpop.permute.xlu0 %8998
      %9000 = vrot.lane.b32.xlu0 %v8364, 64
      %v9001 = vpop.permute.xlu0 %9000
      %9002 = vrot.lane.b32.xlu0 %v8367, 64
      %v9003 = vpop.permute.xlu0 %9002
      %9004 = vrot.lane.b32.xlu0 %v8369, 64
      %v9005 = vpop.permute.xlu0 %9004
      %9006 = vrot.lane.b32.xlu0 %v8372, 64
      %v9007 = vpop.permute.xlu0 %9006
      %9008 = vrot.lane.b32.xlu0 %v8374, 64
      %v9009 = vpop.permute.xlu0 %9008
      %9010 = vrot.lane.b32.xlu0 %v8377, 64
      %v9011 = vpop.permute.xlu0 %9010
      %9012 = vrot.lane.b32.xlu0 %v8379, 64
      %v9013 = vpop.permute.xlu0 %9012
      %9014 = vrot.lane.b32.xlu0 %v8382, 64
      %v9015 = vpop.permute.xlu0 %9014
      %9016 = vrot.lane.b32.xlu0 %v8384, 64
      %v9017 = vpop.permute.xlu0 %9016
      %9018 = vrot.lane.b32.xlu0 %v8387, 64
      %v9019 = vpop.permute.xlu0 %9018
      %9020 = vrot.lane.b32.xlu0 %v8389, 64
      %v9021 = vpop.permute.xlu0 %9020
      %9022 = vrot.lane.b32.xlu0 %v8392, 64
      %v9023 = vpop.permute.xlu0 %9022
      %9024 = vrot.lane.b32.xlu0 %v8394, 64
      %v9025 = vpop.permute.xlu0 %9024
      %9026 = vrot.lane.b32.xlu0 %v8397, 64
      %v9027 = vpop.permute.xlu0 %9026
      %9028 = vrot.lane.b32.xlu0 %v8399, 64
      %v9029 = vpop.permute.xlu0 %9028
      %9030 = vrot.lane.b32.xlu0 %v8402, 64
      %v9031 = vpop.permute.xlu0 %9030
      %9032 = vrot.lane.b32.xlu0 %v8404, 64
      %v9033 = vpop.permute.xlu0 %9032
      %9034 = vrot.lane.b32.xlu0 %v8407, 64
      %v9035 = vpop.permute.xlu0 %9034
      %9036 = vrot.lane.b32.xlu0 %v8409, 64
      %v9037 = vpop.permute.xlu0 %9036
      %9038 = vrot.lane.b32.xlu0 %v8412, 64
      %v9039 = vpop.permute.xlu0 %9038
      %9040 = vrot.lane.b32.xlu0 %v8414, 64
      %v9041 = vpop.permute.xlu0 %9040
      %9042 = vrot.lane.b32.xlu0 %v8417, 64
      %v9043 = vpop.permute.xlu0 %9042
      %9044 = vrot.lane.b32.xlu0 %v8419, 64
      %v9045 = vpop.permute.xlu0 %9044
      %9046 = vrot.lane.b32.xlu0 %v8711, 64
      %v9047 = vpop.permute.xlu0 %9046
      %9048 = vrot.lane.b32.xlu0 %v8713, 64
      %v9049 = vpop.permute.xlu0 %9048
      %v9080 = vsel %vm1550, %v8118, %v8256
      %v9081 = vsel %vm1550, %v8025, %v8258
      %v9082 = vsel %vm1550, %v8119, %v8260
      %v9083 = vsel %vm1550, %v8028, %v8262
      %v9084 = vsel %vm1550, %v8120, %v8264
      %v9085 = vsel %vm1550, %v8031, %v8266
      %v9086 = vsel %vm1550, %v8121, %v8268
      %v9087 = vsel %vm1550, %v8034, %v8270
      %v9088 = vsel %vm1550, %v8122, %v8272
      %v9089 = vsel %vm1550, %v8037, %v8274
      %v9090 = vsel %vm1550, %v8123, %v8276
      %v9091 = vsel %vm1550, %v8040, %v8278
      %v9092 = vsel %vm1550, %v8124, %v8280
      %v9093 = vsel %vm1550, %v8043, %v8282
      %v9094 = vsel %vm1550, %v8125, %v8284
      %v9095 = vsel %vm1550, %v8046, %v8286
      %v9096 = vsel %vm1550, %v8126, %v8288
      %v9097 = vsel %vm1550, %v8049, %v8290
      %v9098 = vsel %vm1550, %v8127, %v8292
      %v9099 = vsel %vm1550, %v8052, %v8294
      %v9100 = vsel %vm1550, %v8128, %v8296
      %v9101 = vsel %vm1550, %v8055, %v8298
      %v9102 = vsel %vm1550, %v8129, %v8300
      %v9103 = vsel %vm1550, %v8058, %v8302
      %v9104 = vsel %vm1550, %v8130, %v8304
      %v9105 = vsel %vm1550, %v8061, %v8306
      %v9106 = vsel %vm1550, %v8131, %v8308
      %v9107 = vsel %vm1550, %v8064, %v8310
      %v9108 = vsel %vm1550, %v8132, %v8312
      %v9109 = vsel %vm1550, %v8067, %v8314
      %v9110 = vsel %vm1583, %v9080, %v8421
      %v9111 = vsel %vm1583, %v9081, %v8423
      %v9112 = vsel %vm1583, %v9082, %v8425
      %v9113 = vsel %vm1583, %v9083, %v8427
      %v9114 = vsel %vm1583, %v9084, %v8429
      %v9115 = vsel %vm1583, %v9085, %v8431
      %v9116 = vsel %vm1583, %v9086, %v8433
      %v9117 = vsel %vm1583, %v9087, %v8435
      %v9118 = vsel %vm1583, %v9088, %v8437
      %v9119 = vsel %vm1583, %v9089, %v8439
      %v9120 = vsel %vm1583, %v9090, %v8441
      %v9121 = vsel %vm1583, %v9091, %v8443
      %v9122 = vsel %vm1583, %v9092, %v8445
      %v9123 = vsel %vm1583, %v9093, %v8447
      %v9124 = vsel %vm1583, %v9094, %v8449
      %v9125 = vsel %vm1583, %v9095, %v8451
      %v9126 = vsel %vm1583, %v9096, %v8453
      %v9127 = vsel %vm1583, %v9097, %v8455
      %v9128 = vsel %vm1583, %v9098, %v8457
      %v9129 = vsel %vm1583, %v9099, %v8459
      %v9130 = vsel %vm1583, %v9100, %v8461
      %v9131 = vsel %vm1583, %v9101, %v8463
      %v9132 = vsel %vm1583, %v9102, %v8465
      %v9133 = vsel %vm1583, %v9103, %v8467
      %v9134 = vsel %vm1583, %v9104, %v8469
      %v9135 = vsel %vm1583, %v9105, %v8471
      %v9136 = vsel %vm1583, %v9106, %v8473
      %v9137 = vsel %vm1583, %v9107, %v8475
      %v9138 = vsel %vm1583, %v9108, %v8477
      %v9139 = vsel %vm1583, %v9109, %v8479
      %v9140 = vsel %vm1616, %v1584, %v8512
      %v9141 = vsel %vm1616, %v1585, %v8514
      %v9142 = vsel %vm1616, %v9110, %v8516
      %v9143 = vsel %vm1616, %v9111, %v8518
      %v9144 = vsel %vm1616, %v9112, %v8520
      %v9145 = vsel %vm1616, %v9113, %v8522
      %v9146 = vsel %vm1616, %v9114, %v8524
      %v9147 = vsel %vm1616, %v9115, %v8526
      %v9148 = vsel %vm1616, %v9116, %v8528
      %v9149 = vsel %vm1616, %v9117, %v8530
      %v9150 = vsel %vm1616, %v9118, %v8532
      %v9151 = vsel %vm1616, %v9119, %v8534
      %v9152 = vsel %vm1616, %v9120, %v8536
      %v9153 = vsel %vm1616, %v9121, %v8538
      %v9154 = vsel %vm1616, %v9122, %v8540
      %v9155 = vsel %vm1616, %v9123, %v8542
      %v9156 = vsel %vm1616, %v9124, %v8544
      %v9157 = vsel %vm1616, %v9125, %v8546
      %v9158 = vsel %vm1616, %v9126, %v8548
      %v9159 = vsel %vm1616, %v9127, %v8550
      %v9160 = vsel %vm1616, %v9128, %v8552
      %v9161 = vsel %vm1616, %v9129, %v8554
      %v9162 = vsel %vm1616, %v9130, %v8556
      %v9163 = vsel %vm1616, %v9131, %v8558
      %v9164 = vsel %vm1616, %v9132, %v8560
      %v9165 = vsel %vm1616, %v9133, %v8562
      %v9166 = vsel %vm1616, %v9134, %v8564
      %v9167 = vsel %vm1616, %v9135, %v8566
      %v9168 = vsel %vm1616, %v9136, %v8568
      %v9169 = vsel %vm1616, %v9137, %v8570
      %v9170 = vsel %vm1616, %v9138, %v8572
      %v9171 = vsel %vm1616, %v9139, %v8574
      %v9172 = vsel %vm1649, %v9140, %v8614
      %v9173 = vsel %vm1649, %v9141, %v8616
      %v9174 = vsel %vm1649, %v9142, %v8618
      %v9175 = vsel %vm1649, %v9143, %v8620
      %v9176 = vsel %vm1649, %v9144, %v8622
      %v9177 = vsel %vm1649, %v9145, %v8624
      %v9178 = vsel %vm1649, %v9146, %v8626
      %v9179 = vsel %vm1649, %v9147, %v8628
      %v9180 = vsel %vm1649, %v9148, %v8630
      %v9181 = vsel %vm1649, %v9149, %v8632
      %v9182 = vsel %vm1649, %v9150, %v8634
      %v9183 = vsel %vm1649, %v9151, %v8636
      %v9184 = vsel %vm1649, %v9152, %v8638
      %v9185 = vsel %vm1649, %v9153, %v8640
      %v9186 = vsel %vm1649, %v9154, %v8642
      %v9187 = vsel %vm1649, %v9155, %v8644
      %v9188 = vsel %vm1649, %v9156, %v8646
      %v9189 = vsel %vm1649, %v9157, %v8648
      %v9190 = vsel %vm1649, %v9158, %v8650
      %v9191 = vsel %vm1649, %v9159, %v8652
      %v9192 = vsel %vm1649, %v9160, %v8654
      %v9193 = vsel %vm1649, %v9161, %v8656
      %v9194 = vsel %vm1649, %v9162, %v8658
      %v9195 = vsel %vm1649, %v9163, %v8660
      %v9196 = vsel %vm1649, %v9164, %v8662
      %v9197 = vsel %vm1649, %v9165, %v8664
      %v9198 = vsel %vm1649, %v9166, %v8666
      %v9199 = vsel %vm1649, %v9167, %v8668
      %v9200 = vsel %vm1649, %v9168, %v8670
      %v9201 = vsel %vm1649, %v9169, %v8672
      %v9202 = vsel %vm1649, %v9170, %v8674
      %v9203 = vsel %vm1649, %v9171, %v8676
      %v9204 = vsel %vm1682, %v9172, %v8715
      %v9205 = vsel %vm1682, %v9173, %v8717
      %v9206 = vsel %vm1682, %v9174, %v8719
      %v9207 = vsel %vm1682, %v9175, %v8721
      %v9208 = vsel %vm1682, %v9176, %v8723
      %v9209 = vsel %vm1682, %v9177, %v8725
      %v9210 = vsel %vm1682, %v9178, %v8727
      %v9211 = vsel %vm1682, %v9179, %v8729
      %v9212 = vsel %vm1682, %v9180, %v8731
      %v9213 = vsel %vm1682, %v9181, %v8733
      %v9214 = vsel %vm1682, %v9182, %v8735
      %v9215 = vsel %vm1682, %v9183, %v8737
      %v9216 = vsel %vm1682, %v9184, %v8739
      %v9217 = vsel %vm1682, %v9185, %v8741
      %v9218 = vsel %vm1682, %v9186, %v8743
      %v9219 = vsel %vm1682, %v9187, %v8745
      %v9220 = vsel %vm1682, %v9188, %v8747
      %v9221 = vsel %vm1682, %v9189, %v8749
      %v9222 = vsel %vm1682, %v9190, %v8751
      %v9223 = vsel %vm1682, %v9191, %v8753
      %v9224 = vsel %vm1682, %v9192, %v8755
      %v9225 = vsel %vm1682, %v9193, %v8757
      %v9226 = vsel %vm1682, %v9194, %v8759
      %v9227 = vsel %vm1682, %v9195, %v8761
      %v9228 = vsel %vm1682, %v9196, %v8763
      %v9229 = vsel %vm1682, %v9197, %v8765
      %v9230 = vsel %vm1682, %v9198, %v8767
      %v9231 = vsel %vm1682, %v9199, %v8769
      %v9232 = vsel %vm1682, %v9200, %v8771
      %v9233 = vsel %vm1682, %v9201, %v8773
      %v9234 = vsel %vm1682, %v9202, %v8775
      %v9235 = vsel %vm1682, %v9203, %v8777
      %v9236 = vsel %vm1715, %v9204, %v8811
      %v9237 = vsel %vm1715, %v9205, %v8813
      %v9238 = vsel %vm1715, %v9206, %v8815
      %v9239 = vsel %vm1715, %v9207, %v8817
      %v9240 = vsel %vm1715, %v9208, %v8819
      %v9241 = vsel %vm1715, %v9209, %v8821
      %v9242 = vsel %vm1715, %v9210, %v8823
      %v9243 = vsel %vm1715, %v9211, %v8825
      %v9244 = vsel %vm1715, %v9212, %v8827
      %v9245 = vsel %vm1715, %v9213, %v8829
      %v9246 = vsel %vm1715, %v9214, %v8831
      %v9247 = vsel %vm1715, %v9215, %v8833
      %v9248 = vsel %vm1715, %v9216, %v8835
      %v9249 = vsel %vm1715, %v9217, %v8837
      %v9250 = vsel %vm1715, %v9218, %v8839
      %v9251 = vsel %vm1715, %v9219, %v8841
      %v9252 = vsel %vm1715, %v9220, %v8843
      %v9253 = vsel %vm1715, %v9221, %v8845
      %v9254 = vsel %vm1715, %v9222, %v8847
      %v9255 = vsel %vm1715, %v9223, %v8849
      %v9256 = vsel %vm1715, %v9224, %v8851
      %v9257 = vsel %vm1715, %v9225, %v8853
      %v9258 = vsel %vm1715, %v9226, %v8855
      %v9259 = vsel %vm1715, %v9227, %v8857
      %v9260 = vsel %vm1715, %v9228, %v8859
      %v9261 = vsel %vm1715, %v9229, %v8861
      %v9262 = vsel %vm1715, %v9230, %v8863
      %v9263 = vsel %vm1715, %v9231, %v8865
      %v9264 = vsel %vm1715, %v9232, %v8867
      %v9265 = vsel %vm1715, %v9233, %v8869
      %v9266 = vsel %vm1715, %v9234, %v1323
      %v9267 = vsel %vm1715, %v9235, %v1325
      %v9268 = vsel %vm1748, %v9236, %v8901
      %v9269 = vsel %vm1748, %v9237, %v8903
      %v9270 = vsel %vm1748, %v9238, %v8905
      %v9271 = vsel %vm1748, %v9239, %v8907
      %v9272 = vsel %vm1748, %v9240, %v8909
      %v9273 = vsel %vm1748, %v9241, %v8911
      %v9274 = vsel %vm1748, %v9242, %v8913
      %v9275 = vsel %vm1748, %v9243, %v8915
      %v9276 = vsel %vm1748, %v9244, %v8917
      %v9277 = vsel %vm1748, %v9245, %v8919
      %v9278 = vsel %vm1748, %v9246, %v8921
      %v9279 = vsel %vm1748, %v9247, %v8923
      %v9280 = vsel %vm1748, %v9248, %v8925
      %v9281 = vsel %vm1748, %v9249, %v8927
      %v9282 = vsel %vm1748, %v9250, %v8929
      %v9283 = vsel %vm1748, %v9251, %v8931
      %v9284 = vsel %vm1748, %v9252, %v8933
      %v9285 = vsel %vm1748, %v9253, %v8935
      %v9286 = vsel %vm1748, %v9254, %v8937
      %v9287 = vsel %vm1748, %v9255, %v8939
      %v9288 = vsel %vm1748, %v9256, %v8941
      %v9289 = vsel %vm1748, %v9257, %v8943
      %v9290 = vsel %vm1748, %v9258, %v8945
      %v9291 = vsel %vm1748, %v9259, %v8947
      %v9292 = vsel %vm1748, %v9260, %v8949
      %v9293 = vsel %vm1748, %v9261, %v8951
      %v9294 = vsel %vm1748, %v9262, %v8953
      %v9295 = vsel %vm1748, %v9263, %v8955
      %v9296 = vsel %vm1748, %v9264, %v8957
      %v9297 = vsel %vm1748, %v9265, %v8959
      %v9298 = vsel %vm1748, %v9266, %v1419
      %v9299 = vsel %vm1748, %v9267, %v1421
      %v9300 = vsel %vm1781, %v9268, %v8991
      %v9301 = vsel %vm1781, %v9269, %v8993
      %v9302 = vsel %vm1781, %v9270, %v8995
      %v9303 = vsel %vm1781, %v9271, %v8997
      %v9304 = vsel %vm1781, %v9272, %v8999
      %v9305 = vsel %vm1781, %v9273, %v9001
      %v9306 = vsel %vm1781, %v9274, %v9003
      %v9307 = vsel %vm1781, %v9275, %v9005
      %v9308 = vsel %vm1781, %v9276, %v9007
      %v9309 = vsel %vm1781, %v9277, %v9009
      %v9310 = vsel %vm1781, %v9278, %v9011
      %v9311 = vsel %vm1781, %v9279, %v9013
      %v9312 = vsel %vm1781, %v9280, %v9015
      %v9313 = vsel %vm1781, %v9281, %v9017
      %v9314 = vsel %vm1781, %v9282, %v9019
      %v9315 = vsel %vm1781, %v9283, %v9021
      %v9316 = vsel %vm1781, %v9284, %v9023
      %v9317 = vsel %vm1781, %v9285, %v9025
      %v9318 = vsel %vm1781, %v9286, %v9027
      %v9319 = vsel %vm1781, %v9287, %v9029
      %v9320 = vsel %vm1781, %v9288, %v9031
      %v9321 = vsel %vm1781, %v9289, %v9033
      %v9322 = vsel %vm1781, %v9290, %v9035
      %v9323 = vsel %vm1781, %v9291, %v9037
      %v9324 = vsel %vm1781, %v9292, %v9039
      %v9325 = vsel %vm1781, %v9293, %v9041
      %v9326 = vsel %vm1781, %v9294, %v9043
      %v9327 = vsel %vm1781, %v9295, %v9045
      %v9328 = vsel %vm1781, %v9296, %v9047
      %v9329 = vsel %vm1781, %v9297, %v9049
      %v9330 = vsel %vm1781, %v9298, %v1515
      %v9331 = vsel %vm1781, %v9299, %v1517
      %v9333 = vlaneseq
      %v9334 = vshrl.u32 %v9333, 7
      %v9335 = vsub.s32 0, %v9334
      %v9336 = vrot.slane %v7990, %v9335
      %v9339 = vsel %vm1820, %v9300, 0
      %v9342 = vsel %vm1820, %v9301, 0
      %v9345 = vsel %vm1820, %v9302, 0
      %v9348 = vsel %vm1820, %v9303, 0
      %v9351 = vsel %vm1820, %v9304, 0
      %v9354 = vsel %vm1820, %v9305, 0
      %v9357 = vsel %vm1820, %v9306, 0
      %v9360 = vsel %vm1820, %v9307, 0
      %v9363 = vsel %vm1820, %v9308, 0
      %v9366 = vsel %vm1820, %v9309, 0
      %v9369 = vsel %vm1820, %v9310, 0
      %v9372 = vsel %vm1820, %v9311, 0
      %v9375 = vsel %vm1820, %v9312, 0
      %v9378 = vsel %vm1820, %v9313, 0
      %v9381 = vsel %vm1820, %v9314, 0
      %v9384 = vsel %vm1820, %v9315, 0
      %v9387 = vsel %vm1820, %v9316, 0
      %v9390 = vsel %vm1820, %v9317, 0
      %v9393 = vsel %vm1820, %v9318, 0
      %v9396 = vsel %vm1820, %v9319, 0
      %v9399 = vsel %vm1820, %v9320, 0
      %v9402 = vsel %vm1820, %v9321, 0
      %v9405 = vsel %vm1820, %v9322, 0
      %v9408 = vsel %vm1820, %v9323, 0
      %v9411 = vsel %vm1820, %v9324, 0
      %v9414 = vsel %vm1820, %v9325, 0
      %v9417 = vsel %vm1820, %v9326, 0
      %v9420 = vsel %vm1820, %v9327, 0
      %v9423 = vsel %vm1820, %v9328, 0
      %v9426 = vsel %vm1820, %v9329, 0
      %v9429 = vsel %vm1820, %v9330, 0
      %v9432 = vsel %vm1820, %v9331, 0
      %9434 = vmatprep.subr.mxu0 0.0
      %9435 = vmatpush1.msra.mxu0 0.0
      %9436 = vmatprep.subr.mxu0 0.0
      %9437 = vmatpush1.msra.mxu0 0.0
      %9438 = vmatprep.subr.mxu0 0.0
      %9439 = vmatpush1.msra.mxu0 0.0
      %9440 = vmatprep.subr.mxu0 0.0
      %9441 = vmatpush1.msra.mxu0 0.0
      %9442 = vmatprep.subr.mxu0 0.0
      %9443 = vmatpush1.msra.mxu0 0.0
      %9444 = vmatprep.subr.mxu0 0.0
      %9445 = vmatpush1.msra.mxu0 0.0
      %9446 = vmatprep.subr.mxu0 0.0
      %9447 = vmatpush1.msra.mxu0 0.0
      %9448 = vmatprep.subr.mxu0 0.0
      %9449 = vmatpush1.msra.mxu0 %v7989
      %9450 = vmatprep.subr.mxu0 0.0
      %9451 = vmatpush1.msra.mxu0 %v7988
      %9452 = vmatprep.subr.mxu0 0.0
      %9453 = vmatpush1.msra.mxu0 %v7987
      %9454 = vmatprep.subr.mxu0 0.0
      %9455 = vmatpush1.msra.mxu0 %v7986
      %9456 = vmatprep.subr.mxu0 0.0
      %9457 = vmatpush1.msra.mxu0 %v7985
      %9458 = vmatprep.subr.mxu0 0.0
      %9459 = vmatpush1.msra.mxu0 %v7984
      %9460 = vmatprep.subr.mxu0 0.0
      %9461 = vmatpush1.msra.mxu0 %v7983
      %9462 = vmatprep.subr.mxu0 0.0
      %9463 = vmatpush1.msra.mxu0 %v7982
      %9464 = vmatprep.subr.mxu0 0.0
      %9465 = vmatpush1.msra.mxu0 %v7981
      %9466 = vmatprep.subr.mxu0 0.0
      %9467 = vmatpush2.msra.mxu0 0.0
      %9468 = vmatprep.subr.mxu0 0.0
      %9469 = vmatpush2.msra.mxu0 0.0
      %9470 = vmatprep.subr.mxu0 0.0
      %9471 = vmatpush2.msra.mxu0 0.0
      %9472 = vmatprep.subr.mxu0 0.0
      %9473 = vmatpush2.msra.mxu0 0.0
      %9474 = vmatprep.subr.mxu0 0.0
      %9475 = vmatpush2.msra.mxu0 0.0
      %9476 = vmatprep.subr.mxu0 0.0
      %9477 = vmatpush2.msra.mxu0 0.0
      %9478 = vmatprep.subr.mxu0 0.0
      %9479 = vmatpush2.msra.mxu0 0.0
      %9480 = vmatprep.subr.mxu0 0.0
      %9481 = vmatpush2.msra.mxu0 0.0
      %9482 = vmatprep.subr.mxu0 0.0
      %9483 = vmatpush2.msra.mxu0 0.0
      %9484 = vmatprep.subr.mxu0 0.0
      %9485 = vmatpush2.msra.mxu0 0.0
      %9486 = vmatprep.subr.mxu0 0.0
      %9487 = vmatpush2.msra.mxu0 0.0
      %9488 = vmatprep.subr.mxu0 0.0
      %9489 = vmatpush2.msra.mxu0 0.0
      %9490 = vmatprep.subr.mxu0 0.0
      %9491 = vmatpush2.msra.mxu0 0.0
      %9492 = vmatprep.subr.mxu0 0.0
      %9493 = vmatpush2.msra.mxu0 0.0
      %9494 = vmatprep.subr.mxu0 0.0
      %9495 = vmatpush2.msra.mxu0 0.0
      %9496 = vmatprep.subr.mxu0 0.0
      %9497 = vmatpush2.msra.mxu0 0.0
      %9498 = vmatprep.mubr.f32.mxu0 0.0
      %9499 = vmatmul.mubr.f32.gmra.mxu0 %v9339
      %v9500 = vpop.f32.mrf.mxu0
      %v9501 = vadd.f32 %v9336, %v9500
      %v9502 = vpop.f32.mrf.mxu0
      %9503 = vmatprep.mubr.f32.mxu0 0.0
      %9504 = vmatmul.mubr.f32.gmra.mxu0 %v9342
      %v9505 = vpop.f32.mrf.mxu0
      %v9506 = vadd.f32 %v9336, %v9505
      %v9507 = vpop.f32.mrf.mxu0
      %9508 = vmatprep.mubr.f32.mxu0 0.0
      %9509 = vmatmul.mubr.f32.gmra.mxu0 %v9345
      %v9510 = vpop.f32.mrf.mxu0
      %v9511 = vadd.f32 %v9336, %v9510
      %v9512 = vpop.f32.mrf.mxu0
      %9513 = vmatprep.mubr.f32.mxu0 0.0
      %9514 = vmatmul.mubr.f32.gmra.mxu0 %v9348
      %v9515 = vpop.f32.mrf.mxu0
      %v9516 = vadd.f32 %v9336, %v9515
      %v9517 = vpop.f32.mrf.mxu0
      %9518 = vmatprep.mubr.f32.mxu0 0.0
      %9519 = vmatmul.mubr.f32.gmra.mxu0 %v9351
      %v9520 = vpop.f32.mrf.mxu0
      %v9521 = vadd.f32 %v9336, %v9520
      %v9522 = vpop.f32.mrf.mxu0
      %9523 = vmatprep.mubr.f32.mxu0 0.0
      %9524 = vmatmul.mubr.f32.gmra.mxu0 %v9354
      %v9525 = vpop.f32.mrf.mxu0
      %v9526 = vadd.f32 %v9336, %v9525
      %v9527 = vpop.f32.mrf.mxu0
      %9528 = vmatprep.mubr.f32.mxu0 0.0
      %9529 = vmatmul.mubr.f32.gmra.mxu0 %v9357
      %v9530 = vpop.f32.mrf.mxu0
      %v9531 = vadd.f32 %v9336, %v9530
      %v9532 = vpop.f32.mrf.mxu0
      %9533 = vmatprep.mubr.f32.mxu0 0.0
      %9534 = vmatmul.mubr.f32.gmra.mxu0 %v9360
      %v9535 = vpop.f32.mrf.mxu0
      %v9536 = vadd.f32 %v9336, %v9535
      %v9537 = vpop.f32.mrf.mxu0
      %9538 = vmatprep.mubr.f32.mxu0 0.0
      %9539 = vmatmul.mubr.f32.gmra.mxu0 %v9363
      %v9540 = vpop.f32.mrf.mxu0
      %v9541 = vadd.f32 %v9336, %v9540
      %v9542 = vpop.f32.mrf.mxu0
      %9543 = vmatprep.mubr.f32.mxu0 0.0
      %9544 = vmatmul.mubr.f32.gmra.mxu0 %v9366
      %v9545 = vpop.f32.mrf.mxu0
      %v9546 = vadd.f32 %v9336, %v9545
      %v9547 = vpop.f32.mrf.mxu0
      %9548 = vmatprep.mubr.f32.mxu0 0.0
      %9549 = vmatmul.mubr.f32.gmra.mxu0 %v9369
      %v9550 = vpop.f32.mrf.mxu0
      %v9551 = vadd.f32 %v9336, %v9550
      %v9552 = vpop.f32.mrf.mxu0
      %9553 = vmatprep.mubr.f32.mxu0 0.0
      %9554 = vmatmul.mubr.f32.gmra.mxu0 %v9372
      %v9555 = vpop.f32.mrf.mxu0
      %v9556 = vadd.f32 %v9336, %v9555
      %v9557 = vpop.f32.mrf.mxu0
      %9558 = vmatprep.mubr.f32.mxu0 0.0
      %9559 = vmatmul.mubr.f32.gmra.mxu0 %v9375
      %v9560 = vpop.f32.mrf.mxu0
      %v9561 = vadd.f32 %v9336, %v9560
      %v9562 = vpop.f32.mrf.mxu0
      %9563 = vmatprep.mubr.f32.mxu0 0.0
      %9564 = vmatmul.mubr.f32.gmra.mxu0 %v9378
      %v9565 = vpop.f32.mrf.mxu0
      %v9566 = vadd.f32 %v9336, %v9565
      %v9567 = vpop.f32.mrf.mxu0
      %9568 = vmatprep.mubr.f32.mxu0 0.0
      %9569 = vmatmul.mubr.f32.gmra.mxu0 %v9381
      %v9570 = vpop.f32.mrf.mxu0
      %v9571 = vadd.f32 %v9336, %v9570
      %v9572 = vpop.f32.mrf.mxu0
      %9573 = vmatprep.mubr.f32.mxu0 0.0
      %9574 = vmatmul.mubr.f32.gmra.mxu0 %v9384
      %v9575 = vpop.f32.mrf.mxu0
      %v9576 = vadd.f32 %v9336, %v9575
      %v9577 = vpop.f32.mrf.mxu0
      %9578 = vmatprep.mubr.f32.mxu0 0.0
      %9579 = vmatmul.mubr.f32.gmra.mxu0 %v9387
      %v9580 = vpop.f32.mrf.mxu0
      %v9581 = vadd.f32 %v9336, %v9580
      %v9582 = vpop.f32.mrf.mxu0
      %9583 = vmatprep.mubr.f32.mxu0 0.0
      %9584 = vmatmul.mubr.f32.gmra.mxu0 %v9390
      %v9585 = vpop.f32.mrf.mxu0
      %v9586 = vadd.f32 %v9336, %v9585
      %v9587 = vpop.f32.mrf.mxu0
      %9588 = vmatprep.mubr.f32.mxu0 0.0
      %9589 = vmatmul.mubr.f32.gmra.mxu0 %v9393
      %v9590 = vpop.f32.mrf.mxu0
      %v9591 = vadd.f32 %v9336, %v9590
      %v9592 = vpop.f32.mrf.mxu0
      %9593 = vmatprep.mubr.f32.mxu0 0.0
      %9594 = vmatmul.mubr.f32.gmra.mxu0 %v9396
      %v9595 = vpop.f32.mrf.mxu0
      %v9596 = vadd.f32 %v9336, %v9595
      %v9597 = vpop.f32.mrf.mxu0
      %9598 = vmatprep.mubr.f32.mxu0 0.0
      %9599 = vmatmul.mubr.f32.gmra.mxu0 %v9399
      %v9600 = vpop.f32.mrf.mxu0
      %v9601 = vadd.f32 %v9336, %v9600
      %v9602 = vpop.f32.mrf.mxu0
      %9603 = vmatprep.mubr.f32.mxu0 0.0
      %9604 = vmatmul.mubr.f32.gmra.mxu0 %v9402
      %v9605 = vpop.f32.mrf.mxu0
      %v9606 = vadd.f32 %v9336, %v9605
      %v9607 = vpop.f32.mrf.mxu0
      %9608 = vmatprep.mubr.f32.mxu0 0.0
      %9609 = vmatmul.mubr.f32.gmra.mxu0 %v9405
      %v9610 = vpop.f32.mrf.mxu0
      %v9611 = vadd.f32 %v9336, %v9610
      %v9612 = vpop.f32.mrf.mxu0
      %9613 = vmatprep.mubr.f32.mxu0 0.0
      %9614 = vmatmul.mubr.f32.gmra.mxu0 %v9408
      %v9615 = vpop.f32.mrf.mxu0
      %v9616 = vadd.f32 %v9336, %v9615
      %v9617 = vpop.f32.mrf.mxu0
      %9618 = vmatprep.mubr.f32.mxu0 0.0
      %9619 = vmatmul.mubr.f32.gmra.mxu0 %v9411
      %v9620 = vpop.f32.mrf.mxu0
      %v9621 = vadd.f32 %v9336, %v9620
      %v9622 = vpop.f32.mrf.mxu0
      %9623 = vmatprep.mubr.f32.mxu0 0.0
      %9624 = vmatmul.mubr.f32.gmra.mxu0 %v9414
      %v9625 = vpop.f32.mrf.mxu0
      %v9626 = vadd.f32 %v9336, %v9625
      %v9627 = vpop.f32.mrf.mxu0
      %9628 = vmatprep.mubr.f32.mxu0 0.0
      %9629 = vmatmul.mubr.f32.gmra.mxu0 %v9417
      %v9630 = vpop.f32.mrf.mxu0
      %v9631 = vadd.f32 %v9336, %v9630
      %v9632 = vpop.f32.mrf.mxu0
      %9633 = vmatprep.mubr.f32.mxu0 0.0
      %9634 = vmatmul.mubr.f32.gmra.mxu0 %v9420
      %v9635 = vpop.f32.mrf.mxu0
      %v9636 = vadd.f32 %v9336, %v9635
      %v9637 = vpop.f32.mrf.mxu0
      %9638 = vmatprep.mubr.f32.mxu0 0.0
      %9639 = vmatmul.mubr.f32.gmra.mxu0 %v9423
      %v9640 = vpop.f32.mrf.mxu0
      %v9641 = vadd.f32 %v9336, %v9640
      %v9642 = vpop.f32.mrf.mxu0
      %9643 = vmatprep.mubr.f32.mxu0 0.0
      %9644 = vmatmul.mubr.f32.gmra.mxu0 %v9426
      %v9645 = vpop.f32.mrf.mxu0
      %v9646 = vadd.f32 %v9336, %v9645
      %v9647 = vpop.f32.mrf.mxu0
      %9648 = vmatprep.mubr.f32.mxu0 0.0
      %9649 = vmatmul.mubr.f32.gmra.mxu0 %v9429
      %v9650 = vpop.f32.mrf.mxu0
      %v9651 = vadd.f32 %v9336, %v9650
      %v9652 = vpop.f32.mrf.mxu0
      %9653 = vmatprep.mubr.f32.mxu0 0.0
      %9654 = vmatmul.mubr.f32.gmra.mxu0 %v9432
      %v9655 = vpop.f32.mrf.mxu0
      %v9656 = vadd.f32 %v9336, %v9655
      %v9657 = vpop.f32.mrf.mxu0
      %9658 = vdwg.mxu0
      %v9659 = vadd.f32 %v9501, %v351
      %v9660 = vadd.f32 %v9506, %v352
      %v9661 = vadd.f32 %v9511, %v353
      %v9662 = vadd.f32 %v9516, %v354
      %v9663 = vadd.f32 %v9521, %v355
      %v9664 = vadd.f32 %v9526, %v356
      %v9665 = vadd.f32 %v9531, %v357
      %v9666 = vadd.f32 %v9536, %v358
      %v9667 = vadd.f32 %v9541, %v359
      %v9668 = vadd.f32 %v9546, %v360
      %v9669 = vadd.f32 %v9551, %v361
      %v9670 = vadd.f32 %v9556, %v362
      %v9671 = vadd.f32 %v9561, %v363
      %v9672 = vadd.f32 %v9566, %v364
      %v9673 = vadd.f32 %v9571, %v365
      %v9674 = vadd.f32 %v9576, %v366
      %v9675 = vadd.f32 %v9581, %v383
      %v9676 = vadd.f32 %v9586, %v384
      %v9677 = vadd.f32 %v9591, %v385
      %v9678 = vadd.f32 %v9596, %v386
      %v9679 = vadd.f32 %v9601, %v387
      %v9680 = vadd.f32 %v9606, %v388
      %v9681 = vadd.f32 %v9611, %v389
      %v9682 = vadd.f32 %v9616, %v390
      %v9683 = vadd.f32 %v9621, %v391
      %v9684 = vadd.f32 %v9626, %v392
      %v9685 = vadd.f32 %v9631, %v393
      %v9686 = vadd.f32 %v9636, %v394
      %v9687 = vadd.f32 %v9641, %v395
      %v9688 = vadd.f32 %v9646, %v396
      %v9689 = vadd.f32 %v9651, %v397
      %v9690 = vadd.f32 %v9656, %v398
      %9691 = vxpose.xlu0.b32.start [1/16] %v9659, 128
      %9692 = vxpose.xlu0.b32.cont [2/16] %v9660, 128
      %9693 = vxpose.xlu0.b32.cont [3/16] %v9661, 128
      %9694 = vxpose.xlu0.b32.cont [4/16] %v9662, 128
      %9695 = vxpose.xlu0.b32.cont [5/16] %v9663, 128
      %9696 = vxpose.xlu0.b32.cont [6/16] %v9664, 128
      %9697 = vxpose.xlu0.b32.cont [7/16] %v9665, 128
      %9698 = vxpose.xlu0.b32.cont [8/16] %v9666, 128
      %9699 = vxpose.xlu0.b32.cont [9/16] %v9667, 128
      %9700 = vxpose.xlu0.b32.cont [10/16] %v9668, 128
      %9701 = vxpose.xlu0.b32.cont [11/16] %v9669, 128
      %9702 = vxpose.xlu0.b32.cont [12/16] %v9670, 128
      %9703 = vxpose.xlu0.b32.cont [13/16] %v9671, 128
      %9704 = vxpose.xlu0.b32.cont [14/16] %v9672, 128
      %9705 = vxpose.xlu0.b32.cont [15/16] %v9673, 128
      %9706 = vxpose.xlu0.b32.end [16/16] %v9674, 128
      %v9707 = vpop.trf.xlu0
      %v9708 = vpop.trf.xlu0
      %v9709 = vpop.trf.xlu0
      %v9710 = vpop.trf.xlu0
      %v9711 = vpop.trf.xlu0
      %v9712 = vpop.trf.xlu0
      %v9713 = vpop.trf.xlu0
      %v9714 = vpop.trf.xlu0
      %v9715 = vpop.trf.xlu0
      %v9716 = vpop.trf.xlu0
      %v9717 = vpop.trf.xlu0
      %v9718 = vpop.trf.xlu0
      %v9719 = vpop.trf.xlu0
      %v9720 = vpop.trf.xlu0
      %v9721 = vpop.trf.xlu0
      %v9722 = vpop.trf.xlu0
      %9723 = vxpose.xlu0.b32.start [1/16] %v9675, 128
      %9724 = vxpose.xlu0.b32.cont [2/16] %v9676, 128
      %9725 = vxpose.xlu0.b32.cont [3/16] %v9677, 128
      %9726 = vxpose.xlu0.b32.cont [4/16] %v9678, 128
      %9727 = vxpose.xlu0.b32.cont [5/16] %v9679, 128
      %9728 = vxpose.xlu0.b32.cont [6/16] %v9680, 128
      %9729 = vxpose.xlu0.b32.cont [7/16] %v9681, 128
      %9730 = vxpose.xlu0.b32.cont [8/16] %v9682, 128
      %9731 = vxpose.xlu0.b32.cont [9/16] %v9683, 128
      %9732 = vxpose.xlu0.b32.cont [10/16] %v9684, 128
      %9733 = vxpose.xlu0.b32.cont [11/16] %v9685, 128
      %9734 = vxpose.xlu0.b32.cont [12/16] %v9686, 128
      %9735 = vxpose.xlu0.b32.cont [13/16] %v9687, 128
      %9736 = vxpose.xlu0.b32.cont [14/16] %v9688, 128
      %9737 = vxpose.xlu0.b32.cont [15/16] %v9689, 128
      %9738 = vxpose.xlu0.b32.end [16/16] %v9690, 128
      %v9739 = vpop.trf.xlu0
      %v9740 = vpop.trf.xlu0
      %v9741 = vpop.trf.xlu0
      %v9742 = vpop.trf.xlu0
      %v9743 = vpop.trf.xlu0
      %v9744 = vpop.trf.xlu0
      %v9745 = vpop.trf.xlu0
      %v9746 = vpop.trf.xlu0
      %v9747 = vpop.trf.xlu0
      %v9748 = vpop.trf.xlu0
      %v9749 = vpop.trf.xlu0
      %v9750 = vpop.trf.xlu0
      %v9751 = vpop.trf.xlu0
      %v9752 = vpop.trf.xlu0
      %v9753 = vpop.trf.xlu0
      %v9754 = vpop.trf.xlu0
      %9755 = vst [vmem:[%s332] sm:$0xff] %v9707
      %9756 = vst [vmem:[%s332 + $0x8] sm:$0xff] %v9739
      %p9757 = scmp.lt.s32.totalorder %s20, 1
      %s9758 = scalar_select %p9757, %s20, 1
      %s9759 = smul.addr %s9758, 2
      %s9760 = smul.addr %s9759, 8
      %s9761 = scalar_lea.vmem %s9, %s9760
      // Predicated region
      $region57: #{residual_group_forward.1} parent=55 // pred_check
        %p9762 = pneg %p232
      $region58: #{residual_group_forward.1} parent=55 // pred_check_branch
        %9764 = sbr.rel (%p9762) target = $region60
      $region59: #{residual_group_forward.1} parent=55 // pred_region
        _
      $region60: #{residual_group_forward.1} parent=55 // pred_fallthru
        _
    $region56: #{residual_group_forward.1} parent=5 // pred_fallthru
      _
    %p9765 = scmp.le.s32.totalorder 2, %s15
    // Predicated region
    $region61: #{residual_group_forward.1} parent=5 // pred_check
      %p9766 = pneg %p9765
    $region62: #{residual_group_forward.1} parent=5 // pred_check_branch
      %9768 = sbr.rel (%p9766) target = $region64
    $region63: #{residual_group_forward.1} parent=5 // pred_region
      %s9769 = ssub.s32 %s15, 2
      // Predicated region
      $region65: #{residual_group_forward.1} parent=63 // pred_check
        %p9770 = pneg %p238
      $region66: #{residual_group_forward.1} parent=63 // pred_check_branch
        %9772 = sbr.rel (%p9770) target = $region68
      $region67: #{residual_group_forward.1} parent=63 // pred_region
        %p9773 = scmp.lt.s32.totalorder %s21, 1
        %s9774 = scalar_select %p9773, %s21, 1
        %s9775 = smul.addr %s9774, 2
        %s9776 = smul.addr %s9775, 8
        %s9777 = scalar_lea.vmem %s9, %s9776
      $region68: #{residual_group_forward.1} parent=63 // pred_fallthru
        _
    $region64: #{residual_group_forward.1} parent=5 // pred_fallthru
      _
  $region6: #{residual_group_forward.1} parent=0 // loop_footer
    %s19 = sadd.s32 1, %s15
  $region7: #{residual_group_forward.1} parent=0 // loop_footer_branch
    %14 = sbr.rel target = $region3
  $region8: #{residual_group_forward.1} parent=0 // loop_exit
    _

</llo_original>
